<compile_context>
chip_gen: v6e
topology: v6e:2x2x1
jax: 0.10.0
libtpu: 0.0.40
codegen_flags: <defaults>
</compile_context>

<pallas_src>
import functools
import math

import jax
import jax.numpy as jnp
from jax.experimental import pallas as pl
from jax.experimental.pallas import tpu as pltpu

LANE = 128
LEAKY_SLOPE = 0.02        # nn.LeakyReLU(0.02)
TIME_EMB_DIM = 32
BN_EPS = 1e-5


def _round_up(x, m):
    return ((x + m - 1) // m) * m


def _n_tile(cp):
    # Generation-aware output-channel tile: 256 lanes fill the v6e/v7x 256-wide
    # MXU when the channel count allows; 128 otherwise (and for v5e-sized C).
    return 256 if cp % 256 == 0 else 128


def _cparams(sem, est_bytes):
    # Explicit scoped-VMEM limit sized from the per-step footprint (feedback),
    # clamped well under v7x's 64 MiB physical VMEM.
    lim = int(min(max(2 * est_bytes + (4 << 20), 16 << 20), 48 << 20))
    return pltpu.CompilerParams(dimension_semantics=sem, vmem_limit_bytes=lim)


# ----------------------------------------------------------------------------
# Kernels
# ----------------------------------------------------------------------------

def _conv1_kernel(p_ref, w_ref, b_ref, a_ref, m_ref, *, neg_slope):
    """Per-image conv1 (as one full-K matmul over im2col patches) + bias +
    LeakyReLU; also emits per-image BN moments (sum, sum of squares)."""
    h = jnp.dot(p_ref[0], w_ref[...], preferred_element_type=jnp.float32)
    h = h + b_ref[...]
    h = jnp.maximum(h, h * neg_slope)                       # LeakyReLU(0.02)
    a_ref[0] = h.astype(a_ref.dtype)
    s0 = jnp.sum(h, axis=0, keepdims=True)
    s1 = jnp.sum(h * h, axis=0, keepdims=True)
    m_ref[0] = jnp.concatenate([s0, s1], axis=0)


def _conv2_kernel(*refs, H, W, cin, n_total, neg_slope, eps, use_time):
    """Per-image fused stage:
         x2 = bn1_affine(a) (+ leaky(time_mlp(t)) broadcast)     [input fusion]
         h2 = leaky_relu(conv2_3x3(x2) + b2)                      [9 in-kernel
                                                  shifted matmuls, no im2col]
       emits h2 (bf16) and per-image BN2 moments."""
    if use_time:
        (a_ref, m1_ref, g1_ref, be1_ref, t_ref, tw_ref, tb_ref,
         w_ref, b_ref, h_ref, m2_ref, xpad_ref) = refs
    else:
        (a_ref, m1_ref, g1_ref, be1_ref,
         w_ref, b_ref, h_ref, m2_ref, xpad_ref) = refs

    # --- BN1 folded affine from accumulated per-image moments (one pass;
    #     mean folded into the shift: y = h*scale + shift)
    s = jnp.sum(m1_ref[...], axis=0)                        # (2, cin)
    inv_n = 1.0 / n_total
    mean = s[0:1, :] * inv_n
    var = s[1:2, :] * inv_n - mean * mean                   # biased (train mode)
    scale = g1_ref[...] * jax.lax.rsqrt(var + eps)
    shift = be1_ref[...] - mean * scale
    if use_time:
        te = jnp.dot(t_ref[0], tw_ref[...],
                     preferred_element_type=jnp.float32) + tb_ref[...]
        te = jnp.maximum(te, te * neg_slope)
        shift = shift + te                                   # per-image row add

    # --- normalized conv2 input pasted into a zero-bordered padded VMEM
    #     scratch (in-kernel padding: no HBM pad pass, borders stay exact 0)
    zr = jnp.zeros((1, W + 2, cin), xpad_ref.dtype)
    xpad_ref[0:1, :, :] = zr
    xpad_ref[H + 1:H + 2, :, :] = zr
    zc = jnp.zeros((H + 2, 1, cin), xpad_ref.dtype)
    xpad_ref[:, 0:1, :] = zc
    xpad_ref[:, W + 1:W + 2, :] = zc
    xn = a_ref[0].astype(jnp.float32) * scale + shift
    xpad_ref[1:H + 1, 1:W + 1, :] = xn.astype(xpad_ref.dtype)

    # --- 3x3 conv as 9 shifted-activation matmuls (in-kernel im2col)
    nt = b_ref.shape[-1]
    acc = jnp.zeros((H * W, nt), jnp.float32)
    for dy in range(3):
        for dx in range(3):
            v = xpad_ref[dy:dy + H, dx:dx + W, :].reshape(H * W, cin)
            acc = acc + jnp.dot(v, w_ref[dy, dx],
                                preferred_element_type=jnp.float32)
    h = acc + b_ref[...]
    h = jnp.maximum(h, h * neg_slope)
    h_ref[0] = h.reshape(H, W, nt).astype(h_ref.dtype)
    s0 = jnp.sum(h, axis=0, keepdims=True)
    s1 = jnp.sum(h * h, axis=0, keepdims=True)
    m2_ref[0] = jnp.concatenate([s0, s1], axis=0)


def _down_tf_kernel(x_ref, w_ref, b_ref, o_ref, *, Ho, Wo, cin):
    """Conv2d(C,C,4,stride 2,pad 1) as 16 unit-stride tap matmuls over the
    parity-split padded input (parity grids P[py,qx][u,v] = xpad[2u+py,2v+qx])."""
    nt = b_ref.shape[-1]
    acc = jnp.zeros((Ho * Wo, nt), jnp.float32)
    for py in range(2):
        for qx in range(2):
            for ry in range(2):
                for rx in range(2):
                    v = x_ref[0, py, qx, ry:ry + Ho, rx:rx + Wo, :]
                    v = v.reshape(Ho * Wo, cin)
                    acc = acc + jnp.dot(v, w_ref[py, qx, ry, rx],
                                        preferred_element_type=jnp.float32)
    o = acc + b_ref[...]
    o_ref[0] = o.reshape(Ho, Wo, nt).astype(o_ref.dtype)


def _up_tf_kernel(x_ref, w_ref, b_ref, o_ref, *, H, W, cin):
    """ConvTranspose2d(C,C,4,2,1) as four per-output-parity 2x2 stride-1
    sub-convolutions over the padded input; the four parity outputs are written
    as one (H, 2, W, 2*C) block whose reshape to (2H, 2W, C) is a free view."""
    nt = b_ref.shape[-1]
    rows = []
    for a in range(2):
        cols = []
        for c in range(2):
            acc = jnp.zeros((H * W, nt), jnp.float32)
            for dy in range(2):
                for dx in range(2):
                    v = x_ref[0, a + dy:a + dy + H, c + dx:c + dx + W, :]
                    v = v.reshape(H * W, cin)
                    acc = acc + jnp.dot(v, w_ref[a, c, dy, dx],
                                        preferred_element_type=jnp.float32)
            cols.append((acc + b_ref[...]).reshape(H, W, nt))
        rows.append(jnp.concatenate(cols, axis=-1))          # (H, W, 2*nt)
    y = jnp.stack(rows, axis=1)                              # (H, 2, W, 2*nt)
    o_ref[0] = y.astype(o_ref.dtype)


# ----------------------------------------------------------------------------
# pallas_call wrappers
# ----------------------------------------------------------------------------

def conv1_lrelu(patches, w, b):
    B, M, K = patches.shape
    Kw, Cp = w.shape
    assert Kw == K
    tn = _n_tile(Cp)
    est = (M * K * 2 + K * tn * 2 + M * tn * 2 + M * tn * 4) * 2
    return pl.pallas_call(
        functools.partial(_conv1_kernel, neg_slope=LEAKY_SLOPE),
        out_shape=(jax.ShapeDtypeStruct((B, M, Cp), jnp.bfloat16),
                   jax.ShapeDtypeStruct((B, 2, Cp), jnp.float32)),
        grid_spec=pltpu.PrefetchScalarGridSpec(
            num_scalar_prefetch=0,
            grid=(B, Cp // tn),
            in_specs=[
                pl.BlockSpec((1, M, K), lambda bb, j: (bb, 0, 0)),
                pl.BlockSpec((K, tn), lambda bb, j: (0, j)),
                pl.BlockSpec((1, tn), lambda bb, j: (0, j)),
            ],
            out_specs=(
                pl.BlockSpec((1, M, tn), lambda bb, j: (bb, 0, j)),
                pl.BlockSpec((1, 2, tn), lambda bb, j: (bb, 0, j)),
            ),
        ),
        compiler_params=_cparams(("parallel", "parallel"), est),
    )(patches, w, b)


def conv2_bn1_lrelu(a, m1, gamma1, beta1, w, b, time_args, *, n_total):
    B, H, W, Cp = a.shape
    Cout = w.shape[-1]
    tn = _n_tile(Cout)
    use_time = time_args is not None

    operands = [a, m1, gamma1, beta1]
    in_specs = [
        pl.BlockSpec((1, H, W, Cp), lambda bb, j: (bb, 0, 0, 0)),
        pl.BlockSpec((B, 2, Cp), lambda bb, j: (0, 0, 0)),
        pl.BlockSpec((1, Cp), lambda bb, j: (0, 0)),
        pl.BlockSpec((1, Cp), lambda bb, j: (0, 0)),
    ]
    if use_time:
        t3, tw, tb = time_args
        operands += [t3, tw, tb]
        in_specs += [
            pl.BlockSpec((1, 1, t3.shape[-1]), lambda bb, j: (bb, 0, 0)),
            pl.BlockSpec((tw.shape[0], Cp), lambda bb, j: (0, 0)),
            pl.BlockSpec((1, Cp), lambda bb, j: (0, 0)),
        ]
    operands += [w, b]
    in_specs += [
        pl.BlockSpec((3, 3, Cp, tn), lambda bb, j: (0, 0, 0, j)),
        pl.BlockSpec((1, tn), lambda bb, j: (0, j)),
    ]

    kernel = functools.partial(
        _conv2_kernel, H=H, W=W, cin=Cp, n_total=float(n_total),
        neg_slope=LEAKY_SLOPE, eps=BN_EPS, use_time=use_time)
    est = (2 * H * W * Cp * 2 + (H + 2) * (W + 2) * Cp * 2
           + 9 * Cp * tn * 2 + H * W * tn * 2
           + H * W * Cp * 4 + H * W * tn * 4) * 2
    return pl.pallas_call(
        kernel,
        out_shape=(jax.ShapeDtypeStruct((B, H, W, Cout), jnp.bfloat16),
                   jax.ShapeDtypeStruct((B, 2, Cout), jnp.float32)),
        grid_spec=pltpu.PrefetchScalarGridSpec(
            num_scalar_prefetch=0,
            grid=(B, Cout // tn),
            in_specs=in_specs,
            out_specs=(
                pl.BlockSpec((1, H, W, tn), lambda bb, j: (bb, 0, 0, j)),
                pl.BlockSpec((1, 2, tn), lambda bb, j: (bb, 0, j)),
            ),
            scratch_shapes=[pltpu.VMEM((H + 2, W + 2, Cp), jnp.bfloat16)],
        ),
        compiler_params=_cparams(("parallel", "parallel"), est),
    )(*operands)


def down_transform(xq, w, b):
    B, _, _, Hp1, Wp1, Cp = xq.shape
    Ho, Wo = Hp1 - 1, Wp1 - 1
    Cout = w.shape[-1]
    tn = _n_tile(Cout)
    est = (4 * Hp1 * Wp1 * Cp * 2 + 16 * Cp * tn * 2
           + Ho * Wo * tn * 4 + Ho * Wo * tn * 4) * 2
    return pl.pallas_call(
        functools.partial(_down_tf_kernel, Ho=Ho, Wo=Wo, cin=Cp),
        out_shape=jax.ShapeDtypeStruct((B, Ho, Wo, Cout), jnp.float32),
        grid_spec=pltpu.PrefetchScalarGridSpec(
            num_scalar_prefetch=0,
            grid=(B, Cout // tn),
            in_specs=[
                pl.BlockSpec((1, 2, 2, Hp1, Wp1, Cp),
                             lambda bb, j: (bb, 0, 0, 0, 0, 0)),
                pl.BlockSpec((2, 2, 2, 2, Cp, tn),
                             lambda bb, j: (0, 0, 0, 0, 0, j)),
                pl.BlockSpec((1, tn), lambda bb, j: (0, j)),
            ],
            out_specs=pl.BlockSpec((1, Ho, Wo, tn),
                                   lambda bb, j: (bb, 0, 0, j)),
        ),
        compiler_params=_cparams(("parallel", "parallel"), est),
    )(xq, w, b)


def up_transform(xpad, w, b):
    # TODO(synk): add an output-channel grid axis for C >> 128 levels; here the
    # full channel range is one block so the interleaved write stays a free view.
    B, Hp2, Wp2, Cp = xpad.shape
    H, W = Hp2 - 2, Wp2 - 2
    Cout = w.shape[-1]
    est = (Hp2 * Wp2 * Cp * 2 + 16 * Cp * Cout * 2
           + H * 2 * W * 2 * Cout * 4 + 4 * H * W * Cout * 4) * 2
    y = pl.pallas_call(
        functools.partial(_up_tf_kernel, H=H, W=W, cin=Cp),
        out_shape=jax.ShapeDtypeStruct((B, H, 2, W, 2 * Cout), jnp.float32),
        grid_spec=pltpu.PrefetchScalarGridSpec(
            num_scalar_prefetch=0,
            grid=(B,),
            in_specs=[
                pl.BlockSpec((1, Hp2, Wp2, Cp), lambda bb: (bb, 0, 0, 0)),
                pl.BlockSpec((2, 2, 2, 2, Cp, Cout),
                             lambda bb: (0, 0, 0, 0, 0, 0)),
                pl.BlockSpec((1, Cout), lambda bb: (0, 0)),
            ],
            out_specs=pl.BlockSpec((1, H, 2, W, 2 * Cout),
                                   lambda bb: (bb, 0, 0, 0, 0)),
        ),
        compiler_params=_cparams(("parallel",), est),
    )(xpad, w, b)
    # subpixel interleave: (B, H, 2, W, 2*C) -> (B, 2H, 2W, C) is a free view
    return y.reshape(B, 2 * H, 2 * W, Cout)


# ----------------------------------------------------------------------------
# XLA glue (cheap, activation-sized passes only; no k*k-inflated im2col slabs)
# ----------------------------------------------------------------------------

def _im2col3x3(x):
    """x: (B,H,W,C) -> (B, H*W, 9*C); column order (ky, kx, c).  Used only for
    conv1 where C is tiny, per review."""
    B, H, W, C = x.shape
    xp = jnp.pad(x, ((0, 0), (1, 1), (1, 1), (0, 0)))
    cols = [xp[:, dy:dy + H, dx:dx + W, :] for dy in range(3) for dx in range(3)]
    p = jnp.stack(cols, axis=3)                 # (B, H, W, 9, C)
    return p.reshape(B, H * W, 9 * C)


def _bn_affine(m, gamma, beta, n_total, eps=BN_EPS):
    """Fold accumulated moments into a per-channel scale/shift (train-mode BN)."""
    s = jnp.sum(m, axis=0)                      # (2, Cp)
    mean = s[0] / n_total
    var = s[1] / n_total - mean * mean
    scale = gamma[0] * jax.lax.rsqrt(var + eps)
    shift = beta[0] - mean * scale
    return scale, shift


def _prep_down_input(h2, scale, shift):
    """BN2 normalize + zero-pad + stride-2 parity split in one fused XLA pass.
    TODO(synk): fold this gather into the transform kernel via strided DMA."""
    B, H, W, Cp = h2.shape
    Ho, Wo = H // 2, W // 2
    xn = (h2.astype(jnp.float32) * scale + shift).astype(jnp.bfloat16)
    xn = jnp.pad(xn, ((0, 0), (1, 1), (1, 1), (0, 0)))
    xn = xn.reshape(B, Ho + 1, 2, Wo + 1, 2, Cp)
    return jnp.transpose(xn, (0, 2, 4, 1, 3, 5))    # (B, 2, 2, Ho+1, Wo+1, Cp)


def _prep_up_input(h2, scale, shift):
    """BN2 normalize + zero-pad (single fused XLA pass, activation-sized)."""
    xn = (h2.astype(jnp.float32) * scale + shift).astype(jnp.bfloat16)
    return jnp.pad(xn, ((0, 0), (1, 1), (1, 1), (0, 0)))


# ----------------------------------------------------------------------------
# Parameters (channel-padded to 128 lanes, matmul-packed, bf16 — done once)
# ----------------------------------------------------------------------------

def _init_conv3(key, cin, cout, cpad):
    kw_, kb = jax.random.split(key)
    w = jax.random.normal(kw_, (3, 3, cin, cout), jnp.float32) / math.sqrt(9 * cin)
    b = 0.01 * jax.random.normal(kb, (cout,), jnp.float32)
    wp = jnp.zeros((3, 3, cin, cpad), jnp.float32).at[..., :cout].set(w)
    wp = wp.reshape(9 * cin, cpad)              # rows (ky,kx,cin); K NOT padded
    bp = jnp.zeros((1, cpad), jnp.float32).at[0, :cout].set(b)
    return {"w": wp.astype(jnp.bfloat16), "b": bp}


def _init_conv3_padded_in(key, c, cpad):
    kw_, kb = jax.random.split(key)
    w = jax.random.normal(kw_, (3, 3, c, c), jnp.float32) / math.sqrt(9 * c)
    b = 0.01 * jax.random.normal(kb, (c,), jnp.float32)
    wp = jnp.zeros((3, 3, cpad, cpad), jnp.float32).at[:, :, :c, :c].set(w)
    bp = jnp.zeros((1, cpad), jnp.float32).at[0, :c].set(b)
    return {"w": wp.astype(jnp.bfloat16), "b": bp}


def _init_linear(key, cin, cout, cpad):
    kw_, kb = jax.random.split(key)
    w = jax.random.normal(kw_, (cin, cout), jnp.float32) / math.sqrt(cin)
    b = 0.01 * jax.random.normal(kb, (cout,), jnp.float32)
    wp = jnp.zeros((cin, cpad), jnp.float32).at[:, :cout].set(w)
    bp = jnp.zeros((1, cpad), jnp.float32).at[0, :cout].set(b)
    return {"w": wp, "b": bp}                   # tiny: keep f32


def _init_bn(key, c, cpad):
    kg, kb = jax.random.split(key)
    g = 1.0 + 0.05 * jax.random.normal(kg, (c,), jnp.float32)
    b = 0.05 * jax.random.normal(kb, (c,), jnp.float32)
    return {"gamma": jnp.zeros((1, cpad), jnp.float32).at[0, :c].set(g),
            "beta": jnp.zeros((1, cpad), jnp.float32).at[0, :c].set(b)}


def _init_transform_down(key, c, cpad):
    """Conv2d(c,c,4,2,1) packed per stride-2 parity: w_pack[py,qx,ry,rx] =
    w[2*ry+py, 2*rx+qx] as a (cpad, cpad) matrix."""
    kw_, kb = jax.random.split(key)
    w = jax.random.normal(kw_, (4, 4, c, c), jnp.float32) / math.sqrt(16 * c)
    b = 0.01 * jax.random.normal(kb, (c,), jnp.float32)
    wp = jnp.zeros((4, 4, cpad, cpad), jnp.float32).at[:, :, :c, :c].set(w)
    packed = jnp.zeros((2, 2, 2, 2, cpad, cpad), jnp.float32)
    for py in range(2):
        for qx in range(2):
            for ry in range(2):
                for rx in range(2):
                    packed = packed.at[py, qx, ry, rx].set(wp[2 * ry + py,
                                                              2 * rx + qx])
    bp = jnp.zeros((1, cpad), jnp.float32).at[0, :c].set(b)
    return {"w": packed.astype(jnp.bfloat16), "b": bp}


def _init_transform_up(key, c, cpad):
    """ConvTranspose2d(c,c,4,2,1) as four per-output-parity 2x2 sub-kernels
    (exact subpixel decomposition).  Logical layout w[ky,kx,cin,cout] ==
    torch weight[cin,cout,ky,kx]."""
    kw_, kb = jax.random.split(key)
    w = jax.random.normal(kw_, (4, 4, c, c), jnp.float32) / math.sqrt(16 * c)
    b = 0.01 * jax.random.normal(kb, (c,), jnp.float32)
    wp = jnp.zeros((4, 4, cpad, cpad), jnp.float32).at[:, :, :c, :c].set(w)
    # output row 2m+a reads padded input rows m+a+dy with taps ky = tap[a][dy]
    tap = {0: (3, 1), 1: (2, 0)}
    packed = jnp.zeros((2, 2, 2, 2, cpad, cpad), jnp.float32)
    for a in range(2):
        for cc in range(2):
            for dy in range(2):
                for dx in range(2):
                    packed = packed.at[a, cc, dy, dx].set(
                        wp[tap[a][dy], tap[cc][dx]])
    bp = jnp.zeros((1, cpad), jnp.float32).at[0, :c].set(b)
    return {"w": packed.astype(jnp.bfloat16), "b": bp}


def init_cond_block(key, in_ch, out_ch, time_emb_dim=TIME_EMB_DIM,
                    up=False, scale=1):
    ks = jax.random.split(key, 6)
    cpad = _round_up(out_ch, LANE)
    c1_in = int(2 * scale) * in_ch if up else int(scale) * in_ch
    return {
        "conv1": _init_conv3(ks[0], c1_in, out_ch, cpad),
        "conv2": _init_conv3_padded_in(ks[1], out_ch, cpad),
        "time": _init_linear(ks[2], time_emb_dim, out_ch, cpad),
        "bn1": _init_bn(ks[3], out_ch, cpad),
        "bn2": _init_bn(ks[4], out_ch, cpad),
        "transform": (_init_transform_up(ks[5], out_ch, cpad) if up
                      else _init_transform_down(ks[5], out_ch, cpad)),
    }


# ----------------------------------------------------------------------------
# Forward pass (CondBlock.forward semantics)
# ----------------------------------------------------------------------------

def cond_block_forward(params, x_nchw, t=None, *, up=False, out_ch):
    x = jnp.transpose(x_nchw, (0, 2, 3, 1)).astype(jnp.bfloat16)     # NHWC bf16
    B, H, W, _ = x.shape
    n_total = B * H * W

    # conv1 -> LeakyReLU (+ per-image BN1 moments); im2col kept only here
    p1 = _im2col3x3(x)                                               # (B,HW,9*cin)
    a, m1 = conv1_lrelu(p1, params["conv1"]["w"], params["conv1"]["b"])
    Cp = a.shape[-1]
    a = a.reshape(B, H, W, Cp)                                       # free view

    # conv2 with BN1 normalize + time-emb add fused on the input path;
    # 3x3 patches gathered in-kernel (no im2col HBM slab)
    time_args = None
    if t is not None:
        time_args = (t.astype(jnp.float32).reshape(B, 1, -1),
                     params["time"]["w"], params["time"]["b"])
    h2, m2 = conv2_bn1_lrelu(a, m1,
                             params["bn1"]["gamma"], params["bn1"]["beta"],
                             params["conv2"]["w"], params["conv2"]["b"],
                             time_args, n_total=n_total)

    # transform, with BN2 normalize folded into its input prep
    scale2, shift2 = _bn_affine(m2, params["bn2"]["gamma"],
                                params["bn2"]["beta"], n_total)
    if up:
        xpad = _prep_up_input(h2, scale2, shift2)
        out = up_transform(xpad, params["transform"]["w"],
                           params["transform"]["b"])
    else:
        xq = _prep_down_input(h2, scale2, shift2)
        out = down_transform(xq, params["transform"]["w"],
                             params["transform"]["b"])

    out = out[..., :out_ch]
    # TODO(synk): keep NHWC/bf16 here when the downstream block consumes it; the
    # NCHW f32 transpose is only for interface parity with the PyTorch module.
    return jnp.transpose(out, (0, 3, 1, 2))


# ----------------------------------------------------------------------------

if __name__ == "__main__":
    key = jax.random.PRNGKey(0)
    kp, kpu, kx, kxu, kt = jax.random.split(key, 5)

    in_ch, out_ch, tdim = 4, 64, TIME_EMB_DIM
    B, H, W = 2, 16, 16

    # Default CondBlock: down-sampling transform Conv2d(out_ch, out_ch, 4, 2, 1)
    params = init_cond_block(kp, in_ch, out_ch, tdim, up=False, scale=1)
    x = jax.random.normal(kx, (B, in_ch, H, W), jnp.float32)
    t = jax.random.normal(kt, (B, tdim), jnp.float32)

    fwd_down = jax.jit(functools.partial(cond_block_forward, up=False,
                                         out_ch=out_ch))
    out = jax.block_until_ready(fwd_down(params, x, t))
    assert out.shape == (B, out_ch, H // 2, W // 2), out.shape
    assert bool(jnp.all(jnp.isfinite(out)))

    # t=None branch of CondBlock.forward
    out_nt = jax.block_until_ready(fwd_down(params, x, None))
    assert out_nt.shape == (B, out_ch, H // 2, W // 2), out_nt.shape
    assert bool(jnp.all(jnp.isfinite(out_nt)))

    # up=True CondBlock: ConvTranspose2d(out_ch, out_ch, 4, 2, 1) transform
    params_up = init_cond_block(kpu, in_ch, out_ch, tdim, up=True, scale=1)
    x_up = jax.random.normal(kxu, (B, 2 * in_ch, H, W), jnp.float32)
    fwd_up = jax.jit(functools.partial(cond_block_forward, up=True,
                                       out_ch=out_ch))
    out_up = jax.block_until_ready(fwd_up(params_up, x_up, t))
    assert out_up.shape == (B, out_ch, 2 * H, 2 * W), out_up.shape
    assert bool(jnp.all(jnp.isfinite(out_up)))

    print("KERNEL_OK")
</pallas_src>

<mosaic_0001>
module attributes {stable_mosaic.version = 11 : i64} {
  func.func @_conv1_kernel(%arg0: i32, %arg1: i32, %arg2: memref<1x256x36xbf16, #tpu.memory_space<vmem>>, %arg3: memref<36x128xbf16, #tpu.memory_space<vmem>>, %arg4: memref<1x128xf32, #tpu.memory_space<vmem>>, %arg5: memref<1x256x128xbf16, #tpu.memory_space<vmem>>, %arg6: memref<1x2x128xf32, #tpu.memory_space<vmem>>) attributes {dimension_semantics = [#tpu.dimension_semantics<parallel>, #tpu.dimension_semantics<parallel>], iteration_bounds = array<i64: 2, 1>, scalar_prefetch = 0 : i64, scratch_operands = 0 : i64, tpu.core_type = #tpu.core_type<tc>, window_params = [{transform_indices = @transform_0, window_bounds = array<i64: 1, 256, 36>}, {transform_indices = @transform_1, window_bounds = array<i64: 36, 128>}, {transform_indices = @transform_2, window_bounds = array<i64: 1, 128>}, {transform_indices = @transform_3, window_bounds = array<i64: 1, 256, 128>}, {transform_indices = @transform_4, window_bounds = array<i64: 1, 2, 128>}]} {
    %c0 = arith.constant 0 : index
    %c0_0 = arith.constant 0 : index
    %c0_1 = arith.constant 0 : index
    %0 = vector.load %arg2[%c0, %c0_0, %c0_1] : memref<1x256x36xbf16, #tpu.memory_space<vmem>>, vector<1x256x36xbf16>
    %1 = vector.shape_cast %0 : vector<1x256x36xbf16> to vector<256x36xbf16>
    %c0_2 = arith.constant 0 : index
    %c0_3 = arith.constant 0 : index
    %2 = vector.load %arg3[%c0_2, %c0_3] : memref<36x128xbf16, #tpu.memory_space<vmem>>, vector<36x128xbf16>
    %cst = arith.constant dense<0.000000e+00> : vector<256x128xf32>
    %3 = tpu.matmul %1, %2, %cst {dimension_numbers = #tpu.dot_dimension_numbers<[1], [0], [0], [1], [0, 0, 1, 1], [], []>} : vector<256x36xbf16>, vector<36x128xbf16>, vector<256x128xf32> -> vector<256x128xf32>
    %c0_4 = arith.constant 0 : index
    %c0_5 = arith.constant 0 : index
    %4 = vector.load %arg4[%c0_4, %c0_5] : memref<1x128xf32, #tpu.memory_space<vmem>>, vector<1x128xf32>
    %5 = vector.broadcast %4 : vector<1x128xf32> to vector<256x128xf32>
    %6 = arith.addf %3, %5 : vector<256x128xf32>
    %cst_6 = arith.constant 2.000000e-02 : f32
    %7 = vector.broadcast %cst_6 : f32 to vector<256x128xf32>
    %8 = arith.mulf %6, %7 : vector<256x128xf32>
    %9 = arith.maximumf %6, %8 : vector<256x128xf32>
    %10 = arith.truncf %9 : vector<256x128xf32> to vector<256x128xbf16>
    %c0_7 = arith.constant 0 : index
    %c0_8 = arith.constant 0 : index
    %c0_9 = arith.constant 0 : index
    %11 = vector.load %arg5[%c0_7, %c0_8, %c0_9] : memref<1x256x128xbf16, #tpu.memory_space<vmem>>, vector<1x256x128xbf16>
    %12 = vector.shape_cast %11 : vector<1x256x128xbf16> to vector<256x128xbf16>
    %13 = vector.shape_cast %10 : vector<256x128xbf16> to vector<1x256x128xbf16>
    tpu.vector_store %arg5[%c0_7, %c0_8, %c0_9], %13 {strides = array<i32>} : memref<1x256x128xbf16, #tpu.memory_space<vmem>>, vector<1x256x128xbf16>,
    %cst_10 = arith.constant dense<0.000000e+00> : vector<128xf32>
    %14 = vector.multi_reduction <add>, %9, %cst_10 [0] : vector<256x128xf32> to vector<128xf32>
    %15 = vector.shape_cast %14 : vector<128xf32> to vector<1x128xf32>
    %16 = arith.mulf %9, %9 : vector<256x128xf32>
    %cst_11 = arith.constant dense<0.000000e+00> : vector<128xf32>
    %17 = vector.multi_reduction <add>, %16, %cst_11 [0] : vector<256x128xf32> to vector<128xf32>
    %18 = vector.shape_cast %17 : vector<128xf32> to vector<1x128xf32>
    %19 = tpu.concatenate %15, %18 in 0 : vector<1x128xf32>, vector<1x128xf32> -> vector<2x128xf32>
    %c0_12 = arith.constant 0 : index
    %c0_13 = arith.constant 0 : index
    %c0_14 = arith.constant 0 : index
    %20 = vector.load %arg6[%c0_12, %c0_13, %c0_14] : memref<1x2x128xf32, #tpu.memory_space<vmem>>, vector<1x2x128xf32>
    %21 = vector.shape_cast %20 : vector<1x2x128xf32> to vector<2x128xf32>
    %22 = vector.shape_cast %19 : vector<2x128xf32> to vector<1x2x128xf32>
    tpu.vector_store %arg6[%c0_12, %c0_13, %c0_14], %22 {strides = array<i32>} : memref<1x2x128xf32, #tpu.memory_space<vmem>>, vector<1x2x128xf32>,
    return
  }
  func.func @transform_0(%arg0: i32, %arg1: i32) -> (i32, i32, i32) {
    %c0_i32 = arith.constant 0 : i32
    %c0_i32_0 = arith.constant 0 : i32
    %c0_i32_1 = arith.constant 0 : i32
    return %arg0, %c0_i32, %c0_i32_0 : i32, i32, i32
  }
  func.func @transform_1(%arg0: i32, %arg1: i32) -> (i32, i32) {
    %c0_i32 = arith.constant 0 : i32
    %c0_i32_0 = arith.constant 0 : i32
    return %c0_i32, %arg1 : i32, i32
  }
  func.func @transform_2(%arg0: i32, %arg1: i32) -> (i32, i32) {
    %c0_i32 = arith.constant 0 : i32
    %c0_i32_0 = arith.constant 0 : i32
    return %c0_i32, %arg1 : i32, i32
  }
  func.func @transform_3(%arg0: i32, %arg1: i32) -> (i32, i32, i32) {
    %c0_i32 = arith.constant 0 : i32
    %c0_i32_0 = arith.constant 0 : i32
    return %arg0, %c0_i32, %arg1 : i32, i32, i32
  }
  func.func @transform_4(%arg0: i32, %arg1: i32) -> (i32, i32, i32) {
    %c0_i32 = arith.constant 0 : i32
    %c0_i32_0 = arith.constant 0 : i32
    return %arg0, %c0_i32, %arg1 : i32, i32, i32
  }
}

module attributes {stable_mosaic.version = 11 : i64} {
  func.func @_conv2_kernel(%arg0: i32, %arg1: i32, %arg2: memref<1x16x16x128xbf16, #tpu.memory_space<vmem>>, %arg3: memref<2x2x128xf32, #tpu.memory_space<vmem>>, %arg4: memref<1x128xf32, #tpu.memory_space<vmem>>, %arg5: memref<1x128xf32, #tpu.memory_space<vmem>>, %arg6: memref<1x1x32xf32, #tpu.memory_space<vmem>>, %arg7: memref<32x128xf32, #tpu.memory_space<vmem>>, %arg8: memref<1x128xf32, #tpu.memory_space<vmem>>, %arg9: memref<3x3x128x128xbf16, #tpu.memory_space<vmem>>, %arg10: memref<1x128xf32, #tpu.memory_space<vmem>>, %arg11: memref<1x16x16x128xbf16, #tpu.memory_space<vmem>>, %arg12: memref<1x2x128xf32, #tpu.memory_space<vmem>>, %arg13: memref<18x18x128xbf16, #tpu.memory_space<vmem>>) attributes {dimension_semantics = [#tpu.dimension_semantics<parallel>, #tpu.dimension_semantics<parallel>], iteration_bounds = array<i64: 2, 1>, scalar_prefetch = 0 : i64, scratch_operands = 1 : i64, tpu.core_type = #tpu.core_type<tc>, window_params = [{transform_indices = @transform_0, window_bounds = array<i64: 1, 16, 16, 128>}, {pipeline_mode = #tpu.pipeline_mode<synchronous>, transform_indices = @transform_1, window_bounds = array<i64: 2, 2, 128>}, {pipeline_mode = #tpu.pipeline_mode<synchronous>, transform_indices = @transform_2, window_bounds = array<i64: 1, 128>}, {pipeline_mode = #tpu.pipeline_mode<synchronous>, transform_indices = @transform_3, window_bounds = array<i64: 1, 128>}, {transform_indices = @transform_4, window_bounds = array<i64: 1, 1, 32>}, {pipeline_mode = #tpu.pipeline_mode<synchronous>, transform_indices = @transform_5, window_bounds = array<i64: 32, 128>}, {pipeline_mode = #tpu.pipeline_mode<synchronous>, transform_indices = @transform_6, window_bounds = array<i64: 1, 128>}, {transform_indices = @transform_7, window_bounds = array<i64: 3, 3, 128, 128>}, {transform_indices = @transform_8, window_bounds = array<i64: 1, 128>}, {transform_indices = @transform_9, window_bounds = array<i64: 1, 16, 16, 128>}, {transform_indices = @transform_10, window_bounds = array<i64: 1, 2, 128>}]} {
    %c0 = arith.constant 0 : index
    %c0_0 = arith.constant 0 : index
    %c0_1 = arith.constant 0 : index
    %0 = vector.load %arg3[%c0, %c0_0, %c0_1] : memref<2x2x128xf32, #tpu.memory_space<vmem>>, vector<2x2x128xf32>
    %cst = arith.constant dense<0.000000e+00> : vector<2x128xf32>
    %1 = vector.multi_reduction <add>, %0, %cst [0] : vector<2x2x128xf32> to vector<2x128xf32>
    %2 = vector.extract_strided_slice %1 {offsets = [0, 0], sizes = [1, 128], strides = [1, 1]} : vector<2x128xf32> to vector<1x128xf32>
    %cst_2 = arith.constant 0.001953125 : f32
    %3 = vector.broadcast %cst_2 : f32 to vector<1x128xf32>
    %4 = arith.mulf %2, %3 : vector<1x128xf32>
    %5 = vector.extract_strided_slice %1 {offsets = [1, 0], sizes = [1, 128], strides = [1, 1]} : vector<2x128xf32> to vector<1x128xf32>
    %cst_3 = arith.constant 0.001953125 : f32
    %6 = vector.broadcast %cst_3 : f32 to vector<1x128xf32>
    %7 = arith.mulf %5, %6 : vector<1x128xf32>
    %8 = arith.mulf %4, %4 : vector<1x128xf32>
    %9 = arith.subf %7, %8 : vector<1x128xf32>
    %c0_4 = arith.constant 0 : index
    %c0_5 = arith.constant 0 : index
    %10 = vector.load %arg4[%c0_4, %c0_5] : memref<1x128xf32, #tpu.memory_space<vmem>>, vector<1x128xf32>
    %cst_6 = arith.constant 9.99999974E-6 : f32
    %11 = vector.broadcast %cst_6 : f32 to vector<1x128xf32>
    %12 = arith.addf %9, %11 : vector<1x128xf32>
    %13 = math.rsqrt %12 : vector<1x128xf32>
    %14 = arith.mulf %10, %13 : vector<1x128xf32>
    %c0_7 = arith.constant 0 : index
    %c0_8 = arith.constant 0 : index
    %15 = vector.load %arg5[%c0_7, %c0_8] : memref<1x128xf32, #tpu.memory_space<vmem>>, vector<1x128xf32>
    %16 = arith.mulf %4, %14 : vector<1x128xf32>
    %17 = arith.subf %15, %16 : vector<1x128xf32>
    %c0_9 = arith.constant 0 : index
    %c0_10 = arith.constant 0 : index
    %c0_11 = arith.constant 0 : index
    %18 = vector.load %arg6[%c0_9, %c0_10, %c0_11] : memref<1x1x32xf32, #tpu.memory_space<vmem>>, vector<1x1x32xf32>
    %19 = vector.shape_cast %18 : vector<1x1x32xf32> to vector<1x32xf32>
    %c0_12 = arith.constant 0 : index
    %c0_13 = arith.constant 0 : index
    %20 = vector.load %arg7[%c0_12, %c0_13] : memref<32x128xf32, #tpu.memory_space<vmem>>, vector<32x128xf32>
    %cst_14 = arith.constant dense<0.000000e+00> : vector<1x128xf32>
    %21 = tpu.matmul %19, %20, %cst_14 {dimension_numbers = #tpu.dot_dimension_numbers<[1], [0], [0], [1], [0, 0, 1, 1], [], []>} : vector<1x32xf32>, vector<32x128xf32>, vector<1x128xf32> -> vector<1x128xf32>
    %c0_15 = arith.constant 0 : index
    %c0_16 = arith.constant 0 : index
    %22 = vector.load %arg8[%c0_15, %c0_16] : memref<1x128xf32, #tpu.memory_space<vmem>>, vector<1x128xf32>
    %23 = arith.addf %21, %22 : vector<1x128xf32>
    %cst_17 = arith.constant 2.000000e-02 : f32
    %24 = vector.broadcast %cst_17 : f32 to vector<1x128xf32>
    %25 = arith.mulf %23, %24 : vector<1x128xf32>
    %26 = arith.maximumf %23, %25 : vector<1x128xf32>
    %27 = arith.addf %17, %26 : vector<1x128xf32>
    %cst_18 = arith.constant 0.000000e+00 : bf16
    %28 = vector.broadcast %cst_18 : bf16 to vector<1x18x128xbf16>
    %c0_19 = arith.constant 0 : index
    %c0_20 = arith.constant 0 : index
    %c0_21 = arith.constant 0 : index
    %29 = vector.load %arg13[%c0_19, %c0_20, %c0_21] : memref<18x18x128xbf16, #tpu.memory_space<vmem>>, vector<1x18x128xbf16>
    tpu.vector_store %arg13[%c0_19, %c0_20, %c0_21], %28 {strides = array<i32>} : memref<18x18x128xbf16, #tpu.memory_space<vmem>>, vector<1x18x128xbf16>,
    %c17 = arith.constant 17 : index
    %c0_22 = arith.constant 0 : index
    %c0_23 = arith.constant 0 : index
    %30 = vector.load %arg13[%c17, %c0_22, %c0_23] : memref<18x18x128xbf16, #tpu.memory_space<vmem>>, vector<1x18x128xbf16>
    tpu.vector_store %arg13[%c17, %c0_22, %c0_23], %28 {strides = array<i32>} : memref<18x18x128xbf16, #tpu.memory_space<vmem>>, vector<1x18x128xbf16>,
    %cst_24 = arith.constant 0.000000e+00 : bf16
    %31 = vector.broadcast %cst_24 : bf16 to vector<18x1x128xbf16>
    %c0_25 = arith.constant 0 : index
    %c0_26 = arith.constant 0 : index
    %c0_27 = arith.constant 0 : index
    %32 = vector.load %arg13[%c0_25, %c0_26, %c0_27] : memref<18x18x128xbf16, #tpu.memory_space<vmem>>, vector<18x1x128xbf16>
    tpu.vector_store %arg13[%c0_25, %c0_26, %c0_27], %31 {strides = array<i32>} : memref<18x18x128xbf16, #tpu.memory_space<vmem>>, vector<18x1x128xbf16>,
    %c0_28 = arith.constant 0 : index
    %c17_29 = arith.constant 17 : index
    %c0_30 = arith.constant 0 : index
    %33 = vector.load %arg13[%c0_28, %c17_29, %c0_30] : memref<18x18x128xbf16, #tpu.memory_space<vmem>>, vector<18x1x128xbf16>
    tpu.vector_store %arg13[%c0_28, %c17_29, %c0_30], %31 {strides = array<i32>} : memref<18x18x128xbf16, #tpu.memory_space<vmem>>, vector<18x1x128xbf16>,
    %c0_31 = arith.constant 0 : index
    %c0_32 = arith.constant 0 : index
    %c0_33 = arith.constant 0 : index
    %c0_34 = arith.constant 0 : index
    %34 = vector.load %arg2[%c0_31, %c0_32, %c0_33, %c0_34] : memref<1x16x16x128xbf16, #tpu.memory_space<vmem>>, vector<1x16x16x128xbf16>
    %35 = vector.shape_cast %34 : vector<1x16x16x128xbf16> to vector<16x16x128xbf16>
    %36 = arith.extf %35 : vector<16x16x128xbf16> to vector<16x16x128xf32>
    %37 = vector.shape_cast %14 : vector<1x128xf32> to vector<1x1x128xf32>
    %38 = vector.broadcast %37 : vector<1x1x128xf32> to vector<16x16x128xf32>
    %39 = arith.mulf %36, %38 : vector<16x16x128xf32>
    %40 = vector.shape_cast %27 : vector<1x128xf32> to vector<1x1x128xf32>
    %41 = vector.broadcast %40 : vector<1x1x128xf32> to vector<16x16x128xf32>
    %42 = arith.addf %39, %41 : vector<16x16x128xf32>
    %43 = arith.truncf %42 : vector<16x16x128xf32> to vector<16x16x128xbf16>
    %c1 = arith.constant 1 : index
    %c1_35 = arith.constant 1 : index
    %c0_36 = arith.constant 0 : index
    %44 = vector.load %arg13[%c1, %c1_35, %c0_36] : memref<18x18x128xbf16, #tpu.memory_space<vmem>>, vector<16x16x128xbf16>
    tpu.vector_store %arg13[%c1, %c1_35, %c0_36], %43 {strides = array<i32>} : memref<18x18x128xbf16, #tpu.memory_space<vmem>>, vector<16x16x128xbf16>,
    %cst_37 = arith.constant 0.000000e+00 : f32
    %45 = vector.broadcast %cst_37 : f32 to vector<256x128xf32>
    %c0_38 = arith.constant 0 : index
    %c0_39 = arith.constant 0 : index
    %c0_40 = arith.constant 0 : index
    %46 = vector.load %arg13[%c0_38, %c0_39, %c0_40] : memref<18x18x128xbf16, #tpu.memory_space<vmem>>, vector<16x16x128xbf16>
    %47 = vector.shape_cast %46 : vector<16x16x128xbf16> to vector<256x128xbf16>
    %c0_41 = arith.constant 0 : index
    %c0_42 = arith.constant 0 : index
    %c0_43 = arith.constant 0 : index
    %c0_44 = arith.constant 0 : index
    %48 = vector.load %arg9[%c0_41, %c0_42, %c0_43, %c0_44] : memref<3x3x128x128xbf16, #tpu.memory_space<vmem>>, vector<1x1x128x128xbf16>
    %49 = vector.shape_cast %48 : vector<1x1x128x128xbf16> to vector<128x128xbf16>
    %cst_45 = arith.constant dense<0.000000e+00> : vector<256x128xf32>
    %50 = tpu.matmul %47, %49, %cst_45 {dimension_numbers = #tpu.dot_dimension_numbers<[1], [0], [0], [1], [0, 0, 1, 1], [], []>} : vector<256x128xbf16>, vector<128x128xbf16>, vector<256x128xf32> -> vector<256x128xf32>
    %51 = arith.addf %45, %50 : vector<256x128xf32>
    %c0_46 = arith.constant 0 : index
    %c1_47 = arith.constant 1 : index
    %c0_48 = arith.constant 0 : index
    %52 = vector.load %arg13[%c0_46, %c1_47, %c0_48] : memref<18x18x128xbf16, #tpu.memory_space<vmem>>, vector<16x16x128xbf16>
    %53 = vector.shape_cast %52 : vector<16x16x128xbf16> to vector<256x128xbf16>
    %c0_49 = arith.constant 0 : index
    %c1_50 = arith.constant 1 : index
    %c0_51 = arith.constant 0 : index
    %c0_52 = arith.constant 0 : index
    %54 = vector.load %arg9[%c0_49, %c1_50, %c0_51, %c0_52] : memref<3x3x128x128xbf16, #tpu.memory_space<vmem>>, vector<1x1x128x128xbf16>
    %55 = vector.shape_cast %54 : vector<1x1x128x128xbf16> to vector<128x128xbf16>
    %cst_53 = arith.constant dense<0.000000e+00> : vector<256x128xf32>
    %56 = tpu.matmul %53, %55, %cst_53 {dimension_numbers = #tpu.dot_dimension_numbers<[1], [0], [0], [1], [0, 0, 1, 1], [], []>} : vector<256x128xbf16>, vector<128x128xbf16>, vector<256x128xf32> -> vector<256x128xf32>
    %57 = arith.addf %51, %56 : vector<256x128xf32>
    %c0_54 = arith.constant 0 : index
    %c2 = arith.constant 2 : index
    %c0_55 = arith.constant 0 : index
    %58 = vector.load %arg13[%c0_54, %c2, %c0_55] : memref<18x18x128xbf16, #tpu.memory_space<vmem>>, vector<16x16x128xbf16>
    %59 = vector.shape_cast %58 : vector<16x16x128xbf16> to vector<256x128xbf16>
    %c0_56 = arith.constant 0 : index
    %c2_57 = arith.constant 2 : index
    %c0_58 = arith.constant 0 : index
    %c0_59 = arith.constant 0 : index
    %60 = vector.load %arg9[%c0_56, %c2_57, %c0_58, %c0_59] : memref<3x3x128x128xbf16, #tpu.memory_space<vmem>>, vector<1x1x128x128xbf16>
    %61 = vector.shape_cast %60 : vector<1x1x128x128xbf16> to vector<128x128xbf16>
    %cst_60 = arith.constant dense<0.000000e+00> : vector<256x128xf32>
    %62 = tpu.matmul %59, %61, %cst_60 {dimension_numbers = #tpu.dot_dimension_numbers<[1], [0], [0], [1], [0, 0, 1, 1], [], []>} : vector<256x128xbf16>, vector<128x128xbf16>, vector<256x128xf32> -> vector<256x128xf32>
    %63 = arith.addf %57, %62 : vector<256x128xf32>
    %c1_61 = arith.constant 1 : index
    %c0_62 = arith.constant 0 : index
    %c0_63 = arith.constant 0 : index
    %64 = vector.load %arg13[%c1_61, %c0_62, %c0_63] : memref<18x18x128xbf16, #tpu.memory_space<vmem>>, vector<16x16x128xbf16>
    %65 = vector.shape_cast %64 : vector<16x16x128xbf16> to vector<256x128xbf16>
    %c1_64 = arith.constant 1 : index
    %c0_65 = arith.constant 0 : index
    %c0_66 = arith.constant 0 : index
    %c0_67 = arith.constant 0 : index
    %66 = vector.load %arg9[%c1_64, %c0_65, %c0_66, %c0_67] : memref<3x3x128x128xbf16, #tpu.memory_space<vmem>>, vector<1x1x128x128xbf16>
    %67 = vector.shape_cast %66 : vector<1x1x128x128xbf16> to vector<128x128xbf16>
    %cst_68 = arith.constant dense<0.000000e+00> : vector<256x128xf32>
    %68 = tpu.matmul %65, %67, %cst_68 {dimension_numbers = #tpu.dot_dimension_numbers<[1], [0], [0], [1], [0, 0, 1, 1], [], []>} : vector<256x128xbf16>, vector<128x128xbf16>, vector<256x128xf32> -> vector<256x128xf32>
    %69 = arith.addf %63, %68 : vector<256x128xf32>
    %c1_69 = arith.constant 1 : index
    %c1_70 = arith.constant 1 : index
    %c0_71 = arith.constant 0 : index
    %70 = vector.load %arg13[%c1_69, %c1_70, %c0_71] : memref<18x18x128xbf16, #tpu.memory_space<vmem>>, vector<16x16x128xbf16>
    %71 = vector.shape_cast %70 : vector<16x16x128xbf16> to vector<256x128xbf16>
    %c1_72 = arith.constant 1 : index
    %c1_73 = arith.constant 1 : index
    %c0_74 = arith.constant 0 : index
    %c0_75 = arith.constant 0 : index
    %72 = vector.load %arg9[%c1_72, %c1_73, %c0_74, %c0_75] : memref<3x3x128x128xbf16, #tpu.memory_space<vmem>>, vector<1x1x128x128xbf16>
    %73 = vector.shape_cast %72 : vector<1x1x128x128xbf16> to vector<128x128xbf16>
    %cst_76 = arith.constant dense<0.000000e+00> : vector<256x128xf32>
    %74 = tpu.matmul %71, %73, %cst_76 {dimension_numbers = #tpu.dot_dimension_numbers<[1], [0], [0], [1], [0, 0, 1, 1], [], []>} : vector<256x128xbf16>, vector<128x128xbf16>, vector<256x128xf32> -> vector<256x128xf32>
    %75 = arith.addf %69, %74 : vector<256x128xf32>
    %c1_77 = arith.constant 1 : index
    %c2_78 = arith.constant 2 : index
    %c0_79 = arith.constant 0 : index
    %76 = vector.load %arg13[%c1_77, %c2_78, %c0_79] : memref<18x18x128xbf16, #tpu.memory_space<vmem>>, vector<16x16x128xbf16>
    %77 = vector.shape_cast %76 : vector<16x16x128xbf16> to vector<256x128xbf16>
    %c1_80 = arith.constant 1 : index
    %c2_81 = arith.constant 2 : index
    %c0_82 = arith.constant 0 : index
    %c0_83 = arith.constant 0 : index
    %78 = vector.load %arg9[%c1_80, %c2_81, %c0_82, %c0_83] : memref<3x3x128x128xbf16, #tpu.memory_space<vmem>>, vector<1x1x128x128xbf16>
    %79 = vector.shape_cast %78 : vector<1x1x128x128xbf16> to vector<128x128xbf16>
    %cst_84 = arith.constant dense<0.000000e+00> : vector<256x128xf32>
    %80 = tpu.matmul %77, %79, %cst_84 {dimension_numbers = #tpu.dot_dimension_numbers<[1], [0], [0], [1], [0, 0, 1, 1], [], []>} : vector<256x128xbf16>, vector<128x128xbf16>, vector<256x128xf32> -> vector<256x128xf32>
    %81 = arith.addf %75, %80 : vector<256x128xf32>
    %c2_85 = arith.constant 2 : index
    %c0_86 = arith.constant 0 : index
    %c0_87 = arith.constant 0 : index
    %82 = vector.load %arg13[%c2_85, %c0_86, %c0_87] : memref<18x18x128xbf16, #tpu.memory_space<vmem>>, vector<16x16x128xbf16>
    %83 = vector.shape_cast %82 : vector<16x16x128xbf16> to vector<256x128xbf16>
    %c2_88 = arith.constant 2 : index
    %c0_89 = arith.constant 0 : index
    %c0_90 = arith.constant 0 : index
    %c0_91 = arith.constant 0 : index
    %84 = vector.load %arg9[%c2_88, %c0_89, %c0_90, %c0_91] : memref<3x3x128x128xbf16, #tpu.memory_space<vmem>>, vector<1x1x128x128xbf16>
    %85 = vector.shape_cast %84 : vector<1x1x128x128xbf16> to vector<128x128xbf16>
    %cst_92 = arith.constant dense<0.000000e+00> : vector<256x128xf32>
    %86 = tpu.matmul %83, %85, %cst_92 {dimension_numbers = #tpu.dot_dimension_numbers<[1], [0], [0], [1], [0, 0, 1, 1], [], []>} : vector<256x128xbf16>, vector<128x128xbf16>, vector<256x128xf32> -> vector<256x128xf32>
    %87 = arith.addf %81, %86 : vector<256x128xf32>
    %c2_93 = arith.constant 2 : index
    %c1_94 = arith.constant 1 : index
    %c0_95 = arith.constant 0 : index
    %88 = vector.load %arg13[%c2_93, %c1_94, %c0_95] : memref<18x18x128xbf16, #tpu.memory_space<vmem>>, vector<16x16x128xbf16>
    %89 = vector.shape_cast %88 : vector<16x16x128xbf16> to vector<256x128xbf16>
    %c2_96 = arith.constant 2 : index
    %c1_97 = arith.constant 1 : index
    %c0_98 = arith.constant 0 : index
    %c0_99 = arith.constant 0 : index
    %90 = vector.load %arg9[%c2_96, %c1_97, %c0_98, %c0_99] : memref<3x3x128x128xbf16, #tpu.memory_space<vmem>>, vector<1x1x128x128xbf16>
    %91 = vector.shape_cast %90 : vector<1x1x128x128xbf16> to vector<128x128xbf16>
    %cst_100 = arith.constant dense<0.000000e+00> : vector<256x128xf32>
    %92 = tpu.matmul %89, %91, %cst_100 {dimension_numbers = #tpu.dot_dimension_numbers<[1], [0], [0], [1], [0, 0, 1, 1], [], []>} : vector<256x128xbf16>, vector<128x128xbf16>, vector<256x128xf32> -> vector<256x128xf32>
    %93 = arith.addf %87, %92 : vector<256x128xf32>
    %c2_101 = arith.constant 2 : index
    %c2_102 = arith.constant 2 : index
    %c0_103 = arith.constant 0 : index
    %94 = vector.load %arg13[%c2_101, %c2_102, %c0_103] : memref<18x18x128xbf16, #tpu.memory_space<vmem>>, vector<16x16x128xbf16>
    %95 = vector.shape_cast %94 : vector<16x16x128xbf16> to vector<256x128xbf16>
    %c2_104 = arith.constant 2 : index
    %c2_105 = arith.constant 2 : index
    %c0_106 = arith.constant 0 : index
    %c0_107 = arith.constant 0 : index
    %96 = vector.load %arg9[%c2_104, %c2_105, %c0_106, %c0_107] : memref<3x3x128x128xbf16, #tpu.memory_space<vmem>>, vector<1x1x128x128xbf16>
    %97 = vector.shape_cast %96 : vector<1x1x128x128xbf16> to vector<128x128xbf16>
    %cst_108 = arith.constant dense<0.000000e+00> : vector<256x128xf32>
    %98 = tpu.matmul %95, %97, %cst_108 {dimension_numbers = #tpu.dot_dimension_numbers<[1], [0], [0], [1], [0, 0, 1, 1], [], []>} : vector<256x128xbf16>, vector<128x128xbf16>, vector<256x128xf32> -> vector<256x128xf32>
    %99 = arith.addf %93, %98 : vector<256x128xf32>
    %c0_109 = arith.constant 0 : index
    %c0_110 = arith.constant 0 : index
    %100 = vector.load %arg10[%c0_109, %c0_110] : memref<1x128xf32, #tpu.memory_space<vmem>>, vector<1x128xf32>
    %101 = vector.broadcast %100 : vector<1x128xf32> to vector<256x128xf32>
    %102 = arith.addf %99, %101 : vector<256x128xf32>
    %cst_111 = arith.constant 2.000000e-02 : f32
    %103 = vector.broadcast %cst_111 : f32 to vector<256x128xf32>
    %104 = arith.mulf %102, %103 : vector<256x128xf32>
    %105 = arith.maximumf %102, %104 : vector<256x128xf32>
    %106 = vector.shape_cast %105 : vector<256x128xf32> to vector<16x16x128xf32>
    %107 = arith.truncf %106 : vector<16x16x128xf32> to vector<16x16x128xbf16>
    %c0_112 = arith.constant 0 : index
    %c0_113 = arith.constant 0 : index
    %c0_114 = arith.constant 0 : index
    %c0_115 = arith.constant 0 : index
    %108 = vector.load %arg11[%c0_112, %c0_113, %c0_114, %c0_115] : memref<1x16x16x128xbf16, #tpu.memory_space<vmem>>, vector<1x16x16x128xbf16>
    %109 = vector.shape_cast %108 : vector<1x16x16x128xbf16> to vector<16x16x128xbf16>
    %110 = vector.shape_cast %107 : vector<16x16x128xbf16> to vector<1x16x16x128xbf16>
    tpu.vector_store %arg11[%c0_112, %c0_113, %c0_114, %c0_115], %110 {strides = array<i32>} : memref<1x16x16x128xbf16, #tpu.memory_space<vmem>>, vector<1x16x16x128xbf16>,
    %cst_116 = arith.constant dense<0.000000e+00> : vector<128xf32>
    %111 = vector.multi_reduction <add>, %105, %cst_116 [0] : vector<256x128xf32> to vector<128xf32>
    %112 = vector.shape_cast %111 : vector<128xf32> to vector<1x128xf32>
    %113 = arith.mulf %105, %105 : vector<256x128xf32>
    %cst_117 = arith.constant dense<0.000000e+00> : vector<128xf32>
    %114 = vector.multi_reduction <add>, %113, %cst_117 [0] : vector<256x128xf32> to vector<128xf32>
    %115 = vector.shape_cast %114 : vector<128xf32> to vector<1x128xf32>
    %116 = tpu.concatenate %112, %115 in 0 : vector<1x128xf32>, vector<1x128xf32> -> vector<2x128xf32>
    %c0_118 = arith.constant 0 : index
    %c0_119 = arith.constant 0 : index
    %c0_120 = arith.constant 0 : index
    %117 = vector.load %arg12[%c0_118, %c0_119, %c0_120] : memref<1x2x128xf32, #tpu.memory_space<vmem>>, vector<1x2x128xf32>
    %118 = vector.shape_cast %117 : vector<1x2x128xf32> to vector<2x128xf32>
    %119 = vector.shape_cast %116 : vector<2x128xf32> to vector<1x2x128xf32>
    tpu.vector_store %arg12[%c0_118, %c0_119, %c0_120], %119 {strides = array<i32>} : memref<1x2x128xf32, #tpu.memory_space<vmem>>, vector<1x2x128xf32>,
    return
  }
  func.func @transform_0(%arg0: i32, %arg1: i32) -> (i32, i32, i32, i32) {
    %c0_i32 = arith.constant 0 : i32
    %c0_i32_0 = arith.constant 0 : i32
    %c0_i32_1 = arith.constant 0 : i32
    %c0_i32_2 = arith.constant 0 : i32
    return %arg0, %c0_i32, %c0_i32_0, %c0_i32_1 : i32, i32, i32, i32
  }
  func.func @transform_1(%arg0: i32, %arg1: i32) -> (i32, i32, i32) {
    %c0_i32 = arith.constant 0 : i32
    %c0_i32_0 = arith.constant 0 : i32
    %c0_i32_1 = arith.constant 0 : i32
    %c0_i32_2 = arith.constant 0 : i32
    return %c0_i32, %c0_i32_0, %c0_i32_1 : i32, i32, i32
  }
  func.func @transform_2(%arg0: i32, %arg1: i32) -> (i32, i32) {
    %c0_i32 = arith.constant 0 : i32
    %c0_i32_0 = arith.constant 0 : i32
    %c0_i32_1 = arith.constant 0 : i32
    return %c0_i32, %c0_i32_0 : i32, i32
  }
  func.func @transform_3(%arg0: i32, %arg1: i32) -> (i32, i32) {
    %c0_i32 = arith.constant 0 : i32
    %c0_i32_0 = arith.constant 0 : i32
    %c0_i32_1 = arith.constant 0 : i32
    return %c0_i32, %c0_i32_0 : i32, i32
  }
  func.func @transform_4(%arg0: i32, %arg1: i32) -> (i32, i32, i32) {
    %c0_i32 = arith.constant 0 : i32
    %c0_i32_0 = arith.constant 0 : i32
    %c0_i32_1 = arith.constant 0 : i32
    return %arg0, %c0_i32, %c0_i32_0 : i32, i32, i32
  }
  func.func @transform_5(%arg0: i32, %arg1: i32) -> (i32, i32) {
    %c0_i32 = arith.constant 0 : i32
    %c0_i32_0 = arith.constant 0 : i32
    %c0_i32_1 = arith.constant 0 : i32
    return %c0_i32, %c0_i32_0 : i32, i32
  }
  func.func @transform_6(%arg0: i32, %arg1: i32) -> (i32, i32) {
    %c0_i32 = arith.constant 0 : i32
    %c0_i32_0 = arith.constant 0 : i32
    %c0_i32_1 = arith.constant 0 : i32
    return %c0_i32, %c0_i32_0 : i32, i32
  }
  func.func @transform_7(%arg0: i32, %arg1: i32) -> (i32, i32, i32, i32) {
    %c0_i32 = arith.constant 0 : i32
    %c0_i32_0 = arith.constant 0 : i32
    %c0_i32_1 = arith.constant 0 : i32
    %c0_i32_2 = arith.constant 0 : i32
    return %c0_i32, %c0_i32_0, %c0_i32_1, %arg1 : i32, i32, i32, i32
  }
  func.func @transform_8(%arg0: i32, %arg1: i32) -> (i32, i32) {
    %c0_i32 = arith.constant 0 : i32
    %c0_i32_0 = arith.constant 0 : i32
    return %c0_i32, %arg1 : i32, i32
  }
  func.func @transform_9(%arg0: i32, %arg1: i32) -> (i32, i32, i32, i32) {
    %c0_i32 = arith.constant 0 : i32
    %c0_i32_0 = arith.constant 0 : i32
    %c0_i32_1 = arith.constant 0 : i32
    return %arg0, %c0_i32, %c0_i32_0, %arg1 : i32, i32, i32, i32
  }
  func.func @transform_10(%arg0: i32, %arg1: i32) -> (i32, i32, i32) {
    %c0_i32 = arith.constant 0 : i32
    %c0_i32_0 = arith.constant 0 : i32
    return %arg0, %c0_i32, %arg1 : i32, i32, i32
  }
}

module attributes {stable_mosaic.version = 11 : i64} {
  func.func @_down_tf_kernel(%arg0: i32, %arg1: i32, %arg2: memref<1x2x2x9x9x128xbf16, #tpu.memory_space<vmem>>, %arg3: memref<2x2x2x2x128x128xbf16, #tpu.memory_space<vmem>>, %arg4: memref<1x128xf32, #tpu.memory_space<vmem>>, %arg5: memref<1x8x8x128xf32, #tpu.memory_space<vmem>>) attributes {dimension_semantics = [#tpu.dimension_semantics<parallel>, #tpu.dimension_semantics<parallel>], iteration_bounds = array<i64: 2, 1>, scalar_prefetch = 0 : i64, scratch_operands = 0 : i64, tpu.core_type = #tpu.core_type<tc>, window_params = [{transform_indices = @transform_0, window_bounds = array<i64: 1, 2, 2, 9, 9, 128>}, {transform_indices = @transform_1, window_bounds = array<i64: 2, 2, 2, 2, 128, 128>}, {transform_indices = @transform_2, window_bounds = array<i64: 1, 128>}, {transform_indices = @transform_3, window_bounds = array<i64: 1, 8, 8, 128>}]} {
    %cst = arith.constant 0.000000e+00 : f32
    %0 = vector.broadcast %cst : f32 to vector<64x128xf32>
    %c0 = arith.constant 0 : index
    %c0_0 = arith.constant 0 : index
    %c0_1 = arith.constant 0 : index
    %c0_2 = arith.constant 0 : index
    %c0_3 = arith.constant 0 : index
    %c0_4 = arith.constant 0 : index
    %1 = vector.load %arg2[%c0, %c0_0, %c0_1, %c0_2, %c0_3, %c0_4] : memref<1x2x2x9x9x128xbf16, #tpu.memory_space<vmem>>, vector<1x1x1x8x8x128xbf16>
    %2 = vector.shape_cast %1 : vector<1x1x1x8x8x128xbf16> to vector<8x8x128xbf16>
    %3 = vector.shape_cast %2 : vector<8x8x128xbf16> to vector<64x128xbf16>
    %c0_5 = arith.constant 0 : index
    %c0_6 = arith.constant 0 : index
    %c0_7 = arith.constant 0 : index
    %c0_8 = arith.constant 0 : index
    %c0_9 = arith.constant 0 : index
    %c0_10 = arith.constant 0 : index
    %4 = vector.load %arg3[%c0_5, %c0_6, %c0_7, %c0_8, %c0_9, %c0_10] : memref<2x2x2x2x128x128xbf16, #tpu.memory_space<vmem>>, vector<1x1x1x1x128x128xbf16>
    %5 = vector.shape_cast %4 : vector<1x1x1x1x128x128xbf16> to vector<128x128xbf16>
    %cst_11 = arith.constant dense<0.000000e+00> : vector<64x128xf32>
    %6 = tpu.matmul %3, %5, %cst_11 {dimension_numbers = #tpu.dot_dimension_numbers<[1], [0], [0], [1], [0, 0, 1, 1], [], []>} : vector<64x128xbf16>, vector<128x128xbf16>, vector<64x128xf32> -> vector<64x128xf32>
    %7 = arith.addf %0, %6 : vector<64x128xf32>
    %c0_12 = arith.constant 0 : index
    %c0_13 = arith.constant 0 : index
    %c0_14 = arith.constant 0 : index
    %c0_15 = arith.constant 0 : index
    %c1 = arith.constant 1 : index
    %c0_16 = arith.constant 0 : index
    %8 = vector.load %arg2[%c0_12, %c0_13, %c0_14, %c0_15, %c1, %c0_16] : memref<1x2x2x9x9x128xbf16, #tpu.memory_space<vmem>>, vector<1x1x1x8x8x128xbf16>
    %9 = vector.shape_cast %8 : vector<1x1x1x8x8x128xbf16> to vector<8x8x128xbf16>
    %10 = vector.shape_cast %9 : vector<8x8x128xbf16> to vector<64x128xbf16>
    %c0_17 = arith.constant 0 : index
    %c0_18 = arith.constant 0 : index
    %c0_19 = arith.constant 0 : index
    %c1_20 = arith.constant 1 : index
    %c0_21 = arith.constant 0 : index
    %c0_22 = arith.constant 0 : index
    %11 = vector.load %arg3[%c0_17, %c0_18, %c0_19, %c1_20, %c0_21, %c0_22] : memref<2x2x2x2x128x128xbf16, #tpu.memory_space<vmem>>, vector<1x1x1x1x128x128xbf16>
    %12 = vector.shape_cast %11 : vector<1x1x1x1x128x128xbf16> to vector<128x128xbf16>
    %cst_23 = arith.constant dense<0.000000e+00> : vector<64x128xf32>
    %13 = tpu.matmul %10, %12, %cst_23 {dimension_numbers = #tpu.dot_dimension_numbers<[1], [0], [0], [1], [0, 0, 1, 1], [], []>} : vector<64x128xbf16>, vector<128x128xbf16>, vector<64x128xf32> -> vector<64x128xf32>
    %14 = arith.addf %7, %13 : vector<64x128xf32>
    %c0_24 = arith.constant 0 : index
    %c0_25 = arith.constant 0 : index
    %c0_26 = arith.constant 0 : index
    %c1_27 = arith.constant 1 : index
    %c0_28 = arith.constant 0 : index
    %c0_29 = arith.constant 0 : index
    %15 = vector.load %arg2[%c0_24, %c0_25, %c0_26, %c1_27, %c0_28, %c0_29] : memref<1x2x2x9x9x128xbf16, #tpu.memory_space<vmem>>, vector<1x1x1x8x8x128xbf16>
    %16 = vector.shape_cast %15 : vector<1x1x1x8x8x128xbf16> to vector<8x8x128xbf16>
    %17 = vector.shape_cast %16 : vector<8x8x128xbf16> to vector<64x128xbf16>
    %c0_30 = arith.constant 0 : index
    %c0_31 = arith.constant 0 : index
    %c1_32 = arith.constant 1 : index
    %c0_33 = arith.constant 0 : index
    %c0_34 = arith.constant 0 : index
    %c0_35 = arith.constant 0 : index
    %18 = vector.load %arg3[%c0_30, %c0_31, %c1_32, %c0_33, %c0_34, %c0_35] : memref<2x2x2x2x128x128xbf16, #tpu.memory_space<vmem>>, vector<1x1x1x1x128x128xbf16>
    %19 = vector.shape_cast %18 : vector<1x1x1x1x128x128xbf16> to vector<128x128xbf16>
    %cst_36 = arith.constant dense<0.000000e+00> : vector<64x128xf32>
    %20 = tpu.matmul %17, %19, %cst_36 {dimension_numbers = #tpu.dot_dimension_numbers<[1], [0], [0], [1], [0, 0, 1, 1], [], []>} : vector<64x128xbf16>, vector<128x128xbf16>, vector<64x128xf32> -> vector<64x128xf32>
    %21 = arith.addf %14, %20 : vector<64x128xf32>
    %c0_37 = arith.constant 0 : index
    %c0_38 = arith.constant 0 : index
    %c0_39 = arith.constant 0 : index
    %c1_40 = arith.constant 1 : index
    %c1_41 = arith.constant 1 : index
    %c0_42 = arith.constant 0 : index
    %22 = vector.load %arg2[%c0_37, %c0_38, %c0_39, %c1_40, %c1_41, %c0_42] : memref<1x2x2x9x9x128xbf16, #tpu.memory_space<vmem>>, vector<1x1x1x8x8x128xbf16>
    %23 = vector.shape_cast %22 : vector<1x1x1x8x8x128xbf16> to vector<8x8x128xbf16>
    %24 = vector.shape_cast %23 : vector<8x8x128xbf16> to vector<64x128xbf16>
    %c0_43 = arith.constant 0 : index
    %c0_44 = arith.constant 0 : index
    %c1_45 = arith.constant 1 : index
    %c1_46 = arith.constant 1 : index
    %c0_47 = arith.constant 0 : index
    %c0_48 = arith.constant 0 : index
    %25 = vector.load %arg3[%c0_43, %c0_44, %c1_45, %c1_46, %c0_47, %c0_48] : memref<2x2x2x2x128x128xbf16, #tpu.memory_space<vmem>>, vector<1x1x1x1x128x128xbf16>
    %26 = vector.shape_cast %25 : vector<1x1x1x1x128x128xbf16> to vector<128x128xbf16>
    %cst_49 = arith.constant dense<0.000000e+00> : vector<64x128xf32>
    %27 = tpu.matmul %24, %26, %cst_49 {dimension_numbers = #tpu.dot_dimension_numbers<[1], [0], [0], [1], [0, 0, 1, 1], [], []>} : vector<64x128xbf16>, vector<128x128xbf16>, vector<64x128xf32> -> vector<64x128xf32>
    %28 = arith.addf %21, %27 : vector<64x128xf32>
    %c0_50 = arith.constant 0 : index
    %c0_51 = arith.constant 0 : index
    %c1_52 = arith.constant 1 : index
    %c0_53 = arith.constant 0 : index
    %c0_54 = arith.constant 0 : index
    %c0_55 = arith.constant 0 : index
    %29 = vector.load %arg2[%c0_50, %c0_51, %c1_52, %c0_53, %c0_54, %c0_55] : memref<1x2x2x9x9x128xbf16, #tpu.memory_space<vmem>>, vector<1x1x1x8x8x128xbf16>
    %30 = vector.shape_cast %29 : vector<1x1x1x8x8x128xbf16> to vector<8x8x128xbf16>
    %31 = vector.shape_cast %30 : vector<8x8x128xbf16> to vector<64x128xbf16>
    %c0_56 = arith.constant 0 : index
    %c1_57 = arith.constant 1 : index
    %c0_58 = arith.constant 0 : index
    %c0_59 = arith.constant 0 : index
    %c0_60 = arith.constant 0 : index
    %c0_61 = arith.constant 0 : index
    %32 = vector.load %arg3[%c0_56, %c1_57, %c0_58, %c0_59, %c0_60, %c0_61] : memref<2x2x2x2x128x128xbf16, #tpu.memory_space<vmem>>, vector<1x1x1x1x128x128xbf16>
    %33 = vector.shape_cast %32 : vector<1x1x1x1x128x128xbf16> to vector<128x128xbf16>
    %cst_62 = arith.constant dense<0.000000e+00> : vector<64x128xf32>
    %34 = tpu.matmul %31, %33, %cst_62 {dimension_numbers = #tpu.dot_dimension_numbers<[1], [0], [0], [1], [0, 0, 1, 1], [], []>} : vector<64x128xbf16>, vector<128x128xbf16>, vector<64x128xf32> -> vector<64x128xf32>
    %35 = arith.addf %28, %34 : vector<64x128xf32>
    %c0_63 = arith.constant 0 : index
    %c0_64 = arith.constant 0 : index
    %c1_65 = arith.constant 1 : index
    %c0_66 = arith.constant 0 : index
    %c1_67 = arith.constant 1 : index
    %c0_68 = arith.constant 0 : index
    %36 = vector.load %arg2[%c0_63, %c0_64, %c1_65, %c0_66, %c1_67, %c0_68] : memref<1x2x2x9x9x128xbf16, #tpu.memory_space<vmem>>, vector<1x1x1x8x8x128xbf16>
    %37 = vector.shape_cast %36 : vector<1x1x1x8x8x128xbf16> to vector<8x8x128xbf16>
    %38 = vector.shape_cast %37 : vector<8x8x128xbf16> to vector<64x128xbf16>
    %c0_69 = arith.constant 0 : index
    %c1_70 = arith.constant 1 : index
    %c0_71 = arith.constant 0 : index
    %c1_72 = arith.constant 1 : index
    %c0_73 = arith.constant 0 : index
    %c0_74 = arith.constant 0 : index
    %39 = vector.load %arg3[%c0_69, %c1_70, %c0_71, %c1_72, %c0_73, %c0_74] : memref<2x2x2x2x128x128xbf16, #tpu.memory_space<vmem>>, vector<1x1x1x1x128x128xbf16>
    %40 = vector.shape_cast %39 : vector<1x1x1x1x128x128xbf16> to vector<128x128xbf16>
    %cst_75 = arith.constant dense<0.000000e+00> : vector<64x128xf32>
    %41 = tpu.matmul %38, %40, %cst_75 {dimension_numbers = #tpu.dot_dimension_numbers<[1], [0], [0], [1], [0, 0, 1, 1], [], []>} : vector<64x128xbf16>, vector<128x128xbf16>, vector<64x128xf32> -> vector<64x128xf32>
    %42 = arith.addf %35, %41 : vector<64x128xf32>
    %c0_76 = arith.constant 0 : index
    %c0_77 = arith.constant 0 : index
    %c1_78 = arith.constant 1 : index
    %c1_79 = arith.constant 1 : index
    %c0_80 = arith.constant 0 : index
    %c0_81 = arith.constant 0 : index
    %43 = vector.load %arg2[%c0_76, %c0_77, %c1_78, %c1_79, %c0_80, %c0_81] : memref<1x2x2x9x9x128xbf16, #tpu.memory_space<vmem>>, vector<1x1x1x8x8x128xbf16>
    %44 = vector.shape_cast %43 : vector<1x1x1x8x8x128xbf16> to vector<8x8x128xbf16>
    %45 = vector.shape_cast %44 : vector<8x8x128xbf16> to vector<64x128xbf16>
    %c0_82 = arith.constant 0 : index
    %c1_83 = arith.constant 1 : index
    %c1_84 = arith.constant 1 : index
    %c0_85 = arith.constant 0 : index
    %c0_86 = arith.constant 0 : index
    %c0_87 = arith.constant 0 : index
    %46 = vector.load %arg3[%c0_82, %c1_83, %c1_84, %c0_85, %c0_86, %c0_87] : memref<2x2x2x2x128x128xbf16, #tpu.memory_space<vmem>>, vector<1x1x1x1x128x128xbf16>
    %47 = vector.shape_cast %46 : vector<1x1x1x1x128x128xbf16> to vector<128x128xbf16>
    %cst_88 = arith.constant dense<0.000000e+00> : vector<64x128xf32>
    %48 = tpu.matmul %45, %47, %cst_88 {dimension_numbers = #tpu.dot_dimension_numbers<[1], [0], [0], [1], [0, 0, 1, 1], [], []>} : vector<64x128xbf16>, vector<128x128xbf16>, vector<64x128xf32> -> vector<64x128xf32>
    %49 = arith.addf %42, %48 : vector<64x128xf32>
    %c0_89 = arith.constant 0 : index
    %c0_90 = arith.constant 0 : index
    %c1_91 = arith.constant 1 : index
    %c1_92 = arith.constant 1 : index
    %c1_93 = arith.constant 1 : index
    %c0_94 = arith.constant 0 : index
    %50 = vector.load %arg2[%c0_89, %c0_90, %c1_91, %c1_92, %c1_93, %c0_94] : memref<1x2x2x9x9x128xbf16, #tpu.memory_space<vmem>>, vector<1x1x1x8x8x128xbf16>
    %51 = vector.shape_cast %50 : vector<1x1x1x8x8x128xbf16> to vector<8x8x128xbf16>
    %52 = vector.shape_cast %51 : vector<8x8x128xbf16> to vector<64x128xbf16>
    %c0_95 = arith.constant 0 : index
    %c1_96 = arith.constant 1 : index
    %c1_97 = arith.constant 1 : index
    %c1_98 = arith.constant 1 : index
    %c0_99 = arith.constant 0 : index
    %c0_100 = arith.constant 0 : index
    %53 = vector.load %arg3[%c0_95, %c1_96, %c1_97, %c1_98, %c0_99, %c0_100] : memref<2x2x2x2x128x128xbf16, #tpu.memory_space<vmem>>, vector<1x1x1x1x128x128xbf16>
    %54 = vector.shape_cast %53 : vector<1x1x1x1x128x128xbf16> to vector<128x128xbf16>
    %cst_101 = arith.constant dense<0.000000e+00> : vector<64x128xf32>
    %55 = tpu.matmul %52, %54, %cst_101 {dimension_numbers = #tpu.dot_dimension_numbers<[1], [0], [0], [1], [0, 0, 1, 1], [], []>} : vector<64x128xbf16>, vector<128x128xbf16>, vector<64x128xf32> -> vector<64x128xf32>
    %56 = arith.addf %49, %55 : vector<64x128xf32>
    %c0_102 = arith.constant 0 : index
    %c1_103 = arith.constant 1 : index
    %c0_104 = arith.constant 0 : index
    %c0_105 = arith.constant 0 : index
    %c0_106 = arith.constant 0 : index
    %c0_107 = arith.constant 0 : index
    %57 = vector.load %arg2[%c0_102, %c1_103, %c0_104, %c0_105, %c0_106, %c0_107] : memref<1x2x2x9x9x128xbf16, #tpu.memory_space<vmem>>, vector<1x1x1x8x8x128xbf16>
    %58 = vector.shape_cast %57 : vector<1x1x1x8x8x128xbf16> to vector<8x8x128xbf16>
    %59 = vector.shape_cast %58 : vector<8x8x128xbf16> to vector<64x128xbf16>
    %c1_108 = arith.constant 1 : index
    %c0_109 = arith.constant 0 : index
    %c0_110 = arith.constant 0 : index
    %c0_111 = arith.constant 0 : index
    %c0_112 = arith.constant 0 : index
    %c0_113 = arith.constant 0 : index
    %60 = vector.load %arg3[%c1_108, %c0_109, %c0_110, %c0_111, %c0_112, %c0_113] : memref<2x2x2x2x128x128xbf16, #tpu.memory_space<vmem>>, vector<1x1x1x1x128x128xbf16>
    %61 = vector.shape_cast %60 : vector<1x1x1x1x128x128xbf16> to vector<128x128xbf16>
    %cst_114 = arith.constant dense<0.000000e+00> : vector<64x128xf32>
    %62 = tpu.matmul %59, %61, %cst_114 {dimension_numbers = #tpu.dot_dimension_numbers<[1], [0], [0], [1], [0, 0, 1, 1], [], []>} : vector<64x128xbf16>, vector<128x128xbf16>, vector<64x128xf32> -> vector<64x128xf32>
    %63 = arith.addf %56, %62 : vector<64x128xf32>
    %c0_115 = arith.constant 0 : index
    %c1_116 = arith.constant 1 : index
    %c0_117 = arith.constant 0 : index
    %c0_118 = arith.constant 0 : index
    %c1_119 = arith.constant 1 : index
    %c0_120 = arith.constant 0 : index
    %64 = vector.load %arg2[%c0_115, %c1_116, %c0_117, %c0_118, %c1_119, %c0_120] : memref<1x2x2x9x9x128xbf16, #tpu.memory_space<vmem>>, vector<1x1x1x8x8x128xbf16>
    %65 = vector.shape_cast %64 : vector<1x1x1x8x8x128xbf16> to vector<8x8x128xbf16>
    %66 = vector.shape_cast %65 : vector<8x8x128xbf16> to vector<64x128xbf16>
    %c1_121 = arith.constant 1 : index
    %c0_122 = arith.constant 0 : index
    %c0_123 = arith.constant 0 : index
    %c1_124 = arith.constant 1 : index
    %c0_125 = arith.constant 0 : index
    %c0_126 = arith.constant 0 : index
    %67 = vector.load %arg3[%c1_121, %c0_122, %c0_123, %c1_124, %c0_125, %c0_126] : memref<2x2x2x2x128x128xbf16, #tpu.memory_space<vmem>>, vector<1x1x1x1x128x128xbf16>
    %68 = vector.shape_cast %67 : vector<1x1x1x1x128x128xbf16> to vector<128x128xbf16>
    %cst_127 = arith.constant dense<0.000000e+00> : vector<64x128xf32>
    %69 = tpu.matmul %66, %68, %cst_127 {dimension_numbers = #tpu.dot_dimension_numbers<[1], [0], [0], [1], [0, 0, 1, 1], [], []>} : vector<64x128xbf16>, vector<128x128xbf16>, vector<64x128xf32> -> vector<64x128xf32>
    %70 = arith.addf %63, %69 : vector<64x128xf32>
    %c0_128 = arith.constant 0 : index
    %c1_129 = arith.constant 1 : index
    %c0_130 = arith.constant 0 : index
    %c1_131 = arith.constant 1 : index
    %c0_132 = arith.constant 0 : index
    %c0_133 = arith.constant 0 : index
    %71 = vector.load %arg2[%c0_128, %c1_129, %c0_130, %c1_131, %c0_132, %c0_133] : memref<1x2x2x9x9x128xbf16, #tpu.memory_space<vmem>>, vector<1x1x1x8x8x128xbf16>
    %72 = vector.shape_cast %71 : vector<1x1x1x8x8x128xbf16> to vector<8x8x128xbf16>
    %73 = vector.shape_cast %72 : vector<8x8x128xbf16> to vector<64x128xbf16>
    %c1_134 = arith.constant 1 : index
    %c0_135 = arith.constant 0 : index
    %c1_136 = arith.constant 1 : index
    %c0_137 = arith.constant 0 : index
    %c0_138 = arith.constant 0 : index
    %c0_139 = arith.constant 0 : index
    %74 = vector.load %arg3[%c1_134, %c0_135, %c1_136, %c0_137, %c0_138, %c0_139] : memref<2x2x2x2x128x128xbf16, #tpu.memory_space<vmem>>, vector<1x1x1x1x128x128xbf16>
    %75 = vector.shape_cast %74 : vector<1x1x1x1x128x128xbf16> to vector<128x128xbf16>
    %cst_140 = arith.constant dense<0.000000e+00> : vector<64x128xf32>
    %76 = tpu.matmul %73, %75, %cst_140 {dimension_numbers = #tpu.dot_dimension_numbers<[1], [0], [0], [1], [0, 0, 1, 1], [], []>} : vector<64x128xbf16>, vector<128x128xbf16>, vector<64x128xf32> -> vector<64x128xf32>
    %77 = arith.addf %70, %76 : vector<64x128xf32>
    %c0_141 = arith.constant 0 : index
    %c1_142 = arith.constant 1 : index
    %c0_143 = arith.constant 0 : index
    %c1_144 = arith.constant 1 : index
    %c1_145 = arith.constant 1 : index
    %c0_146 = arith.constant 0 : index
    %78 = vector.load %arg2[%c0_141, %c1_142, %c0_143, %c1_144, %c1_145, %c0_146] : memref<1x2x2x9x9x128xbf16, #tpu.memory_space<vmem>>, vector<1x1x1x8x8x128xbf16>
    %79 = vector.shape_cast %78 : vector<1x1x1x8x8x128xbf16> to vector<8x8x128xbf16>
    %80 = vector.shape_cast %79 : vector<8x8x128xbf16> to vector<64x128xbf16>
    %c1_147 = arith.constant 1 : index
    %c0_148 = arith.constant 0 : index
    %c1_149 = arith.constant 1 : index
    %c1_150 = arith.constant 1 : index
    %c0_151 = arith.constant 0 : index
    %c0_152 = arith.constant 0 : index
    %81 = vector.load %arg3[%c1_147, %c0_148, %c1_149, %c1_150, %c0_151, %c0_152] : memref<2x2x2x2x128x128xbf16, #tpu.memory_space<vmem>>, vector<1x1x1x1x128x128xbf16>
    %82 = vector.shape_cast %81 : vector<1x1x1x1x128x128xbf16> to vector<128x128xbf16>
    %cst_153 = arith.constant dense<0.000000e+00> : vector<64x128xf32>
    %83 = tpu.matmul %80, %82, %cst_153 {dimension_numbers = #tpu.dot_dimension_numbers<[1], [0], [0], [1], [0, 0, 1, 1], [], []>} : vector<64x128xbf16>, vector<128x128xbf16>, vector<64x128xf32> -> vector<64x128xf32>
    %84 = arith.addf %77, %83 : vector<64x128xf32>
    %c0_154 = arith.constant 0 : index
    %c1_155 = arith.constant 1 : index
    %c1_156 = arith.constant 1 : index
    %c0_157 = arith.constant 0 : index
    %c0_158 = arith.constant 0 : index
    %c0_159 = arith.constant 0 : index
    %85 = vector.load %arg2[%c0_154, %c1_155, %c1_156, %c0_157, %c0_158, %c0_159] : memref<1x2x2x9x9x128xbf16, #tpu.memory_space<vmem>>, vector<1x1x1x8x8x128xbf16>
    %86 = vector.shape_cast %85 : vector<1x1x1x8x8x128xbf16> to vector<8x8x128xbf16>
    %87 = vector.shape_cast %86 : vector<8x8x128xbf16> to vector<64x128xbf16>
    %c1_160 = arith.constant 1 : index
    %c1_161 = arith.constant 1 : index
    %c0_162 = arith.constant 0 : index
    %c0_163 = arith.constant 0 : index
    %c0_164 = arith.constant 0 : index
    %c0_165 = arith.constant 0 : index
    %88 = vector.load %arg3[%c1_160, %c1_161, %c0_162, %c0_163, %c0_164, %c0_165] : memref<2x2x2x2x128x128xbf16, #tpu.memory_space<vmem>>, vector<1x1x1x1x128x128xbf16>
    %89 = vector.shape_cast %88 : vector<1x1x1x1x128x128xbf16> to vector<128x128xbf16>
    %cst_166 = arith.constant dense<0.000000e+00> : vector<64x128xf32>
    %90 = tpu.matmul %87, %89, %cst_166 {dimension_numbers = #tpu.dot_dimension_numbers<[1], [0], [0], [1], [0, 0, 1, 1], [], []>} : vector<64x128xbf16>, vector<128x128xbf16>, vector<64x128xf32> -> vector<64x128xf32>
    %91 = arith.addf %84, %90 : vector<64x128xf32>
    %c0_167 = arith.constant 0 : index
    %c1_168 = arith.constant 1 : index
    %c1_169 = arith.constant 1 : index
    %c0_170 = arith.constant 0 : index
    %c1_171 = arith.constant 1 : index
    %c0_172 = arith.constant 0 : index
    %92 = vector.load %arg2[%c0_167, %c1_168, %c1_169, %c0_170, %c1_171, %c0_172] : memref<1x2x2x9x9x128xbf16, #tpu.memory_space<vmem>>, vector<1x1x1x8x8x128xbf16>
    %93 = vector.shape_cast %92 : vector<1x1x1x8x8x128xbf16> to vector<8x8x128xbf16>
    %94 = vector.shape_cast %93 : vector<8x8x128xbf16> to vector<64x128xbf16>
    %c1_173 = arith.constant 1 : index
    %c1_174 = arith.constant 1 : index
    %c0_175 = arith.constant 0 : index
    %c1_176 = arith.constant 1 : index
    %c0_177 = arith.constant 0 : index
    %c0_178 = arith.constant 0 : index
    %95 = vector.load %arg3[%c1_173, %c1_174, %c0_175, %c1_176, %c0_177, %c0_178] : memref<2x2x2x2x128x128xbf16, #tpu.memory_space<vmem>>, vector<1x1x1x1x128x128xbf16>
    %96 = vector.shape_cast %95 : vector<1x1x1x1x128x128xbf16> to vector<128x128xbf16>
    %cst_179 = arith.constant dense<0.000000e+00> : vector<64x128xf32>
    %97 = tpu.matmul %94, %96, %cst_179 {dimension_numbers = #tpu.dot_dimension_numbers<[1], [0], [0], [1], [0, 0, 1, 1], [], []>} : vector<64x128xbf16>, vector<128x128xbf16>, vector<64x128xf32> -> vector<64x128xf32>
    %98 = arith.addf %91, %97 : vector<64x128xf32>
    %c0_180 = arith.constant 0 : index
    %c1_181 = arith.constant 1 : index
    %c1_182 = arith.constant 1 : index
    %c1_183 = arith.constant 1 : index
    %c0_184 = arith.constant 0 : index
    %c0_185 = arith.constant 0 : index
    %99 = vector.load %arg2[%c0_180, %c1_181, %c1_182, %c1_183, %c0_184, %c0_185] : memref<1x2x2x9x9x128xbf16, #tpu.memory_space<vmem>>, vector<1x1x1x8x8x128xbf16>
    %100 = vector.shape_cast %99 : vector<1x1x1x8x8x128xbf16> to vector<8x8x128xbf16>
    %101 = vector.shape_cast %100 : vector<8x8x128xbf16> to vector<64x128xbf16>
    %c1_186 = arith.constant 1 : index
    %c1_187 = arith.constant 1 : index
    %c1_188 = arith.constant 1 : index
    %c0_189 = arith.constant 0 : index
    %c0_190 = arith.constant 0 : index
    %c0_191 = arith.constant 0 : index
    %102 = vector.load %arg3[%c1_186, %c1_187, %c1_188, %c0_189, %c0_190, %c0_191] : memref<2x2x2x2x128x128xbf16, #tpu.memory_space<vmem>>, vector<1x1x1x1x128x128xbf16>
    %103 = vector.shape_cast %102 : vector<1x1x1x1x128x128xbf16> to vector<128x128xbf16>
    %cst_192 = arith.constant dense<0.000000e+00> : vector<64x128xf32>
    %104 = tpu.matmul %101, %103, %cst_192 {dimension_numbers = #tpu.dot_dimension_numbers<[1], [0], [0], [1], [0, 0, 1, 1], [], []>} : vector<64x128xbf16>, vector<128x128xbf16>, vector<64x128xf32> -> vector<64x128xf32>
    %105 = arith.addf %98, %104 : vector<64x128xf32>
    %c0_193 = arith.constant 0 : index
    %c1_194 = arith.constant 1 : index
    %c1_195 = arith.constant 1 : index
    %c1_196 = arith.constant 1 : index
    %c1_197 = arith.constant 1 : index
    %c0_198 = arith.constant 0 : index
    %106 = vector.load %arg2[%c0_193, %c1_194, %c1_195, %c1_196, %c1_197, %c0_198] : memref<1x2x2x9x9x128xbf16, #tpu.memory_space<vmem>>, vector<1x1x1x8x8x128xbf16>
    %107 = vector.shape_cast %106 : vector<1x1x1x8x8x128xbf16> to vector<8x8x128xbf16>
    %108 = vector.shape_cast %107 : vector<8x8x128xbf16> to vector<64x128xbf16>
    %c1_199 = arith.constant 1 : index
    %c1_200 = arith.constant 1 : index
    %c1_201 = arith.constant 1 : index
    %c1_202 = arith.constant 1 : index
    %c0_203 = arith.constant 0 : index
    %c0_204 = arith.constant 0 : index
    %109 = vector.load %arg3[%c1_199, %c1_200, %c1_201, %c1_202, %c0_203, %c0_204] : memref<2x2x2x2x128x128xbf16, #tpu.memory_space<vmem>>, vector<1x1x1x1x128x128xbf16>
    %110 = vector.shape_cast %109 : vector<1x1x1x1x128x128xbf16> to vector<128x128xbf16>
    %cst_205 = arith.constant dense<0.000000e+00> : vector<64x128xf32>
    %111 = tpu.matmul %108, %110, %cst_205 {dimension_numbers = #tpu.dot_dimension_numbers<[1], [0], [0], [1], [0, 0, 1, 1], [], []>} : vector<64x128xbf16>, vector<128x128xbf16>, vector<64x128xf32> -> vector<64x128xf32>
    %112 = arith.addf %105, %111 : vector<64x128xf32>
    %c0_206 = arith.constant 0 : index
    %c0_207 = arith.constant 0 : index
    %113 = vector.load %arg4[%c0_206, %c0_207] : memref<1x128xf32, #tpu.memory_space<vmem>>, vector<1x128xf32>
    %114 = vector.broadcast %113 : vector<1x128xf32> to vector<64x128xf32>
    %115 = arith.addf %112, %114 : vector<64x128xf32>
    %116 = vector.shape_cast %115 : vector<64x128xf32> to vector<8x8x128xf32>
    %c0_208 = arith.constant 0 : index
    %c0_209 = arith.constant 0 : index
    %c0_210 = arith.constant 0 : index
    %c0_211 = arith.constant 0 : index
    %117 = vector.load %arg5[%c0_208, %c0_209, %c0_210, %c0_211] : memref<1x8x8x128xf32, #tpu.memory_space<vmem>>, vector<1x8x8x128xf32>
    %118 = vector.shape_cast %117 : vector<1x8x8x128xf32> to vector<8x8x128xf32>
    %119 = vector.shape_cast %116 : vector<8x8x128xf32> to vector<1x8x8x128xf32>
    tpu.vector_store %arg5[%c0_208, %c0_209, %c0_210, %c0_211], %119 {strides = array<i32>} : memref<1x8x8x128xf32, #tpu.memory_space<vmem>>, vector<1x8x8x128xf32>,
    return
  }
  func.func @transform_0(%arg0: i32, %arg1: i32) -> (i32, i32, i32, i32, i32, i32) {
    %c0_i32 = arith.constant 0 : i32
    %c0_i32_0 = arith.constant 0 : i32
    %c0_i32_1 = arith.constant 0 : i32
    %c0_i32_2 = arith.constant 0 : i32
    %c0_i32_3 = arith.constant 0 : i32
    %c0_i32_4 = arith.constant 0 : i32
    return %arg0, %c0_i32, %c0_i32_0, %c0_i32_1, %c0_i32_2, %c0_i32_3 : i32, i32, i32, i32, i32, i32
  }
  func.func @transform_1(%arg0: i32, %arg1: i32) -> (i32, i32, i32, i32, i32, i32) {
    %c0_i32 = arith.constant 0 : i32
    %c0_i32_0 = arith.constant 0 : i32
    %c0_i32_1 = arith.constant 0 : i32
    %c0_i32_2 = arith.constant 0 : i32
    %c0_i32_3 = arith.constant 0 : i32
    %c0_i32_4 = arith.constant 0 : i32
    return %c0_i32, %c0_i32_0, %c0_i32_1, %c0_i32_2, %c0_i32_3, %arg1 : i32, i32, i32, i32, i32, i32
  }
  func.func @transform_2(%arg0: i32, %arg1: i32) -> (i32, i32) {
    %c0_i32 = arith.constant 0 : i32
    %c0_i32_0 = arith.constant 0 : i32
    return %c0_i32, %arg1 : i32, i32
  }
  func.func @transform_3(%arg0: i32, %arg1: i32) -> (i32, i32, i32, i32) {
    %c0_i32 = arith.constant 0 : i32
    %c0_i32_0 = arith.constant 0 : i32
    %c0_i32_1 = arith.constant 0 : i32
    return %arg0, %c0_i32, %c0_i32_0, %arg1 : i32, i32, i32, i32
  }
}

</mosaic_0001>

<llo_original>
// kernel: cond_block_forward.3
$region0: #{cond_block_forward.3}
  #allocation0 [shape = 'u32[]', space=smem, size = 0x4, offset = 0x4, fixed_abs, tag = 'smem constant byte address 0x4 - core index']
  #allocation1 [shape = 'u32[144,128]{1,0:T(1,128)}', space=vmem, size = 0x12000, scoped, tag = 'internal scratch']
  %s0 = inlined_call_operand.vmem [shape: bf16[2,256,36], index: 0, kind: input, shape index: {}]
  %s1 = inlined_call_operand.vmem [shape: bf16[36,128], index: 1, kind: input, shape index: {}]
  %s2 = inlined_call_operand.vmem [shape: f32[1,128], index: 2, kind: input, shape index: {}]
  %s3 = inlined_call_operand.vmem [shape: bf16[2,256,128], index: 3, kind: output, shape index: {0}]
  %s4 = inlined_call_operand.vmem [shape: f32[2,2,128], index: 4, kind: output, shape index: {1}]
  %5 = xla_tuple %s3, %s4
  %s6 = sld [smem:[#allocation0]]
  $region53: #{cond_block_forward.3} parent=0
    _
  %s8 = ssub.s32 1, %s6
  %s9 = scalar_select 0, %s8, %s6
  loop: start=0, step=1, limit=4
  $region2: #{cond_block_forward.3} parent=0 // loop_pre_header
    _
  $region3: #{cond_block_forward.3} parent=0 // loop_header
    %s11 = sphi 0, %s15
    %p12 = scmp.ge.s32.totalorder %s11, 4
    %s18 = sphi 0, %s30
    %s19 = sphi 0, %s26
    %s20 = sphi 0, %s18
    %s21 = sphi 0, %s19
    %s22 = sphi 0, %s20
    %s23 = sphi 0, %s21
    %s33 = sphi 0, %s35
    %s36 = sphi 0, %s33
    %s37 = sphi 0, %s36
    %s53 = sphi 0, %s37
    %s59 = sphi 0, %s61
    %s62 = sphi 0, %s59
    %s63 = sphi 0, %s62
    %s79 = sphi 0, %s63
    %s85 = sphi 0, %s87
    %s88 = sphi 0, %s85
    %s89 = sphi 0, %s88
    %s105 = sphi 0, %s89
    %s113 = sphi 0, %s115
    %s116 = sphi 0, %s113
    %s117 = sphi 0, %s116
    %s133 = sphi 0, %s117
    %s141 = sphi 0, %s143
    %s144 = sphi 0, %s141
    %s145 = sphi 0, %s144
    %s161 = sphi 0, %s145
  $region4: #{cond_block_forward.3} parent=0 // loop_header_branch
    %14 = sbr.rel (%p12) target = $region8
  $region5: #{cond_block_forward.3} parent=0 // loop_body
    %s16 = ssub.s32 %s11, 1
    %s17 = ssub.s32 %s11, 2
    %s24 = sadd.s32 1, %s19
    %p25 = scmp.ge.s32.totalorder %s24, 1
    %s26 = scalar_select %p25, 0, %s24
    %s27 = sadd.s32 1, %s18
    %s28 = scalar_select %p25, %s27, %s18
    %p29 = scmp.ge.s32.totalorder %s28, 2
    %s30 = scalar_select %p29, 0, %s28
    %s31 = ssub.s32 %s18, %s30
    %p32 = scmp.eq.s32.totalorder %s31, 0
    %s34 = sadd.s32 %s33, 1
    %s35 = scalar_select %p32, %s33, %s34
    %p38 = pneg %p32
    %p39 = scmp.eq.s32.totalorder %s11, 1
    %p40 = por %p38, %p39
    %p41 = scmp.ne.s32.totalorder %s33, %s36
    %p42 = scmp.eq.s32.totalorder %s11, 0
    %p43 = por %p41, %p42
    %p44 = scmp.ne.s32.totalorder %s33, %s36
    %p45 = scmp.eq.s32.totalorder %s16, 1
    %p46 = por %p44, %p45
    %p47 = scmp.ne.s32.totalorder %s36, %s37
    %p48 = scmp.eq.s32.totalorder %s16, 0
    %p49 = por %p47, %p48
    %p50 = scmp.ne.s32.totalorder %s36, %s37
    %p51 = scmp.eq.s32.totalorder %s17, 1
    %p52 = por %p50, %p51
    %p54 = scmp.ne.s32.totalorder %s37, %s53
    %p55 = scmp.eq.s32.totalorder %s17, 0
    %p56 = por %p54, %p55
    %s57 = ssub.s32 %s19, %s26
    %p58 = scmp.eq.s32.totalorder %s57, 0
    %s60 = sadd.s32 %s59, 1
    %s61 = scalar_select %p58, %s59, %s60
    %p64 = pneg %p58
    %p65 = scmp.eq.s32.totalorder %s11, 1
    %p66 = por %p64, %p65
    %p67 = scmp.ne.s32.totalorder %s59, %s62
    %p68 = scmp.eq.s32.totalorder %s11, 0
    %p69 = por %p67, %p68
    %p70 = scmp.ne.s32.totalorder %s59, %s62
    %p71 = scmp.eq.s32.totalorder %s16, 1
    %p72 = por %p70, %p71
    %p73 = scmp.ne.s32.totalorder %s62, %s63
    %p74 = scmp.eq.s32.totalorder %s16, 0
    %p75 = por %p73, %p74
    %p76 = scmp.ne.s32.totalorder %s62, %s63
    %p77 = scmp.eq.s32.totalorder %s17, 1
    %p78 = por %p76, %p77
    %p80 = scmp.ne.s32.totalorder %s63, %s79
    %p81 = scmp.eq.s32.totalorder %s17, 0
    %p82 = por %p80, %p81
    %s83 = ssub.s32 %s19, %s26
    %p84 = scmp.eq.s32.totalorder %s83, 0
    %s86 = sadd.s32 %s85, 1
    %s87 = scalar_select %p84, %s85, %s86
    %p90 = pneg %p84
    %p91 = scmp.eq.s32.totalorder %s11, 1
    %p92 = por %p90, %p91
    %p93 = scmp.ne.s32.totalorder %s85, %s88
    %p94 = scmp.eq.s32.totalorder %s11, 0
    %p95 = por %p93, %p94
    %p96 = scmp.ne.s32.totalorder %s85, %s88
    %p97 = scmp.eq.s32.totalorder %s16, 1
    %p98 = por %p96, %p97
    %p99 = scmp.ne.s32.totalorder %s88, %s89
    %p100 = scmp.eq.s32.totalorder %s16, 0
    %p101 = por %p99, %p100
    %p102 = scmp.ne.s32.totalorder %s88, %s89
    %p103 = scmp.eq.s32.totalorder %s17, 1
    %p104 = por %p102, %p103
    %p106 = scmp.ne.s32.totalorder %s89, %s105
    %p107 = scmp.eq.s32.totalorder %s17, 0
    %p108 = por %p106, %p107
    %s109 = ssub.s32 %s18, %s30
    %s110 = ssub.s32 %s19, %s26
    %s111 = sor.u32 %s109, %s110
    %p112 = scmp.eq.s32.totalorder %s111, 0
    %s114 = sadd.s32 %s113, 1
    %s115 = scalar_select %p112, %s113, %s114
    %p118 = pneg %p112
    %p119 = scmp.eq.s32.totalorder %s11, 1
    %p120 = por %p118, %p119
    %p121 = scmp.ne.s32.totalorder %s113, %s116
    %p122 = scmp.eq.s32.totalorder %s11, 0
    %p123 = por %p121, %p122
    %p124 = scmp.ne.s32.totalorder %s113, %s116
    %p125 = scmp.eq.s32.totalorder %s16, 1
    %p126 = por %p124, %p125
    %p127 = scmp.ne.s32.totalorder %s116, %s117
    %p128 = scmp.eq.s32.totalorder %s16, 0
    %p129 = por %p127, %p128
    %p130 = scmp.ne.s32.totalorder %s116, %s117
    %p131 = scmp.eq.s32.totalorder %s17, 1
    %p132 = por %p130, %p131
    %p134 = scmp.ne.s32.totalorder %s117, %s133
    %p135 = scmp.eq.s32.totalorder %s17, 0
    %p136 = por %p134, %p135
    %s137 = ssub.s32 %s18, %s30
    %s138 = ssub.s32 %s19, %s26
    %s139 = sor.u32 %s137, %s138
    %p140 = scmp.eq.s32.totalorder %s139, 0
    %s142 = sadd.s32 %s141, 1
    %s143 = scalar_select %p140, %s141, %s142
    %p146 = pneg %p140
    %p147 = scmp.eq.s32.totalorder %s11, 1
    %p148 = por %p146, %p147
    %p149 = scmp.ne.s32.totalorder %s141, %s144
    %p150 = scmp.eq.s32.totalorder %s11, 0
    %p151 = por %p149, %p150
    %p152 = scmp.ne.s32.totalorder %s141, %s144
    %p153 = scmp.eq.s32.totalorder %s16, 1
    %p154 = por %p152, %p153
    %p155 = scmp.ne.s32.totalorder %s144, %s145
    %p156 = scmp.eq.s32.totalorder %s16, 0
    %p157 = por %p155, %p156
    %p158 = scmp.ne.s32.totalorder %s144, %s145
    %p159 = scmp.eq.s32.totalorder %s17, 1
    %p160 = por %p158, %p159
    %p162 = scmp.ne.s32.totalorder %s145, %s161
    %p163 = scmp.eq.s32.totalorder %s17, 0
    %p164 = por %p162, %p163
    %p165 = scmp.le.s32.totalorder 1, %s11
    %p166 = scmp.lt.s32.totalorder %s11, 3
    %p167 = pnand %p165, %p166
    %p168 = pneg %p167
    // Predicated region
    $region9: #{cond_block_forward.3} parent=5 // pred_check
      _
    $region10: #{cond_block_forward.3} parent=5 // pred_check_branch
      %170 = sbr.rel (%p167) target = $region12
    $region11: #{cond_block_forward.3} parent=5 // pred_region
      %s171 = ssub.s32 %s11, 1
      // Predicated region
      $region13: #{cond_block_forward.3} parent=11 // pred_check
        %p172 = pneg %p75
      $region14: #{cond_block_forward.3} parent=11 // pred_check_branch
        %174 = sbr.rel (%p172) target = $region16
      $region15: #{cond_block_forward.3} parent=11 // pred_region
        %p175 = scmp.lt.s32.totalorder %s21, 0
        %s176 = scalar_select %p175, %s21, 0
        %s177 = smul.addr %s176, 4
        %s178 = scalar_lea.vmem %s1, %s177
      $region16: #{cond_block_forward.3} parent=11 // pred_fallthru
        _
      // Predicated region
      $region17: #{cond_block_forward.3} parent=11 // pred_check
        %p179 = pneg %p101
      $region18: #{cond_block_forward.3} parent=11 // pred_check_branch
        %181 = sbr.rel (%p179) target = $region20
      $region19: #{cond_block_forward.3} parent=11 // pred_region
        %p182 = scmp.lt.s32.totalorder %s21, 0
        %s183 = scalar_select %p182, %s21, 0
        %s184 = scalar_lea.vmem %s2, %s183
      $region20: #{cond_block_forward.3} parent=11 // pred_fallthru
        _
    $region12: #{cond_block_forward.3} parent=5 // pred_fallthru
      _
    %p185 = scmp.lt.s32.totalorder %s11, 2
    // Predicated region
    $region21: #{cond_block_forward.3} parent=5 // pred_check
      %p186 = pneg %p185
    $region22: #{cond_block_forward.3} parent=5 // pred_check_branch
      %188 = sbr.rel (%p186) target = $region24
    $region23: #{cond_block_forward.3} parent=5 // pred_region
      // Predicated region
      $region25: #{cond_block_forward.3} parent=23 // pred_check
        %p189 = pneg %p43
      $region26: #{cond_block_forward.3} parent=23 // pred_check_branch
        %191 = sbr.rel (%p189) target = $region28
      $region27: #{cond_block_forward.3} parent=23 // pred_region
        %p192 = scmp.lt.s32.totalorder %s18, 1
        %s193 = scalar_select %p192, %s18, 1
        %s194 = smul.addr %s193, 32
        %s195 = smul.addr %s194, 4
        %s196 = scalar_lea.vmem %s0, %s195
      $region28: #{cond_block_forward.3} parent=23 // pred_fallthru
        _
    $region24: #{cond_block_forward.3} parent=5 // pred_fallthru
      _
    %p197 = scmp.le.s32.totalorder 1, %s11
    %p198 = scmp.lt.s32.totalorder %s11, 3
    %p199 = pnand %p197, %p198
    %p200 = pneg %p199
    // Predicated region
    $region29: #{cond_block_forward.3} parent=5 // pred_check
      _
    $region30: #{cond_block_forward.3} parent=5 // pred_check_branch
      %202 = sbr.rel (%p199) target = $region32
    $region31: #{cond_block_forward.3} parent=5 // pred_region
      %s203 = ssub.s32 %s11, 1
      %p204 = scmp.lt.s32.totalorder %s20, 1
      %s205 = scalar_select %p204, %s20, 1
      %s206 = smul.addr %s205, 32
      %s207 = smul.addr %s206, 4
      %s208 = scalar_lea.vmem %s0, %s207
      %p209 = pneg %p49
      %p210 = pneg %p46
      %p211 = scmp.lt.s32.totalorder %s21, 0
      %s212 = scalar_select %p211, %s21, 0
      %s213 = smul.addr %s212, 4
      %s214 = scalar_lea.vmem %s1, %s213
      %p215 = pneg %p75
      %p216 = pneg %p72
      %p217 = scmp.lt.s32.totalorder %s21, 0
      %s218 = scalar_select %p217, %s21, 0
      %s219 = scalar_lea.vmem %s2, %s218
      %p220 = pneg %p101
      %p221 = pneg %p98
      %p222 = pneg %p129
      %p223 = pneg %p126
      %p224 = scmp.lt.s32.totalorder %s20, 1
      %s225 = scalar_select %p224, %s20, 1
      %p226 = scmp.lt.s32.totalorder %s21, 0
      %s227 = scalar_select %p226, %s21, 0
      %s228 = smul.addr %s225, 32
      %s229 = sadd.s32 %s227, %s228
      %s230 = smul.addr %s229, 4
      %s231 = scalar_lea.vmem %s3, %s230
      %p232 = pneg %p157
      %p233 = pneg %p154
      %p234 = scmp.lt.s32.totalorder %s20, 1
      %s235 = scalar_select %p234, %s20, 1
      %p236 = scmp.lt.s32.totalorder %s21, 0
      %s237 = scalar_select %p236, %s21, 0
      %s238 = sadd.s32 %s237, %s235
      %s239 = smul.addr %s238, 2
      %s240 = scalar_lea.vmem %s4, %s239
      %p241 = scmp.lt.s32.totalorder %s20, 1
      %s242 = scalar_select %p241, %s20, 1
      %s243 = smul.addr %s242, 32
      %s244 = smul.addr %s243, 4
      %s245 = scalar_lea.vmem %s0, %s244
      %p246 = scmp.lt.s32.totalorder %s21, 0
      %s247 = scalar_select %p246, %s21, 0
      %s248 = smul.addr %s247, 4
      %s249 = scalar_lea.vmem %s1, %s248
      %p250 = scmp.lt.s32.totalorder %s21, 0
      %s251 = scalar_select %p250, %s21, 0
      %s252 = scalar_lea.vmem %s2, %s251
      %p253 = scmp.lt.s32.totalorder %s20, 1
      %s254 = scalar_select %p253, %s20, 1
      %p255 = scmp.lt.s32.totalorder %s21, 0
      %s256 = scalar_select %p255, %s21, 0
      %s257 = smul.addr %s254, 32
      %s258 = sadd.s32 %s256, %s257
      %s259 = smul.addr %s258, 4
      %s260 = scalar_lea.vmem %s3, %s259
      %p261 = scmp.lt.s32.totalorder %s20, 1
      %s262 = scalar_select %p261, %s20, 1
      %p263 = scmp.lt.s32.totalorder %s21, 0
      %s264 = scalar_select %p263, %s21, 0
      %s265 = sadd.s32 %s264, %s262
      %s266 = smul.addr %s265, 2
      %s267 = scalar_lea.vmem %s4, %s266
      %v269 = vld [vmem:[%s245] sm:$0xf]
      %v270 = vld [vmem:[%s245 + $0x4] sm:$0xf]
      %v271 = vld [vmem:[%s245 + $0x8] sm:$0xf]
      %v272 = vld [vmem:[%s245 + $0xc] sm:$0xf]
      %v273 = vld [vmem:[%s245 + $0x10] sm:$0xf]
      %v274 = vld [vmem:[%s245 + $0x14] sm:$0xf]
      %v275 = vld [vmem:[%s245 + $0x18] sm:$0xf]
      %v276 = vld [vmem:[%s245 + $0x1c] sm:$0xf]
      %v277 = vld [vmem:[%s245 + $0x20] sm:$0xf]
      %v278 = vld [vmem:[%s245 + $0x24] sm:$0xf]
      %v279 = vld [vmem:[%s245 + $0x28] sm:$0xf]
      %v280 = vld [vmem:[%s245 + $0x2c] sm:$0xf]
      %v281 = vld [vmem:[%s245 + $0x30] sm:$0xf]
      %v282 = vld [vmem:[%s245 + $0x34] sm:$0xf]
      %v283 = vld [vmem:[%s245 + $0x38] sm:$0xf]
      %v284 = vld [vmem:[%s245 + $0x3c] sm:$0xf]
      %v285 = vld [vmem:[%s245 + $0x40] sm:$0xf]
      %v286 = vld [vmem:[%s245 + $0x44] sm:$0xf]
      %v287 = vld [vmem:[%s245 + $0x48] sm:$0xf]
      %v288 = vld [vmem:[%s245 + $0x4c] sm:$0xf]
      %v289 = vld [vmem:[%s245 + $0x50] sm:$0xf]
      %v290 = vld [vmem:[%s245 + $0x54] sm:$0xf]
      %v291 = vld [vmem:[%s245 + $0x58] sm:$0xf]
      %v292 = vld [vmem:[%s245 + $0x5c] sm:$0xf]
      %v293 = vld [vmem:[%s245 + $0x60] sm:$0xf]
      %v294 = vld [vmem:[%s245 + $0x64] sm:$0xf]
      %v295 = vld [vmem:[%s245 + $0x68] sm:$0xf]
      %v296 = vld [vmem:[%s245 + $0x6c] sm:$0xf]
      %v297 = vld [vmem:[%s245 + $0x70] sm:$0xf]
      %v298 = vld [vmem:[%s245 + $0x74] sm:$0xf]
      %v299 = vld [vmem:[%s245 + $0x78] sm:$0xf]
      %v300 = vld [vmem:[%s245 + $0x7c] sm:$0xf]
      %v301 = vld [vmem:[%s249] sm:$0xf]
      %v302 = vld [vmem:[%s249 + $0x4] sm:$0xf]
      %v303 = vld [vmem:[%s249 + $0x8] sm:$0xf]
      %v304 = vld [vmem:[%s249 + $0xc] sm:$0xf]
      %v305 = vld [vmem:[%s249 + $0x10] sm:$0x3]
      %v306 = vld [vmem:[%s252] sm:$0x1]
      %v308 = vlaneseq
      %v309 = vshrl.u32 %v308, 7
      %v310 = vsub.s32 0, %v309
      %v311 = vrot.slane %v306, %v310
      %v345 = vunpack.c.l.b16 %v269
      %v346 = vunpack.c.l.b16 %v270
      %v347 = vunpack.c.l.b16 %v271
      %v348 = vunpack.c.l.b16 %v272
      %v349 = vunpack.c.l.b16 %v273
      %v350 = vunpack.c.l.b16 %v274
      %v351 = vunpack.c.l.b16 %v275
      %v352 = vunpack.c.l.b16 %v276
      %v353 = vunpack.c.l.b16 %v277
      %v354 = vunpack.c.l.b16 %v278
      %v355 = vunpack.c.l.b16 %v279
      %v356 = vunpack.c.l.b16 %v280
      %v357 = vunpack.c.l.b16 %v281
      %v358 = vunpack.c.l.b16 %v282
      %v359 = vunpack.c.l.b16 %v283
      %v360 = vunpack.c.l.b16 %v284
      %v361 = vunpack.c.l.b16 %v285
      %v362 = vunpack.c.l.b16 %v286
      %v363 = vunpack.c.l.b16 %v287
      %v364 = vunpack.c.l.b16 %v288
      %v365 = vunpack.c.l.b16 %v289
      %v366 = vunpack.c.l.b16 %v290
      %v367 = vunpack.c.l.b16 %v291
      %v368 = vunpack.c.l.b16 %v292
      %v369 = vunpack.c.l.b16 %v293
      %v370 = vunpack.c.l.b16 %v294
      %v371 = vunpack.c.l.b16 %v295
      %v372 = vunpack.c.l.b16 %v296
      %v373 = vunpack.c.l.b16 %v297
      %v374 = vunpack.c.l.b16 %v298
      %v375 = vunpack.c.l.b16 %v299
      %v376 = vunpack.c.l.b16 %v300
      %v377 = vpack.c.b16 %v346, %v345
      %v378 = vpack.c.b16 %v348, %v347
      %v379 = vpack.c.b16 %v350, %v349
      %v380 = vpack.c.b16 %v352, %v351
      %v381 = vpack.c.b16 %v354, %v353
      %v382 = vpack.c.b16 %v356, %v355
      %v383 = vpack.c.b16 %v358, %v357
      %v384 = vpack.c.b16 %v360, %v359
      %v385 = vpack.c.b16 %v362, %v361
      %v386 = vpack.c.b16 %v364, %v363
      %v387 = vpack.c.b16 %v366, %v365
      %v388 = vpack.c.b16 %v368, %v367
      %v389 = vpack.c.b16 %v370, %v369
      %v390 = vpack.c.b16 %v372, %v371
      %v391 = vpack.c.b16 %v374, %v373
      %v392 = vpack.c.b16 %v376, %v375
      %v398 = vunpack.c.l.b16 %v301
      %v399 = vunpack.c.l.b16 %v302
      %v400 = vunpack.c.l.b16 %v303
      %v401 = vunpack.c.l.b16 %v304
      %v402 = vunpack.c.l.b16 %v305
      %v403 = vpack.c.b16 %v399, %v398
      %v404 = vpack.c.b16 %v401, %v400
      %v405 = vpack.c.b16 %v402, %v402
      %vm408 = vcmask 293888
      %v410 = vsel %vm408, %v377, 0
      %v413 = vsel %vm408, %v378, 0
      %v416 = vsel %vm408, %v379, 0
      %v419 = vsel %vm408, %v380, 0
      %v422 = vsel %vm408, %v381, 0
      %v425 = vsel %vm408, %v382, 0
      %v428 = vsel %vm408, %v383, 0
      %v431 = vsel %vm408, %v384, 0
      %v434 = vsel %vm408, %v385, 0
      %v437 = vsel %vm408, %v386, 0
      %v440 = vsel %vm408, %v387, 0
      %v443 = vsel %vm408, %v388, 0
      %v446 = vsel %vm408, %v389, 0
      %v449 = vsel %vm408, %v390, 0
      %v452 = vsel %vm408, %v391, 0
      %v455 = vsel %vm408, %v392, 0
      %vm457 = vcmask 1041408
      %v459 = vsel %vm457, %v405, 0
      %461 = vmatprep.subr.bf16.mxu0 0
      %462 = vmatpush1.bf16.msra.mxu0 0
      %463 = vmatprep.subr.bf16.mxu0 0
      %464 = vmatpush1.bf16.msra.mxu0 0
      %465 = vmatprep.subr.bf16.mxu0 0
      %466 = vmatpush1.bf16.msra.mxu0 0
      %467 = vmatprep.subr.bf16.mxu0 0
      %468 = vmatpush1.bf16.msra.mxu0 0
      %469 = vmatprep.subr.bf16.mxu0 0
      %470 = vmatpush1.bf16.msra.mxu0 0
      %471 = vmatprep.subr.bf16.mxu0 0
      %472 = vmatpush1.bf16.msra.mxu0 %v459
      %473 = vmatprep.subr.bf16.mxu0 0
      %474 = vmatpush1.bf16.msra.mxu0 %v404
      %475 = vmatprep.subr.bf16.mxu0 0
      %476 = vmatpush1.bf16.msra.mxu0 %v403
      %477 = vmatprep.subr.bf16.mxu0 0
      %478 = vmatpush2.bf16.msra.mxu0 0
      %479 = vmatprep.subr.bf16.mxu0 0
      %480 = vmatpush2.bf16.msra.mxu0 0
      %481 = vmatprep.subr.bf16.mxu0 0
      %482 = vmatpush2.bf16.msra.mxu0 0
      %483 = vmatprep.subr.bf16.mxu0 0
      %484 = vmatpush2.bf16.msra.mxu0 0
      %485 = vmatprep.subr.bf16.mxu0 0
      %486 = vmatpush2.bf16.msra.mxu0 0
      %487 = vmatprep.subr.bf16.mxu0 0
      %488 = vmatpush2.bf16.msra.mxu0 0
      %489 = vmatprep.subr.bf16.mxu0 0
      %490 = vmatpush2.bf16.msra.mxu0 0
      %491 = vmatprep.subr.bf16.mxu0 0
      %492 = vmatpush2.bf16.msra.mxu0 0
      %493 = vmatprep.mubr.bf16.mxu0 0
      %494 = vmatmul.mubr.bf16.gmra.mxu0 %v410
      %v495 = vpop.f32.mrf.mxu0
      %v496 = vadd.f32 %v311, %v495
      %v497 = vpop.f32.mrf.mxu0
      %v498 = vpop.f32.mrf.mxu0
      %v499 = vadd.f32 %v311, %v498
      %v500 = vpop.f32.mrf.mxu0
      %501 = vmatprep.mubr.bf16.mxu0 0
      %502 = vmatmul.mubr.bf16.gmra.mxu0 %v413
      %v503 = vpop.f32.mrf.mxu0
      %v504 = vadd.f32 %v311, %v503
      %v505 = vpop.f32.mrf.mxu0
      %v506 = vpop.f32.mrf.mxu0
      %v507 = vadd.f32 %v311, %v506
      %v508 = vpop.f32.mrf.mxu0
      %509 = vmatprep.mubr.bf16.mxu0 0
      %510 = vmatmul.mubr.bf16.gmra.mxu0 %v416
      %v511 = vpop.f32.mrf.mxu0
      %v512 = vadd.f32 %v311, %v511
      %v513 = vpop.f32.mrf.mxu0
      %v514 = vpop.f32.mrf.mxu0
      %v515 = vadd.f32 %v311, %v514
      %v516 = vpop.f32.mrf.mxu0
      %517 = vmatprep.mubr.bf16.mxu0 0
      %518 = vmatmul.mubr.bf16.gmra.mxu0 %v419
      %v519 = vpop.f32.mrf.mxu0
      %v520 = vadd.f32 %v311, %v519
      %v521 = vpop.f32.mrf.mxu0
      %v522 = vpop.f32.mrf.mxu0
      %v523 = vadd.f32 %v311, %v522
      %v524 = vpop.f32.mrf.mxu0
      %525 = vmatprep.mubr.bf16.mxu0 0
      %526 = vmatmul.mubr.bf16.gmra.mxu0 %v422
      %v527 = vpop.f32.mrf.mxu0
      %v528 = vadd.f32 %v311, %v527
      %v529 = vpop.f32.mrf.mxu0
      %v530 = vpop.f32.mrf.mxu0
      %v531 = vadd.f32 %v311, %v530
      %v532 = vpop.f32.mrf.mxu0
      %533 = vmatprep.mubr.bf16.mxu0 0
      %534 = vmatmul.mubr.bf16.gmra.mxu0 %v425
      %v535 = vpop.f32.mrf.mxu0
      %v536 = vadd.f32 %v311, %v535
      %v537 = vpop.f32.mrf.mxu0
      %v538 = vpop.f32.mrf.mxu0
      %v539 = vadd.f32 %v311, %v538
      %v540 = vpop.f32.mrf.mxu0
      %541 = vmatprep.mubr.bf16.mxu0 0
      %542 = vmatmul.mubr.bf16.gmra.mxu0 %v428
      %v543 = vpop.f32.mrf.mxu0
      %v544 = vadd.f32 %v311, %v543
      %v545 = vpop.f32.mrf.mxu0
      %v546 = vpop.f32.mrf.mxu0
      %v547 = vadd.f32 %v311, %v546
      %v548 = vpop.f32.mrf.mxu0
      %549 = vmatprep.mubr.bf16.mxu0 0
      %550 = vmatmul.mubr.bf16.gmra.mxu0 %v431
      %v551 = vpop.f32.mrf.mxu0
      %v552 = vadd.f32 %v311, %v551
      %v553 = vpop.f32.mrf.mxu0
      %v554 = vpop.f32.mrf.mxu0
      %v555 = vadd.f32 %v311, %v554
      %v556 = vpop.f32.mrf.mxu0
      %557 = vmatprep.mubr.bf16.mxu0 0
      %558 = vmatmul.mubr.bf16.gmra.mxu0 %v434
      %v559 = vpop.f32.mrf.mxu0
      %v560 = vadd.f32 %v311, %v559
      %v561 = vpop.f32.mrf.mxu0
      %v562 = vpop.f32.mrf.mxu0
      %v563 = vadd.f32 %v311, %v562
      %v564 = vpop.f32.mrf.mxu0
      %565 = vmatprep.mubr.bf16.mxu0 0
      %566 = vmatmul.mubr.bf16.gmra.mxu0 %v437
      %v567 = vpop.f32.mrf.mxu0
      %v568 = vadd.f32 %v311, %v567
      %v569 = vpop.f32.mrf.mxu0
      %v570 = vpop.f32.mrf.mxu0
      %v571 = vadd.f32 %v311, %v570
      %v572 = vpop.f32.mrf.mxu0
      %573 = vmatprep.mubr.bf16.mxu0 0
      %574 = vmatmul.mubr.bf16.gmra.mxu0 %v440
      %v575 = vpop.f32.mrf.mxu0
      %v576 = vadd.f32 %v311, %v575
      %v577 = vpop.f32.mrf.mxu0
      %v578 = vpop.f32.mrf.mxu0
      %v579 = vadd.f32 %v311, %v578
      %v580 = vpop.f32.mrf.mxu0
      %581 = vmatprep.mubr.bf16.mxu0 0
      %582 = vmatmul.mubr.bf16.gmra.mxu0 %v443
      %v583 = vpop.f32.mrf.mxu0
      %v584 = vadd.f32 %v311, %v583
      %v585 = vpop.f32.mrf.mxu0
      %v586 = vpop.f32.mrf.mxu0
      %v587 = vadd.f32 %v311, %v586
      %v588 = vpop.f32.mrf.mxu0
      %589 = vmatprep.mubr.bf16.mxu0 0
      %590 = vmatmul.mubr.bf16.gmra.mxu0 %v446
      %v591 = vpop.f32.mrf.mxu0
      %v592 = vadd.f32 %v311, %v591
      %v593 = vpop.f32.mrf.mxu0
      %v594 = vpop.f32.mrf.mxu0
      %v595 = vadd.f32 %v311, %v594
      %v596 = vpop.f32.mrf.mxu0
      %597 = vmatprep.mubr.bf16.mxu0 0
      %598 = vmatmul.mubr.bf16.gmra.mxu0 %v449
      %v599 = vpop.f32.mrf.mxu0
      %v600 = vadd.f32 %v311, %v599
      %v601 = vpop.f32.mrf.mxu0
      %v602 = vpop.f32.mrf.mxu0
      %v603 = vadd.f32 %v311, %v602
      %v604 = vpop.f32.mrf.mxu0
      %605 = vmatprep.mubr.bf16.mxu0 0
      %606 = vmatmul.mubr.bf16.gmra.mxu0 %v452
      %v607 = vpop.f32.mrf.mxu0
      %v608 = vadd.f32 %v311, %v607
      %v609 = vpop.f32.mrf.mxu0
      %v610 = vpop.f32.mrf.mxu0
      %v611 = vadd.f32 %v311, %v610
      %v612 = vpop.f32.mrf.mxu0
      %613 = vmatprep.mubr.bf16.mxu0 0
      %614 = vmatmul.mubr.bf16.gmra.mxu0 %v455
      %v615 = vpop.f32.mrf.mxu0
      %v616 = vadd.f32 %v311, %v615
      %v617 = vpop.f32.mrf.mxu0
      %v618 = vpop.f32.mrf.mxu0
      %v619 = vadd.f32 %v311, %v618
      %v620 = vpop.f32.mrf.mxu0
      %621 = vdwg.mxu0
      %v622 = vmul.f32 %v496, 0.02
      %v623 = vmul.f32 %v499, 0.02
      %v624 = vmul.f32 %v504, 0.02
      %v625 = vmul.f32 %v507, 0.02
      %v626 = vmul.f32 %v512, 0.02
      %v627 = vmul.f32 %v515, 0.02
      %v628 = vmul.f32 %v520, 0.02
      %v629 = vmul.f32 %v523, 0.02
      %v630 = vmul.f32 %v528, 0.02
      %v631 = vmul.f32 %v531, 0.02
      %v632 = vmul.f32 %v536, 0.02
      %v633 = vmul.f32 %v539, 0.02
      %v634 = vmul.f32 %v544, 0.02
      %v635 = vmul.f32 %v547, 0.02
      %v636 = vmul.f32 %v552, 0.02
      %v637 = vmul.f32 %v555, 0.02
      %v638 = vmul.f32 %v560, 0.02
      %v639 = vmul.f32 %v563, 0.02
      %v640 = vmul.f32 %v568, 0.02
      %v641 = vmul.f32 %v571, 0.02
      %v642 = vmul.f32 %v576, 0.02
      %v643 = vmul.f32 %v579, 0.02
      %v644 = vmul.f32 %v584, 0.02
      %v645 = vmul.f32 %v587, 0.02
      %v646 = vmul.f32 %v592, 0.02
      %v647 = vmul.f32 %v595, 0.02
      %v648 = vmul.f32 %v600, 0.02
      %v649 = vmul.f32 %v603, 0.02
      %v650 = vmul.f32 %v608, 0.02
      %v651 = vmul.f32 %v611, 0.02
      %v652 = vmul.f32 %v616, 0.02
      %v653 = vmul.f32 %v619, 0.02
      %v654 = vmax.f32 %v496, %v622
      %v655 = vmax.f32 %v499, %v623
      %v656 = vmax.f32 %v504, %v624
      %v657 = vmax.f32 %v507, %v625
      %v658 = vmax.f32 %v512, %v626
      %v659 = vmax.f32 %v515, %v627
      %v660 = vmax.f32 %v520, %v628
      %v661 = vmax.f32 %v523, %v629
      %v662 = vmax.f32 %v528, %v630
      %v663 = vmax.f32 %v531, %v631
      %v664 = vmax.f32 %v536, %v632
      %v665 = vmax.f32 %v539, %v633
      %v666 = vmax.f32 %v544, %v634
      %v667 = vmax.f32 %v547, %v635
      %v668 = vmax.f32 %v552, %v636
      %v669 = vmax.f32 %v555, %v637
      %v670 = vmax.f32 %v560, %v638
      %v671 = vmax.f32 %v563, %v639
      %v672 = vmax.f32 %v568, %v640
      %v673 = vmax.f32 %v571, %v641
      %v674 = vmax.f32 %v576, %v642
      %v675 = vmax.f32 %v579, %v643
      %v676 = vmax.f32 %v584, %v644
      %v677 = vmax.f32 %v587, %v645
      %v678 = vmax.f32 %v592, %v646
      %v679 = vmax.f32 %v595, %v647
      %v680 = vmax.f32 %v600, %v648
      %v681 = vmax.f32 %v603, %v649
      %v682 = vmax.f32 %v608, %v650
      %v683 = vmax.f32 %v611, %v651
      %v684 = vmax.f32 %v616, %v652
      %v685 = vmax.f32 %v619, %v653
      %v686 = vpack.c.bf16 %v655, %v654
      %v687 = vpack.c.bf16 %v657, %v656
      %v688 = vpack.c.bf16 %v659, %v658
      %v689 = vpack.c.bf16 %v661, %v660
      %v690 = vpack.c.bf16 %v663, %v662
      %v691 = vpack.c.bf16 %v665, %v664
      %v692 = vpack.c.bf16 %v667, %v666
      %v693 = vpack.c.bf16 %v669, %v668
      %v694 = vpack.c.bf16 %v671, %v670
      %v695 = vpack.c.bf16 %v673, %v672
      %v696 = vpack.c.bf16 %v675, %v674
      %v697 = vpack.c.bf16 %v677, %v676
      %v698 = vpack.c.bf16 %v679, %v678
      %v699 = vpack.c.bf16 %v681, %v680
      %v700 = vpack.c.bf16 %v683, %v682
      %v701 = vpack.c.bf16 %v685, %v684
      %v718 = vunpack.c.l.b16 %v686
      %v719 = vunpack.c.h.b16 %v686
      %v720 = vunpack.c.l.b16 %v687
      %v721 = vunpack.c.h.b16 %v687
      %v722 = vunpack.c.l.b16 %v688
      %v723 = vunpack.c.h.b16 %v688
      %v724 = vunpack.c.l.b16 %v689
      %v725 = vunpack.c.h.b16 %v689
      %v726 = vunpack.c.l.b16 %v690
      %v727 = vunpack.c.h.b16 %v690
      %v728 = vunpack.c.l.b16 %v691
      %v729 = vunpack.c.h.b16 %v691
      %v730 = vunpack.c.l.b16 %v692
      %v731 = vunpack.c.h.b16 %v692
      %v732 = vunpack.c.l.b16 %v693
      %v733 = vunpack.c.h.b16 %v693
      %v734 = vunpack.c.l.b16 %v694
      %v735 = vunpack.c.h.b16 %v694
      %v736 = vunpack.c.l.b16 %v695
      %v737 = vunpack.c.h.b16 %v695
      %v738 = vunpack.c.l.b16 %v696
      %v739 = vunpack.c.h.b16 %v696
      %v740 = vunpack.c.l.b16 %v697
      %v741 = vunpack.c.h.b16 %v697
      %v742 = vunpack.c.l.b16 %v698
      %v743 = vunpack.c.h.b16 %v698
      %v744 = vunpack.c.l.b16 %v699
      %v745 = vunpack.c.h.b16 %v699
      %v746 = vunpack.c.l.b16 %v700
      %v747 = vunpack.c.h.b16 %v700
      %v748 = vunpack.c.l.b16 %v701
      %v749 = vunpack.c.h.b16 %v701
      %v750 = vpack.c.b16 %v718, %v718
      %v751 = vpack.c.b16 %v719, %v719
      %v752 = vpack.c.b16 %v720, %v720
      %v753 = vpack.c.b16 %v721, %v721
      %v754 = vpack.c.b16 %v722, %v722
      %v755 = vpack.c.b16 %v723, %v723
      %v756 = vpack.c.b16 %v724, %v724
      %v757 = vpack.c.b16 %v725, %v725
      %v758 = vpack.c.b16 %v726, %v726
      %v759 = vpack.c.b16 %v727, %v727
      %v760 = vpack.c.b16 %v728, %v728
      %v761 = vpack.c.b16 %v729, %v729
      %v762 = vpack.c.b16 %v730, %v730
      %v763 = vpack.c.b16 %v731, %v731
      %v764 = vpack.c.b16 %v732, %v732
      %v765 = vpack.c.b16 %v733, %v733
      %v766 = vpack.c.b16 %v734, %v734
      %v767 = vpack.c.b16 %v735, %v735
      %v768 = vpack.c.b16 %v736, %v736
      %v769 = vpack.c.b16 %v737, %v737
      %v770 = vpack.c.b16 %v738, %v738
      %v771 = vpack.c.b16 %v739, %v739
      %v772 = vpack.c.b16 %v740, %v740
      %v773 = vpack.c.b16 %v741, %v741
      %v774 = vpack.c.b16 %v742, %v742
      %v775 = vpack.c.b16 %v743, %v743
      %v776 = vpack.c.b16 %v744, %v744
      %v777 = vpack.c.b16 %v745, %v745
      %v778 = vpack.c.b16 %v746, %v746
      %v779 = vpack.c.b16 %v747, %v747
      %v780 = vpack.c.b16 %v748, %v748
      %v781 = vpack.c.b16 %v749, %v749
      %814 = vst [vmem:[%s260] sm:$0xf] %v750
      %815 = vst [vmem:[%s260 + $0x4] sm:$0xf] %v751
      %816 = vst [vmem:[%s260 + $0x8] sm:$0xf] %v752
      %817 = vst [vmem:[%s260 + $0xc] sm:$0xf] %v753
      %818 = vst [vmem:[%s260 + $0x10] sm:$0xf] %v754
      %819 = vst [vmem:[%s260 + $0x14] sm:$0xf] %v755
      %820 = vst [vmem:[%s260 + $0x18] sm:$0xf] %v756
      %821 = vst [vmem:[%s260 + $0x1c] sm:$0xf] %v757
      %822 = vst [vmem:[%s260 + $0x20] sm:$0xf] %v758
      %823 = vst [vmem:[%s260 + $0x24] sm:$0xf] %v759
      %824 = vst [vmem:[%s260 + $0x28] sm:$0xf] %v760
      %825 = vst [vmem:[%s260 + $0x2c] sm:$0xf] %v761
      %826 = vst [vmem:[%s260 + $0x30] sm:$0xf] %v762
      %827 = vst [vmem:[%s260 + $0x34] sm:$0xf] %v763
      %828 = vst [vmem:[%s260 + $0x38] sm:$0xf] %v764
      %829 = vst [vmem:[%s260 + $0x3c] sm:$0xf] %v765
      %830 = vst [vmem:[%s260 + $0x40] sm:$0xf] %v766
      %831 = vst [vmem:[%s260 + $0x44] sm:$0xf] %v767
      %832 = vst [vmem:[%s260 + $0x48] sm:$0xf] %v768
      %833 = vst [vmem:[%s260 + $0x4c] sm:$0xf] %v769
      %834 = vst [vmem:[%s260 + $0x50] sm:$0xf] %v770
      %835 = vst [vmem:[%s260 + $0x54] sm:$0xf] %v771
      %836 = vst [vmem:[%s260 + $0x58] sm:$0xf] %v772
      %837 = vst [vmem:[%s260 + $0x5c] sm:$0xf] %v773
      %838 = vst [vmem:[%s260 + $0x60] sm:$0xf] %v774
      %839 = vst [vmem:[%s260 + $0x64] sm:$0xf] %v775
      %840 = vst [vmem:[%s260 + $0x68] sm:$0xf] %v776
      %841 = vst [vmem:[%s260 + $0x6c] sm:$0xf] %v777
      %842 = vst [vmem:[%s260 + $0x70] sm:$0xf] %v778
      %843 = vst [vmem:[%s260 + $0x74] sm:$0xf] %v779
      %844 = vst [vmem:[%s260 + $0x78] sm:$0xf] %v780
      %845 = vst [vmem:[%s260 + $0x7c] sm:$0xf] %v781
      %v846 = vadd.f32 %v654, %v655
      %v847 = vadd.f32 %v846, %v656
      %v848 = vadd.f32 %v847, %v657
      %v849 = vadd.f32 %v848, %v658
      %v850 = vadd.f32 %v849, %v659
      %v851 = vadd.f32 %v850, %v660
      %v852 = vadd.f32 %v851, %v661
      %v853 = vadd.f32 %v852, %v662
      %v854 = vadd.f32 %v853, %v663
      %v855 = vadd.f32 %v854, %v664
      %v856 = vadd.f32 %v855, %v665
      %v857 = vadd.f32 %v856, %v666
      %v858 = vadd.f32 %v857, %v667
      %v859 = vadd.f32 %v858, %v668
      %v860 = vadd.f32 %v859, %v669
      %v861 = vadd.f32 %v860, %v670
      %v862 = vadd.f32 %v861, %v671
      %v863 = vadd.f32 %v862, %v672
      %v864 = vadd.f32 %v863, %v673
      %v865 = vadd.f32 %v864, %v674
      %v866 = vadd.f32 %v865, %v675
      %v867 = vadd.f32 %v866, %v676
      %v868 = vadd.f32 %v867, %v677
      %v869 = vadd.f32 %v868, %v678
      %v870 = vadd.f32 %v869, %v679
      %v871 = vadd.f32 %v870, %v680
      %v872 = vadd.f32 %v871, %v681
      %v873 = vadd.f32 %v872, %v682
      %v874 = vadd.f32 %v873, %v683
      %v875 = vadd.f32 %v874, %v684
      %v876 = vadd.f32 %v875, %v685
      %v877 = vrot.slane %v876, 4
      %v878 = vadd.f32 %v876, %v877
      %v879 = vrot.slane %v878, 2
      %v880 = vadd.f32 %v878, %v879
      %v881 = vrot.slane %v880, 1
      %v882 = vadd.f32 %v880, %v881
      %v883 = vmul.f32 %v654, %v654
      %v884 = vmul.f32 %v655, %v655
      %v885 = vmul.f32 %v656, %v656
      %v886 = vmul.f32 %v657, %v657
      %v887 = vmul.f32 %v658, %v658
      %v888 = vmul.f32 %v659, %v659
      %v889 = vmul.f32 %v660, %v660
      %v890 = vmul.f32 %v661, %v661
      %v891 = vmul.f32 %v662, %v662
      %v892 = vmul.f32 %v663, %v663
      %v893 = vmul.f32 %v664, %v664
      %v894 = vmul.f32 %v665, %v665
      %v895 = vmul.f32 %v666, %v666
      %v896 = vmul.f32 %v667, %v667
      %v897 = vmul.f32 %v668, %v668
      %v898 = vmul.f32 %v669, %v669
      %v899 = vmul.f32 %v670, %v670
      %v900 = vmul.f32 %v671, %v671
      %v901 = vmul.f32 %v672, %v672
      %v902 = vmul.f32 %v673, %v673
      %v903 = vmul.f32 %v674, %v674
      %v904 = vmul.f32 %v675, %v675
      %v905 = vmul.f32 %v676, %v676
      %v906 = vmul.f32 %v677, %v677
      %v907 = vmul.f32 %v678, %v678
      %v908 = vmul.f32 %v679, %v679
      %v909 = vmul.f32 %v680, %v680
      %v910 = vmul.f32 %v681, %v681
      %v911 = vmul.f32 %v682, %v682
      %v912 = vmul.f32 %v683, %v683
      %v913 = vmul.f32 %v684, %v684
      %v914 = vmul.f32 %v685, %v685
      %v915 = vadd.f32 %v883, %v884
      %v916 = vadd.f32 %v915, %v885
      %v917 = vadd.f32 %v916, %v886
      %v918 = vadd.f32 %v917, %v887
      %v919 = vadd.f32 %v918, %v888
      %v920 = vadd.f32 %v919, %v889
      %v921 = vadd.f32 %v920, %v890
      %v922 = vadd.f32 %v921, %v891
      %v923 = vadd.f32 %v922, %v892
      %v924 = vadd.f32 %v923, %v893
      %v925 = vadd.f32 %v924, %v894
      %v926 = vadd.f32 %v925, %v895
      %v927 = vadd.f32 %v926, %v896
      %v928 = vadd.f32 %v927, %v897
      %v929 = vadd.f32 %v928, %v898
      %v930 = vadd.f32 %v929, %v899
      %v931 = vadd.f32 %v930, %v900
      %v932 = vadd.f32 %v931, %v901
      %v933 = vadd.f32 %v932, %v902
      %v934 = vadd.f32 %v933, %v903
      %v935 = vadd.f32 %v934, %v904
      %v936 = vadd.f32 %v935, %v905
      %v937 = vadd.f32 %v936, %v906
      %v938 = vadd.f32 %v937, %v907
      %v939 = vadd.f32 %v938, %v908
      %v940 = vadd.f32 %v939, %v909
      %v941 = vadd.f32 %v940, %v910
      %v942 = vadd.f32 %v941, %v911
      %v943 = vadd.f32 %v942, %v912
      %v944 = vadd.f32 %v943, %v913
      %v945 = vadd.f32 %v944, %v914
      %v946 = vrot.slane %v945, 4
      %v947 = vadd.f32 %v945, %v946
      %v948 = vrot.slane %v947, 2
      %v949 = vadd.f32 %v947, %v948
      %v950 = vrot.slane %v949, 1
      %v951 = vadd.f32 %v949, %v950
      %vm952 = vcmask 1040384
      %v953 = vsel %vm952, %v882, %v951
      %954 = vst [vmem:[%s267] sm:$0x3] %v953
      %p955 = scmp.lt.s32.totalorder %s20, 1
      %s956 = scalar_select %p955, %s20, 1
      %p957 = scmp.lt.s32.totalorder %s21, 0
      %s958 = scalar_select %p957, %s21, 0
      %s959 = smul.addr %s956, 32
      %s960 = sadd.s32 %s958, %s959
      %s961 = smul.addr %s960, 4
      %s962 = scalar_lea.vmem %s3, %s961
      %p963 = scmp.lt.s32.totalorder %s20, 1
      %s964 = scalar_select %p963, %s20, 1
      %p965 = scmp.lt.s32.totalorder %s21, 0
      %s966 = scalar_select %p965, %s21, 0
      %s967 = sadd.s32 %s966, %s964
      %s968 = smul.addr %s967, 2
      %s969 = scalar_lea.vmem %s4, %s968
      // Predicated region
      $region33: #{cond_block_forward.3} parent=31 // pred_check
        %p970 = pneg %p126
      $region34: #{cond_block_forward.3} parent=31 // pred_check_branch
        %972 = sbr.rel (%p970) target = $region36
      $region35: #{cond_block_forward.3} parent=31 // pred_region
        _
      $region36: #{cond_block_forward.3} parent=31 // pred_fallthru
        _
      // Predicated region
      $region37: #{cond_block_forward.3} parent=31 // pred_check
        %p973 = pneg %p154
      $region38: #{cond_block_forward.3} parent=31 // pred_check_branch
        %975 = sbr.rel (%p973) target = $region40
      $region39: #{cond_block_forward.3} parent=31 // pred_region
        _
      $region40: #{cond_block_forward.3} parent=31 // pred_fallthru
        _
    $region32: #{cond_block_forward.3} parent=5 // pred_fallthru
      _
    %p976 = scmp.le.s32.totalorder 2, %s11
    // Predicated region
    $region41: #{cond_block_forward.3} parent=5 // pred_check
      %p977 = pneg %p976
    $region42: #{cond_block_forward.3} parent=5 // pred_check_branch
      %979 = sbr.rel (%p977) target = $region44
    $region43: #{cond_block_forward.3} parent=5 // pred_region
      %s980 = ssub.s32 %s11, 2
      // Predicated region
      $region45: #{cond_block_forward.3} parent=43 // pred_check
        %p981 = pneg %p132
      $region46: #{cond_block_forward.3} parent=43 // pred_check_branch
        %983 = sbr.rel (%p981) target = $region48
      $region47: #{cond_block_forward.3} parent=43 // pred_region
        %p984 = scmp.lt.s32.totalorder %s22, 1
        %s985 = scalar_select %p984, %s22, 1
        %p986 = scmp.lt.s32.totalorder %s23, 0
        %s987 = scalar_select %p986, %s23, 0
        %s988 = smul.addr %s985, 32
        %s989 = sadd.s32 %s987, %s988
        %s990 = smul.addr %s989, 4
        %s991 = scalar_lea.vmem %s3, %s990
      $region48: #{cond_block_forward.3} parent=43 // pred_fallthru
        _
      // Predicated region
      $region49: #{cond_block_forward.3} parent=43 // pred_check
        %p992 = pneg %p160
      $region50: #{cond_block_forward.3} parent=43 // pred_check_branch
        %994 = sbr.rel (%p992) target = $region52
      $region51: #{cond_block_forward.3} parent=43 // pred_region
        %p995 = scmp.lt.s32.totalorder %s22, 1
        %s996 = scalar_select %p995, %s22, 1
        %p997 = scmp.lt.s32.totalorder %s23, 0
        %s998 = scalar_select %p997, %s23, 0
        %s999 = sadd.s32 %s998, %s996
        %s1000 = smul.addr %s999, 2
        %s1001 = scalar_lea.vmem %s4, %s1000
      $region52: #{cond_block_forward.3} parent=43 // pred_fallthru
        _
    $region44: #{cond_block_forward.3} parent=5 // pred_fallthru
      _
  $region6: #{cond_block_forward.3} parent=0 // loop_footer
    %s15 = sadd.s32 1, %s11
  $region7: #{cond_block_forward.3} parent=0 // loop_footer_branch
    %10 = sbr.rel target = $region3
  $region8: #{cond_block_forward.3} parent=0 // loop_exit
    _

// kernel: cond_block_forward.5
$region0: #{cond_block_forward.5}
  #allocation0 [shape = 'u32[]', space=smem, size = 0x4, offset = 0x4, fixed_abs, tag = 'smem constant byte address 0x4 - core index']
  #allocation1 [shape = 'u32[144,128]{1,0:T(1,128)}', space=vmem, size = 0x12000, scoped, tag = 'internal scratch']
  %s0 = inlined_call_operand.vmem [shape: bf16[2,2,2,9,9,128], index: 0, kind: input, shape index: {}]
  %s1 = inlined_call_operand.vmem [shape: bf16[2,2,2,2,128,128], index: 1, kind: input, shape index: {}]
  %s2 = inlined_call_operand.vmem [shape: f32[1,128], index: 2, kind: input, shape index: {}]
  %s3 = inlined_call_operand.vmem [shape: f32[2,8,8,128], index: 3, kind: output, shape index: {}]
  %s4 = sld [smem:[#allocation0]]
  $region45: #{cond_block_forward.5} parent=0
    _
  %s6 = ssub.s32 1, %s4
  %s7 = scalar_select 0, %s6, %s4
  loop: start=0, step=1, limit=4
  $region2: #{cond_block_forward.5} parent=0 // loop_pre_header
    _
  $region3: #{cond_block_forward.5} parent=0 // loop_header
    %s9 = sphi 0, %s13
    %p10 = scmp.ge.s32.totalorder %s9, 4
    %s16 = sphi 0, %s28
    %s17 = sphi 0, %s24
    %s18 = sphi 0, %s16
    %s19 = sphi 0, %s17
    %s20 = sphi 0, %s18
    %s21 = sphi 0, %s19
    %s31 = sphi 0, %s33
    %s34 = sphi 0, %s31
    %s35 = sphi 0, %s34
    %s51 = sphi 0, %s35
    %s57 = sphi 0, %s59
    %s60 = sphi 0, %s57
    %s61 = sphi 0, %s60
    %s77 = sphi 0, %s61
    %s83 = sphi 0, %s85
    %s86 = sphi 0, %s83
    %s87 = sphi 0, %s86
    %s103 = sphi 0, %s87
    %s111 = sphi 0, %s113
    %s114 = sphi 0, %s111
    %s115 = sphi 0, %s114
    %s131 = sphi 0, %s115
  $region4: #{cond_block_forward.5} parent=0 // loop_header_branch
    %12 = sbr.rel (%p10) target = $region8
  $region5: #{cond_block_forward.5} parent=0 // loop_body
    %s14 = ssub.s32 %s9, 1
    %s15 = ssub.s32 %s9, 2
    %s22 = sadd.s32 1, %s17
    %p23 = scmp.ge.s32.totalorder %s22, 1
    %s24 = scalar_select %p23, 0, %s22
    %s25 = sadd.s32 1, %s16
    %s26 = scalar_select %p23, %s25, %s16
    %p27 = scmp.ge.s32.totalorder %s26, 2
    %s28 = scalar_select %p27, 0, %s26
    %s29 = ssub.s32 %s16, %s28
    %p30 = scmp.eq.s32.totalorder %s29, 0
    %s32 = sadd.s32 %s31, 1
    %s33 = scalar_select %p30, %s31, %s32
    %p36 = pneg %p30
    %p37 = scmp.eq.s32.totalorder %s9, 1
    %p38 = por %p36, %p37
    %p39 = scmp.ne.s32.totalorder %s31, %s34
    %p40 = scmp.eq.s32.totalorder %s9, 0
    %p41 = por %p39, %p40
    %p42 = scmp.ne.s32.totalorder %s31, %s34
    %p43 = scmp.eq.s32.totalorder %s14, 1
    %p44 = por %p42, %p43
    %p45 = scmp.ne.s32.totalorder %s34, %s35
    %p46 = scmp.eq.s32.totalorder %s14, 0
    %p47 = por %p45, %p46
    %p48 = scmp.ne.s32.totalorder %s34, %s35
    %p49 = scmp.eq.s32.totalorder %s15, 1
    %p50 = por %p48, %p49
    %p52 = scmp.ne.s32.totalorder %s35, %s51
    %p53 = scmp.eq.s32.totalorder %s15, 0
    %p54 = por %p52, %p53
    %s55 = ssub.s32 %s17, %s24
    %p56 = scmp.eq.s32.totalorder %s55, 0
    %s58 = sadd.s32 %s57, 1
    %s59 = scalar_select %p56, %s57, %s58
    %p62 = pneg %p56
    %p63 = scmp.eq.s32.totalorder %s9, 1
    %p64 = por %p62, %p63
    %p65 = scmp.ne.s32.totalorder %s57, %s60
    %p66 = scmp.eq.s32.totalorder %s9, 0
    %p67 = por %p65, %p66
    %p68 = scmp.ne.s32.totalorder %s57, %s60
    %p69 = scmp.eq.s32.totalorder %s14, 1
    %p70 = por %p68, %p69
    %p71 = scmp.ne.s32.totalorder %s60, %s61
    %p72 = scmp.eq.s32.totalorder %s14, 0
    %p73 = por %p71, %p72
    %p74 = scmp.ne.s32.totalorder %s60, %s61
    %p75 = scmp.eq.s32.totalorder %s15, 1
    %p76 = por %p74, %p75
    %p78 = scmp.ne.s32.totalorder %s61, %s77
    %p79 = scmp.eq.s32.totalorder %s15, 0
    %p80 = por %p78, %p79
    %s81 = ssub.s32 %s17, %s24
    %p82 = scmp.eq.s32.totalorder %s81, 0
    %s84 = sadd.s32 %s83, 1
    %s85 = scalar_select %p82, %s83, %s84
    %p88 = pneg %p82
    %p89 = scmp.eq.s32.totalorder %s9, 1
    %p90 = por %p88, %p89
    %p91 = scmp.ne.s32.totalorder %s83, %s86
    %p92 = scmp.eq.s32.totalorder %s9, 0
    %p93 = por %p91, %p92
    %p94 = scmp.ne.s32.totalorder %s83, %s86
    %p95 = scmp.eq.s32.totalorder %s14, 1
    %p96 = por %p94, %p95
    %p97 = scmp.ne.s32.totalorder %s86, %s87
    %p98 = scmp.eq.s32.totalorder %s14, 0
    %p99 = por %p97, %p98
    %p100 = scmp.ne.s32.totalorder %s86, %s87
    %p101 = scmp.eq.s32.totalorder %s15, 1
    %p102 = por %p100, %p101
    %p104 = scmp.ne.s32.totalorder %s87, %s103
    %p105 = scmp.eq.s32.totalorder %s15, 0
    %p106 = por %p104, %p105
    %s107 = ssub.s32 %s16, %s28
    %s108 = ssub.s32 %s17, %s24
    %s109 = sor.u32 %s107, %s108
    %p110 = scmp.eq.s32.totalorder %s109, 0
    %s112 = sadd.s32 %s111, 1
    %s113 = scalar_select %p110, %s111, %s112
    %p116 = pneg %p110
    %p117 = scmp.eq.s32.totalorder %s9, 1
    %p118 = por %p116, %p117
    %p119 = scmp.ne.s32.totalorder %s111, %s114
    %p120 = scmp.eq.s32.totalorder %s9, 0
    %p121 = por %p119, %p120
    %p122 = scmp.ne.s32.totalorder %s111, %s114
    %p123 = scmp.eq.s32.totalorder %s14, 1
    %p124 = por %p122, %p123
    %p125 = scmp.ne.s32.totalorder %s114, %s115
    %p126 = scmp.eq.s32.totalorder %s14, 0
    %p127 = por %p125, %p126
    %p128 = scmp.ne.s32.totalorder %s114, %s115
    %p129 = scmp.eq.s32.totalorder %s15, 1
    %p130 = por %p128, %p129
    %p132 = scmp.ne.s32.totalorder %s115, %s131
    %p133 = scmp.eq.s32.totalorder %s15, 0
    %p134 = por %p132, %p133
    %p135 = scmp.le.s32.totalorder 1, %s9
    %p136 = scmp.lt.s32.totalorder %s9, 3
    %p137 = pnand %p135, %p136
    %p138 = pneg %p137
    // Predicated region
    $region9: #{cond_block_forward.5} parent=5 // pred_check
      _
    $region10: #{cond_block_forward.5} parent=5 // pred_check_branch
      %140 = sbr.rel (%p137) target = $region12
    $region11: #{cond_block_forward.5} parent=5 // pred_region
      %s141 = ssub.s32 %s9, 1
      // Predicated region
      $region13: #{cond_block_forward.5} parent=11 // pred_check
        %p142 = pneg %p73
      $region14: #{cond_block_forward.5} parent=11 // pred_check_branch
        %144 = sbr.rel (%p142) target = $region16
      $region15: #{cond_block_forward.5} parent=11 // pred_region
        %p145 = scmp.lt.s32.totalorder %s19, 0
        %s146 = scalar_select %p145, %s19, 0
        %s147 = smul.addr %s146, 4
        %s148 = scalar_lea.vmem %s1, %s147
      $region16: #{cond_block_forward.5} parent=11 // pred_fallthru
        _
      // Predicated region
      $region17: #{cond_block_forward.5} parent=11 // pred_check
        %p149 = pneg %p99
      $region18: #{cond_block_forward.5} parent=11 // pred_check_branch
        %151 = sbr.rel (%p149) target = $region20
      $region19: #{cond_block_forward.5} parent=11 // pred_region
        %p152 = scmp.lt.s32.totalorder %s19, 0
        %s153 = scalar_select %p152, %s19, 0
        %s154 = scalar_lea.vmem %s2, %s153
      $region20: #{cond_block_forward.5} parent=11 // pred_fallthru
        _
    $region12: #{cond_block_forward.5} parent=5 // pred_fallthru
      _
    %p155 = scmp.lt.s32.totalorder %s9, 2
    // Predicated region
    $region21: #{cond_block_forward.5} parent=5 // pred_check
      %p156 = pneg %p155
    $region22: #{cond_block_forward.5} parent=5 // pred_check_branch
      %158 = sbr.rel (%p156) target = $region24
    $region23: #{cond_block_forward.5} parent=5 // pred_region
      // Predicated region
      $region25: #{cond_block_forward.5} parent=23 // pred_check
        %p159 = pneg %p41
      $region26: #{cond_block_forward.5} parent=23 // pred_check_branch
        %161 = sbr.rel (%p159) target = $region28
      $region27: #{cond_block_forward.5} parent=23 // pred_region
        %p162 = scmp.lt.s32.totalorder %s16, 1
        %s163 = scalar_select %p162, %s16, 1
        %s164 = smul.addr %s163, 72
        %s165 = smul.addr %s164, 4
        %s166 = scalar_lea.vmem %s0, %s165
      $region28: #{cond_block_forward.5} parent=23 // pred_fallthru
        _
    $region24: #{cond_block_forward.5} parent=5 // pred_fallthru
      _
    %p167 = scmp.le.s32.totalorder 1, %s9
    %p168 = scmp.lt.s32.totalorder %s9, 3
    %p169 = pnand %p167, %p168
    %p170 = pneg %p169
    // Predicated region
    $region29: #{cond_block_forward.5} parent=5 // pred_check
      _
    $region30: #{cond_block_forward.5} parent=5 // pred_check_branch
      %172 = sbr.rel (%p169) target = $region32
    $region31: #{cond_block_forward.5} parent=5 // pred_region
      %s173 = ssub.s32 %s9, 1
      %p174 = scmp.lt.s32.totalorder %s18, 1
      %s175 = scalar_select %p174, %s18, 1
      %s176 = smul.addr %s175, 72
      %s177 = smul.addr %s176, 4
      %s178 = scalar_lea.vmem %s0, %s177
      %p179 = pneg %p47
      %p180 = pneg %p44
      %p181 = scmp.lt.s32.totalorder %s19, 0
      %s182 = scalar_select %p181, %s19, 0
      %s183 = smul.addr %s182, 4
      %s184 = scalar_lea.vmem %s1, %s183
      %p185 = pneg %p73
      %p186 = pneg %p70
      %p187 = scmp.lt.s32.totalorder %s19, 0
      %s188 = scalar_select %p187, %s19, 0
      %s189 = scalar_lea.vmem %s2, %s188
      %p190 = pneg %p99
      %p191 = pneg %p96
      %p192 = pneg %p127
      %p193 = pneg %p124
      %p194 = scmp.lt.s32.totalorder %s18, 1
      %s195 = scalar_select %p194, %s18, 1
      %p196 = scmp.lt.s32.totalorder %s19, 0
      %s197 = scalar_select %p196, %s19, 0
      %s198 = smul.addr %s195, 8
      %s199 = sadd.s32 %s197, %s198
      %s200 = smul.addr %s199, 8
      %s201 = scalar_lea.vmem %s3, %s200
      %p202 = scmp.lt.s32.totalorder %s18, 1
      %s203 = scalar_select %p202, %s18, 1
      %s204 = smul.addr %s203, 72
      %s205 = smul.addr %s204, 4
      %s206 = scalar_lea.vmem %s0, %s205
      %p207 = scmp.lt.s32.totalorder %s19, 0
      %s208 = scalar_select %p207, %s19, 0
      %s209 = smul.addr %s208, 4
      %s210 = scalar_lea.vmem %s1, %s209
      %p211 = scmp.lt.s32.totalorder %s19, 0
      %s212 = scalar_select %p211, %s19, 0
      %s213 = scalar_lea.vmem %s2, %s212
      %p214 = scmp.lt.s32.totalorder %s18, 1
      %s215 = scalar_select %p214, %s18, 1
      %p216 = scmp.lt.s32.totalorder %s19, 0
      %s217 = scalar_select %p216, %s19, 0
      %s218 = smul.addr %s215, 8
      %s219 = sadd.s32 %s217, %s218
      %s220 = smul.addr %s219, 8
      %s221 = scalar_lea.vmem %s3, %s220
      %v223 = vld [vmem:[%s206] sm:$0xf]
      %v224 = vld [vmem:[%s206 + $0x8] sm:$0xf]
      %v225 = vld [vmem:[%s206 + $0x10] sm:$0xf]
      %v226 = vld [vmem:[%s206 + $0x18] sm:$0xf]
      %v227 = vld [vmem:[%s206 + $0x20] sm:$0xf]
      %v228 = vld [vmem:[%s206 + $0x28] sm:$0xf]
      %v229 = vld [vmem:[%s206 + $0x30] sm:$0xf]
      %v230 = vld [vmem:[%s206 + $0x38] sm:$0xf]
      %v231 = vld [vmem:[%s210] sm:$0xf]
      %v232 = vld [vmem:[%s210 + $0x4] sm:$0xf]
      %v233 = vld [vmem:[%s210 + $0x8] sm:$0xf]
      %v234 = vld [vmem:[%s210 + $0xc] sm:$0xf]
      %v235 = vld [vmem:[%s210 + $0x10] sm:$0xf]
      %v236 = vld [vmem:[%s210 + $0x14] sm:$0xf]
      %v237 = vld [vmem:[%s210 + $0x18] sm:$0xf]
      %v238 = vld [vmem:[%s210 + $0x1c] sm:$0xf]
      %v239 = vld [vmem:[%s210 + $0x20] sm:$0xf]
      %v240 = vld [vmem:[%s210 + $0x24] sm:$0xf]
      %v241 = vld [vmem:[%s210 + $0x28] sm:$0xf]
      %v242 = vld [vmem:[%s210 + $0x2c] sm:$0xf]
      %v243 = vld [vmem:[%s210 + $0x30] sm:$0xf]
      %v244 = vld [vmem:[%s210 + $0x34] sm:$0xf]
      %v245 = vld [vmem:[%s210 + $0x38] sm:$0xf]
      %v246 = vld [vmem:[%s210 + $0x3c] sm:$0xf]
      %v247 = vld [vmem:[%s206 + $0x4] sm:$0x1]
      %v248 = vld [vmem:[%s206 + $0xc] sm:$0x1]
      %v249 = vld [vmem:[%s206 + $0x14] sm:$0x1]
      %v250 = vld [vmem:[%s206 + $0x1c] sm:$0x1]
      %v251 = vld [vmem:[%s206 + $0x24] sm:$0x1]
      %v252 = vld [vmem:[%s206 + $0x2c] sm:$0x1]
      %v253 = vld [vmem:[%s206 + $0x34] sm:$0x1]
      %v254 = vld [vmem:[%s206 + $0x3c] sm:$0x1]
      %vm255 = vsmask.f32 3328
      %vm256 = vsmask.f32 7440
      %vm257 = vmor %vm255, %vm256
      %v259 = vshrl.u32 %v223, 16
      %v261 = vrot.slane %v259, 4
      %v262 = vshll.u32 %v223, 16
      %v264 = vrot.slane %v262, 5
      %v265 = vor.u32 %v261, %v264
      %v266 = vrot.slane %v265, 4
      %v268 = vshll.u32 %v247, 16
      %v270 = vrot.slane %v268, 5
      %v271 = vsel %vm257, %v266, %v270
      %v273 = vshrl.u32 %v224, 16
      %v275 = vrot.slane %v273, 4
      %v276 = vshll.u32 %v224, 16
      %v278 = vrot.slane %v276, 5
      %v279 = vor.u32 %v275, %v278
      %v280 = vrot.slane %v279, 4
      %v282 = vshll.u32 %v248, 16
      %v284 = vrot.slane %v282, 5
      %v285 = vsel %vm257, %v280, %v284
      %v287 = vshrl.u32 %v225, 16
      %v289 = vrot.slane %v287, 4
      %v290 = vshll.u32 %v225, 16
      %v292 = vrot.slane %v290, 5
      %v293 = vor.u32 %v289, %v292
      %v294 = vrot.slane %v293, 4
      %v296 = vshll.u32 %v249, 16
      %v298 = vrot.slane %v296, 5
      %v299 = vsel %vm257, %v294, %v298
      %v301 = vshrl.u32 %v226, 16
      %v303 = vrot.slane %v301, 4
      %v304 = vshll.u32 %v226, 16
      %v306 = vrot.slane %v304, 5
      %v307 = vor.u32 %v303, %v306
      %v308 = vrot.slane %v307, 4
      %v310 = vshll.u32 %v250, 16
      %v312 = vrot.slane %v310, 5
      %v313 = vsel %vm257, %v308, %v312
      %v315 = vshrl.u32 %v227, 16
      %v317 = vrot.slane %v315, 4
      %v318 = vshll.u32 %v227, 16
      %v320 = vrot.slane %v318, 5
      %v321 = vor.u32 %v317, %v320
      %v322 = vrot.slane %v321, 4
      %v324 = vshll.u32 %v251, 16
      %v326 = vrot.slane %v324, 5
      %v327 = vsel %vm257, %v322, %v326
      %v329 = vshrl.u32 %v228, 16
      %v331 = vrot.slane %v329, 4
      %v332 = vshll.u32 %v228, 16
      %v334 = vrot.slane %v332, 5
      %v335 = vor.u32 %v331, %v334
      %v336 = vrot.slane %v335, 4
      %v338 = vshll.u32 %v252, 16
      %v340 = vrot.slane %v338, 5
      %v341 = vsel %vm257, %v336, %v340
      %v343 = vshrl.u32 %v229, 16
      %v345 = vrot.slane %v343, 4
      %v346 = vshll.u32 %v229, 16
      %v348 = vrot.slane %v346, 5
      %v349 = vor.u32 %v345, %v348
      %v350 = vrot.slane %v349, 4
      %v352 = vshll.u32 %v253, 16
      %v354 = vrot.slane %v352, 5
      %v355 = vsel %vm257, %v350, %v354
      %v357 = vshrl.u32 %v230, 16
      %v359 = vrot.slane %v357, 4
      %v360 = vshll.u32 %v230, 16
      %v362 = vrot.slane %v360, 5
      %v363 = vor.u32 %v359, %v362
      %v364 = vrot.slane %v363, 4
      %v366 = vshll.u32 %v254, 16
      %v368 = vrot.slane %v366, 5
      %v369 = vsel %vm257, %v364, %v368
      %s370 = scalar_lea.vmem %s210, 64
      %v371 = vld [vmem:[%s370] sm:$0xf]
      %v372 = vld [vmem:[%s370 + $0x4] sm:$0xf]
      %v373 = vld [vmem:[%s370 + $0x8] sm:$0xf]
      %v374 = vld [vmem:[%s370 + $0xc] sm:$0xf]
      %v375 = vld [vmem:[%s370 + $0x10] sm:$0xf]
      %v376 = vld [vmem:[%s370 + $0x14] sm:$0xf]
      %v377 = vld [vmem:[%s370 + $0x18] sm:$0xf]
      %v378 = vld [vmem:[%s370 + $0x1c] sm:$0xf]
      %v379 = vld [vmem:[%s370 + $0x20] sm:$0xf]
      %v380 = vld [vmem:[%s370 + $0x24] sm:$0xf]
      %v381 = vld [vmem:[%s370 + $0x28] sm:$0xf]
      %v382 = vld [vmem:[%s370 + $0x2c] sm:$0xf]
      %v383 = vld [vmem:[%s370 + $0x30] sm:$0xf]
      %v384 = vld [vmem:[%s370 + $0x34] sm:$0xf]
      %v385 = vld [vmem:[%s370 + $0x38] sm:$0xf]
      %v386 = vld [vmem:[%s370 + $0x3c] sm:$0xf]
      %v387 = vunpack.c.l.b16 %v271
      %v388 = vunpack.c.l.b16 %v285
      %v389 = vunpack.c.l.b16 %v299
      %v390 = vunpack.c.l.b16 %v313
      %v391 = vunpack.c.l.b16 %v327
      %v392 = vunpack.c.l.b16 %v341
      %v393 = vunpack.c.l.b16 %v355
      %v394 = vunpack.c.l.b16 %v369
      %v395 = vpack.c.b16 %v388, %v387
      %v396 = vpack.c.b16 %v390, %v389
      %v397 = vpack.c.b16 %v392, %v391
      %v398 = vpack.c.b16 %v394, %v393
      %v419 = vunpack.c.l.b16 %v371
      %v420 = vunpack.c.l.b16 %v372
      %v421 = vunpack.c.l.b16 %v373
      %v422 = vunpack.c.l.b16 %v374
      %v423 = vunpack.c.l.b16 %v375
      %v424 = vunpack.c.l.b16 %v376
      %v425 = vunpack.c.l.b16 %v377
      %v426 = vunpack.c.l.b16 %v378
      %v427 = vunpack.c.l.b16 %v379
      %v428 = vunpack.c.l.b16 %v380
      %v429 = vunpack.c.l.b16 %v381
      %v430 = vunpack.c.l.b16 %v382
      %v431 = vunpack.c.l.b16 %v383
      %v432 = vunpack.c.l.b16 %v384
      %v433 = vunpack.c.l.b16 %v385
      %v434 = vunpack.c.l.b16 %v386
      %v435 = vpack.c.b16 %v420, %v419
      %v436 = vpack.c.b16 %v422, %v421
      %v437 = vpack.c.b16 %v424, %v423
      %v438 = vpack.c.b16 %v426, %v425
      %v439 = vpack.c.b16 %v428, %v427
      %v440 = vpack.c.b16 %v430, %v429
      %v441 = vpack.c.b16 %v432, %v431
      %v442 = vpack.c.b16 %v434, %v433
      %451 = vmatprep.subr.bf16.mxu0 0
      %452 = vmatpush1.bf16.msra.mxu0 %v442
      %453 = vmatprep.subr.bf16.mxu0 0
      %454 = vmatpush1.bf16.msra.mxu0 %v441
      %455 = vmatprep.subr.bf16.mxu0 0
      %456 = vmatpush1.bf16.msra.mxu0 %v440
      %457 = vmatprep.subr.bf16.mxu0 0
      %458 = vmatpush1.bf16.msra.mxu0 %v439
      %459 = vmatprep.subr.bf16.mxu0 0
      %460 = vmatpush1.bf16.msra.mxu0 %v438
      %461 = vmatprep.subr.bf16.mxu0 0
      %462 = vmatpush1.bf16.msra.mxu0 %v437
      %463 = vmatprep.subr.bf16.mxu0 0
      %464 = vmatpush1.bf16.msra.mxu0 %v436
      %465 = vmatprep.subr.bf16.mxu0 0
      %466 = vmatpush1.bf16.msra.mxu0 %v435
      %467 = vmatprep.subr.bf16.mxu0 0
      %468 = vmatpush2.bf16.msra.mxu0 0
      %469 = vmatprep.subr.bf16.mxu0 0
      %470 = vmatpush2.bf16.msra.mxu0 0
      %471 = vmatprep.subr.bf16.mxu0 0
      %472 = vmatpush2.bf16.msra.mxu0 0
      %473 = vmatprep.subr.bf16.mxu0 0
      %474 = vmatpush2.bf16.msra.mxu0 0
      %475 = vmatprep.subr.bf16.mxu0 0
      %476 = vmatpush2.bf16.msra.mxu0 0
      %477 = vmatprep.subr.bf16.mxu0 0
      %478 = vmatpush2.bf16.msra.mxu0 0
      %479 = vmatprep.subr.bf16.mxu0 0
      %480 = vmatpush2.bf16.msra.mxu0 0
      %481 = vmatprep.subr.bf16.mxu0 0
      %482 = vmatpush2.bf16.msra.mxu0 0
      %483 = vmatprep.mubr.bf16.mxu0 0
      %484 = vmatmul.mubr.bf16.gmra.mxu0 %v395
      %v485 = vpop.f32.mrf.mxu0
      %v486 = vadd.f32 0.0, %v485
      %v487 = vpop.f32.mrf.mxu0
      %v488 = vpop.f32.mrf.mxu0
      %v489 = vadd.f32 0.0, %v488
      %v490 = vpop.f32.mrf.mxu0
      %491 = vmatprep.mubr.bf16.mxu0 0
      %492 = vmatmul.mubr.bf16.gmra.mxu0 %v396
      %v493 = vpop.f32.mrf.mxu0
      %v494 = vadd.f32 0.0, %v493
      %v495 = vpop.f32.mrf.mxu0
      %v496 = vpop.f32.mrf.mxu0
      %v497 = vadd.f32 0.0, %v496
      %v498 = vpop.f32.mrf.mxu0
      %499 = vmatprep.mubr.bf16.mxu0 0
      %500 = vmatmul.mubr.bf16.gmra.mxu0 %v397
      %v501 = vpop.f32.mrf.mxu0
      %v502 = vadd.f32 0.0, %v501
      %v503 = vpop.f32.mrf.mxu0
      %v504 = vpop.f32.mrf.mxu0
      %v505 = vadd.f32 0.0, %v504
      %v506 = vpop.f32.mrf.mxu0
      %507 = vmatprep.mubr.bf16.mxu0 0
      %508 = vmatmul.mubr.bf16.gmra.mxu0 %v398
      %v509 = vpop.f32.mrf.mxu0
      %v510 = vadd.f32 0.0, %v509
      %v511 = vpop.f32.mrf.mxu0
      %v512 = vpop.f32.mrf.mxu0
      %v513 = vadd.f32 0.0, %v512
      %v514 = vpop.f32.mrf.mxu0
      %515 = vdwg.mxu0
      %v524 = vunpack.c.l.b16 %v223
      %v525 = vunpack.c.l.b16 %v224
      %v526 = vunpack.c.l.b16 %v225
      %v527 = vunpack.c.l.b16 %v226
      %v528 = vunpack.c.l.b16 %v227
      %v529 = vunpack.c.l.b16 %v228
      %v530 = vunpack.c.l.b16 %v229
      %v531 = vunpack.c.l.b16 %v230
      %v532 = vpack.c.b16 %v525, %v524
      %v533 = vpack.c.b16 %v527, %v526
      %v534 = vpack.c.b16 %v529, %v528
      %v535 = vpack.c.b16 %v531, %v530
      %v556 = vunpack.c.l.b16 %v231
      %v557 = vunpack.c.l.b16 %v232
      %v558 = vunpack.c.l.b16 %v233
      %v559 = vunpack.c.l.b16 %v234
      %v560 = vunpack.c.l.b16 %v235
      %v561 = vunpack.c.l.b16 %v236
      %v562 = vunpack.c.l.b16 %v237
      %v563 = vunpack.c.l.b16 %v238
      %v564 = vunpack.c.l.b16 %v239
      %v565 = vunpack.c.l.b16 %v240
      %v566 = vunpack.c.l.b16 %v241
      %v567 = vunpack.c.l.b16 %v242
      %v568 = vunpack.c.l.b16 %v243
      %v569 = vunpack.c.l.b16 %v244
      %v570 = vunpack.c.l.b16 %v245
      %v571 = vunpack.c.l.b16 %v246
      %v572 = vpack.c.b16 %v557, %v556
      %v573 = vpack.c.b16 %v559, %v558
      %v574 = vpack.c.b16 %v561, %v560
      %v575 = vpack.c.b16 %v563, %v562
      %v576 = vpack.c.b16 %v565, %v564
      %v577 = vpack.c.b16 %v567, %v566
      %v578 = vpack.c.b16 %v569, %v568
      %v579 = vpack.c.b16 %v571, %v570
      %588 = vmatprep.subr.bf16.mxu0 0
      %589 = vmatpush1.bf16.msra.mxu0 %v579
      %590 = vmatprep.subr.bf16.mxu0 0
      %591 = vmatpush1.bf16.msra.mxu0 %v578
      %592 = vmatprep.subr.bf16.mxu0 0
      %593 = vmatpush1.bf16.msra.mxu0 %v577
      %594 = vmatprep.subr.bf16.mxu0 0
      %595 = vmatpush1.bf16.msra.mxu0 %v576
      %596 = vmatprep.subr.bf16.mxu0 0
      %597 = vmatpush1.bf16.msra.mxu0 %v575
      %598 = vmatprep.subr.bf16.mxu0 0
      %599 = vmatpush1.bf16.msra.mxu0 %v574
      %600 = vmatprep.subr.bf16.mxu0 0
      %601 = vmatpush1.bf16.msra.mxu0 %v573
      %602 = vmatprep.subr.bf16.mxu0 0
      %603 = vmatpush1.bf16.msra.mxu0 %v572
      %604 = vmatprep.subr.bf16.mxu0 0
      %605 = vmatpush2.bf16.msra.mxu0 0
      %606 = vmatprep.subr.bf16.mxu0 0
      %607 = vmatpush2.bf16.msra.mxu0 0
      %608 = vmatprep.subr.bf16.mxu0 0
      %609 = vmatpush2.bf16.msra.mxu0 0
      %610 = vmatprep.subr.bf16.mxu0 0
      %611 = vmatpush2.bf16.msra.mxu0 0
      %612 = vmatprep.subr.bf16.mxu0 0
      %613 = vmatpush2.bf16.msra.mxu0 0
      %614 = vmatprep.subr.bf16.mxu0 0
      %615 = vmatpush2.bf16.msra.mxu0 0
      %616 = vmatprep.subr.bf16.mxu0 0
      %617 = vmatpush2.bf16.msra.mxu0 0
      %618 = vmatprep.subr.bf16.mxu0 0
      %619 = vmatpush2.bf16.msra.mxu0 0
      %620 = vmatprep.mubr.bf16.mxu0 0
      %621 = vmatmul.mubr.bf16.gmra.mxu0 %v532
      %v622 = vpop.f32.mrf.mxu0
      %v623 = vadd.f32 %v486, %v622
      %v624 = vpop.f32.mrf.mxu0
      %v625 = vpop.f32.mrf.mxu0
      %v626 = vadd.f32 %v489, %v625
      %v627 = vpop.f32.mrf.mxu0
      %628 = vmatprep.mubr.bf16.mxu0 0
      %629 = vmatmul.mubr.bf16.gmra.mxu0 %v533
      %v630 = vpop.f32.mrf.mxu0
      %v631 = vadd.f32 %v494, %v630
      %v632 = vpop.f32.mrf.mxu0
      %v633 = vpop.f32.mrf.mxu0
      %v634 = vadd.f32 %v497, %v633
      %v635 = vpop.f32.mrf.mxu0
      %636 = vmatprep.mubr.bf16.mxu0 0
      %637 = vmatmul.mubr.bf16.gmra.mxu0 %v534
      %v638 = vpop.f32.mrf.mxu0
      %v639 = vadd.f32 %v502, %v638
      %v640 = vpop.f32.mrf.mxu0
      %v641 = vpop.f32.mrf.mxu0
      %v642 = vadd.f32 %v505, %v641
      %v643 = vpop.f32.mrf.mxu0
      %644 = vmatprep.mubr.bf16.mxu0 0
      %645 = vmatmul.mubr.bf16.gmra.mxu0 %v535
      %v646 = vpop.f32.mrf.mxu0
      %v647 = vadd.f32 %v510, %v646
      %v648 = vpop.f32.mrf.mxu0
      %v649 = vpop.f32.mrf.mxu0
      %v650 = vadd.f32 %v513, %v649
      %v651 = vpop.f32.mrf.mxu0
      %652 = vdwg.mxu0
      %s653 = scalar_lea.vmem %s206, 8
      %v654 = vld [vmem:[%s653] sm:$0xf]
      %v655 = vld [vmem:[%s653 + $0x8] sm:$0xf]
      %v656 = vld [vmem:[%s653 + $0x10] sm:$0xf]
      %v657 = vld [vmem:[%s653 + $0x18] sm:$0xf]
      %v658 = vld [vmem:[%s653 + $0x20] sm:$0xf]
      %v659 = vld [vmem:[%s653 + $0x28] sm:$0xf]
      %v660 = vld [vmem:[%s653 + $0x30] sm:$0xf]
      %v661 = vld [vmem:[%s653 + $0x38] sm:$0xf]
      %s662 = scalar_lea.vmem %s210, 128
      %v663 = vld [vmem:[%s662] sm:$0xf]
      %v664 = vld [vmem:[%s662 + $0x4] sm:$0xf]
      %v665 = vld [vmem:[%s662 + $0x8] sm:$0xf]
      %v666 = vld [vmem:[%s662 + $0xc] sm:$0xf]
      %v667 = vld [vmem:[%s662 + $0x10] sm:$0xf]
      %v668 = vld [vmem:[%s662 + $0x14] sm:$0xf]
      %v669 = vld [vmem:[%s662 + $0x18] sm:$0xf]
      %v670 = vld [vmem:[%s662 + $0x1c] sm:$0xf]
      %v671 = vld [vmem:[%s662 + $0x20] sm:$0xf]
      %v672 = vld [vmem:[%s662 + $0x24] sm:$0xf]
      %v673 = vld [vmem:[%s662 + $0x28] sm:$0xf]
      %v674 = vld [vmem:[%s662 + $0x2c] sm:$0xf]
      %v675 = vld [vmem:[%s662 + $0x30] sm:$0xf]
      %v676 = vld [vmem:[%s662 + $0x34] sm:$0xf]
      %v677 = vld [vmem:[%s662 + $0x38] sm:$0xf]
      %v678 = vld [vmem:[%s662 + $0x3c] sm:$0xf]
      %v687 = vunpack.c.l.b16 %v654
      %v688 = vunpack.c.l.b16 %v655
      %v689 = vunpack.c.l.b16 %v656
      %v690 = vunpack.c.l.b16 %v657
      %v691 = vunpack.c.l.b16 %v658
      %v692 = vunpack.c.l.b16 %v659
      %v693 = vunpack.c.l.b16 %v660
      %v694 = vunpack.c.l.b16 %v661
      %v695 = vpack.c.b16 %v688, %v687
      %v696 = vpack.c.b16 %v690, %v689
      %v697 = vpack.c.b16 %v692, %v691
      %v698 = vpack.c.b16 %v694, %v693
      %v719 = vunpack.c.l.b16 %v663
      %v720 = vunpack.c.l.b16 %v664
      %v721 = vunpack.c.l.b16 %v665
      %v722 = vunpack.c.l.b16 %v666
      %v723 = vunpack.c.l.b16 %v667
      %v724 = vunpack.c.l.b16 %v668
      %v725 = vunpack.c.l.b16 %v669
      %v726 = vunpack.c.l.b16 %v670
      %v727 = vunpack.c.l.b16 %v671
      %v728 = vunpack.c.l.b16 %v672
      %v729 = vunpack.c.l.b16 %v673
      %v730 = vunpack.c.l.b16 %v674
      %v731 = vunpack.c.l.b16 %v675
      %v732 = vunpack.c.l.b16 %v676
      %v733 = vunpack.c.l.b16 %v677
      %v734 = vunpack.c.l.b16 %v678
      %v735 = vpack.c.b16 %v720, %v719
      %v736 = vpack.c.b16 %v722, %v721
      %v737 = vpack.c.b16 %v724, %v723
      %v738 = vpack.c.b16 %v726, %v725
      %v739 = vpack.c.b16 %v728, %v727
      %v740 = vpack.c.b16 %v730, %v729
      %v741 = vpack.c.b16 %v732, %v731
      %v742 = vpack.c.b16 %v734, %v733
      %751 = vmatprep.subr.bf16.mxu0 0
      %752 = vmatpush1.bf16.msra.mxu0 %v742
      %753 = vmatprep.subr.bf16.mxu0 0
      %754 = vmatpush1.bf16.msra.mxu0 %v741
      %755 = vmatprep.subr.bf16.mxu0 0
      %756 = vmatpush1.bf16.msra.mxu0 %v740
      %757 = vmatprep.subr.bf16.mxu0 0
      %758 = vmatpush1.bf16.msra.mxu0 %v739
      %759 = vmatprep.subr.bf16.mxu0 0
      %760 = vmatpush1.bf16.msra.mxu0 %v738
      %761 = vmatprep.subr.bf16.mxu0 0
      %762 = vmatpush1.bf16.msra.mxu0 %v737
      %763 = vmatprep.subr.bf16.mxu0 0
      %764 = vmatpush1.bf16.msra.mxu0 %v736
      %765 = vmatprep.subr.bf16.mxu0 0
      %766 = vmatpush1.bf16.msra.mxu0 %v735
      %767 = vmatprep.subr.bf16.mxu0 0
      %768 = vmatpush2.bf16.msra.mxu0 0
      %769 = vmatprep.subr.bf16.mxu0 0
      %770 = vmatpush2.bf16.msra.mxu0 0
      %771 = vmatprep.subr.bf16.mxu0 0
      %772 = vmatpush2.bf16.msra.mxu0 0
      %773 = vmatprep.subr.bf16.mxu0 0
      %774 = vmatpush2.bf16.msra.mxu0 0
      %775 = vmatprep.subr.bf16.mxu0 0
      %776 = vmatpush2.bf16.msra.mxu0 0
      %777 = vmatprep.subr.bf16.mxu0 0
      %778 = vmatpush2.bf16.msra.mxu0 0
      %779 = vmatprep.subr.bf16.mxu0 0
      %780 = vmatpush2.bf16.msra.mxu0 0
      %781 = vmatprep.subr.bf16.mxu0 0
      %782 = vmatpush2.bf16.msra.mxu0 0
      %783 = vmatprep.mubr.bf16.mxu0 0
      %784 = vmatmul.mubr.bf16.gmra.mxu0 %v695
      %v785 = vpop.f32.mrf.mxu0
      %v786 = vadd.f32 0.0, %v785
      %v787 = vpop.f32.mrf.mxu0
      %v788 = vpop.f32.mrf.mxu0
      %v789 = vadd.f32 0.0, %v788
      %v790 = vpop.f32.mrf.mxu0
      %791 = vmatprep.mubr.bf16.mxu0 0
      %792 = vmatmul.mubr.bf16.gmra.mxu0 %v696
      %v793 = vpop.f32.mrf.mxu0
      %v794 = vadd.f32 0.0, %v793
      %v795 = vpop.f32.mrf.mxu0
      %v796 = vpop.f32.mrf.mxu0
      %v797 = vadd.f32 0.0, %v796
      %v798 = vpop.f32.mrf.mxu0
      %799 = vmatprep.mubr.bf16.mxu0 0
      %800 = vmatmul.mubr.bf16.gmra.mxu0 %v697
      %v801 = vpop.f32.mrf.mxu0
      %v802 = vadd.f32 0.0, %v801
      %v803 = vpop.f32.mrf.mxu0
      %v804 = vpop.f32.mrf.mxu0
      %v805 = vadd.f32 0.0, %v804
      %v806 = vpop.f32.mrf.mxu0
      %807 = vmatprep.mubr.bf16.mxu0 0
      %808 = vmatmul.mubr.bf16.gmra.mxu0 %v698
      %v809 = vpop.f32.mrf.mxu0
      %v810 = vadd.f32 0.0, %v809
      %v811 = vpop.f32.mrf.mxu0
      %v812 = vpop.f32.mrf.mxu0
      %v813 = vadd.f32 0.0, %v812
      %v814 = vpop.f32.mrf.mxu0
      %815 = vdwg.mxu0
      %v816 = vadd.f32 %v623, %v786
      %v817 = vadd.f32 %v626, %v789
      %v818 = vadd.f32 %v631, %v794
      %v819 = vadd.f32 %v634, %v797
      %v820 = vadd.f32 %v639, %v802
      %v821 = vadd.f32 %v642, %v805
      %v822 = vadd.f32 %v647, %v810
      %v823 = vadd.f32 %v650, %v813
      %v824 = vld [vmem:[%s653] sm:$0xf]
      %v825 = vld [vmem:[%s653 + $0x4] sm:$0x1]
      %v826 = vld [vmem:[%s653 + $0x8] sm:$0xf]
      %v827 = vld [vmem:[%s653 + $0xc] sm:$0x1]
      %v828 = vld [vmem:[%s653 + $0x10] sm:$0xf]
      %v829 = vld [vmem:[%s653 + $0x14] sm:$0x1]
      %v830 = vld [vmem:[%s653 + $0x18] sm:$0xf]
      %v831 = vld [vmem:[%s653 + $0x1c] sm:$0x1]
      %v832 = vld [vmem:[%s653 + $0x20] sm:$0xf]
      %v833 = vld [vmem:[%s653 + $0x24] sm:$0x1]
      %v834 = vld [vmem:[%s653 + $0x28] sm:$0xf]
      %v835 = vld [vmem:[%s653 + $0x2c] sm:$0x1]
      %v836 = vld [vmem:[%s653 + $0x30] sm:$0xf]
      %v837 = vld [vmem:[%s653 + $0x34] sm:$0x1]
      %v838 = vld [vmem:[%s653 + $0x38] sm:$0xf]
      %v839 = vld [vmem:[%s653 + $0x3c] sm:$0x1]
      %v841 = vshrl.u32 %v824, 16
      %v843 = vrot.slane %v841, 4
      %v844 = vshll.u32 %v824, 16
      %v846 = vrot.slane %v844, 5
      %v847 = vor.u32 %v843, %v846
      %v848 = vrot.slane %v847, 4
      %v850 = vshll.u32 %v825, 16
      %v852 = vrot.slane %v850, 5
      %v853 = vsel %vm257, %v848, %v852
      %v855 = vshrl.u32 %v826, 16
      %v857 = vrot.slane %v855, 4
      %v858 = vshll.u32 %v826, 16
      %v860 = vrot.slane %v858, 5
      %v861 = vor.u32 %v857, %v860
      %v862 = vrot.slane %v861, 4
      %v864 = vshll.u32 %v827, 16
      %v866 = vrot.slane %v864, 5
      %v867 = vsel %vm257, %v862, %v866
      %v869 = vshrl.u32 %v828, 16
      %v871 = vrot.slane %v869, 4
      %v872 = vshll.u32 %v828, 16
      %v874 = vrot.slane %v872, 5
      %v875 = vor.u32 %v871, %v874
      %v876 = vrot.slane %v875, 4
      %v878 = vshll.u32 %v829, 16
      %v880 = vrot.slane %v878, 5
      %v881 = vsel %vm257, %v876, %v880
      %v883 = vshrl.u32 %v830, 16
      %v885 = vrot.slane %v883, 4
      %v886 = vshll.u32 %v830, 16
      %v888 = vrot.slane %v886, 5
      %v889 = vor.u32 %v885, %v888
      %v890 = vrot.slane %v889, 4
      %v892 = vshll.u32 %v831, 16
      %v894 = vrot.slane %v892, 5
      %v895 = vsel %vm257, %v890, %v894
      %v897 = vshrl.u32 %v832, 16
      %v899 = vrot.slane %v897, 4
      %v900 = vshll.u32 %v832, 16
      %v902 = vrot.slane %v900, 5
      %v903 = vor.u32 %v899, %v902
      %v904 = vrot.slane %v903, 4
      %v906 = vshll.u32 %v833, 16
      %v908 = vrot.slane %v906, 5
      %v909 = vsel %vm257, %v904, %v908
      %v911 = vshrl.u32 %v834, 16
      %v913 = vrot.slane %v911, 4
      %v914 = vshll.u32 %v834, 16
      %v916 = vrot.slane %v914, 5
      %v917 = vor.u32 %v913, %v916
      %v918 = vrot.slane %v917, 4
      %v920 = vshll.u32 %v835, 16
      %v922 = vrot.slane %v920, 5
      %v923 = vsel %vm257, %v918, %v922
      %v925 = vshrl.u32 %v836, 16
      %v927 = vrot.slane %v925, 4
      %v928 = vshll.u32 %v836, 16
      %v930 = vrot.slane %v928, 5
      %v931 = vor.u32 %v927, %v930
      %v932 = vrot.slane %v931, 4
      %v934 = vshll.u32 %v837, 16
      %v936 = vrot.slane %v934, 5
      %v937 = vsel %vm257, %v932, %v936
      %v939 = vshrl.u32 %v838, 16
      %v941 = vrot.slane %v939, 4
      %v942 = vshll.u32 %v838, 16
      %v944 = vrot.slane %v942, 5
      %v945 = vor.u32 %v941, %v944
      %v946 = vrot.slane %v945, 4
      %v948 = vshll.u32 %v839, 16
      %v950 = vrot.slane %v948, 5
      %v951 = vsel %vm257, %v946, %v950
      %s952 = scalar_lea.vmem %s210, 192
      %v953 = vld [vmem:[%s952] sm:$0xf]
      %v954 = vld [vmem:[%s952 + $0x4] sm:$0xf]
      %v955 = vld [vmem:[%s952 + $0x8] sm:$0xf]
      %v956 = vld [vmem:[%s952 + $0xc] sm:$0xf]
      %v957 = vld [vmem:[%s952 + $0x10] sm:$0xf]
      %v958 = vld [vmem:[%s952 + $0x14] sm:$0xf]
      %v959 = vld [vmem:[%s952 + $0x18] sm:$0xf]
      %v960 = vld [vmem:[%s952 + $0x1c] sm:$0xf]
      %v961 = vld [vmem:[%s952 + $0x20] sm:$0xf]
      %v962 = vld [vmem:[%s952 + $0x24] sm:$0xf]
      %v963 = vld [vmem:[%s952 + $0x28] sm:$0xf]
      %v964 = vld [vmem:[%s952 + $0x2c] sm:$0xf]
      %v965 = vld [vmem:[%s952 + $0x30] sm:$0xf]
      %v966 = vld [vmem:[%s952 + $0x34] sm:$0xf]
      %v967 = vld [vmem:[%s952 + $0x38] sm:$0xf]
      %v968 = vld [vmem:[%s952 + $0x3c] sm:$0xf]
      %v969 = vunpack.c.l.b16 %v853
      %v970 = vunpack.c.l.b16 %v867
      %v971 = vunpack.c.l.b16 %v881
      %v972 = vunpack.c.l.b16 %v895
      %v973 = vunpack.c.l.b16 %v909
      %v974 = vunpack.c.l.b16 %v923
      %v975 = vunpack.c.l.b16 %v937
      %v976 = vunpack.c.l.b16 %v951
      %v977 = vpack.c.b16 %v970, %v969
      %v978 = vpack.c.b16 %v972, %v971
      %v979 = vpack.c.b16 %v974, %v973
      %v980 = vpack.c.b16 %v976, %v975
      %v1001 = vunpack.c.l.b16 %v953
      %v1002 = vunpack.c.l.b16 %v954
      %v1003 = vunpack.c.l.b16 %v955
      %v1004 = vunpack.c.l.b16 %v956
      %v1005 = vunpack.c.l.b16 %v957
      %v1006 = vunpack.c.l.b16 %v958
      %v1007 = vunpack.c.l.b16 %v959
      %v1008 = vunpack.c.l.b16 %v960
      %v1009 = vunpack.c.l.b16 %v961
      %v1010 = vunpack.c.l.b16 %v962
      %v1011 = vunpack.c.l.b16 %v963
      %v1012 = vunpack.c.l.b16 %v964
      %v1013 = vunpack.c.l.b16 %v965
      %v1014 = vunpack.c.l.b16 %v966
      %v1015 = vunpack.c.l.b16 %v967
      %v1016 = vunpack.c.l.b16 %v968
      %v1017 = vpack.c.b16 %v1002, %v1001
      %v1018 = vpack.c.b16 %v1004, %v1003
      %v1019 = vpack.c.b16 %v1006, %v1005
      %v1020 = vpack.c.b16 %v1008, %v1007
      %v1021 = vpack.c.b16 %v1010, %v1009
      %v1022 = vpack.c.b16 %v1012, %v1011
      %v1023 = vpack.c.b16 %v1014, %v1013
      %v1024 = vpack.c.b16 %v1016, %v1015
      %1033 = vmatprep.subr.bf16.mxu0 0
      %1034 = vmatpush1.bf16.msra.mxu0 %v1024
      %1035 = vmatprep.subr.bf16.mxu0 0
      %1036 = vmatpush1.bf16.msra.mxu0 %v1023
      %1037 = vmatprep.subr.bf16.mxu0 0
      %1038 = vmatpush1.bf16.msra.mxu0 %v1022
      %1039 = vmatprep.subr.bf16.mxu0 0
      %1040 = vmatpush1.bf16.msra.mxu0 %v1021
      %1041 = vmatprep.subr.bf16.mxu0 0
      %1042 = vmatpush1.bf16.msra.mxu0 %v1020
      %1043 = vmatprep.subr.bf16.mxu0 0
      %1044 = vmatpush1.bf16.msra.mxu0 %v1019
      %1045 = vmatprep.subr.bf16.mxu0 0
      %1046 = vmatpush1.bf16.msra.mxu0 %v1018
      %1047 = vmatprep.subr.bf16.mxu0 0
      %1048 = vmatpush1.bf16.msra.mxu0 %v1017
      %1049 = vmatprep.subr.bf16.mxu0 0
      %1050 = vmatpush2.bf16.msra.mxu0 0
      %1051 = vmatprep.subr.bf16.mxu0 0
      %1052 = vmatpush2.bf16.msra.mxu0 0
      %1053 = vmatprep.subr.bf16.mxu0 0
      %1054 = vmatpush2.bf16.msra.mxu0 0
      %1055 = vmatprep.subr.bf16.mxu0 0
      %1056 = vmatpush2.bf16.msra.mxu0 0
      %1057 = vmatprep.subr.bf16.mxu0 0
      %1058 = vmatpush2.bf16.msra.mxu0 0
      %1059 = vmatprep.subr.bf16.mxu0 0
      %1060 = vmatpush2.bf16.msra.mxu0 0
      %1061 = vmatprep.subr.bf16.mxu0 0
      %1062 = vmatpush2.bf16.msra.mxu0 0
      %1063 = vmatprep.subr.bf16.mxu0 0
      %1064 = vmatpush2.bf16.msra.mxu0 0
      %1065 = vmatprep.mubr.bf16.mxu0 0
      %1066 = vmatmul.mubr.bf16.gmra.mxu0 %v977
      %v1067 = vpop.f32.mrf.mxu0
      %v1068 = vadd.f32 0.0, %v1067
      %v1069 = vpop.f32.mrf.mxu0
      %v1070 = vpop.f32.mrf.mxu0
      %v1071 = vadd.f32 0.0, %v1070
      %v1072 = vpop.f32.mrf.mxu0
      %1073 = vmatprep.mubr.bf16.mxu0 0
      %1074 = vmatmul.mubr.bf16.gmra.mxu0 %v978
      %v1075 = vpop.f32.mrf.mxu0
      %v1076 = vadd.f32 0.0, %v1075
      %v1077 = vpop.f32.mrf.mxu0
      %v1078 = vpop.f32.mrf.mxu0
      %v1079 = vadd.f32 0.0, %v1078
      %v1080 = vpop.f32.mrf.mxu0
      %1081 = vmatprep.mubr.bf16.mxu0 0
      %1082 = vmatmul.mubr.bf16.gmra.mxu0 %v979
      %v1083 = vpop.f32.mrf.mxu0
      %v1084 = vadd.f32 0.0, %v1083
      %v1085 = vpop.f32.mrf.mxu0
      %v1086 = vpop.f32.mrf.mxu0
      %v1087 = vadd.f32 0.0, %v1086
      %v1088 = vpop.f32.mrf.mxu0
      %1089 = vmatprep.mubr.bf16.mxu0 0
      %1090 = vmatmul.mubr.bf16.gmra.mxu0 %v980
      %v1091 = vpop.f32.mrf.mxu0
      %v1092 = vadd.f32 0.0, %v1091
      %v1093 = vpop.f32.mrf.mxu0
      %v1094 = vpop.f32.mrf.mxu0
      %v1095 = vadd.f32 0.0, %v1094
      %v1096 = vpop.f32.mrf.mxu0
      %1097 = vdwg.mxu0
      %v1098 = vadd.f32 %v816, %v1068
      %v1099 = vadd.f32 %v817, %v1071
      %v1100 = vadd.f32 %v818, %v1076
      %v1101 = vadd.f32 %v819, %v1079
      %v1102 = vadd.f32 %v820, %v1084
      %v1103 = vadd.f32 %v821, %v1087
      %v1104 = vadd.f32 %v822, %v1092
      %v1105 = vadd.f32 %v823, %v1095
      %s1106 = scalar_lea.vmem %s206, 72
      %v1107 = vld [vmem:[%s1106] sm:$0xf]
      %v1108 = vld [vmem:[%s1106 + $0x8] sm:$0xf]
      %v1109 = vld [vmem:[%s1106 + $0x10] sm:$0xf]
      %v1110 = vld [vmem:[%s1106 + $0x18] sm:$0xf]
      %v1111 = vld [vmem:[%s1106 + $0x20] sm:$0xf]
      %v1112 = vld [vmem:[%s1106 + $0x28] sm:$0xf]
      %v1113 = vld [vmem:[%s1106 + $0x30] sm:$0xf]
      %v1114 = vld [vmem:[%s1106 + $0x38] sm:$0xf]
      %s1115 = scalar_lea.vmem %s210, 256
      %v1116 = vld [vmem:[%s1115] sm:$0xf]
      %v1117 = vld [vmem:[%s1115 + $0x4] sm:$0xf]
      %v1118 = vld [vmem:[%s1115 + $0x8] sm:$0xf]
      %v1119 = vld [vmem:[%s1115 + $0xc] sm:$0xf]
      %v1120 = vld [vmem:[%s1115 + $0x10] sm:$0xf]
      %v1121 = vld [vmem:[%s1115 + $0x14] sm:$0xf]
      %v1122 = vld [vmem:[%s1115 + $0x18] sm:$0xf]
      %v1123 = vld [vmem:[%s1115 + $0x1c] sm:$0xf]
      %v1124 = vld [vmem:[%s1115 + $0x20] sm:$0xf]
      %v1125 = vld [vmem:[%s1115 + $0x24] sm:$0xf]
      %v1126 = vld [vmem:[%s1115 + $0x28] sm:$0xf]
      %v1127 = vld [vmem:[%s1115 + $0x2c] sm:$0xf]
      %v1128 = vld [vmem:[%s1115 + $0x30] sm:$0xf]
      %v1129 = vld [vmem:[%s1115 + $0x34] sm:$0xf]
      %v1130 = vld [vmem:[%s1115 + $0x38] sm:$0xf]
      %v1131 = vld [vmem:[%s1115 + $0x3c] sm:$0xf]
      %v1140 = vunpack.c.l.b16 %v1107
      %v1141 = vunpack.c.l.b16 %v1108
      %v1142 = vunpack.c.l.b16 %v1109
      %v1143 = vunpack.c.l.b16 %v1110
      %v1144 = vunpack.c.l.b16 %v1111
      %v1145 = vunpack.c.l.b16 %v1112
      %v1146 = vunpack.c.l.b16 %v1113
      %v1147 = vunpack.c.l.b16 %v1114
      %v1148 = vpack.c.b16 %v1141, %v1140
      %v1149 = vpack.c.b16 %v1143, %v1142
      %v1150 = vpack.c.b16 %v1145, %v1144
      %v1151 = vpack.c.b16 %v1147, %v1146
      %v1172 = vunpack.c.l.b16 %v1116
      %v1173 = vunpack.c.l.b16 %v1117
      %v1174 = vunpack.c.l.b16 %v1118
      %v1175 = vunpack.c.l.b16 %v1119
      %v1176 = vunpack.c.l.b16 %v1120
      %v1177 = vunpack.c.l.b16 %v1121
      %v1178 = vunpack.c.l.b16 %v1122
      %v1179 = vunpack.c.l.b16 %v1123
      %v1180 = vunpack.c.l.b16 %v1124
      %v1181 = vunpack.c.l.b16 %v1125
      %v1182 = vunpack.c.l.b16 %v1126
      %v1183 = vunpack.c.l.b16 %v1127
      %v1184 = vunpack.c.l.b16 %v1128
      %v1185 = vunpack.c.l.b16 %v1129
      %v1186 = vunpack.c.l.b16 %v1130
      %v1187 = vunpack.c.l.b16 %v1131
      %v1188 = vpack.c.b16 %v1173, %v1172
      %v1189 = vpack.c.b16 %v1175, %v1174
      %v1190 = vpack.c.b16 %v1177, %v1176
      %v1191 = vpack.c.b16 %v1179, %v1178
      %v1192 = vpack.c.b16 %v1181, %v1180
      %v1193 = vpack.c.b16 %v1183, %v1182
      %v1194 = vpack.c.b16 %v1185, %v1184
      %v1195 = vpack.c.b16 %v1187, %v1186
      %1204 = vmatprep.subr.bf16.mxu0 0
      %1205 = vmatpush1.bf16.msra.mxu0 %v1195
      %1206 = vmatprep.subr.bf16.mxu0 0
      %1207 = vmatpush1.bf16.msra.mxu0 %v1194
      %1208 = vmatprep.subr.bf16.mxu0 0
      %1209 = vmatpush1.bf16.msra.mxu0 %v1193
      %1210 = vmatprep.subr.bf16.mxu0 0
      %1211 = vmatpush1.bf16.msra.mxu0 %v1192
      %1212 = vmatprep.subr.bf16.mxu0 0
      %1213 = vmatpush1.bf16.msra.mxu0 %v1191
      %1214 = vmatprep.subr.bf16.mxu0 0
      %1215 = vmatpush1.bf16.msra.mxu0 %v1190
      %1216 = vmatprep.subr.bf16.mxu0 0
      %1217 = vmatpush1.bf16.msra.mxu0 %v1189
      %1218 = vmatprep.subr.bf16.mxu0 0
      %1219 = vmatpush1.bf16.msra.mxu0 %v1188
      %1220 = vmatprep.subr.bf16.mxu0 0
      %1221 = vmatpush2.bf16.msra.mxu0 0
      %1222 = vmatprep.subr.bf16.mxu0 0
      %1223 = vmatpush2.bf16.msra.mxu0 0
      %1224 = vmatprep.subr.bf16.mxu0 0
      %1225 = vmatpush2.bf16.msra.mxu0 0
      %1226 = vmatprep.subr.bf16.mxu0 0
      %1227 = vmatpush2.bf16.msra.mxu0 0
      %1228 = vmatprep.subr.bf16.mxu0 0
      %1229 = vmatpush2.bf16.msra.mxu0 0
      %1230 = vmatprep.subr.bf16.mxu0 0
      %1231 = vmatpush2.bf16.msra.mxu0 0
      %1232 = vmatprep.subr.bf16.mxu0 0
      %1233 = vmatpush2.bf16.msra.mxu0 0
      %1234 = vmatprep.subr.bf16.mxu0 0
      %1235 = vmatpush2.bf16.msra.mxu0 0
      %1236 = vmatprep.mubr.bf16.mxu0 0
      %1237 = vmatmul.mubr.bf16.gmra.mxu0 %v1148
      %v1238 = vpop.f32.mrf.mxu0
      %v1239 = vadd.f32 0.0, %v1238
      %v1240 = vpop.f32.mrf.mxu0
      %v1241 = vpop.f32.mrf.mxu0
      %v1242 = vadd.f32 0.0, %v1241
      %v1243 = vpop.f32.mrf.mxu0
      %1244 = vmatprep.mubr.bf16.mxu0 0
      %1245 = vmatmul.mubr.bf16.gmra.mxu0 %v1149
      %v1246 = vpop.f32.mrf.mxu0
      %v1247 = vadd.f32 0.0, %v1246
      %v1248 = vpop.f32.mrf.mxu0
      %v1249 = vpop.f32.mrf.mxu0
      %v1250 = vadd.f32 0.0, %v1249
      %v1251 = vpop.f32.mrf.mxu0
      %1252 = vmatprep.mubr.bf16.mxu0 0
      %1253 = vmatmul.mubr.bf16.gmra.mxu0 %v1150
      %v1254 = vpop.f32.mrf.mxu0
      %v1255 = vadd.f32 0.0, %v1254
      %v1256 = vpop.f32.mrf.mxu0
      %v1257 = vpop.f32.mrf.mxu0
      %v1258 = vadd.f32 0.0, %v1257
      %v1259 = vpop.f32.mrf.mxu0
      %1260 = vmatprep.mubr.bf16.mxu0 0
      %1261 = vmatmul.mubr.bf16.gmra.mxu0 %v1151
      %v1262 = vpop.f32.mrf.mxu0
      %v1263 = vadd.f32 0.0, %v1262
      %v1264 = vpop.f32.mrf.mxu0
      %v1265 = vpop.f32.mrf.mxu0
      %v1266 = vadd.f32 0.0, %v1265
      %v1267 = vpop.f32.mrf.mxu0
      %1268 = vdwg.mxu0
      %v1269 = vadd.f32 %v1098, %v1239
      %v1270 = vadd.f32 %v1099, %v1242
      %v1271 = vadd.f32 %v1100, %v1247
      %v1272 = vadd.f32 %v1101, %v1250
      %v1273 = vadd.f32 %v1102, %v1255
      %v1274 = vadd.f32 %v1103, %v1258
      %v1275 = vadd.f32 %v1104, %v1263
      %v1276 = vadd.f32 %v1105, %v1266
      %v1277 = vld [vmem:[%s1106] sm:$0xf]
      %v1278 = vld [vmem:[%s1106 + $0x4] sm:$0x1]
      %v1279 = vld [vmem:[%s1106 + $0x8] sm:$0xf]
      %v1280 = vld [vmem:[%s1106 + $0xc] sm:$0x1]
      %v1281 = vld [vmem:[%s1106 + $0x10] sm:$0xf]
      %v1282 = vld [vmem:[%s1106 + $0x14] sm:$0x1]
      %v1283 = vld [vmem:[%s1106 + $0x18] sm:$0xf]
      %v1284 = vld [vmem:[%s1106 + $0x1c] sm:$0x1]
      %v1285 = vld [vmem:[%s1106 + $0x20] sm:$0xf]
      %v1286 = vld [vmem:[%s1106 + $0x24] sm:$0x1]
      %v1287 = vld [vmem:[%s1106 + $0x28] sm:$0xf]
      %v1288 = vld [vmem:[%s1106 + $0x2c] sm:$0x1]
      %v1289 = vld [vmem:[%s1106 + $0x30] sm:$0xf]
      %v1290 = vld [vmem:[%s1106 + $0x34] sm:$0x1]
      %v1291 = vld [vmem:[%s1106 + $0x38] sm:$0xf]
      %v1292 = vld [vmem:[%s1106 + $0x3c] sm:$0x1]
      %v1294 = vshrl.u32 %v1277, 16
      %v1296 = vrot.slane %v1294, 4
      %v1297 = vshll.u32 %v1277, 16
      %v1299 = vrot.slane %v1297, 5
      %v1300 = vor.u32 %v1296, %v1299
      %v1301 = vrot.slane %v1300, 4
      %v1303 = vshll.u32 %v1278, 16
      %v1305 = vrot.slane %v1303, 5
      %v1306 = vsel %vm257, %v1301, %v1305
      %v1308 = vshrl.u32 %v1279, 16
      %v1310 = vrot.slane %v1308, 4
      %v1311 = vshll.u32 %v1279, 16
      %v1313 = vrot.slane %v1311, 5
      %v1314 = vor.u32 %v1310, %v1313
      %v1315 = vrot.slane %v1314, 4
      %v1317 = vshll.u32 %v1280, 16
      %v1319 = vrot.slane %v1317, 5
      %v1320 = vsel %vm257, %v1315, %v1319
      %v1322 = vshrl.u32 %v1281, 16
      %v1324 = vrot.slane %v1322, 4
      %v1325 = vshll.u32 %v1281, 16
      %v1327 = vrot.slane %v1325, 5
      %v1328 = vor.u32 %v1324, %v1327
      %v1329 = vrot.slane %v1328, 4
      %v1331 = vshll.u32 %v1282, 16
      %v1333 = vrot.slane %v1331, 5
      %v1334 = vsel %vm257, %v1329, %v1333
      %v1336 = vshrl.u32 %v1283, 16
      %v1338 = vrot.slane %v1336, 4
      %v1339 = vshll.u32 %v1283, 16
      %v1341 = vrot.slane %v1339, 5
      %v1342 = vor.u32 %v1338, %v1341
      %v1343 = vrot.slane %v1342, 4
      %v1345 = vshll.u32 %v1284, 16
      %v1347 = vrot.slane %v1345, 5
      %v1348 = vsel %vm257, %v1343, %v1347
      %v1350 = vshrl.u32 %v1285, 16
      %v1352 = vrot.slane %v1350, 4
      %v1353 = vshll.u32 %v1285, 16
      %v1355 = vrot.slane %v1353, 5
      %v1356 = vor.u32 %v1352, %v1355
      %v1357 = vrot.slane %v1356, 4
      %v1359 = vshll.u32 %v1286, 16
      %v1361 = vrot.slane %v1359, 5
      %v1362 = vsel %vm257, %v1357, %v1361
      %v1364 = vshrl.u32 %v1287, 16
      %v1366 = vrot.slane %v1364, 4
      %v1367 = vshll.u32 %v1287, 16
      %v1369 = vrot.slane %v1367, 5
      %v1370 = vor.u32 %v1366, %v1369
      %v1371 = vrot.slane %v1370, 4
      %v1373 = vshll.u32 %v1288, 16
      %v1375 = vrot.slane %v1373, 5
      %v1376 = vsel %vm257, %v1371, %v1375
      %v1378 = vshrl.u32 %v1289, 16
      %v1380 = vrot.slane %v1378, 4
      %v1381 = vshll.u32 %v1289, 16
      %v1383 = vrot.slane %v1381, 5
      %v1384 = vor.u32 %v1380, %v1383
      %v1385 = vrot.slane %v1384, 4
      %v1387 = vshll.u32 %v1290, 16
      %v1389 = vrot.slane %v1387, 5
      %v1390 = vsel %vm257, %v1385, %v1389
      %v1392 = vshrl.u32 %v1291, 16
      %v1394 = vrot.slane %v1392, 4
      %v1395 = vshll.u32 %v1291, 16
      %v1397 = vrot.slane %v1395, 5
      %v1398 = vor.u32 %v1394, %v1397
      %v1399 = vrot.slane %v1398, 4
      %v1401 = vshll.u32 %v1292, 16
      %v1403 = vrot.slane %v1401, 5
      %v1404 = vsel %vm257, %v1399, %v1403
      %s1405 = scalar_lea.vmem %s210, 320
      %v1406 = vld [vmem:[%s1405] sm:$0xf]
      %v1407 = vld [vmem:[%s1405 + $0x4] sm:$0xf]
      %v1408 = vld [vmem:[%s1405 + $0x8] sm:$0xf]
      %v1409 = vld [vmem:[%s1405 + $0xc] sm:$0xf]
      %v1410 = vld [vmem:[%s1405 + $0x10] sm:$0xf]
      %v1411 = vld [vmem:[%s1405 + $0x14] sm:$0xf]
      %v1412 = vld [vmem:[%s1405 + $0x18] sm:$0xf]
      %v1413 = vld [vmem:[%s1405 + $0x1c] sm:$0xf]
      %v1414 = vld [vmem:[%s1405 + $0x20] sm:$0xf]
      %v1415 = vld [vmem:[%s1405 + $0x24] sm:$0xf]
      %v1416 = vld [vmem:[%s1405 + $0x28] sm:$0xf]
      %v1417 = vld [vmem:[%s1405 + $0x2c] sm:$0xf]
      %v1418 = vld [vmem:[%s1405 + $0x30] sm:$0xf]
      %v1419 = vld [vmem:[%s1405 + $0x34] sm:$0xf]
      %v1420 = vld [vmem:[%s1405 + $0x38] sm:$0xf]
      %v1421 = vld [vmem:[%s1405 + $0x3c] sm:$0xf]
      %v1422 = vunpack.c.l.b16 %v1306
      %v1423 = vunpack.c.l.b16 %v1320
      %v1424 = vunpack.c.l.b16 %v1334
      %v1425 = vunpack.c.l.b16 %v1348
      %v1426 = vunpack.c.l.b16 %v1362
      %v1427 = vunpack.c.l.b16 %v1376
      %v1428 = vunpack.c.l.b16 %v1390
      %v1429 = vunpack.c.l.b16 %v1404
      %v1430 = vpack.c.b16 %v1423, %v1422
      %v1431 = vpack.c.b16 %v1425, %v1424
      %v1432 = vpack.c.b16 %v1427, %v1426
      %v1433 = vpack.c.b16 %v1429, %v1428
      %v1454 = vunpack.c.l.b16 %v1406
      %v1455 = vunpack.c.l.b16 %v1407
      %v1456 = vunpack.c.l.b16 %v1408
      %v1457 = vunpack.c.l.b16 %v1409
      %v1458 = vunpack.c.l.b16 %v1410
      %v1459 = vunpack.c.l.b16 %v1411
      %v1460 = vunpack.c.l.b16 %v1412
      %v1461 = vunpack.c.l.b16 %v1413
      %v1462 = vunpack.c.l.b16 %v1414
      %v1463 = vunpack.c.l.b16 %v1415
      %v1464 = vunpack.c.l.b16 %v1416
      %v1465 = vunpack.c.l.b16 %v1417
      %v1466 = vunpack.c.l.b16 %v1418
      %v1467 = vunpack.c.l.b16 %v1419
      %v1468 = vunpack.c.l.b16 %v1420
      %v1469 = vunpack.c.l.b16 %v1421
      %v1470 = vpack.c.b16 %v1455, %v1454
      %v1471 = vpack.c.b16 %v1457, %v1456
      %v1472 = vpack.c.b16 %v1459, %v1458
      %v1473 = vpack.c.b16 %v1461, %v1460
      %v1474 = vpack.c.b16 %v1463, %v1462
      %v1475 = vpack.c.b16 %v1465, %v1464
      %v1476 = vpack.c.b16 %v1467, %v1466
      %v1477 = vpack.c.b16 %v1469, %v1468
      %1486 = vmatprep.subr.bf16.mxu0 0
      %1487 = vmatpush1.bf16.msra.mxu0 %v1477
      %1488 = vmatprep.subr.bf16.mxu0 0
      %1489 = vmatpush1.bf16.msra.mxu0 %v1476
      %1490 = vmatprep.subr.bf16.mxu0 0
      %1491 = vmatpush1.bf16.msra.mxu0 %v1475
      %1492 = vmatprep.subr.bf16.mxu0 0
      %1493 = vmatpush1.bf16.msra.mxu0 %v1474
      %1494 = vmatprep.subr.bf16.mxu0 0
      %1495 = vmatpush1.bf16.msra.mxu0 %v1473
      %1496 = vmatprep.subr.bf16.mxu0 0
      %1497 = vmatpush1.bf16.msra.mxu0 %v1472
      %1498 = vmatprep.subr.bf16.mxu0 0
      %1499 = vmatpush1.bf16.msra.mxu0 %v1471
      %1500 = vmatprep.subr.bf16.mxu0 0
      %1501 = vmatpush1.bf16.msra.mxu0 %v1470
      %1502 = vmatprep.subr.bf16.mxu0 0
      %1503 = vmatpush2.bf16.msra.mxu0 0
      %1504 = vmatprep.subr.bf16.mxu0 0
      %1505 = vmatpush2.bf16.msra.mxu0 0
      %1506 = vmatprep.subr.bf16.mxu0 0
      %1507 = vmatpush2.bf16.msra.mxu0 0
      %1508 = vmatprep.subr.bf16.mxu0 0
      %1509 = vmatpush2.bf16.msra.mxu0 0
      %1510 = vmatprep.subr.bf16.mxu0 0
      %1511 = vmatpush2.bf16.msra.mxu0 0
      %1512 = vmatprep.subr.bf16.mxu0 0
      %1513 = vmatpush2.bf16.msra.mxu0 0
      %1514 = vmatprep.subr.bf16.mxu0 0
      %1515 = vmatpush2.bf16.msra.mxu0 0
      %1516 = vmatprep.subr.bf16.mxu0 0
      %1517 = vmatpush2.bf16.msra.mxu0 0
      %1518 = vmatprep.mubr.bf16.mxu0 0
      %1519 = vmatmul.mubr.bf16.gmra.mxu0 %v1430
      %v1520 = vpop.f32.mrf.mxu0
      %v1521 = vadd.f32 0.0, %v1520
      %v1522 = vpop.f32.mrf.mxu0
      %v1523 = vpop.f32.mrf.mxu0
      %v1524 = vadd.f32 0.0, %v1523
      %v1525 = vpop.f32.mrf.mxu0
      %1526 = vmatprep.mubr.bf16.mxu0 0
      %1527 = vmatmul.mubr.bf16.gmra.mxu0 %v1431
      %v1528 = vpop.f32.mrf.mxu0
      %v1529 = vadd.f32 0.0, %v1528
      %v1530 = vpop.f32.mrf.mxu0
      %v1531 = vpop.f32.mrf.mxu0
      %v1532 = vadd.f32 0.0, %v1531
      %v1533 = vpop.f32.mrf.mxu0
      %1534 = vmatprep.mubr.bf16.mxu0 0
      %1535 = vmatmul.mubr.bf16.gmra.mxu0 %v1432
      %v1536 = vpop.f32.mrf.mxu0
      %v1537 = vadd.f32 0.0, %v1536
      %v1538 = vpop.f32.mrf.mxu0
      %v1539 = vpop.f32.mrf.mxu0
      %v1540 = vadd.f32 0.0, %v1539
      %v1541 = vpop.f32.mrf.mxu0
      %1542 = vmatprep.mubr.bf16.mxu0 0
      %1543 = vmatmul.mubr.bf16.gmra.mxu0 %v1433
      %v1544 = vpop.f32.mrf.mxu0
      %v1545 = vadd.f32 0.0, %v1544
      %v1546 = vpop.f32.mrf.mxu0
      %v1547 = vpop.f32.mrf.mxu0
      %v1548 = vadd.f32 0.0, %v1547
      %v1549 = vpop.f32.mrf.mxu0
      %1550 = vdwg.mxu0
      %v1551 = vadd.f32 %v1269, %v1521
      %v1552 = vadd.f32 %v1270, %v1524
      %v1553 = vadd.f32 %v1271, %v1529
      %v1554 = vadd.f32 %v1272, %v1532
      %v1555 = vadd.f32 %v1273, %v1537
      %v1556 = vadd.f32 %v1274, %v1540
      %v1557 = vadd.f32 %v1275, %v1545
      %v1558 = vadd.f32 %v1276, %v1548
      %s1559 = scalar_lea.vmem %s206, 80
      %v1560 = vld [vmem:[%s1559] sm:$0xf]
      %v1561 = vld [vmem:[%s1559 + $0x8] sm:$0xf]
      %v1562 = vld [vmem:[%s1559 + $0x10] sm:$0xf]
      %v1563 = vld [vmem:[%s1559 + $0x18] sm:$0xf]
      %v1564 = vld [vmem:[%s1559 + $0x20] sm:$0xf]
      %v1565 = vld [vmem:[%s1559 + $0x28] sm:$0xf]
      %v1566 = vld [vmem:[%s1559 + $0x30] sm:$0xf]
      %v1567 = vld [vmem:[%s1559 + $0x38] sm:$0xf]
      %s1568 = scalar_lea.vmem %s210, 384
      %v1569 = vld [vmem:[%s1568] sm:$0xf]
      %v1570 = vld [vmem:[%s1568 + $0x4] sm:$0xf]
      %v1571 = vld [vmem:[%s1568 + $0x8] sm:$0xf]
      %v1572 = vld [vmem:[%s1568 + $0xc] sm:$0xf]
      %v1573 = vld [vmem:[%s1568 + $0x10] sm:$0xf]
      %v1574 = vld [vmem:[%s1568 + $0x14] sm:$0xf]
      %v1575 = vld [vmem:[%s1568 + $0x18] sm:$0xf]
      %v1576 = vld [vmem:[%s1568 + $0x1c] sm:$0xf]
      %v1577 = vld [vmem:[%s1568 + $0x20] sm:$0xf]
      %v1578 = vld [vmem:[%s1568 + $0x24] sm:$0xf]
      %v1579 = vld [vmem:[%s1568 + $0x28] sm:$0xf]
      %v1580 = vld [vmem:[%s1568 + $0x2c] sm:$0xf]
      %v1581 = vld [vmem:[%s1568 + $0x30] sm:$0xf]
      %v1582 = vld [vmem:[%s1568 + $0x34] sm:$0xf]
      %v1583 = vld [vmem:[%s1568 + $0x38] sm:$0xf]
      %v1584 = vld [vmem:[%s1568 + $0x3c] sm:$0xf]
      %v1593 = vunpack.c.l.b16 %v1560
      %v1594 = vunpack.c.l.b16 %v1561
      %v1595 = vunpack.c.l.b16 %v1562
      %v1596 = vunpack.c.l.b16 %v1563
      %v1597 = vunpack.c.l.b16 %v1564
      %v1598 = vunpack.c.l.b16 %v1565
      %v1599 = vunpack.c.l.b16 %v1566
      %v1600 = vunpack.c.l.b16 %v1567
      %v1601 = vpack.c.b16 %v1594, %v1593
      %v1602 = vpack.c.b16 %v1596, %v1595
      %v1603 = vpack.c.b16 %v1598, %v1597
      %v1604 = vpack.c.b16 %v1600, %v1599
      %v1625 = vunpack.c.l.b16 %v1569
      %v1626 = vunpack.c.l.b16 %v1570
      %v1627 = vunpack.c.l.b16 %v1571
      %v1628 = vunpack.c.l.b16 %v1572
      %v1629 = vunpack.c.l.b16 %v1573
      %v1630 = vunpack.c.l.b16 %v1574
      %v1631 = vunpack.c.l.b16 %v1575
      %v1632 = vunpack.c.l.b16 %v1576
      %v1633 = vunpack.c.l.b16 %v1577
      %v1634 = vunpack.c.l.b16 %v1578
      %v1635 = vunpack.c.l.b16 %v1579
      %v1636 = vunpack.c.l.b16 %v1580
      %v1637 = vunpack.c.l.b16 %v1581
      %v1638 = vunpack.c.l.b16 %v1582
      %v1639 = vunpack.c.l.b16 %v1583
      %v1640 = vunpack.c.l.b16 %v1584
      %v1641 = vpack.c.b16 %v1626, %v1625
      %v1642 = vpack.c.b16 %v1628, %v1627
      %v1643 = vpack.c.b16 %v1630, %v1629
      %v1644 = vpack.c.b16 %v1632, %v1631
      %v1645 = vpack.c.b16 %v1634, %v1633
      %v1646 = vpack.c.b16 %v1636, %v1635
      %v1647 = vpack.c.b16 %v1638, %v1637
      %v1648 = vpack.c.b16 %v1640, %v1639
      %1657 = vmatprep.subr.bf16.mxu0 0
      %1658 = vmatpush1.bf16.msra.mxu0 %v1648
      %1659 = vmatprep.subr.bf16.mxu0 0
      %1660 = vmatpush1.bf16.msra.mxu0 %v1647
      %1661 = vmatprep.subr.bf16.mxu0 0
      %1662 = vmatpush1.bf16.msra.mxu0 %v1646
      %1663 = vmatprep.subr.bf16.mxu0 0
      %1664 = vmatpush1.bf16.msra.mxu0 %v1645
      %1665 = vmatprep.subr.bf16.mxu0 0
      %1666 = vmatpush1.bf16.msra.mxu0 %v1644
      %1667 = vmatprep.subr.bf16.mxu0 0
      %1668 = vmatpush1.bf16.msra.mxu0 %v1643
      %1669 = vmatprep.subr.bf16.mxu0 0
      %1670 = vmatpush1.bf16.msra.mxu0 %v1642
      %1671 = vmatprep.subr.bf16.mxu0 0
      %1672 = vmatpush1.bf16.msra.mxu0 %v1641
      %1673 = vmatprep.subr.bf16.mxu0 0
      %1674 = vmatpush2.bf16.msra.mxu0 0
      %1675 = vmatprep.subr.bf16.mxu0 0
      %1676 = vmatpush2.bf16.msra.mxu0 0
      %1677 = vmatprep.subr.bf16.mxu0 0
      %1678 = vmatpush2.bf16.msra.mxu0 0
      %1679 = vmatprep.subr.bf16.mxu0 0
      %1680 = vmatpush2.bf16.msra.mxu0 0
      %1681 = vmatprep.subr.bf16.mxu0 0
      %1682 = vmatpush2.bf16.msra.mxu0 0
      %1683 = vmatprep.subr.bf16.mxu0 0
      %1684 = vmatpush2.bf16.msra.mxu0 0
      %1685 = vmatprep.subr.bf16.mxu0 0
      %1686 = vmatpush2.bf16.msra.mxu0 0
      %1687 = vmatprep.subr.bf16.mxu0 0
      %1688 = vmatpush2.bf16.msra.mxu0 0
      %1689 = vmatprep.mubr.bf16.mxu0 0
      %1690 = vmatmul.mubr.bf16.gmra.mxu0 %v1601
      %v1691 = vpop.f32.mrf.mxu0
      %v1692 = vadd.f32 0.0, %v1691
      %v1693 = vpop.f32.mrf.mxu0
      %v1694 = vpop.f32.mrf.mxu0
      %v1695 = vadd.f32 0.0, %v1694
      %v1696 = vpop.f32.mrf.mxu0
      %1697 = vmatprep.mubr.bf16.mxu0 0
      %1698 = vmatmul.mubr.bf16.gmra.mxu0 %v1602
      %v1699 = vpop.f32.mrf.mxu0
      %v1700 = vadd.f32 0.0, %v1699
      %v1701 = vpop.f32.mrf.mxu0
      %v1702 = vpop.f32.mrf.mxu0
      %v1703 = vadd.f32 0.0, %v1702
      %v1704 = vpop.f32.mrf.mxu0
      %1705 = vmatprep.mubr.bf16.mxu0 0
      %1706 = vmatmul.mubr.bf16.gmra.mxu0 %v1603
      %v1707 = vpop.f32.mrf.mxu0
      %v1708 = vadd.f32 0.0, %v1707
      %v1709 = vpop.f32.mrf.mxu0
      %v1710 = vpop.f32.mrf.mxu0
      %v1711 = vadd.f32 0.0, %v1710
      %v1712 = vpop.f32.mrf.mxu0
      %1713 = vmatprep.mubr.bf16.mxu0 0
      %1714 = vmatmul.mubr.bf16.gmra.mxu0 %v1604
      %v1715 = vpop.f32.mrf.mxu0
      %v1716 = vadd.f32 0.0, %v1715
      %v1717 = vpop.f32.mrf.mxu0
      %v1718 = vpop.f32.mrf.mxu0
      %v1719 = vadd.f32 0.0, %v1718
      %v1720 = vpop.f32.mrf.mxu0
      %1721 = vdwg.mxu0
      %v1722 = vadd.f32 %v1551, %v1692
      %v1723 = vadd.f32 %v1552, %v1695
      %v1724 = vadd.f32 %v1553, %v1700
      %v1725 = vadd.f32 %v1554, %v1703
      %v1726 = vadd.f32 %v1555, %v1708
      %v1727 = vadd.f32 %v1556, %v1711
      %v1728 = vadd.f32 %v1557, %v1716
      %v1729 = vadd.f32 %v1558, %v1719
      %v1730 = vld [vmem:[%s1559] sm:$0xf]
      %v1731 = vld [vmem:[%s1559 + $0x4] sm:$0x1]
      %v1732 = vld [vmem:[%s1559 + $0x8] sm:$0xf]
      %v1733 = vld [vmem:[%s1559 + $0xc] sm:$0x1]
      %v1734 = vld [vmem:[%s1559 + $0x10] sm:$0xf]
      %v1735 = vld [vmem:[%s1559 + $0x14] sm:$0x1]
      %v1736 = vld [vmem:[%s1559 + $0x18] sm:$0xf]
      %v1737 = vld [vmem:[%s1559 + $0x1c] sm:$0x1]
      %v1738 = vld [vmem:[%s1559 + $0x20] sm:$0xf]
      %v1739 = vld [vmem:[%s1559 + $0x24] sm:$0x1]
      %v1740 = vld [vmem:[%s1559 + $0x28] sm:$0xf]
      %v1741 = vld [vmem:[%s1559 + $0x2c] sm:$0x1]
      %v1742 = vld [vmem:[%s1559 + $0x30] sm:$0xf]
      %v1743 = vld [vmem:[%s1559 + $0x34] sm:$0x1]
      %v1744 = vld [vmem:[%s1559 + $0x38] sm:$0xf]
      %v1745 = vld [vmem:[%s1559 + $0x3c] sm:$0x1]
      %v1747 = vshrl.u32 %v1730, 16
      %v1749 = vrot.slane %v1747, 4
      %v1750 = vshll.u32 %v1730, 16
      %v1752 = vrot.slane %v1750, 5
      %v1753 = vor.u32 %v1749, %v1752
      %v1754 = vrot.slane %v1753, 4
      %v1756 = vshll.u32 %v1731, 16
      %v1758 = vrot.slane %v1756, 5
      %v1759 = vsel %vm257, %v1754, %v1758
      %v1761 = vshrl.u32 %v1732, 16
      %v1763 = vrot.slane %v1761, 4
      %v1764 = vshll.u32 %v1732, 16
      %v1766 = vrot.slane %v1764, 5
      %v1767 = vor.u32 %v1763, %v1766
      %v1768 = vrot.slane %v1767, 4
      %v1770 = vshll.u32 %v1733, 16
      %v1772 = vrot.slane %v1770, 5
      %v1773 = vsel %vm257, %v1768, %v1772
      %v1775 = vshrl.u32 %v1734, 16
      %v1777 = vrot.slane %v1775, 4
      %v1778 = vshll.u32 %v1734, 16
      %v1780 = vrot.slane %v1778, 5
      %v1781 = vor.u32 %v1777, %v1780
      %v1782 = vrot.slane %v1781, 4
      %v1784 = vshll.u32 %v1735, 16
      %v1786 = vrot.slane %v1784, 5
      %v1787 = vsel %vm257, %v1782, %v1786
      %v1789 = vshrl.u32 %v1736, 16
      %v1791 = vrot.slane %v1789, 4
      %v1792 = vshll.u32 %v1736, 16
      %v1794 = vrot.slane %v1792, 5
      %v1795 = vor.u32 %v1791, %v1794
      %v1796 = vrot.slane %v1795, 4
      %v1798 = vshll.u32 %v1737, 16
      %v1800 = vrot.slane %v1798, 5
      %v1801 = vsel %vm257, %v1796, %v1800
      %v1803 = vshrl.u32 %v1738, 16
      %v1805 = vrot.slane %v1803, 4
      %v1806 = vshll.u32 %v1738, 16
      %v1808 = vrot.slane %v1806, 5
      %v1809 = vor.u32 %v1805, %v1808
      %v1810 = vrot.slane %v1809, 4
      %v1812 = vshll.u32 %v1739, 16
      %v1814 = vrot.slane %v1812, 5
      %v1815 = vsel %vm257, %v1810, %v1814
      %v1817 = vshrl.u32 %v1740, 16
      %v1819 = vrot.slane %v1817, 4
      %v1820 = vshll.u32 %v1740, 16
      %v1822 = vrot.slane %v1820, 5
      %v1823 = vor.u32 %v1819, %v1822
      %v1824 = vrot.slane %v1823, 4
      %v1826 = vshll.u32 %v1741, 16
      %v1828 = vrot.slane %v1826, 5
      %v1829 = vsel %vm257, %v1824, %v1828
      %v1831 = vshrl.u32 %v1742, 16
      %v1833 = vrot.slane %v1831, 4
      %v1834 = vshll.u32 %v1742, 16
      %v1836 = vrot.slane %v1834, 5
      %v1837 = vor.u32 %v1833, %v1836
      %v1838 = vrot.slane %v1837, 4
      %v1840 = vshll.u32 %v1743, 16
      %v1842 = vrot.slane %v1840, 5
      %v1843 = vsel %vm257, %v1838, %v1842
      %v1845 = vshrl.u32 %v1744, 16
      %v1847 = vrot.slane %v1845, 4
      %v1848 = vshll.u32 %v1744, 16
      %v1850 = vrot.slane %v1848, 5
      %v1851 = vor.u32 %v1847, %v1850
      %v1852 = vrot.slane %v1851, 4
      %v1854 = vshll.u32 %v1745, 16
      %v1856 = vrot.slane %v1854, 5
      %v1857 = vsel %vm257, %v1852, %v1856
      %s1858 = scalar_lea.vmem %s210, 448
      %v1859 = vld [vmem:[%s1858] sm:$0xf]
      %v1860 = vld [vmem:[%s1858 + $0x4] sm:$0xf]
      %v1861 = vld [vmem:[%s1858 + $0x8] sm:$0xf]
      %v1862 = vld [vmem:[%s1858 + $0xc] sm:$0xf]
      %v1863 = vld [vmem:[%s1858 + $0x10] sm:$0xf]
      %v1864 = vld [vmem:[%s1858 + $0x14] sm:$0xf]
      %v1865 = vld [vmem:[%s1858 + $0x18] sm:$0xf]
      %v1866 = vld [vmem:[%s1858 + $0x1c] sm:$0xf]
      %v1867 = vld [vmem:[%s1858 + $0x20] sm:$0xf]
      %v1868 = vld [vmem:[%s1858 + $0x24] sm:$0xf]
      %v1869 = vld [vmem:[%s1858 + $0x28] sm:$0xf]
      %v1870 = vld [vmem:[%s1858 + $0x2c] sm:$0xf]
      %v1871 = vld [vmem:[%s1858 + $0x30] sm:$0xf]
      %v1872 = vld [vmem:[%s1858 + $0x34] sm:$0xf]
      %v1873 = vld [vmem:[%s1858 + $0x38] sm:$0xf]
      %v1874 = vld [vmem:[%s1858 + $0x3c] sm:$0xf]
      %v1875 = vunpack.c.l.b16 %v1759
      %v1876 = vunpack.c.l.b16 %v1773
      %v1877 = vunpack.c.l.b16 %v1787
      %v1878 = vunpack.c.l.b16 %v1801
      %v1879 = vunpack.c.l.b16 %v1815
      %v1880 = vunpack.c.l.b16 %v1829
      %v1881 = vunpack.c.l.b16 %v1843
      %v1882 = vunpack.c.l.b16 %v1857
      %v1883 = vpack.c.b16 %v1876, %v1875
      %v1884 = vpack.c.b16 %v1878, %v1877
      %v1885 = vpack.c.b16 %v1880, %v1879
      %v1886 = vpack.c.b16 %v1882, %v1881
      %v1907 = vunpack.c.l.b16 %v1859
      %v1908 = vunpack.c.l.b16 %v1860
      %v1909 = vunpack.c.l.b16 %v1861
      %v1910 = vunpack.c.l.b16 %v1862
      %v1911 = vunpack.c.l.b16 %v1863
      %v1912 = vunpack.c.l.b16 %v1864
      %v1913 = vunpack.c.l.b16 %v1865
      %v1914 = vunpack.c.l.b16 %v1866
      %v1915 = vunpack.c.l.b16 %v1867
      %v1916 = vunpack.c.l.b16 %v1868
      %v1917 = vunpack.c.l.b16 %v1869
      %v1918 = vunpack.c.l.b16 %v1870
      %v1919 = vunpack.c.l.b16 %v1871
      %v1920 = vunpack.c.l.b16 %v1872
      %v1921 = vunpack.c.l.b16 %v1873
      %v1922 = vunpack.c.l.b16 %v1874
      %v1923 = vpack.c.b16 %v1908, %v1907
      %v1924 = vpack.c.b16 %v1910, %v1909
      %v1925 = vpack.c.b16 %v1912, %v1911
      %v1926 = vpack.c.b16 %v1914, %v1913
      %v1927 = vpack.c.b16 %v1916, %v1915
      %v1928 = vpack.c.b16 %v1918, %v1917
      %v1929 = vpack.c.b16 %v1920, %v1919
      %v1930 = vpack.c.b16 %v1922, %v1921
      %1939 = vmatprep.subr.bf16.mxu0 0
      %1940 = vmatpush1.bf16.msra.mxu0 %v1930
      %1941 = vmatprep.subr.bf16.mxu0 0
      %1942 = vmatpush1.bf16.msra.mxu0 %v1929
      %1943 = vmatprep.subr.bf16.mxu0 0
      %1944 = vmatpush1.bf16.msra.mxu0 %v1928
      %1945 = vmatprep.subr.bf16.mxu0 0
      %1946 = vmatpush1.bf16.msra.mxu0 %v1927
      %1947 = vmatprep.subr.bf16.mxu0 0
      %1948 = vmatpush1.bf16.msra.mxu0 %v1926
      %1949 = vmatprep.subr.bf16.mxu0 0
      %1950 = vmatpush1.bf16.msra.mxu0 %v1925
      %1951 = vmatprep.subr.bf16.mxu0 0
      %1952 = vmatpush1.bf16.msra.mxu0 %v1924
      %1953 = vmatprep.subr.bf16.mxu0 0
      %1954 = vmatpush1.bf16.msra.mxu0 %v1923
      %1955 = vmatprep.subr.bf16.mxu0 0
      %1956 = vmatpush2.bf16.msra.mxu0 0
      %1957 = vmatprep.subr.bf16.mxu0 0
      %1958 = vmatpush2.bf16.msra.mxu0 0
      %1959 = vmatprep.subr.bf16.mxu0 0
      %1960 = vmatpush2.bf16.msra.mxu0 0
      %1961 = vmatprep.subr.bf16.mxu0 0
      %1962 = vmatpush2.bf16.msra.mxu0 0
      %1963 = vmatprep.subr.bf16.mxu0 0
      %1964 = vmatpush2.bf16.msra.mxu0 0
      %1965 = vmatprep.subr.bf16.mxu0 0
      %1966 = vmatpush2.bf16.msra.mxu0 0
      %1967 = vmatprep.subr.bf16.mxu0 0
      %1968 = vmatpush2.bf16.msra.mxu0 0
      %1969 = vmatprep.subr.bf16.mxu0 0
      %1970 = vmatpush2.bf16.msra.mxu0 0
      %1971 = vmatprep.mubr.bf16.mxu0 0
      %1972 = vmatmul.mubr.bf16.gmra.mxu0 %v1883
      %v1973 = vpop.f32.mrf.mxu0
      %v1974 = vadd.f32 0.0, %v1973
      %v1975 = vpop.f32.mrf.mxu0
      %v1976 = vpop.f32.mrf.mxu0
      %v1977 = vadd.f32 0.0, %v1976
      %v1978 = vpop.f32.mrf.mxu0
      %1979 = vmatprep.mubr.bf16.mxu0 0
      %1980 = vmatmul.mubr.bf16.gmra.mxu0 %v1884
      %v1981 = vpop.f32.mrf.mxu0
      %v1982 = vadd.f32 0.0, %v1981
      %v1983 = vpop.f32.mrf.mxu0
      %v1984 = vpop.f32.mrf.mxu0
      %v1985 = vadd.f32 0.0, %v1984
      %v1986 = vpop.f32.mrf.mxu0
      %1987 = vmatprep.mubr.bf16.mxu0 0
      %1988 = vmatmul.mubr.bf16.gmra.mxu0 %v1885
      %v1989 = vpop.f32.mrf.mxu0
      %v1990 = vadd.f32 0.0, %v1989
      %v1991 = vpop.f32.mrf.mxu0
      %v1992 = vpop.f32.mrf.mxu0
      %v1993 = vadd.f32 0.0, %v1992
      %v1994 = vpop.f32.mrf.mxu0
      %1995 = vmatprep.mubr.bf16.mxu0 0
      %1996 = vmatmul.mubr.bf16.gmra.mxu0 %v1886
      %v1997 = vpop.f32.mrf.mxu0
      %v1998 = vadd.f32 0.0, %v1997
      %v1999 = vpop.f32.mrf.mxu0
      %v2000 = vpop.f32.mrf.mxu0
      %v2001 = vadd.f32 0.0, %v2000
      %v2002 = vpop.f32.mrf.mxu0
      %2003 = vdwg.mxu0
      %v2004 = vadd.f32 %v1722, %v1974
      %v2005 = vadd.f32 %v1723, %v1977
      %v2006 = vadd.f32 %v1724, %v1982
      %v2007 = vadd.f32 %v1725, %v1985
      %v2008 = vadd.f32 %v1726, %v1990
      %v2009 = vadd.f32 %v1727, %v1993
      %v2010 = vadd.f32 %v1728, %v1998
      %v2011 = vadd.f32 %v1729, %v2001
      %s2012 = scalar_lea.vmem %s206, 144
      %v2013 = vld [vmem:[%s2012] sm:$0xf]
      %v2014 = vld [vmem:[%s2012 + $0x8] sm:$0xf]
      %v2015 = vld [vmem:[%s2012 + $0x10] sm:$0xf]
      %v2016 = vld [vmem:[%s2012 + $0x18] sm:$0xf]
      %v2017 = vld [vmem:[%s2012 + $0x20] sm:$0xf]
      %v2018 = vld [vmem:[%s2012 + $0x28] sm:$0xf]
      %v2019 = vld [vmem:[%s2012 + $0x30] sm:$0xf]
      %v2020 = vld [vmem:[%s2012 + $0x38] sm:$0xf]
      %s2021 = scalar_lea.vmem %s210, 512
      %v2022 = vld [vmem:[%s2021] sm:$0xf]
      %v2023 = vld [vmem:[%s2021 + $0x4] sm:$0xf]
      %v2024 = vld [vmem:[%s2021 + $0x8] sm:$0xf]
      %v2025 = vld [vmem:[%s2021 + $0xc] sm:$0xf]
      %v2026 = vld [vmem:[%s2021 + $0x10] sm:$0xf]
      %v2027 = vld [vmem:[%s2021 + $0x14] sm:$0xf]
      %v2028 = vld [vmem:[%s2021 + $0x18] sm:$0xf]
      %v2029 = vld [vmem:[%s2021 + $0x1c] sm:$0xf]
      %v2030 = vld [vmem:[%s2021 + $0x20] sm:$0xf]
      %v2031 = vld [vmem:[%s2021 + $0x24] sm:$0xf]
      %v2032 = vld [vmem:[%s2021 + $0x28] sm:$0xf]
      %v2033 = vld [vmem:[%s2021 + $0x2c] sm:$0xf]
      %v2034 = vld [vmem:[%s2021 + $0x30] sm:$0xf]
      %v2035 = vld [vmem:[%s2021 + $0x34] sm:$0xf]
      %v2036 = vld [vmem:[%s2021 + $0x38] sm:$0xf]
      %v2037 = vld [vmem:[%s2021 + $0x3c] sm:$0xf]
      %v2046 = vunpack.c.l.b16 %v2013
      %v2047 = vunpack.c.l.b16 %v2014
      %v2048 = vunpack.c.l.b16 %v2015
      %v2049 = vunpack.c.l.b16 %v2016
      %v2050 = vunpack.c.l.b16 %v2017
      %v2051 = vunpack.c.l.b16 %v2018
      %v2052 = vunpack.c.l.b16 %v2019
      %v2053 = vunpack.c.l.b16 %v2020
      %v2054 = vpack.c.b16 %v2047, %v2046
      %v2055 = vpack.c.b16 %v2049, %v2048
      %v2056 = vpack.c.b16 %v2051, %v2050
      %v2057 = vpack.c.b16 %v2053, %v2052
      %v2078 = vunpack.c.l.b16 %v2022
      %v2079 = vunpack.c.l.b16 %v2023
      %v2080 = vunpack.c.l.b16 %v2024
      %v2081 = vunpack.c.l.b16 %v2025
      %v2082 = vunpack.c.l.b16 %v2026
      %v2083 = vunpack.c.l.b16 %v2027
      %v2084 = vunpack.c.l.b16 %v2028
      %v2085 = vunpack.c.l.b16 %v2029
      %v2086 = vunpack.c.l.b16 %v2030
      %v2087 = vunpack.c.l.b16 %v2031
      %v2088 = vunpack.c.l.b16 %v2032
      %v2089 = vunpack.c.l.b16 %v2033
      %v2090 = vunpack.c.l.b16 %v2034
      %v2091 = vunpack.c.l.b16 %v2035
      %v2092 = vunpack.c.l.b16 %v2036
      %v2093 = vunpack.c.l.b16 %v2037
      %v2094 = vpack.c.b16 %v2079, %v2078
      %v2095 = vpack.c.b16 %v2081, %v2080
      %v2096 = vpack.c.b16 %v2083, %v2082
      %v2097 = vpack.c.b16 %v2085, %v2084
      %v2098 = vpack.c.b16 %v2087, %v2086
      %v2099 = vpack.c.b16 %v2089, %v2088
      %v2100 = vpack.c.b16 %v2091, %v2090
      %v2101 = vpack.c.b16 %v2093, %v2092
      %2110 = vmatprep.subr.bf16.mxu0 0
      %2111 = vmatpush1.bf16.msra.mxu0 %v2101
      %2112 = vmatprep.subr.bf16.mxu0 0
      %2113 = vmatpush1.bf16.msra.mxu0 %v2100
      %2114 = vmatprep.subr.bf16.mxu0 0
      %2115 = vmatpush1.bf16.msra.mxu0 %v2099
      %2116 = vmatprep.subr.bf16.mxu0 0
      %2117 = vmatpush1.bf16.msra.mxu0 %v2098
      %2118 = vmatprep.subr.bf16.mxu0 0
      %2119 = vmatpush1.bf16.msra.mxu0 %v2097
      %2120 = vmatprep.subr.bf16.mxu0 0
      %2121 = vmatpush1.bf16.msra.mxu0 %v2096
      %2122 = vmatprep.subr.bf16.mxu0 0
      %2123 = vmatpush1.bf16.msra.mxu0 %v2095
      %2124 = vmatprep.subr.bf16.mxu0 0
      %2125 = vmatpush1.bf16.msra.mxu0 %v2094
      %2126 = vmatprep.subr.bf16.mxu0 0
      %2127 = vmatpush2.bf16.msra.mxu0 0
      %2128 = vmatprep.subr.bf16.mxu0 0
      %2129 = vmatpush2.bf16.msra.mxu0 0
      %2130 = vmatprep.subr.bf16.mxu0 0
      %2131 = vmatpush2.bf16.msra.mxu0 0
      %2132 = vmatprep.subr.bf16.mxu0 0
      %2133 = vmatpush2.bf16.msra.mxu0 0
      %2134 = vmatprep.subr.bf16.mxu0 0
      %2135 = vmatpush2.bf16.msra.mxu0 0
      %2136 = vmatprep.subr.bf16.mxu0 0
      %2137 = vmatpush2.bf16.msra.mxu0 0
      %2138 = vmatprep.subr.bf16.mxu0 0
      %2139 = vmatpush2.bf16.msra.mxu0 0
      %2140 = vmatprep.subr.bf16.mxu0 0
      %2141 = vmatpush2.bf16.msra.mxu0 0
      %2142 = vmatprep.mubr.bf16.mxu0 0
      %2143 = vmatmul.mubr.bf16.gmra.mxu0 %v2054
      %v2144 = vpop.f32.mrf.mxu0
      %v2145 = vadd.f32 0.0, %v2144
      %v2146 = vpop.f32.mrf.mxu0
      %v2147 = vpop.f32.mrf.mxu0
      %v2148 = vadd.f32 0.0, %v2147
      %v2149 = vpop.f32.mrf.mxu0
      %2150 = vmatprep.mubr.bf16.mxu0 0
      %2151 = vmatmul.mubr.bf16.gmra.mxu0 %v2055
      %v2152 = vpop.f32.mrf.mxu0
      %v2153 = vadd.f32 0.0, %v2152
      %v2154 = vpop.f32.mrf.mxu0
      %v2155 = vpop.f32.mrf.mxu0
      %v2156 = vadd.f32 0.0, %v2155
      %v2157 = vpop.f32.mrf.mxu0
      %2158 = vmatprep.mubr.bf16.mxu0 0
      %2159 = vmatmul.mubr.bf16.gmra.mxu0 %v2056
      %v2160 = vpop.f32.mrf.mxu0
      %v2161 = vadd.f32 0.0, %v2160
      %v2162 = vpop.f32.mrf.mxu0
      %v2163 = vpop.f32.mrf.mxu0
      %v2164 = vadd.f32 0.0, %v2163
      %v2165 = vpop.f32.mrf.mxu0
      %2166 = vmatprep.mubr.bf16.mxu0 0
      %2167 = vmatmul.mubr.bf16.gmra.mxu0 %v2057
      %v2168 = vpop.f32.mrf.mxu0
      %v2169 = vadd.f32 0.0, %v2168
      %v2170 = vpop.f32.mrf.mxu0
      %v2171 = vpop.f32.mrf.mxu0
      %v2172 = vadd.f32 0.0, %v2171
      %v2173 = vpop.f32.mrf.mxu0
      %2174 = vdwg.mxu0
      %v2175 = vadd.f32 %v2004, %v2145
      %v2176 = vadd.f32 %v2005, %v2148
      %v2177 = vadd.f32 %v2006, %v2153
      %v2178 = vadd.f32 %v2007, %v2156
      %v2179 = vadd.f32 %v2008, %v2161
      %v2180 = vadd.f32 %v2009, %v2164
      %v2181 = vadd.f32 %v2010, %v2169
      %v2182 = vadd.f32 %v2011, %v2172
      %v2183 = vld [vmem:[%s2012] sm:$0xf]
      %v2184 = vld [vmem:[%s2012 + $0x4] sm:$0x1]
      %v2185 = vld [vmem:[%s2012 + $0x8] sm:$0xf]
      %v2186 = vld [vmem:[%s2012 + $0xc] sm:$0x1]
      %v2187 = vld [vmem:[%s2012 + $0x10] sm:$0xf]
      %v2188 = vld [vmem:[%s2012 + $0x14] sm:$0x1]
      %v2189 = vld [vmem:[%s2012 + $0x18] sm:$0xf]
      %v2190 = vld [vmem:[%s2012 + $0x1c] sm:$0x1]
      %v2191 = vld [vmem:[%s2012 + $0x20] sm:$0xf]
      %v2192 = vld [vmem:[%s2012 + $0x24] sm:$0x1]
      %v2193 = vld [vmem:[%s2012 + $0x28] sm:$0xf]
      %v2194 = vld [vmem:[%s2012 + $0x2c] sm:$0x1]
      %v2195 = vld [vmem:[%s2012 + $0x30] sm:$0xf]
      %v2196 = vld [vmem:[%s2012 + $0x34] sm:$0x1]
      %v2197 = vld [vmem:[%s2012 + $0x38] sm:$0xf]
      %v2198 = vld [vmem:[%s2012 + $0x3c] sm:$0x1]
      %v2200 = vshrl.u32 %v2183, 16
      %v2202 = vrot.slane %v2200, 4
      %v2203 = vshll.u32 %v2183, 16
      %v2205 = vrot.slane %v2203, 5
      %v2206 = vor.u32 %v2202, %v2205
      %v2207 = vrot.slane %v2206, 4
      %v2209 = vshll.u32 %v2184, 16
      %v2211 = vrot.slane %v2209, 5
      %v2212 = vsel %vm257, %v2207, %v2211
      %v2214 = vshrl.u32 %v2185, 16
      %v2216 = vrot.slane %v2214, 4
      %v2217 = vshll.u32 %v2185, 16
      %v2219 = vrot.slane %v2217, 5
      %v2220 = vor.u32 %v2216, %v2219
      %v2221 = vrot.slane %v2220, 4
      %v2223 = vshll.u32 %v2186, 16
      %v2225 = vrot.slane %v2223, 5
      %v2226 = vsel %vm257, %v2221, %v2225
      %v2228 = vshrl.u32 %v2187, 16
      %v2230 = vrot.slane %v2228, 4
      %v2231 = vshll.u32 %v2187, 16
      %v2233 = vrot.slane %v2231, 5
      %v2234 = vor.u32 %v2230, %v2233
      %v2235 = vrot.slane %v2234, 4
      %v2237 = vshll.u32 %v2188, 16
      %v2239 = vrot.slane %v2237, 5
      %v2240 = vsel %vm257, %v2235, %v2239
      %v2242 = vshrl.u32 %v2189, 16
      %v2244 = vrot.slane %v2242, 4
      %v2245 = vshll.u32 %v2189, 16
      %v2247 = vrot.slane %v2245, 5
      %v2248 = vor.u32 %v2244, %v2247
      %v2249 = vrot.slane %v2248, 4
      %v2251 = vshll.u32 %v2190, 16
      %v2253 = vrot.slane %v2251, 5
      %v2254 = vsel %vm257, %v2249, %v2253
      %v2256 = vshrl.u32 %v2191, 16
      %v2258 = vrot.slane %v2256, 4
      %v2259 = vshll.u32 %v2191, 16
      %v2261 = vrot.slane %v2259, 5
      %v2262 = vor.u32 %v2258, %v2261
      %v2263 = vrot.slane %v2262, 4
      %v2265 = vshll.u32 %v2192, 16
      %v2267 = vrot.slane %v2265, 5
      %v2268 = vsel %vm257, %v2263, %v2267
      %v2270 = vshrl.u32 %v2193, 16
      %v2272 = vrot.slane %v2270, 4
      %v2273 = vshll.u32 %v2193, 16
      %v2275 = vrot.slane %v2273, 5
      %v2276 = vor.u32 %v2272, %v2275
      %v2277 = vrot.slane %v2276, 4
      %v2279 = vshll.u32 %v2194, 16
      %v2281 = vrot.slane %v2279, 5
      %v2282 = vsel %vm257, %v2277, %v2281
      %v2284 = vshrl.u32 %v2195, 16
      %v2286 = vrot.slane %v2284, 4
      %v2287 = vshll.u32 %v2195, 16
      %v2289 = vrot.slane %v2287, 5
      %v2290 = vor.u32 %v2286, %v2289
      %v2291 = vrot.slane %v2290, 4
      %v2293 = vshll.u32 %v2196, 16
      %v2295 = vrot.slane %v2293, 5
      %v2296 = vsel %vm257, %v2291, %v2295
      %v2298 = vshrl.u32 %v2197, 16
      %v2300 = vrot.slane %v2298, 4
      %v2301 = vshll.u32 %v2197, 16
      %v2303 = vrot.slane %v2301, 5
      %v2304 = vor.u32 %v2300, %v2303
      %v2305 = vrot.slane %v2304, 4
      %v2307 = vshll.u32 %v2198, 16
      %v2309 = vrot.slane %v2307, 5
      %v2310 = vsel %vm257, %v2305, %v2309
      %s2311 = scalar_lea.vmem %s210, 576
      %v2312 = vld [vmem:[%s2311] sm:$0xf]
      %v2313 = vld [vmem:[%s2311 + $0x4] sm:$0xf]
      %v2314 = vld [vmem:[%s2311 + $0x8] sm:$0xf]
      %v2315 = vld [vmem:[%s2311 + $0xc] sm:$0xf]
      %v2316 = vld [vmem:[%s2311 + $0x10] sm:$0xf]
      %v2317 = vld [vmem:[%s2311 + $0x14] sm:$0xf]
      %v2318 = vld [vmem:[%s2311 + $0x18] sm:$0xf]
      %v2319 = vld [vmem:[%s2311 + $0x1c] sm:$0xf]
      %v2320 = vld [vmem:[%s2311 + $0x20] sm:$0xf]
      %v2321 = vld [vmem:[%s2311 + $0x24] sm:$0xf]
      %v2322 = vld [vmem:[%s2311 + $0x28] sm:$0xf]
      %v2323 = vld [vmem:[%s2311 + $0x2c] sm:$0xf]
      %v2324 = vld [vmem:[%s2311 + $0x30] sm:$0xf]
      %v2325 = vld [vmem:[%s2311 + $0x34] sm:$0xf]
      %v2326 = vld [vmem:[%s2311 + $0x38] sm:$0xf]
      %v2327 = vld [vmem:[%s2311 + $0x3c] sm:$0xf]
      %v2328 = vunpack.c.l.b16 %v2212
      %v2329 = vunpack.c.l.b16 %v2226
      %v2330 = vunpack.c.l.b16 %v2240
      %v2331 = vunpack.c.l.b16 %v2254
      %v2332 = vunpack.c.l.b16 %v2268
      %v2333 = vunpack.c.l.b16 %v2282
      %v2334 = vunpack.c.l.b16 %v2296
      %v2335 = vunpack.c.l.b16 %v2310
      %v2336 = vpack.c.b16 %v2329, %v2328
      %v2337 = vpack.c.b16 %v2331, %v2330
      %v2338 = vpack.c.b16 %v2333, %v2332
      %v2339 = vpack.c.b16 %v2335, %v2334
      %v2360 = vunpack.c.l.b16 %v2312
      %v2361 = vunpack.c.l.b16 %v2313
      %v2362 = vunpack.c.l.b16 %v2314
      %v2363 = vunpack.c.l.b16 %v2315
      %v2364 = vunpack.c.l.b16 %v2316
      %v2365 = vunpack.c.l.b16 %v2317
      %v2366 = vunpack.c.l.b16 %v2318
      %v2367 = vunpack.c.l.b16 %v2319
      %v2368 = vunpack.c.l.b16 %v2320
      %v2369 = vunpack.c.l.b16 %v2321
      %v2370 = vunpack.c.l.b16 %v2322
      %v2371 = vunpack.c.l.b16 %v2323
      %v2372 = vunpack.c.l.b16 %v2324
      %v2373 = vunpack.c.l.b16 %v2325
      %v2374 = vunpack.c.l.b16 %v2326
      %v2375 = vunpack.c.l.b16 %v2327
      %v2376 = vpack.c.b16 %v2361, %v2360
      %v2377 = vpack.c.b16 %v2363, %v2362
      %v2378 = vpack.c.b16 %v2365, %v2364
      %v2379 = vpack.c.b16 %v2367, %v2366
      %v2380 = vpack.c.b16 %v2369, %v2368
      %v2381 = vpack.c.b16 %v2371, %v2370
      %v2382 = vpack.c.b16 %v2373, %v2372
      %v2383 = vpack.c.b16 %v2375, %v2374
      %2392 = vmatprep.subr.bf16.mxu0 0
      %2393 = vmatpush1.bf16.msra.mxu0 %v2383
      %2394 = vmatprep.subr.bf16.mxu0 0
      %2395 = vmatpush1.bf16.msra.mxu0 %v2382
      %2396 = vmatprep.subr.bf16.mxu0 0
      %2397 = vmatpush1.bf16.msra.mxu0 %v2381
      %2398 = vmatprep.subr.bf16.mxu0 0
      %2399 = vmatpush1.bf16.msra.mxu0 %v2380
      %2400 = vmatprep.subr.bf16.mxu0 0
      %2401 = vmatpush1.bf16.msra.mxu0 %v2379
      %2402 = vmatprep.subr.bf16.mxu0 0
      %2403 = vmatpush1.bf16.msra.mxu0 %v2378
      %2404 = vmatprep.subr.bf16.mxu0 0
      %2405 = vmatpush1.bf16.msra.mxu0 %v2377
      %2406 = vmatprep.subr.bf16.mxu0 0
      %2407 = vmatpush1.bf16.msra.mxu0 %v2376
      %2408 = vmatprep.subr.bf16.mxu0 0
      %2409 = vmatpush2.bf16.msra.mxu0 0
      %2410 = vmatprep.subr.bf16.mxu0 0
      %2411 = vmatpush2.bf16.msra.mxu0 0
      %2412 = vmatprep.subr.bf16.mxu0 0
      %2413 = vmatpush2.bf16.msra.mxu0 0
      %2414 = vmatprep.subr.bf16.mxu0 0
      %2415 = vmatpush2.bf16.msra.mxu0 0
      %2416 = vmatprep.subr.bf16.mxu0 0
      %2417 = vmatpush2.bf16.msra.mxu0 0
      %2418 = vmatprep.subr.bf16.mxu0 0
      %2419 = vmatpush2.bf16.msra.mxu0 0
      %2420 = vmatprep.subr.bf16.mxu0 0
      %2421 = vmatpush2.bf16.msra.mxu0 0
      %2422 = vmatprep.subr.bf16.mxu0 0
      %2423 = vmatpush2.bf16.msra.mxu0 0
      %2424 = vmatprep.mubr.bf16.mxu0 0
      %2425 = vmatmul.mubr.bf16.gmra.mxu0 %v2336
      %v2426 = vpop.f32.mrf.mxu0
      %v2427 = vadd.f32 0.0, %v2426
      %v2428 = vpop.f32.mrf.mxu0
      %v2429 = vpop.f32.mrf.mxu0
      %v2430 = vadd.f32 0.0, %v2429
      %v2431 = vpop.f32.mrf.mxu0
      %2432 = vmatprep.mubr.bf16.mxu0 0
      %2433 = vmatmul.mubr.bf16.gmra.mxu0 %v2337
      %v2434 = vpop.f32.mrf.mxu0
      %v2435 = vadd.f32 0.0, %v2434
      %v2436 = vpop.f32.mrf.mxu0
      %v2437 = vpop.f32.mrf.mxu0
      %v2438 = vadd.f32 0.0, %v2437
      %v2439 = vpop.f32.mrf.mxu0
      %2440 = vmatprep.mubr.bf16.mxu0 0
      %2441 = vmatmul.mubr.bf16.gmra.mxu0 %v2338
      %v2442 = vpop.f32.mrf.mxu0
      %v2443 = vadd.f32 0.0, %v2442
      %v2444 = vpop.f32.mrf.mxu0
      %v2445 = vpop.f32.mrf.mxu0
      %v2446 = vadd.f32 0.0, %v2445
      %v2447 = vpop.f32.mrf.mxu0
      %2448 = vmatprep.mubr.bf16.mxu0 0
      %2449 = vmatmul.mubr.bf16.gmra.mxu0 %v2339
      %v2450 = vpop.f32.mrf.mxu0
      %v2451 = vadd.f32 0.0, %v2450
      %v2452 = vpop.f32.mrf.mxu0
      %v2453 = vpop.f32.mrf.mxu0
      %v2454 = vadd.f32 0.0, %v2453
      %v2455 = vpop.f32.mrf.mxu0
      %2456 = vdwg.mxu0
      %v2457 = vadd.f32 %v2175, %v2427
      %v2458 = vadd.f32 %v2176, %v2430
      %v2459 = vadd.f32 %v2177, %v2435
      %v2460 = vadd.f32 %v2178, %v2438
      %v2461 = vadd.f32 %v2179, %v2443
      %v2462 = vadd.f32 %v2180, %v2446
      %v2463 = vadd.f32 %v2181, %v2451
      %v2464 = vadd.f32 %v2182, %v2454
      %s2465 = scalar_lea.vmem %s206, 152
      %v2466 = vld [vmem:[%s2465] sm:$0xf]
      %v2467 = vld [vmem:[%s2465 + $0x8] sm:$0xf]
      %v2468 = vld [vmem:[%s2465 + $0x10] sm:$0xf]
      %v2469 = vld [vmem:[%s2465 + $0x18] sm:$0xf]
      %v2470 = vld [vmem:[%s2465 + $0x20] sm:$0xf]
      %v2471 = vld [vmem:[%s2465 + $0x28] sm:$0xf]
      %v2472 = vld [vmem:[%s2465 + $0x30] sm:$0xf]
      %v2473 = vld [vmem:[%s2465 + $0x38] sm:$0xf]
      %s2474 = scalar_lea.vmem %s210, 640
      %v2475 = vld [vmem:[%s2474] sm:$0xf]
      %v2476 = vld [vmem:[%s2474 + $0x4] sm:$0xf]
      %v2477 = vld [vmem:[%s2474 + $0x8] sm:$0xf]
      %v2478 = vld [vmem:[%s2474 + $0xc] sm:$0xf]
      %v2479 = vld [vmem:[%s2474 + $0x10] sm:$0xf]
      %v2480 = vld [vmem:[%s2474 + $0x14] sm:$0xf]
      %v2481 = vld [vmem:[%s2474 + $0x18] sm:$0xf]
      %v2482 = vld [vmem:[%s2474 + $0x1c] sm:$0xf]
      %v2483 = vld [vmem:[%s2474 + $0x20] sm:$0xf]
      %v2484 = vld [vmem:[%s2474 + $0x24] sm:$0xf]
      %v2485 = vld [vmem:[%s2474 + $0x28] sm:$0xf]
      %v2486 = vld [vmem:[%s2474 + $0x2c] sm:$0xf]
      %v2487 = vld [vmem:[%s2474 + $0x30] sm:$0xf]
      %v2488 = vld [vmem:[%s2474 + $0x34] sm:$0xf]
      %v2489 = vld [vmem:[%s2474 + $0x38] sm:$0xf]
      %v2490 = vld [vmem:[%s2474 + $0x3c] sm:$0xf]
      %v2499 = vunpack.c.l.b16 %v2466
      %v2500 = vunpack.c.l.b16 %v2467
      %v2501 = vunpack.c.l.b16 %v2468
      %v2502 = vunpack.c.l.b16 %v2469
      %v2503 = vunpack.c.l.b16 %v2470
      %v2504 = vunpack.c.l.b16 %v2471
      %v2505 = vunpack.c.l.b16 %v2472
      %v2506 = vunpack.c.l.b16 %v2473
      %v2507 = vpack.c.b16 %v2500, %v2499
      %v2508 = vpack.c.b16 %v2502, %v2501
      %v2509 = vpack.c.b16 %v2504, %v2503
      %v2510 = vpack.c.b16 %v2506, %v2505
      %v2531 = vunpack.c.l.b16 %v2475
      %v2532 = vunpack.c.l.b16 %v2476
      %v2533 = vunpack.c.l.b16 %v2477
      %v2534 = vunpack.c.l.b16 %v2478
      %v2535 = vunpack.c.l.b16 %v2479
      %v2536 = vunpack.c.l.b16 %v2480
      %v2537 = vunpack.c.l.b16 %v2481
      %v2538 = vunpack.c.l.b16 %v2482
      %v2539 = vunpack.c.l.b16 %v2483
      %v2540 = vunpack.c.l.b16 %v2484
      %v2541 = vunpack.c.l.b16 %v2485
      %v2542 = vunpack.c.l.b16 %v2486
      %v2543 = vunpack.c.l.b16 %v2487
      %v2544 = vunpack.c.l.b16 %v2488
      %v2545 = vunpack.c.l.b16 %v2489
      %v2546 = vunpack.c.l.b16 %v2490
      %v2547 = vpack.c.b16 %v2532, %v2531
      %v2548 = vpack.c.b16 %v2534, %v2533
      %v2549 = vpack.c.b16 %v2536, %v2535
      %v2550 = vpack.c.b16 %v2538, %v2537
      %v2551 = vpack.c.b16 %v2540, %v2539
      %v2552 = vpack.c.b16 %v2542, %v2541
      %v2553 = vpack.c.b16 %v2544, %v2543
      %v2554 = vpack.c.b16 %v2546, %v2545
      %2563 = vmatprep.subr.bf16.mxu0 0
      %2564 = vmatpush1.bf16.msra.mxu0 %v2554
      %2565 = vmatprep.subr.bf16.mxu0 0
      %2566 = vmatpush1.bf16.msra.mxu0 %v2553
      %2567 = vmatprep.subr.bf16.mxu0 0
      %2568 = vmatpush1.bf16.msra.mxu0 %v2552
      %2569 = vmatprep.subr.bf16.mxu0 0
      %2570 = vmatpush1.bf16.msra.mxu0 %v2551
      %2571 = vmatprep.subr.bf16.mxu0 0
      %2572 = vmatpush1.bf16.msra.mxu0 %v2550
      %2573 = vmatprep.subr.bf16.mxu0 0
      %2574 = vmatpush1.bf16.msra.mxu0 %v2549
      %2575 = vmatprep.subr.bf16.mxu0 0
      %2576 = vmatpush1.bf16.msra.mxu0 %v2548
      %2577 = vmatprep.subr.bf16.mxu0 0
      %2578 = vmatpush1.bf16.msra.mxu0 %v2547
      %2579 = vmatprep.subr.bf16.mxu0 0
      %2580 = vmatpush2.bf16.msra.mxu0 0
      %2581 = vmatprep.subr.bf16.mxu0 0
      %2582 = vmatpush2.bf16.msra.mxu0 0
      %2583 = vmatprep.subr.bf16.mxu0 0
      %2584 = vmatpush2.bf16.msra.mxu0 0
      %2585 = vmatprep.subr.bf16.mxu0 0
      %2586 = vmatpush2.bf16.msra.mxu0 0
      %2587 = vmatprep.subr.bf16.mxu0 0
      %2588 = vmatpush2.bf16.msra.mxu0 0
      %2589 = vmatprep.subr.bf16.mxu0 0
      %2590 = vmatpush2.bf16.msra.mxu0 0
      %2591 = vmatprep.subr.bf16.mxu0 0
      %2592 = vmatpush2.bf16.msra.mxu0 0
      %2593 = vmatprep.subr.bf16.mxu0 0
      %2594 = vmatpush2.bf16.msra.mxu0 0
      %2595 = vmatprep.mubr.bf16.mxu0 0
      %2596 = vmatmul.mubr.bf16.gmra.mxu0 %v2507
      %v2597 = vpop.f32.mrf.mxu0
      %v2598 = vadd.f32 0.0, %v2597
      %v2599 = vpop.f32.mrf.mxu0
      %v2600 = vpop.f32.mrf.mxu0
      %v2601 = vadd.f32 0.0, %v2600
      %v2602 = vpop.f32.mrf.mxu0
      %2603 = vmatprep.mubr.bf16.mxu0 0
      %2604 = vmatmul.mubr.bf16.gmra.mxu0 %v2508
      %v2605 = vpop.f32.mrf.mxu0
      %v2606 = vadd.f32 0.0, %v2605
      %v2607 = vpop.f32.mrf.mxu0
      %v2608 = vpop.f32.mrf.mxu0
      %v2609 = vadd.f32 0.0, %v2608
      %v2610 = vpop.f32.mrf.mxu0
      %2611 = vmatprep.mubr.bf16.mxu0 0
      %2612 = vmatmul.mubr.bf16.gmra.mxu0 %v2509
      %v2613 = vpop.f32.mrf.mxu0
      %v2614 = vadd.f32 0.0, %v2613
      %v2615 = vpop.f32.mrf.mxu0
      %v2616 = vpop.f32.mrf.mxu0
      %v2617 = vadd.f32 0.0, %v2616
      %v2618 = vpop.f32.mrf.mxu0
      %2619 = vmatprep.mubr.bf16.mxu0 0
      %2620 = vmatmul.mubr.bf16.gmra.mxu0 %v2510
      %v2621 = vpop.f32.mrf.mxu0
      %v2622 = vadd.f32 0.0, %v2621
      %v2623 = vpop.f32.mrf.mxu0
      %v2624 = vpop.f32.mrf.mxu0
      %v2625 = vadd.f32 0.0, %v2624
      %v2626 = vpop.f32.mrf.mxu0
      %2627 = vdwg.mxu0
      %v2628 = vadd.f32 %v2457, %v2598
      %v2629 = vadd.f32 %v2458, %v2601
      %v2630 = vadd.f32 %v2459, %v2606
      %v2631 = vadd.f32 %v2460, %v2609
      %v2632 = vadd.f32 %v2461, %v2614
      %v2633 = vadd.f32 %v2462, %v2617
      %v2634 = vadd.f32 %v2463, %v2622
      %v2635 = vadd.f32 %v2464, %v2625
      %v2636 = vld [vmem:[%s2465] sm:$0xf]
      %v2637 = vld [vmem:[%s2465 + $0x4] sm:$0x1]
      %v2638 = vld [vmem:[%s2465 + $0x8] sm:$0xf]
      %v2639 = vld [vmem:[%s2465 + $0xc] sm:$0x1]
      %v2640 = vld [vmem:[%s2465 + $0x10] sm:$0xf]
      %v2641 = vld [vmem:[%s2465 + $0x14] sm:$0x1]
      %v2642 = vld [vmem:[%s2465 + $0x18] sm:$0xf]
      %v2643 = vld [vmem:[%s2465 + $0x1c] sm:$0x1]
      %v2644 = vld [vmem:[%s2465 + $0x20] sm:$0xf]
      %v2645 = vld [vmem:[%s2465 + $0x24] sm:$0x1]
      %v2646 = vld [vmem:[%s2465 + $0x28] sm:$0xf]
      %v2647 = vld [vmem:[%s2465 + $0x2c] sm:$0x1]
      %v2648 = vld [vmem:[%s2465 + $0x30] sm:$0xf]
      %v2649 = vld [vmem:[%s2465 + $0x34] sm:$0x1]
      %v2650 = vld [vmem:[%s2465 + $0x38] sm:$0xf]
      %v2651 = vld [vmem:[%s2465 + $0x3c] sm:$0x1]
      %v2653 = vshrl.u32 %v2636, 16
      %v2655 = vrot.slane %v2653, 4
      %v2656 = vshll.u32 %v2636, 16
      %v2658 = vrot.slane %v2656, 5
      %v2659 = vor.u32 %v2655, %v2658
      %v2660 = vrot.slane %v2659, 4
      %v2662 = vshll.u32 %v2637, 16
      %v2664 = vrot.slane %v2662, 5
      %v2665 = vsel %vm257, %v2660, %v2664
      %v2667 = vshrl.u32 %v2638, 16
      %v2669 = vrot.slane %v2667, 4
      %v2670 = vshll.u32 %v2638, 16
      %v2672 = vrot.slane %v2670, 5
      %v2673 = vor.u32 %v2669, %v2672
      %v2674 = vrot.slane %v2673, 4
      %v2676 = vshll.u32 %v2639, 16
      %v2678 = vrot.slane %v2676, 5
      %v2679 = vsel %vm257, %v2674, %v2678
      %v2681 = vshrl.u32 %v2640, 16
      %v2683 = vrot.slane %v2681, 4
      %v2684 = vshll.u32 %v2640, 16
      %v2686 = vrot.slane %v2684, 5
      %v2687 = vor.u32 %v2683, %v2686
      %v2688 = vrot.slane %v2687, 4
      %v2690 = vshll.u32 %v2641, 16
      %v2692 = vrot.slane %v2690, 5
      %v2693 = vsel %vm257, %v2688, %v2692
      %v2695 = vshrl.u32 %v2642, 16
      %v2697 = vrot.slane %v2695, 4
      %v2698 = vshll.u32 %v2642, 16
      %v2700 = vrot.slane %v2698, 5
      %v2701 = vor.u32 %v2697, %v2700
      %v2702 = vrot.slane %v2701, 4
      %v2704 = vshll.u32 %v2643, 16
      %v2706 = vrot.slane %v2704, 5
      %v2707 = vsel %vm257, %v2702, %v2706
      %v2709 = vshrl.u32 %v2644, 16
      %v2711 = vrot.slane %v2709, 4
      %v2712 = vshll.u32 %v2644, 16
      %v2714 = vrot.slane %v2712, 5
      %v2715 = vor.u32 %v2711, %v2714
      %v2716 = vrot.slane %v2715, 4
      %v2718 = vshll.u32 %v2645, 16
      %v2720 = vrot.slane %v2718, 5
      %v2721 = vsel %vm257, %v2716, %v2720
      %v2723 = vshrl.u32 %v2646, 16
      %v2725 = vrot.slane %v2723, 4
      %v2726 = vshll.u32 %v2646, 16
      %v2728 = vrot.slane %v2726, 5
      %v2729 = vor.u32 %v2725, %v2728
      %v2730 = vrot.slane %v2729, 4
      %v2732 = vshll.u32 %v2647, 16
      %v2734 = vrot.slane %v2732, 5
      %v2735 = vsel %vm257, %v2730, %v2734
      %v2737 = vshrl.u32 %v2648, 16
      %v2739 = vrot.slane %v2737, 4
      %v2740 = vshll.u32 %v2648, 16
      %v2742 = vrot.slane %v2740, 5
      %v2743 = vor.u32 %v2739, %v2742
      %v2744 = vrot.slane %v2743, 4
      %v2746 = vshll.u32 %v2649, 16
      %v2748 = vrot.slane %v2746, 5
      %v2749 = vsel %vm257, %v2744, %v2748
      %v2751 = vshrl.u32 %v2650, 16
      %v2753 = vrot.slane %v2751, 4
      %v2754 = vshll.u32 %v2650, 16
      %v2756 = vrot.slane %v2754, 5
      %v2757 = vor.u32 %v2753, %v2756
      %v2758 = vrot.slane %v2757, 4
      %v2760 = vshll.u32 %v2651, 16
      %v2762 = vrot.slane %v2760, 5
      %v2763 = vsel %vm257, %v2758, %v2762
      %s2764 = scalar_lea.vmem %s210, 704
      %v2765 = vld [vmem:[%s2764] sm:$0xf]
      %v2766 = vld [vmem:[%s2764 + $0x4] sm:$0xf]
      %v2767 = vld [vmem:[%s2764 + $0x8] sm:$0xf]
      %v2768 = vld [vmem:[%s2764 + $0xc] sm:$0xf]
      %v2769 = vld [vmem:[%s2764 + $0x10] sm:$0xf]
      %v2770 = vld [vmem:[%s2764 + $0x14] sm:$0xf]
      %v2771 = vld [vmem:[%s2764 + $0x18] sm:$0xf]
      %v2772 = vld [vmem:[%s2764 + $0x1c] sm:$0xf]
      %v2773 = vld [vmem:[%s2764 + $0x20] sm:$0xf]
      %v2774 = vld [vmem:[%s2764 + $0x24] sm:$0xf]
      %v2775 = vld [vmem:[%s2764 + $0x28] sm:$0xf]
      %v2776 = vld [vmem:[%s2764 + $0x2c] sm:$0xf]
      %v2777 = vld [vmem:[%s2764 + $0x30] sm:$0xf]
      %v2778 = vld [vmem:[%s2764 + $0x34] sm:$0xf]
      %v2779 = vld [vmem:[%s2764 + $0x38] sm:$0xf]
      %v2780 = vld [vmem:[%s2764 + $0x3c] sm:$0xf]
      %v2781 = vunpack.c.l.b16 %v2665
      %v2782 = vunpack.c.l.b16 %v2679
      %v2783 = vunpack.c.l.b16 %v2693
      %v2784 = vunpack.c.l.b16 %v2707
      %v2785 = vunpack.c.l.b16 %v2721
      %v2786 = vunpack.c.l.b16 %v2735
      %v2787 = vunpack.c.l.b16 %v2749
      %v2788 = vunpack.c.l.b16 %v2763
      %v2789 = vpack.c.b16 %v2782, %v2781
      %v2790 = vpack.c.b16 %v2784, %v2783
      %v2791 = vpack.c.b16 %v2786, %v2785
      %v2792 = vpack.c.b16 %v2788, %v2787
      %v2813 = vunpack.c.l.b16 %v2765
      %v2814 = vunpack.c.l.b16 %v2766
      %v2815 = vunpack.c.l.b16 %v2767
      %v2816 = vunpack.c.l.b16 %v2768
      %v2817 = vunpack.c.l.b16 %v2769
      %v2818 = vunpack.c.l.b16 %v2770
      %v2819 = vunpack.c.l.b16 %v2771
      %v2820 = vunpack.c.l.b16 %v2772
      %v2821 = vunpack.c.l.b16 %v2773
      %v2822 = vunpack.c.l.b16 %v2774
      %v2823 = vunpack.c.l.b16 %v2775
      %v2824 = vunpack.c.l.b16 %v2776
      %v2825 = vunpack.c.l.b16 %v2777
      %v2826 = vunpack.c.l.b16 %v2778
      %v2827 = vunpack.c.l.b16 %v2779
      %v2828 = vunpack.c.l.b16 %v2780
      %v2829 = vpack.c.b16 %v2814, %v2813
      %v2830 = vpack.c.b16 %v2816, %v2815
      %v2831 = vpack.c.b16 %v2818, %v2817
      %v2832 = vpack.c.b16 %v2820, %v2819
      %v2833 = vpack.c.b16 %v2822, %v2821
      %v2834 = vpack.c.b16 %v2824, %v2823
      %v2835 = vpack.c.b16 %v2826, %v2825
      %v2836 = vpack.c.b16 %v2828, %v2827
      %2845 = vmatprep.subr.bf16.mxu0 0
      %2846 = vmatpush1.bf16.msra.mxu0 %v2836
      %2847 = vmatprep.subr.bf16.mxu0 0
      %2848 = vmatpush1.bf16.msra.mxu0 %v2835
      %2849 = vmatprep.subr.bf16.mxu0 0
      %2850 = vmatpush1.bf16.msra.mxu0 %v2834
      %2851 = vmatprep.subr.bf16.mxu0 0
      %2852 = vmatpush1.bf16.msra.mxu0 %v2833
      %2853 = vmatprep.subr.bf16.mxu0 0
      %2854 = vmatpush1.bf16.msra.mxu0 %v2832
      %2855 = vmatprep.subr.bf16.mxu0 0
      %2856 = vmatpush1.bf16.msra.mxu0 %v2831
      %2857 = vmatprep.subr.bf16.mxu0 0
      %2858 = vmatpush1.bf16.msra.mxu0 %v2830
      %2859 = vmatprep.subr.bf16.mxu0 0
      %2860 = vmatpush1.bf16.msra.mxu0 %v2829
      %2861 = vmatprep.subr.bf16.mxu0 0
      %2862 = vmatpush2.bf16.msra.mxu0 0
      %2863 = vmatprep.subr.bf16.mxu0 0
      %2864 = vmatpush2.bf16.msra.mxu0 0
      %2865 = vmatprep.subr.bf16.mxu0 0
      %2866 = vmatpush2.bf16.msra.mxu0 0
      %2867 = vmatprep.subr.bf16.mxu0 0
      %2868 = vmatpush2.bf16.msra.mxu0 0
      %2869 = vmatprep.subr.bf16.mxu0 0
      %2870 = vmatpush2.bf16.msra.mxu0 0
      %2871 = vmatprep.subr.bf16.mxu0 0
      %2872 = vmatpush2.bf16.msra.mxu0 0
      %2873 = vmatprep.subr.bf16.mxu0 0
      %2874 = vmatpush2.bf16.msra.mxu0 0
      %2875 = vmatprep.subr.bf16.mxu0 0
      %2876 = vmatpush2.bf16.msra.mxu0 0
      %2877 = vmatprep.mubr.bf16.mxu0 0
      %2878 = vmatmul.mubr.bf16.gmra.mxu0 %v2789
      %v2879 = vpop.f32.mrf.mxu0
      %v2880 = vadd.f32 0.0, %v2879
      %v2881 = vpop.f32.mrf.mxu0
      %v2882 = vpop.f32.mrf.mxu0
      %v2883 = vadd.f32 0.0, %v2882
      %v2884 = vpop.f32.mrf.mxu0
      %2885 = vmatprep.mubr.bf16.mxu0 0
      %2886 = vmatmul.mubr.bf16.gmra.mxu0 %v2790
      %v2887 = vpop.f32.mrf.mxu0
      %v2888 = vadd.f32 0.0, %v2887
      %v2889 = vpop.f32.mrf.mxu0
      %v2890 = vpop.f32.mrf.mxu0
      %v2891 = vadd.f32 0.0, %v2890
      %v2892 = vpop.f32.mrf.mxu0
      %2893 = vmatprep.mubr.bf16.mxu0 0
      %2894 = vmatmul.mubr.bf16.gmra.mxu0 %v2791
      %v2895 = vpop.f32.mrf.mxu0
      %v2896 = vadd.f32 0.0, %v2895
      %v2897 = vpop.f32.mrf.mxu0
      %v2898 = vpop.f32.mrf.mxu0
      %v2899 = vadd.f32 0.0, %v2898
      %v2900 = vpop.f32.mrf.mxu0
      %2901 = vmatprep.mubr.bf16.mxu0 0
      %2902 = vmatmul.mubr.bf16.gmra.mxu0 %v2792
      %v2903 = vpop.f32.mrf.mxu0
      %v2904 = vadd.f32 0.0, %v2903
      %v2905 = vpop.f32.mrf.mxu0
      %v2906 = vpop.f32.mrf.mxu0
      %v2907 = vadd.f32 0.0, %v2906
      %v2908 = vpop.f32.mrf.mxu0
      %2909 = vdwg.mxu0
      %v2910 = vadd.f32 %v2628, %v2880
      %v2911 = vadd.f32 %v2629, %v2883
      %v2912 = vadd.f32 %v2630, %v2888
      %v2913 = vadd.f32 %v2631, %v2891
      %v2914 = vadd.f32 %v2632, %v2896
      %v2915 = vadd.f32 %v2633, %v2899
      %v2916 = vadd.f32 %v2634, %v2904
      %v2917 = vadd.f32 %v2635, %v2907
      %s2918 = scalar_lea.vmem %s206, 216
      %v2919 = vld [vmem:[%s2918] sm:$0xf]
      %v2920 = vld [vmem:[%s2918 + $0x8] sm:$0xf]
      %v2921 = vld [vmem:[%s2918 + $0x10] sm:$0xf]
      %v2922 = vld [vmem:[%s2918 + $0x18] sm:$0xf]
      %v2923 = vld [vmem:[%s2918 + $0x20] sm:$0xf]
      %v2924 = vld [vmem:[%s2918 + $0x28] sm:$0xf]
      %v2925 = vld [vmem:[%s2918 + $0x30] sm:$0xf]
      %v2926 = vld [vmem:[%s2918 + $0x38] sm:$0xf]
      %s2927 = scalar_lea.vmem %s210, 768
      %v2928 = vld [vmem:[%s2927] sm:$0xf]
      %v2929 = vld [vmem:[%s2927 + $0x4] sm:$0xf]
      %v2930 = vld [vmem:[%s2927 + $0x8] sm:$0xf]
      %v2931 = vld [vmem:[%s2927 + $0xc] sm:$0xf]
      %v2932 = vld [vmem:[%s2927 + $0x10] sm:$0xf]
      %v2933 = vld [vmem:[%s2927 + $0x14] sm:$0xf]
      %v2934 = vld [vmem:[%s2927 + $0x18] sm:$0xf]
      %v2935 = vld [vmem:[%s2927 + $0x1c] sm:$0xf]
      %v2936 = vld [vmem:[%s2927 + $0x20] sm:$0xf]
      %v2937 = vld [vmem:[%s2927 + $0x24] sm:$0xf]
      %v2938 = vld [vmem:[%s2927 + $0x28] sm:$0xf]
      %v2939 = vld [vmem:[%s2927 + $0x2c] sm:$0xf]
      %v2940 = vld [vmem:[%s2927 + $0x30] sm:$0xf]
      %v2941 = vld [vmem:[%s2927 + $0x34] sm:$0xf]
      %v2942 = vld [vmem:[%s2927 + $0x38] sm:$0xf]
      %v2943 = vld [vmem:[%s2927 + $0x3c] sm:$0xf]
      %v2952 = vunpack.c.l.b16 %v2919
      %v2953 = vunpack.c.l.b16 %v2920
      %v2954 = vunpack.c.l.b16 %v2921
      %v2955 = vunpack.c.l.b16 %v2922
      %v2956 = vunpack.c.l.b16 %v2923
      %v2957 = vunpack.c.l.b16 %v2924
      %v2958 = vunpack.c.l.b16 %v2925
      %v2959 = vunpack.c.l.b16 %v2926
      %v2960 = vpack.c.b16 %v2953, %v2952
      %v2961 = vpack.c.b16 %v2955, %v2954
      %v2962 = vpack.c.b16 %v2957, %v2956
      %v2963 = vpack.c.b16 %v2959, %v2958
      %v2984 = vunpack.c.l.b16 %v2928
      %v2985 = vunpack.c.l.b16 %v2929
      %v2986 = vunpack.c.l.b16 %v2930
      %v2987 = vunpack.c.l.b16 %v2931
      %v2988 = vunpack.c.l.b16 %v2932
      %v2989 = vunpack.c.l.b16 %v2933
      %v2990 = vunpack.c.l.b16 %v2934
      %v2991 = vunpack.c.l.b16 %v2935
      %v2992 = vunpack.c.l.b16 %v2936
      %v2993 = vunpack.c.l.b16 %v2937
      %v2994 = vunpack.c.l.b16 %v2938
      %v2995 = vunpack.c.l.b16 %v2939
      %v2996 = vunpack.c.l.b16 %v2940
      %v2997 = vunpack.c.l.b16 %v2941
      %v2998 = vunpack.c.l.b16 %v2942
      %v2999 = vunpack.c.l.b16 %v2943
      %v3000 = vpack.c.b16 %v2985, %v2984
      %v3001 = vpack.c.b16 %v2987, %v2986
      %v3002 = vpack.c.b16 %v2989, %v2988
      %v3003 = vpack.c.b16 %v2991, %v2990
      %v3004 = vpack.c.b16 %v2993, %v2992
      %v3005 = vpack.c.b16 %v2995, %v2994
      %v3006 = vpack.c.b16 %v2997, %v2996
      %v3007 = vpack.c.b16 %v2999, %v2998
      %3016 = vmatprep.subr.bf16.mxu0 0
      %3017 = vmatpush1.bf16.msra.mxu0 %v3007
      %3018 = vmatprep.subr.bf16.mxu0 0
      %3019 = vmatpush1.bf16.msra.mxu0 %v3006
      %3020 = vmatprep.subr.bf16.mxu0 0
      %3021 = vmatpush1.bf16.msra.mxu0 %v3005
      %3022 = vmatprep.subr.bf16.mxu0 0
      %3023 = vmatpush1.bf16.msra.mxu0 %v3004
      %3024 = vmatprep.subr.bf16.mxu0 0
      %3025 = vmatpush1.bf16.msra.mxu0 %v3003
      %3026 = vmatprep.subr.bf16.mxu0 0
      %3027 = vmatpush1.bf16.msra.mxu0 %v3002
      %3028 = vmatprep.subr.bf16.mxu0 0
      %3029 = vmatpush1.bf16.msra.mxu0 %v3001
      %3030 = vmatprep.subr.bf16.mxu0 0
      %3031 = vmatpush1.bf16.msra.mxu0 %v3000
      %3032 = vmatprep.subr.bf16.mxu0 0
      %3033 = vmatpush2.bf16.msra.mxu0 0
      %3034 = vmatprep.subr.bf16.mxu0 0
      %3035 = vmatpush2.bf16.msra.mxu0 0
      %3036 = vmatprep.subr.bf16.mxu0 0
      %3037 = vmatpush2.bf16.msra.mxu0 0
      %3038 = vmatprep.subr.bf16.mxu0 0
      %3039 = vmatpush2.bf16.msra.mxu0 0
      %3040 = vmatprep.subr.bf16.mxu0 0
      %3041 = vmatpush2.bf16.msra.mxu0 0
      %3042 = vmatprep.subr.bf16.mxu0 0
      %3043 = vmatpush2.bf16.msra.mxu0 0
      %3044 = vmatprep.subr.bf16.mxu0 0
      %3045 = vmatpush2.bf16.msra.mxu0 0
      %3046 = vmatprep.subr.bf16.mxu0 0
      %3047 = vmatpush2.bf16.msra.mxu0 0
      %3048 = vmatprep.mubr.bf16.mxu0 0
      %3049 = vmatmul.mubr.bf16.gmra.mxu0 %v2960
      %v3050 = vpop.f32.mrf.mxu0
      %v3051 = vadd.f32 0.0, %v3050
      %v3052 = vpop.f32.mrf.mxu0
      %v3053 = vpop.f32.mrf.mxu0
      %v3054 = vadd.f32 0.0, %v3053
      %v3055 = vpop.f32.mrf.mxu0
      %3056 = vmatprep.mubr.bf16.mxu0 0
      %3057 = vmatmul.mubr.bf16.gmra.mxu0 %v2961
      %v3058 = vpop.f32.mrf.mxu0
      %v3059 = vadd.f32 0.0, %v3058
      %v3060 = vpop.f32.mrf.mxu0
      %v3061 = vpop.f32.mrf.mxu0
      %v3062 = vadd.f32 0.0, %v3061
      %v3063 = vpop.f32.mrf.mxu0
      %3064 = vmatprep.mubr.bf16.mxu0 0
      %3065 = vmatmul.mubr.bf16.gmra.mxu0 %v2962
      %v3066 = vpop.f32.mrf.mxu0
      %v3067 = vadd.f32 0.0, %v3066
      %v3068 = vpop.f32.mrf.mxu0
      %v3069 = vpop.f32.mrf.mxu0
      %v3070 = vadd.f32 0.0, %v3069
      %v3071 = vpop.f32.mrf.mxu0
      %3072 = vmatprep.mubr.bf16.mxu0 0
      %3073 = vmatmul.mubr.bf16.gmra.mxu0 %v2963
      %v3074 = vpop.f32.mrf.mxu0
      %v3075 = vadd.f32 0.0, %v3074
      %v3076 = vpop.f32.mrf.mxu0
      %v3077 = vpop.f32.mrf.mxu0
      %v3078 = vadd.f32 0.0, %v3077
      %v3079 = vpop.f32.mrf.mxu0
      %3080 = vdwg.mxu0
      %v3081 = vadd.f32 %v2910, %v3051
      %v3082 = vadd.f32 %v2911, %v3054
      %v3083 = vadd.f32 %v2912, %v3059
      %v3084 = vadd.f32 %v2913, %v3062
      %v3085 = vadd.f32 %v2914, %v3067
      %v3086 = vadd.f32 %v2915, %v3070
      %v3087 = vadd.f32 %v2916, %v3075
      %v3088 = vadd.f32 %v2917, %v3078
      %v3089 = vld [vmem:[%s2918] sm:$0xf]
      %v3090 = vld [vmem:[%s2918 + $0x4] sm:$0x1]
      %v3091 = vld [vmem:[%s2918 + $0x8] sm:$0xf]
      %v3092 = vld [vmem:[%s2918 + $0xc] sm:$0x1]
      %v3093 = vld [vmem:[%s2918 + $0x10] sm:$0xf]
      %v3094 = vld [vmem:[%s2918 + $0x14] sm:$0x1]
      %v3095 = vld [vmem:[%s2918 + $0x18] sm:$0xf]
      %v3096 = vld [vmem:[%s2918 + $0x1c] sm:$0x1]
      %v3097 = vld [vmem:[%s2918 + $0x20] sm:$0xf]
      %v3098 = vld [vmem:[%s2918 + $0x24] sm:$0x1]
      %v3099 = vld [vmem:[%s2918 + $0x28] sm:$0xf]
      %v3100 = vld [vmem:[%s2918 + $0x2c] sm:$0x1]
      %v3101 = vld [vmem:[%s2918 + $0x30] sm:$0xf]
      %v3102 = vld [vmem:[%s2918 + $0x34] sm:$0x1]
      %v3103 = vld [vmem:[%s2918 + $0x38] sm:$0xf]
      %v3104 = vld [vmem:[%s2918 + $0x3c] sm:$0x1]
      %v3106 = vshrl.u32 %v3089, 16
      %v3108 = vrot.slane %v3106, 4
      %v3109 = vshll.u32 %v3089, 16
      %v3111 = vrot.slane %v3109, 5
      %v3112 = vor.u32 %v3108, %v3111
      %v3113 = vrot.slane %v3112, 4
      %v3115 = vshll.u32 %v3090, 16
      %v3117 = vrot.slane %v3115, 5
      %v3118 = vsel %vm257, %v3113, %v3117
      %v3120 = vshrl.u32 %v3091, 16
      %v3122 = vrot.slane %v3120, 4
      %v3123 = vshll.u32 %v3091, 16
      %v3125 = vrot.slane %v3123, 5
      %v3126 = vor.u32 %v3122, %v3125
      %v3127 = vrot.slane %v3126, 4
      %v3129 = vshll.u32 %v3092, 16
      %v3131 = vrot.slane %v3129, 5
      %v3132 = vsel %vm257, %v3127, %v3131
      %v3134 = vshrl.u32 %v3093, 16
      %v3136 = vrot.slane %v3134, 4
      %v3137 = vshll.u32 %v3093, 16
      %v3139 = vrot.slane %v3137, 5
      %v3140 = vor.u32 %v3136, %v3139
      %v3141 = vrot.slane %v3140, 4
      %v3143 = vshll.u32 %v3094, 16
      %v3145 = vrot.slane %v3143, 5
      %v3146 = vsel %vm257, %v3141, %v3145
      %v3148 = vshrl.u32 %v3095, 16
      %v3150 = vrot.slane %v3148, 4
      %v3151 = vshll.u32 %v3095, 16
      %v3153 = vrot.slane %v3151, 5
      %v3154 = vor.u32 %v3150, %v3153
      %v3155 = vrot.slane %v3154, 4
      %v3157 = vshll.u32 %v3096, 16
      %v3159 = vrot.slane %v3157, 5
      %v3160 = vsel %vm257, %v3155, %v3159
      %v3162 = vshrl.u32 %v3097, 16
      %v3164 = vrot.slane %v3162, 4
      %v3165 = vshll.u32 %v3097, 16
      %v3167 = vrot.slane %v3165, 5
      %v3168 = vor.u32 %v3164, %v3167
      %v3169 = vrot.slane %v3168, 4
      %v3171 = vshll.u32 %v3098, 16
      %v3173 = vrot.slane %v3171, 5
      %v3174 = vsel %vm257, %v3169, %v3173
      %v3176 = vshrl.u32 %v3099, 16
      %v3178 = vrot.slane %v3176, 4
      %v3179 = vshll.u32 %v3099, 16
      %v3181 = vrot.slane %v3179, 5
      %v3182 = vor.u32 %v3178, %v3181
      %v3183 = vrot.slane %v3182, 4
      %v3185 = vshll.u32 %v3100, 16
      %v3187 = vrot.slane %v3185, 5
      %v3188 = vsel %vm257, %v3183, %v3187
      %v3190 = vshrl.u32 %v3101, 16
      %v3192 = vrot.slane %v3190, 4
      %v3193 = vshll.u32 %v3101, 16
      %v3195 = vrot.slane %v3193, 5
      %v3196 = vor.u32 %v3192, %v3195
      %v3197 = vrot.slane %v3196, 4
      %v3199 = vshll.u32 %v3102, 16
      %v3201 = vrot.slane %v3199, 5
      %v3202 = vsel %vm257, %v3197, %v3201
      %v3204 = vshrl.u32 %v3103, 16
      %v3206 = vrot.slane %v3204, 4
      %v3207 = vshll.u32 %v3103, 16
      %v3209 = vrot.slane %v3207, 5
      %v3210 = vor.u32 %v3206, %v3209
      %v3211 = vrot.slane %v3210, 4
      %v3213 = vshll.u32 %v3104, 16
      %v3215 = vrot.slane %v3213, 5
      %v3216 = vsel %vm257, %v3211, %v3215
      %s3217 = scalar_lea.vmem %s210, 832
      %v3218 = vld [vmem:[%s3217] sm:$0xf]
      %v3219 = vld [vmem:[%s3217 + $0x4] sm:$0xf]
      %v3220 = vld [vmem:[%s3217 + $0x8] sm:$0xf]
      %v3221 = vld [vmem:[%s3217 + $0xc] sm:$0xf]
      %v3222 = vld [vmem:[%s3217 + $0x10] sm:$0xf]
      %v3223 = vld [vmem:[%s3217 + $0x14] sm:$0xf]
      %v3224 = vld [vmem:[%s3217 + $0x18] sm:$0xf]
      %v3225 = vld [vmem:[%s3217 + $0x1c] sm:$0xf]
      %v3226 = vld [vmem:[%s3217 + $0x20] sm:$0xf]
      %v3227 = vld [vmem:[%s3217 + $0x24] sm:$0xf]
      %v3228 = vld [vmem:[%s3217 + $0x28] sm:$0xf]
      %v3229 = vld [vmem:[%s3217 + $0x2c] sm:$0xf]
      %v3230 = vld [vmem:[%s3217 + $0x30] sm:$0xf]
      %v3231 = vld [vmem:[%s3217 + $0x34] sm:$0xf]
      %v3232 = vld [vmem:[%s3217 + $0x38] sm:$0xf]
      %v3233 = vld [vmem:[%s3217 + $0x3c] sm:$0xf]
      %v3234 = vunpack.c.l.b16 %v3118
      %v3235 = vunpack.c.l.b16 %v3132
      %v3236 = vunpack.c.l.b16 %v3146
      %v3237 = vunpack.c.l.b16 %v3160
      %v3238 = vunpack.c.l.b16 %v3174
      %v3239 = vunpack.c.l.b16 %v3188
      %v3240 = vunpack.c.l.b16 %v3202
      %v3241 = vunpack.c.l.b16 %v3216
      %v3242 = vpack.c.b16 %v3235, %v3234
      %v3243 = vpack.c.b16 %v3237, %v3236
      %v3244 = vpack.c.b16 %v3239, %v3238
      %v3245 = vpack.c.b16 %v3241, %v3240
      %v3266 = vunpack.c.l.b16 %v3218
      %v3267 = vunpack.c.l.b16 %v3219
      %v3268 = vunpack.c.l.b16 %v3220
      %v3269 = vunpack.c.l.b16 %v3221
      %v3270 = vunpack.c.l.b16 %v3222
      %v3271 = vunpack.c.l.b16 %v3223
      %v3272 = vunpack.c.l.b16 %v3224
      %v3273 = vunpack.c.l.b16 %v3225
      %v3274 = vunpack.c.l.b16 %v3226
      %v3275 = vunpack.c.l.b16 %v3227
      %v3276 = vunpack.c.l.b16 %v3228
      %v3277 = vunpack.c.l.b16 %v3229
      %v3278 = vunpack.c.l.b16 %v3230
      %v3279 = vunpack.c.l.b16 %v3231
      %v3280 = vunpack.c.l.b16 %v3232
      %v3281 = vunpack.c.l.b16 %v3233
      %v3282 = vpack.c.b16 %v3267, %v3266
      %v3283 = vpack.c.b16 %v3269, %v3268
      %v3284 = vpack.c.b16 %v3271, %v3270
      %v3285 = vpack.c.b16 %v3273, %v3272
      %v3286 = vpack.c.b16 %v3275, %v3274
      %v3287 = vpack.c.b16 %v3277, %v3276
      %v3288 = vpack.c.b16 %v3279, %v3278
      %v3289 = vpack.c.b16 %v3281, %v3280
      %3298 = vmatprep.subr.bf16.mxu0 0
      %3299 = vmatpush1.bf16.msra.mxu0 %v3289
      %3300 = vmatprep.subr.bf16.mxu0 0
      %3301 = vmatpush1.bf16.msra.mxu0 %v3288
      %3302 = vmatprep.subr.bf16.mxu0 0
      %3303 = vmatpush1.bf16.msra.mxu0 %v3287
      %3304 = vmatprep.subr.bf16.mxu0 0
      %3305 = vmatpush1.bf16.msra.mxu0 %v3286
      %3306 = vmatprep.subr.bf16.mxu0 0
      %3307 = vmatpush1.bf16.msra.mxu0 %v3285
      %3308 = vmatprep.subr.bf16.mxu0 0
      %3309 = vmatpush1.bf16.msra.mxu0 %v3284
      %3310 = vmatprep.subr.bf16.mxu0 0
      %3311 = vmatpush1.bf16.msra.mxu0 %v3283
      %3312 = vmatprep.subr.bf16.mxu0 0
      %3313 = vmatpush1.bf16.msra.mxu0 %v3282
      %3314 = vmatprep.subr.bf16.mxu0 0
      %3315 = vmatpush2.bf16.msra.mxu0 0
      %3316 = vmatprep.subr.bf16.mxu0 0
      %3317 = vmatpush2.bf16.msra.mxu0 0
      %3318 = vmatprep.subr.bf16.mxu0 0
      %3319 = vmatpush2.bf16.msra.mxu0 0
      %3320 = vmatprep.subr.bf16.mxu0 0
      %3321 = vmatpush2.bf16.msra.mxu0 0
      %3322 = vmatprep.subr.bf16.mxu0 0
      %3323 = vmatpush2.bf16.msra.mxu0 0
      %3324 = vmatprep.subr.bf16.mxu0 0
      %3325 = vmatpush2.bf16.msra.mxu0 0
      %3326 = vmatprep.subr.bf16.mxu0 0
      %3327 = vmatpush2.bf16.msra.mxu0 0
      %3328 = vmatprep.subr.bf16.mxu0 0
      %3329 = vmatpush2.bf16.msra.mxu0 0
      %3330 = vmatprep.mubr.bf16.mxu0 0
      %3331 = vmatmul.mubr.bf16.gmra.mxu0 %v3242
      %v3332 = vpop.f32.mrf.mxu0
      %v3333 = vadd.f32 0.0, %v3332
      %v3334 = vpop.f32.mrf.mxu0
      %v3335 = vpop.f32.mrf.mxu0
      %v3336 = vadd.f32 0.0, %v3335
      %v3337 = vpop.f32.mrf.mxu0
      %3338 = vmatprep.mubr.bf16.mxu0 0
      %3339 = vmatmul.mubr.bf16.gmra.mxu0 %v3243
      %v3340 = vpop.f32.mrf.mxu0
      %v3341 = vadd.f32 0.0, %v3340
      %v3342 = vpop.f32.mrf.mxu0
      %v3343 = vpop.f32.mrf.mxu0
      %v3344 = vadd.f32 0.0, %v3343
      %v3345 = vpop.f32.mrf.mxu0
      %3346 = vmatprep.mubr.bf16.mxu0 0
      %3347 = vmatmul.mubr.bf16.gmra.mxu0 %v3244
      %v3348 = vpop.f32.mrf.mxu0
      %v3349 = vadd.f32 0.0, %v3348
      %v3350 = vpop.f32.mrf.mxu0
      %v3351 = vpop.f32.mrf.mxu0
      %v3352 = vadd.f32 0.0, %v3351
      %v3353 = vpop.f32.mrf.mxu0
      %3354 = vmatprep.mubr.bf16.mxu0 0
      %3355 = vmatmul.mubr.bf16.gmra.mxu0 %v3245
      %v3356 = vpop.f32.mrf.mxu0
      %v3357 = vadd.f32 0.0, %v3356
      %v3358 = vpop.f32.mrf.mxu0
      %v3359 = vpop.f32.mrf.mxu0
      %v3360 = vadd.f32 0.0, %v3359
      %v3361 = vpop.f32.mrf.mxu0
      %3362 = vdwg.mxu0
      %v3363 = vadd.f32 %v3081, %v3333
      %v3364 = vadd.f32 %v3082, %v3336
      %v3365 = vadd.f32 %v3083, %v3341
      %v3366 = vadd.f32 %v3084, %v3344
      %v3367 = vadd.f32 %v3085, %v3349
      %v3368 = vadd.f32 %v3086, %v3352
      %v3369 = vadd.f32 %v3087, %v3357
      %v3370 = vadd.f32 %v3088, %v3360
      %s3371 = scalar_lea.vmem %s206, 224
      %v3372 = vld [vmem:[%s3371] sm:$0xf]
      %v3373 = vld [vmem:[%s3371 + $0x8] sm:$0xf]
      %v3374 = vld [vmem:[%s3371 + $0x10] sm:$0xf]
      %v3375 = vld [vmem:[%s3371 + $0x18] sm:$0xf]
      %v3376 = vld [vmem:[%s3371 + $0x20] sm:$0xf]
      %v3377 = vld [vmem:[%s3371 + $0x28] sm:$0xf]
      %v3378 = vld [vmem:[%s3371 + $0x30] sm:$0xf]
      %v3379 = vld [vmem:[%s3371 + $0x38] sm:$0xf]
      %s3380 = scalar_lea.vmem %s210, 896
      %v3381 = vld [vmem:[%s3380] sm:$0xf]
      %v3382 = vld [vmem:[%s3380 + $0x4] sm:$0xf]
      %v3383 = vld [vmem:[%s3380 + $0x8] sm:$0xf]
      %v3384 = vld [vmem:[%s3380 + $0xc] sm:$0xf]
      %v3385 = vld [vmem:[%s3380 + $0x10] sm:$0xf]
      %v3386 = vld [vmem:[%s3380 + $0x14] sm:$0xf]
      %v3387 = vld [vmem:[%s3380 + $0x18] sm:$0xf]
      %v3388 = vld [vmem:[%s3380 + $0x1c] sm:$0xf]
      %v3389 = vld [vmem:[%s3380 + $0x20] sm:$0xf]
      %v3390 = vld [vmem:[%s3380 + $0x24] sm:$0xf]
      %v3391 = vld [vmem:[%s3380 + $0x28] sm:$0xf]
      %v3392 = vld [vmem:[%s3380 + $0x2c] sm:$0xf]
      %v3393 = vld [vmem:[%s3380 + $0x30] sm:$0xf]
      %v3394 = vld [vmem:[%s3380 + $0x34] sm:$0xf]
      %v3395 = vld [vmem:[%s3380 + $0x38] sm:$0xf]
      %v3396 = vld [vmem:[%s3380 + $0x3c] sm:$0xf]
      %v3405 = vunpack.c.l.b16 %v3372
      %v3406 = vunpack.c.l.b16 %v3373
      %v3407 = vunpack.c.l.b16 %v3374
      %v3408 = vunpack.c.l.b16 %v3375
      %v3409 = vunpack.c.l.b16 %v3376
      %v3410 = vunpack.c.l.b16 %v3377
      %v3411 = vunpack.c.l.b16 %v3378
      %v3412 = vunpack.c.l.b16 %v3379
      %v3413 = vpack.c.b16 %v3406, %v3405
      %v3414 = vpack.c.b16 %v3408, %v3407
      %v3415 = vpack.c.b16 %v3410, %v3409
      %v3416 = vpack.c.b16 %v3412, %v3411
      %v3437 = vunpack.c.l.b16 %v3381
      %v3438 = vunpack.c.l.b16 %v3382
      %v3439 = vunpack.c.l.b16 %v3383
      %v3440 = vunpack.c.l.b16 %v3384
      %v3441 = vunpack.c.l.b16 %v3385
      %v3442 = vunpack.c.l.b16 %v3386
      %v3443 = vunpack.c.l.b16 %v3387
      %v3444 = vunpack.c.l.b16 %v3388
      %v3445 = vunpack.c.l.b16 %v3389
      %v3446 = vunpack.c.l.b16 %v3390
      %v3447 = vunpack.c.l.b16 %v3391
      %v3448 = vunpack.c.l.b16 %v3392
      %v3449 = vunpack.c.l.b16 %v3393
      %v3450 = vunpack.c.l.b16 %v3394
      %v3451 = vunpack.c.l.b16 %v3395
      %v3452 = vunpack.c.l.b16 %v3396
      %v3453 = vpack.c.b16 %v3438, %v3437
      %v3454 = vpack.c.b16 %v3440, %v3439
      %v3455 = vpack.c.b16 %v3442, %v3441
      %v3456 = vpack.c.b16 %v3444, %v3443
      %v3457 = vpack.c.b16 %v3446, %v3445
      %v3458 = vpack.c.b16 %v3448, %v3447
      %v3459 = vpack.c.b16 %v3450, %v3449
      %v3460 = vpack.c.b16 %v3452, %v3451
      %3469 = vmatprep.subr.bf16.mxu0 0
      %3470 = vmatpush1.bf16.msra.mxu0 %v3460
      %3471 = vmatprep.subr.bf16.mxu0 0
      %3472 = vmatpush1.bf16.msra.mxu0 %v3459
      %3473 = vmatprep.subr.bf16.mxu0 0
      %3474 = vmatpush1.bf16.msra.mxu0 %v3458
      %3475 = vmatprep.subr.bf16.mxu0 0
      %3476 = vmatpush1.bf16.msra.mxu0 %v3457
      %3477 = vmatprep.subr.bf16.mxu0 0
      %3478 = vmatpush1.bf16.msra.mxu0 %v3456
      %3479 = vmatprep.subr.bf16.mxu0 0
      %3480 = vmatpush1.bf16.msra.mxu0 %v3455
      %3481 = vmatprep.subr.bf16.mxu0 0
      %3482 = vmatpush1.bf16.msra.mxu0 %v3454
      %3483 = vmatprep.subr.bf16.mxu0 0
      %3484 = vmatpush1.bf16.msra.mxu0 %v3453
      %3485 = vmatprep.subr.bf16.mxu0 0
      %3486 = vmatpush2.bf16.msra.mxu0 0
      %3487 = vmatprep.subr.bf16.mxu0 0
      %3488 = vmatpush2.bf16.msra.mxu0 0
      %3489 = vmatprep.subr.bf16.mxu0 0
      %3490 = vmatpush2.bf16.msra.mxu0 0
      %3491 = vmatprep.subr.bf16.mxu0 0
      %3492 = vmatpush2.bf16.msra.mxu0 0
      %3493 = vmatprep.subr.bf16.mxu0 0
      %3494 = vmatpush2.bf16.msra.mxu0 0
      %3495 = vmatprep.subr.bf16.mxu0 0
      %3496 = vmatpush2.bf16.msra.mxu0 0
      %3497 = vmatprep.subr.bf16.mxu0 0
      %3498 = vmatpush2.bf16.msra.mxu0 0
      %3499 = vmatprep.subr.bf16.mxu0 0
      %3500 = vmatpush2.bf16.msra.mxu0 0
      %3501 = vmatprep.mubr.bf16.mxu0 0
      %3502 = vmatmul.mubr.bf16.gmra.mxu0 %v3413
      %v3503 = vpop.f32.mrf.mxu0
      %v3504 = vadd.f32 0.0, %v3503
      %v3505 = vpop.f32.mrf.mxu0
      %v3506 = vpop.f32.mrf.mxu0
      %v3507 = vadd.f32 0.0, %v3506
      %v3508 = vpop.f32.mrf.mxu0
      %3509 = vmatprep.mubr.bf16.mxu0 0
      %3510 = vmatmul.mubr.bf16.gmra.mxu0 %v3414
      %v3511 = vpop.f32.mrf.mxu0
      %v3512 = vadd.f32 0.0, %v3511
      %v3513 = vpop.f32.mrf.mxu0
      %v3514 = vpop.f32.mrf.mxu0
      %v3515 = vadd.f32 0.0, %v3514
      %v3516 = vpop.f32.mrf.mxu0
      %3517 = vmatprep.mubr.bf16.mxu0 0
      %3518 = vmatmul.mubr.bf16.gmra.mxu0 %v3415
      %v3519 = vpop.f32.mrf.mxu0
      %v3520 = vadd.f32 0.0, %v3519
      %v3521 = vpop.f32.mrf.mxu0
      %v3522 = vpop.f32.mrf.mxu0
      %v3523 = vadd.f32 0.0, %v3522
      %v3524 = vpop.f32.mrf.mxu0
      %3525 = vmatprep.mubr.bf16.mxu0 0
      %3526 = vmatmul.mubr.bf16.gmra.mxu0 %v3416
      %v3527 = vpop.f32.mrf.mxu0
      %v3528 = vadd.f32 0.0, %v3527
      %v3529 = vpop.f32.mrf.mxu0
      %v3530 = vpop.f32.mrf.mxu0
      %v3531 = vadd.f32 0.0, %v3530
      %v3532 = vpop.f32.mrf.mxu0
      %3533 = vdwg.mxu0
      %v3534 = vadd.f32 %v3363, %v3504
      %v3535 = vadd.f32 %v3364, %v3507
      %v3536 = vadd.f32 %v3365, %v3512
      %v3537 = vadd.f32 %v3366, %v3515
      %v3538 = vadd.f32 %v3367, %v3520
      %v3539 = vadd.f32 %v3368, %v3523
      %v3540 = vadd.f32 %v3369, %v3528
      %v3541 = vadd.f32 %v3370, %v3531
      %v3542 = vld [vmem:[%s3371] sm:$0xf]
      %v3543 = vld [vmem:[%s3371 + $0x4] sm:$0x1]
      %v3544 = vld [vmem:[%s3371 + $0x8] sm:$0xf]
      %v3545 = vld [vmem:[%s3371 + $0xc] sm:$0x1]
      %v3546 = vld [vmem:[%s3371 + $0x10] sm:$0xf]
      %v3547 = vld [vmem:[%s3371 + $0x14] sm:$0x1]
      %v3548 = vld [vmem:[%s3371 + $0x18] sm:$0xf]
      %v3549 = vld [vmem:[%s3371 + $0x1c] sm:$0x1]
      %v3550 = vld [vmem:[%s3371 + $0x20] sm:$0xf]
      %v3551 = vld [vmem:[%s3371 + $0x24] sm:$0x1]
      %v3552 = vld [vmem:[%s3371 + $0x28] sm:$0xf]
      %v3553 = vld [vmem:[%s3371 + $0x2c] sm:$0x1]
      %v3554 = vld [vmem:[%s3371 + $0x30] sm:$0xf]
      %v3555 = vld [vmem:[%s3371 + $0x34] sm:$0x1]
      %v3556 = vld [vmem:[%s3371 + $0x38] sm:$0xf]
      %v3557 = vld [vmem:[%s3371 + $0x3c] sm:$0x1]
      %v3559 = vshrl.u32 %v3542, 16
      %v3561 = vrot.slane %v3559, 4
      %v3562 = vshll.u32 %v3542, 16
      %v3564 = vrot.slane %v3562, 5
      %v3565 = vor.u32 %v3561, %v3564
      %v3566 = vrot.slane %v3565, 4
      %v3568 = vshll.u32 %v3543, 16
      %v3570 = vrot.slane %v3568, 5
      %v3571 = vsel %vm257, %v3566, %v3570
      %v3573 = vshrl.u32 %v3544, 16
      %v3575 = vrot.slane %v3573, 4
      %v3576 = vshll.u32 %v3544, 16
      %v3578 = vrot.slane %v3576, 5
      %v3579 = vor.u32 %v3575, %v3578
      %v3580 = vrot.slane %v3579, 4
      %v3582 = vshll.u32 %v3545, 16
      %v3584 = vrot.slane %v3582, 5
      %v3585 = vsel %vm257, %v3580, %v3584
      %v3587 = vshrl.u32 %v3546, 16
      %v3589 = vrot.slane %v3587, 4
      %v3590 = vshll.u32 %v3546, 16
      %v3592 = vrot.slane %v3590, 5
      %v3593 = vor.u32 %v3589, %v3592
      %v3594 = vrot.slane %v3593, 4
      %v3596 = vshll.u32 %v3547, 16
      %v3598 = vrot.slane %v3596, 5
      %v3599 = vsel %vm257, %v3594, %v3598
      %v3601 = vshrl.u32 %v3548, 16
      %v3603 = vrot.slane %v3601, 4
      %v3604 = vshll.u32 %v3548, 16
      %v3606 = vrot.slane %v3604, 5
      %v3607 = vor.u32 %v3603, %v3606
      %v3608 = vrot.slane %v3607, 4
      %v3610 = vshll.u32 %v3549, 16
      %v3612 = vrot.slane %v3610, 5
      %v3613 = vsel %vm257, %v3608, %v3612
      %v3615 = vshrl.u32 %v3550, 16
      %v3617 = vrot.slane %v3615, 4
      %v3618 = vshll.u32 %v3550, 16
      %v3620 = vrot.slane %v3618, 5
      %v3621 = vor.u32 %v3617, %v3620
      %v3622 = vrot.slane %v3621, 4
      %v3624 = vshll.u32 %v3551, 16
      %v3626 = vrot.slane %v3624, 5
      %v3627 = vsel %vm257, %v3622, %v3626
      %v3629 = vshrl.u32 %v3552, 16
      %v3631 = vrot.slane %v3629, 4
      %v3632 = vshll.u32 %v3552, 16
      %v3634 = vrot.slane %v3632, 5
      %v3635 = vor.u32 %v3631, %v3634
      %v3636 = vrot.slane %v3635, 4
      %v3638 = vshll.u32 %v3553, 16
      %v3640 = vrot.slane %v3638, 5
      %v3641 = vsel %vm257, %v3636, %v3640
      %v3643 = vshrl.u32 %v3554, 16
      %v3645 = vrot.slane %v3643, 4
      %v3646 = vshll.u32 %v3554, 16
      %v3648 = vrot.slane %v3646, 5
      %v3649 = vor.u32 %v3645, %v3648
      %v3650 = vrot.slane %v3649, 4
      %v3652 = vshll.u32 %v3555, 16
      %v3654 = vrot.slane %v3652, 5
      %v3655 = vsel %vm257, %v3650, %v3654
      %v3657 = vshrl.u32 %v3556, 16
      %v3659 = vrot.slane %v3657, 4
      %v3660 = vshll.u32 %v3556, 16
      %v3662 = vrot.slane %v3660, 5
      %v3663 = vor.u32 %v3659, %v3662
      %v3664 = vrot.slane %v3663, 4
      %v3666 = vshll.u32 %v3557, 16
      %v3668 = vrot.slane %v3666, 5
      %v3669 = vsel %vm257, %v3664, %v3668
      %s3670 = scalar_lea.vmem %s210, 960
      %v3671 = vld [vmem:[%s3670] sm:$0xf]
      %v3672 = vld [vmem:[%s3670 + $0x4] sm:$0xf]
      %v3673 = vld [vmem:[%s3670 + $0x8] sm:$0xf]
      %v3674 = vld [vmem:[%s3670 + $0xc] sm:$0xf]
      %v3675 = vld [vmem:[%s3670 + $0x10] sm:$0xf]
      %v3676 = vld [vmem:[%s3670 + $0x14] sm:$0xf]
      %v3677 = vld [vmem:[%s3670 + $0x18] sm:$0xf]
      %v3678 = vld [vmem:[%s3670 + $0x1c] sm:$0xf]
      %v3679 = vld [vmem:[%s3670 + $0x20] sm:$0xf]
      %v3680 = vld [vmem:[%s3670 + $0x24] sm:$0xf]
      %v3681 = vld [vmem:[%s3670 + $0x28] sm:$0xf]
      %v3682 = vld [vmem:[%s3670 + $0x2c] sm:$0xf]
      %v3683 = vld [vmem:[%s3670 + $0x30] sm:$0xf]
      %v3684 = vld [vmem:[%s3670 + $0x34] sm:$0xf]
      %v3685 = vld [vmem:[%s3670 + $0x38] sm:$0xf]
      %v3686 = vld [vmem:[%s3670 + $0x3c] sm:$0xf]
      %v3687 = vunpack.c.l.b16 %v3571
      %v3688 = vunpack.c.l.b16 %v3585
      %v3689 = vunpack.c.l.b16 %v3599
      %v3690 = vunpack.c.l.b16 %v3613
      %v3691 = vunpack.c.l.b16 %v3627
      %v3692 = vunpack.c.l.b16 %v3641
      %v3693 = vunpack.c.l.b16 %v3655
      %v3694 = vunpack.c.l.b16 %v3669
      %v3695 = vpack.c.b16 %v3688, %v3687
      %v3696 = vpack.c.b16 %v3690, %v3689
      %v3697 = vpack.c.b16 %v3692, %v3691
      %v3698 = vpack.c.b16 %v3694, %v3693
      %v3719 = vunpack.c.l.b16 %v3671
      %v3720 = vunpack.c.l.b16 %v3672
      %v3721 = vunpack.c.l.b16 %v3673
      %v3722 = vunpack.c.l.b16 %v3674
      %v3723 = vunpack.c.l.b16 %v3675
      %v3724 = vunpack.c.l.b16 %v3676
      %v3725 = vunpack.c.l.b16 %v3677
      %v3726 = vunpack.c.l.b16 %v3678
      %v3727 = vunpack.c.l.b16 %v3679
      %v3728 = vunpack.c.l.b16 %v3680
      %v3729 = vunpack.c.l.b16 %v3681
      %v3730 = vunpack.c.l.b16 %v3682
      %v3731 = vunpack.c.l.b16 %v3683
      %v3732 = vunpack.c.l.b16 %v3684
      %v3733 = vunpack.c.l.b16 %v3685
      %v3734 = vunpack.c.l.b16 %v3686
      %v3735 = vpack.c.b16 %v3720, %v3719
      %v3736 = vpack.c.b16 %v3722, %v3721
      %v3737 = vpack.c.b16 %v3724, %v3723
      %v3738 = vpack.c.b16 %v3726, %v3725
      %v3739 = vpack.c.b16 %v3728, %v3727
      %v3740 = vpack.c.b16 %v3730, %v3729
      %v3741 = vpack.c.b16 %v3732, %v3731
      %v3742 = vpack.c.b16 %v3734, %v3733
      %3751 = vmatprep.subr.bf16.mxu0 0
      %3752 = vmatpush1.bf16.msra.mxu0 %v3742
      %3753 = vmatprep.subr.bf16.mxu0 0
      %3754 = vmatpush1.bf16.msra.mxu0 %v3741
      %3755 = vmatprep.subr.bf16.mxu0 0
      %3756 = vmatpush1.bf16.msra.mxu0 %v3740
      %3757 = vmatprep.subr.bf16.mxu0 0
      %3758 = vmatpush1.bf16.msra.mxu0 %v3739
      %3759 = vmatprep.subr.bf16.mxu0 0
      %3760 = vmatpush1.bf16.msra.mxu0 %v3738
      %3761 = vmatprep.subr.bf16.mxu0 0
      %3762 = vmatpush1.bf16.msra.mxu0 %v3737
      %3763 = vmatprep.subr.bf16.mxu0 0
      %3764 = vmatpush1.bf16.msra.mxu0 %v3736
      %3765 = vmatprep.subr.bf16.mxu0 0
      %3766 = vmatpush1.bf16.msra.mxu0 %v3735
      %3767 = vmatprep.subr.bf16.mxu0 0
      %3768 = vmatpush2.bf16.msra.mxu0 0
      %3769 = vmatprep.subr.bf16.mxu0 0
      %3770 = vmatpush2.bf16.msra.mxu0 0
      %3771 = vmatprep.subr.bf16.mxu0 0
      %3772 = vmatpush2.bf16.msra.mxu0 0
      %3773 = vmatprep.subr.bf16.mxu0 0
      %3774 = vmatpush2.bf16.msra.mxu0 0
      %3775 = vmatprep.subr.bf16.mxu0 0
      %3776 = vmatpush2.bf16.msra.mxu0 0
      %3777 = vmatprep.subr.bf16.mxu0 0
      %3778 = vmatpush2.bf16.msra.mxu0 0
      %3779 = vmatprep.subr.bf16.mxu0 0
      %3780 = vmatpush2.bf16.msra.mxu0 0
      %3781 = vmatprep.subr.bf16.mxu0 0
      %3782 = vmatpush2.bf16.msra.mxu0 0
      %3783 = vmatprep.mubr.bf16.mxu0 0
      %3784 = vmatmul.mubr.bf16.gmra.mxu0 %v3695
      %v3785 = vpop.f32.mrf.mxu0
      %v3786 = vadd.f32 0.0, %v3785
      %v3787 = vpop.f32.mrf.mxu0
      %v3788 = vpop.f32.mrf.mxu0
      %v3789 = vadd.f32 0.0, %v3788
      %v3790 = vpop.f32.mrf.mxu0
      %3791 = vmatprep.mubr.bf16.mxu0 0
      %3792 = vmatmul.mubr.bf16.gmra.mxu0 %v3696
      %v3793 = vpop.f32.mrf.mxu0
      %v3794 = vadd.f32 0.0, %v3793
      %v3795 = vpop.f32.mrf.mxu0
      %v3796 = vpop.f32.mrf.mxu0
      %v3797 = vadd.f32 0.0, %v3796
      %v3798 = vpop.f32.mrf.mxu0
      %3799 = vmatprep.mubr.bf16.mxu0 0
      %3800 = vmatmul.mubr.bf16.gmra.mxu0 %v3697
      %v3801 = vpop.f32.mrf.mxu0
      %v3802 = vadd.f32 0.0, %v3801
      %v3803 = vpop.f32.mrf.mxu0
      %v3804 = vpop.f32.mrf.mxu0
      %v3805 = vadd.f32 0.0, %v3804
      %v3806 = vpop.f32.mrf.mxu0
      %3807 = vmatprep.mubr.bf16.mxu0 0
      %3808 = vmatmul.mubr.bf16.gmra.mxu0 %v3698
      %v3809 = vpop.f32.mrf.mxu0
      %v3810 = vadd.f32 0.0, %v3809
      %v3811 = vpop.f32.mrf.mxu0
      %v3812 = vpop.f32.mrf.mxu0
      %v3813 = vadd.f32 0.0, %v3812
      %v3814 = vpop.f32.mrf.mxu0
      %3815 = vdwg.mxu0
      %v3816 = vadd.f32 %v3534, %v3786
      %v3817 = vadd.f32 %v3535, %v3789
      %v3818 = vadd.f32 %v3536, %v3794
      %v3819 = vadd.f32 %v3537, %v3797
      %v3820 = vadd.f32 %v3538, %v3802
      %v3821 = vadd.f32 %v3539, %v3805
      %v3822 = vadd.f32 %v3540, %v3810
      %v3823 = vadd.f32 %v3541, %v3813
      %v3824 = vld [vmem:[%s213] sm:$0x1]
      %v3826 = vlaneseq
      %v3827 = vshrl.u32 %v3826, 7
      %v3828 = vsub.s32 0, %v3827
      %v3829 = vrot.slane %v3824, %v3828
      %v3831 = vadd.f32 %v3816, %v3829
      %v3832 = vadd.f32 %v3817, %v3829
      %v3833 = vadd.f32 %v3818, %v3829
      %v3834 = vadd.f32 %v3819, %v3829
      %v3835 = vadd.f32 %v3820, %v3829
      %v3836 = vadd.f32 %v3821, %v3829
      %v3837 = vadd.f32 %v3822, %v3829
      %v3838 = vadd.f32 %v3823, %v3829
      %3839 = vst [vmem:[%s221] sm:$0xff] %v3831
      %3840 = vst [vmem:[%s221 + $0x8] sm:$0xff] %v3832
      %3841 = vst [vmem:[%s221 + $0x10] sm:$0xff] %v3833
      %3842 = vst [vmem:[%s221 + $0x18] sm:$0xff] %v3834
      %3843 = vst [vmem:[%s221 + $0x20] sm:$0xff] %v3835
      %3844 = vst [vmem:[%s221 + $0x28] sm:$0xff] %v3836
      %3845 = vst [vmem:[%s221 + $0x30] sm:$0xff] %v3837
      %3846 = vst [vmem:[%s221 + $0x38] sm:$0xff] %v3838
      %p3847 = scmp.lt.s32.totalorder %s18, 1
      %s3848 = scalar_select %p3847, %s18, 1
      %p3849 = scmp.lt.s32.totalorder %s19, 0
      %s3850 = scalar_select %p3849, %s19, 0
      %s3851 = smul.addr %s3848, 8
      %s3852 = sadd.s32 %s3850, %s3851
      %s3853 = smul.addr %s3852, 8
      %s3854 = scalar_lea.vmem %s3, %s3853
      // Predicated region
      $region33: #{cond_block_forward.5} parent=31 // pred_check
        %p3855 = pneg %p124
      $region34: #{cond_block_forward.5} parent=31 // pred_check_branch
        %3857 = sbr.rel (%p3855) target = $region36
      $region35: #{cond_block_forward.5} parent=31 // pred_region
        _
      $region36: #{cond_block_forward.5} parent=31 // pred_fallthru
        _
    $region32: #{cond_block_forward.5} parent=5 // pred_fallthru
      _
    %p3858 = scmp.le.s32.totalorder 2, %s9
    // Predicated region
    $region37: #{cond_block_forward.5} parent=5 // pred_check
      %p3859 = pneg %p3858
    $region38: #{cond_block_forward.5} parent=5 // pred_check_branch
      %3861 = sbr.rel (%p3859) target = $region40
    $region39: #{cond_block_forward.5} parent=5 // pred_region
      %s3862 = ssub.s32 %s9, 2
      // Predicated region
      $region41: #{cond_block_forward.5} parent=39 // pred_check
        %p3863 = pneg %p130
      $region42: #{cond_block_forward.5} parent=39 // pred_check_branch
        %3865 = sbr.rel (%p3863) target = $region44
      $region43: #{cond_block_forward.5} parent=39 // pred_region
        %p3866 = scmp.lt.s32.totalorder %s20, 1
        %s3867 = scalar_select %p3866, %s20, 1
        %p3868 = scmp.lt.s32.totalorder %s21, 0
        %s3869 = scalar_select %p3868, %s21, 0
        %s3870 = smul.addr %s3867, 8
        %s3871 = sadd.s32 %s3869, %s3870
        %s3872 = smul.addr %s3871, 8
        %s3873 = scalar_lea.vmem %s3, %s3872
      $region44: #{cond_block_forward.5} parent=39 // pred_fallthru
        _
    $region40: #{cond_block_forward.5} parent=5 // pred_fallthru
      _
  $region6: #{cond_block_forward.5} parent=0 // loop_footer
    %s13 = sadd.s32 1, %s9
  $region7: #{cond_block_forward.5} parent=0 // loop_footer_branch
    %8 = sbr.rel target = $region3
  $region8: #{cond_block_forward.5} parent=0 // loop_exit
    _

// kernel: cond_block_forward.4
$region0: #{cond_block_forward.4}
  #allocation0 [shape = 'u32[]', space=smem, size = 0x4, offset = 0x4, fixed_abs, tag = 'smem constant byte address 0x4 - core index']
  #allocation1 [shape = 'u32[144,128]{1,0:T(1,128)}', space=vmem, size = 0x12000, scoped, tag = 'internal scratch']
  #allocation2 [shape = 'bf16[18,18,128]{2,1,0:T(8,128)(2,1)}', space=vmem, size = 0x1b000, scoped, tag = 'scratch operand']
  %s0 = inlined_call_operand.vmem [shape: bf16[2,16,16,128], index: 0, kind: input, shape index: {}]
  %s1 = inlined_call_operand.vmem [shape: f32[2,2,128], index: 1, kind: input, shape index: {}]
  %s2 = inlined_call_operand.vmem [shape: f32[1,128], index: 2, kind: input, shape index: {}]
  %s3 = inlined_call_operand.vmem [shape: f32[1,128], index: 3, kind: input, shape index: {}]
  %s4 = inlined_call_operand.vmem [shape: f32[2,1,32], index: 4, kind: input, shape index: {}]
  %s5 = inlined_call_operand.vmem [shape: f32[32,128], index: 5, kind: input, shape index: {}]
  %s6 = inlined_call_operand.vmem [shape: f32[1,128], index: 6, kind: input, shape index: {}]
  %s7 = inlined_call_operand.vmem [shape: bf16[3,3,128,128], index: 7, kind: input, shape index: {}]
  %s8 = inlined_call_operand.vmem [shape: f32[1,128], index: 8, kind: input, shape index: {}]
  %s9 = inlined_call_operand.vmem [shape: bf16[2,16,16,128], index: 9, kind: output, shape index: {0}]
  %s10 = inlined_call_operand.vmem [shape: f32[2,2,128], index: 10, kind: output, shape index: {1}]
  %11 = xla_tuple %s9, %s10
  %s12 = sld [smem:[#allocation0]]
  $region77: #{cond_block_forward.4} parent=0
    _
  %s14 = ssub.s32 1, %s12
  %s15 = scalar_select 0, %s14, %s12
  loop: start=0, step=1, limit=4
  $region2: #{cond_block_forward.4} parent=0 // loop_pre_header
    _
  $region3: #{cond_block_forward.4} parent=0 // loop_header
    %s17 = sphi 0, %s21
    %p18 = scmp.ge.s32.totalorder %s17, 4
    %s24 = sphi 0, %s36
    %s25 = sphi 0, %s32
    %s26 = sphi 0, %s24
    %s27 = sphi 0, %s25
    %s28 = sphi 0, %s26
    %s29 = sphi 0, %s27
    %s39 = sphi 0, %s41
    %s42 = sphi 0, %s39
    %s43 = sphi 0, %s42
    %s59 = sphi 0, %s43
    %s63 = sphi 0, %s63
    %s65 = sphi 0, %s63
    %s66 = sphi 0, %s65
    %s80 = sphi 0, %s66
    %s84 = sphi 0, %s84
    %s86 = sphi 0, %s84
    %s87 = sphi 0, %s86
    %s101 = sphi 0, %s87
    %s105 = sphi 0, %s105
    %s107 = sphi 0, %s105
    %s108 = sphi 0, %s107
    %s122 = sphi 0, %s108
    %s128 = sphi 0, %s130
    %s131 = sphi 0, %s128
    %s132 = sphi 0, %s131
    %s148 = sphi 0, %s132
    %s152 = sphi 0, %s152
    %s154 = sphi 0, %s152
    %s155 = sphi 0, %s154
    %s169 = sphi 0, %s155
    %s173 = sphi 0, %s173
    %s175 = sphi 0, %s173
    %s176 = sphi 0, %s175
    %s190 = sphi 0, %s176
    %s196 = sphi 0, %s198
    %s199 = sphi 0, %s196
    %s200 = sphi 0, %s199
    %s216 = sphi 0, %s200
    %s222 = sphi 0, %s224
    %s225 = sphi 0, %s222
    %s226 = sphi 0, %s225
    %s242 = sphi 0, %s226
    %s250 = sphi 0, %s252
    %s253 = sphi 0, %s250
    %s254 = sphi 0, %s253
    %s270 = sphi 0, %s254
    %s278 = sphi 0, %s280
    %s281 = sphi 0, %s278
    %s282 = sphi 0, %s281
    %s298 = sphi 0, %s282
  $region4: #{cond_block_forward.4} parent=0 // loop_header_branch
    %20 = sbr.rel (%p18) target = $region8
  $region5: #{cond_block_forward.4} parent=0 // loop_body
    %s22 = ssub.s32 %s17, 1
    %s23 = ssub.s32 %s17, 2
    %s30 = sadd.s32 1, %s25
    %p31 = scmp.ge.s32.totalorder %s30, 1
    %s32 = scalar_select %p31, 0, %s30
    %s33 = sadd.s32 1, %s24
    %s34 = scalar_select %p31, %s33, %s24
    %p35 = scmp.ge.s32.totalorder %s34, 2
    %s36 = scalar_select %p35, 0, %s34
    %s37 = ssub.s32 %s24, %s36
    %p38 = scmp.eq.s32.totalorder %s37, 0
    %s40 = sadd.s32 %s39, 1
    %s41 = scalar_select %p38, %s39, %s40
    %p44 = pneg %p38
    %p45 = scmp.eq.s32.totalorder %s17, 1
    %p46 = por %p44, %p45
    %p47 = scmp.ne.s32.totalorder %s39, %s42
    %p48 = scmp.eq.s32.totalorder %s17, 0
    %p49 = por %p47, %p48
    %p50 = scmp.ne.s32.totalorder %s39, %s42
    %p51 = scmp.eq.s32.totalorder %s22, 1
    %p52 = por %p50, %p51
    %p53 = scmp.ne.s32.totalorder %s42, %s43
    %p54 = scmp.eq.s32.totalorder %s22, 0
    %p55 = por %p53, %p54
    %p56 = scmp.ne.s32.totalorder %s42, %s43
    %p57 = scmp.eq.s32.totalorder %s23, 1
    %p58 = por %p56, %p57
    %p60 = scmp.ne.s32.totalorder %s43, %s59
    %p61 = scmp.eq.s32.totalorder %s23, 0
    %p62 = por %p60, %p61
    %s64 = sadd.s32 %s63, 1
    %p67 = scmp.eq.s32.totalorder %s17, 1
    %p68 = scmp.ne.s32.totalorder %s63, %s65
    %p69 = scmp.eq.s32.totalorder %s17, 0
    %p70 = por %p68, %p69
    %p71 = scmp.ne.s32.totalorder %s63, %s65
    %p72 = scmp.eq.s32.totalorder %s22, 1
    %p73 = por %p71, %p72
    %p74 = scmp.ne.s32.totalorder %s65, %s66
    %p75 = scmp.eq.s32.totalorder %s22, 0
    %p76 = por %p74, %p75
    %p77 = scmp.ne.s32.totalorder %s65, %s66
    %p78 = scmp.eq.s32.totalorder %s23, 1
    %p79 = por %p77, %p78
    %p81 = scmp.ne.s32.totalorder %s66, %s80
    %p82 = scmp.eq.s32.totalorder %s23, 0
    %p83 = por %p81, %p82
    %s85 = sadd.s32 %s84, 1
    %p88 = scmp.eq.s32.totalorder %s17, 1
    %p89 = scmp.ne.s32.totalorder %s84, %s86
    %p90 = scmp.eq.s32.totalorder %s17, 0
    %p91 = por %p89, %p90
    %p92 = scmp.ne.s32.totalorder %s84, %s86
    %p93 = scmp.eq.s32.totalorder %s22, 1
    %p94 = por %p92, %p93
    %p95 = scmp.ne.s32.totalorder %s86, %s87
    %p96 = scmp.eq.s32.totalorder %s22, 0
    %p97 = por %p95, %p96
    %p98 = scmp.ne.s32.totalorder %s86, %s87
    %p99 = scmp.eq.s32.totalorder %s23, 1
    %p100 = por %p98, %p99
    %p102 = scmp.ne.s32.totalorder %s87, %s101
    %p103 = scmp.eq.s32.totalorder %s23, 0
    %p104 = por %p102, %p103
    %s106 = sadd.s32 %s105, 1
    %p109 = scmp.eq.s32.totalorder %s17, 1
    %p110 = scmp.ne.s32.totalorder %s105, %s107
    %p111 = scmp.eq.s32.totalorder %s17, 0
    %p112 = por %p110, %p111
    %p113 = scmp.ne.s32.totalorder %s105, %s107
    %p114 = scmp.eq.s32.totalorder %s22, 1
    %p115 = por %p113, %p114
    %p116 = scmp.ne.s32.totalorder %s107, %s108
    %p117 = scmp.eq.s32.totalorder %s22, 0
    %p118 = por %p116, %p117
    %p119 = scmp.ne.s32.totalorder %s107, %s108
    %p120 = scmp.eq.s32.totalorder %s23, 1
    %p121 = por %p119, %p120
    %p123 = scmp.ne.s32.totalorder %s108, %s122
    %p124 = scmp.eq.s32.totalorder %s23, 0
    %p125 = por %p123, %p124
    %s126 = ssub.s32 %s24, %s36
    %p127 = scmp.eq.s32.totalorder %s126, 0
    %s129 = sadd.s32 %s128, 1
    %s130 = scalar_select %p127, %s128, %s129
    %p133 = pneg %p127
    %p134 = scmp.eq.s32.totalorder %s17, 1
    %p135 = por %p133, %p134
    %p136 = scmp.ne.s32.totalorder %s128, %s131
    %p137 = scmp.eq.s32.totalorder %s17, 0
    %p138 = por %p136, %p137
    %p139 = scmp.ne.s32.totalorder %s128, %s131
    %p140 = scmp.eq.s32.totalorder %s22, 1
    %p141 = por %p139, %p140
    %p142 = scmp.ne.s32.totalorder %s131, %s132
    %p143 = scmp.eq.s32.totalorder %s22, 0
    %p144 = por %p142, %p143
    %p145 = scmp.ne.s32.totalorder %s131, %s132
    %p146 = scmp.eq.s32.totalorder %s23, 1
    %p147 = por %p145, %p146
    %p149 = scmp.ne.s32.totalorder %s132, %s148
    %p150 = scmp.eq.s32.totalorder %s23, 0
    %p151 = por %p149, %p150
    %s153 = sadd.s32 %s152, 1
    %p156 = scmp.eq.s32.totalorder %s17, 1
    %p157 = scmp.ne.s32.totalorder %s152, %s154
    %p158 = scmp.eq.s32.totalorder %s17, 0
    %p159 = por %p157, %p158
    %p160 = scmp.ne.s32.totalorder %s152, %s154
    %p161 = scmp.eq.s32.totalorder %s22, 1
    %p162 = por %p160, %p161
    %p163 = scmp.ne.s32.totalorder %s154, %s155
    %p164 = scmp.eq.s32.totalorder %s22, 0
    %p165 = por %p163, %p164
    %p166 = scmp.ne.s32.totalorder %s154, %s155
    %p167 = scmp.eq.s32.totalorder %s23, 1
    %p168 = por %p166, %p167
    %p170 = scmp.ne.s32.totalorder %s155, %s169
    %p171 = scmp.eq.s32.totalorder %s23, 0
    %p172 = por %p170, %p171
    %s174 = sadd.s32 %s173, 1
    %p177 = scmp.eq.s32.totalorder %s17, 1
    %p178 = scmp.ne.s32.totalorder %s173, %s175
    %p179 = scmp.eq.s32.totalorder %s17, 0
    %p180 = por %p178, %p179
    %p181 = scmp.ne.s32.totalorder %s173, %s175
    %p182 = scmp.eq.s32.totalorder %s22, 1
    %p183 = por %p181, %p182
    %p184 = scmp.ne.s32.totalorder %s175, %s176
    %p185 = scmp.eq.s32.totalorder %s22, 0
    %p186 = por %p184, %p185
    %p187 = scmp.ne.s32.totalorder %s175, %s176
    %p188 = scmp.eq.s32.totalorder %s23, 1
    %p189 = por %p187, %p188
    %p191 = scmp.ne.s32.totalorder %s176, %s190
    %p192 = scmp.eq.s32.totalorder %s23, 0
    %p193 = por %p191, %p192
    %s194 = ssub.s32 %s25, %s32
    %p195 = scmp.eq.s32.totalorder %s194, 0
    %s197 = sadd.s32 %s196, 1
    %s198 = scalar_select %p195, %s196, %s197
    %p201 = pneg %p195
    %p202 = scmp.eq.s32.totalorder %s17, 1
    %p203 = por %p201, %p202
    %p204 = scmp.ne.s32.totalorder %s196, %s199
    %p205 = scmp.eq.s32.totalorder %s17, 0
    %p206 = por %p204, %p205
    %p207 = scmp.ne.s32.totalorder %s196, %s199
    %p208 = scmp.eq.s32.totalorder %s22, 1
    %p209 = por %p207, %p208
    %p210 = scmp.ne.s32.totalorder %s199, %s200
    %p211 = scmp.eq.s32.totalorder %s22, 0
    %p212 = por %p210, %p211
    %p213 = scmp.ne.s32.totalorder %s199, %s200
    %p214 = scmp.eq.s32.totalorder %s23, 1
    %p215 = por %p213, %p214
    %p217 = scmp.ne.s32.totalorder %s200, %s216
    %p218 = scmp.eq.s32.totalorder %s23, 0
    %p219 = por %p217, %p218
    %s220 = ssub.s32 %s25, %s32
    %p221 = scmp.eq.s32.totalorder %s220, 0
    %s223 = sadd.s32 %s222, 1
    %s224 = scalar_select %p221, %s222, %s223
    %p227 = pneg %p221
    %p228 = scmp.eq.s32.totalorder %s17, 1
    %p229 = por %p227, %p228
    %p230 = scmp.ne.s32.totalorder %s222, %s225
    %p231 = scmp.eq.s32.totalorder %s17, 0
    %p232 = por %p230, %p231
    %p233 = scmp.ne.s32.totalorder %s222, %s225
    %p234 = scmp.eq.s32.totalorder %s22, 1
    %p235 = por %p233, %p234
    %p236 = scmp.ne.s32.totalorder %s225, %s226
    %p237 = scmp.eq.s32.totalorder %s22, 0
    %p238 = por %p236, %p237
    %p239 = scmp.ne.s32.totalorder %s225, %s226
    %p240 = scmp.eq.s32.totalorder %s23, 1
    %p241 = por %p239, %p240
    %p243 = scmp.ne.s32.totalorder %s226, %s242
    %p244 = scmp.eq.s32.totalorder %s23, 0
    %p245 = por %p243, %p244
    %s246 = ssub.s32 %s24, %s36
    %s247 = ssub.s32 %s25, %s32
    %s248 = sor.u32 %s246, %s247
    %p249 = scmp.eq.s32.totalorder %s248, 0
    %s251 = sadd.s32 %s250, 1
    %s252 = scalar_select %p249, %s250, %s251
    %p255 = pneg %p249
    %p256 = scmp.eq.s32.totalorder %s17, 1
    %p257 = por %p255, %p256
    %p258 = scmp.ne.s32.totalorder %s250, %s253
    %p259 = scmp.eq.s32.totalorder %s17, 0
    %p260 = por %p258, %p259
    %p261 = scmp.ne.s32.totalorder %s250, %s253
    %p262 = scmp.eq.s32.totalorder %s22, 1
    %p263 = por %p261, %p262
    %p264 = scmp.ne.s32.totalorder %s253, %s254
    %p265 = scmp.eq.s32.totalorder %s22, 0
    %p266 = por %p264, %p265
    %p267 = scmp.ne.s32.totalorder %s253, %s254
    %p268 = scmp.eq.s32.totalorder %s23, 1
    %p269 = por %p267, %p268
    %p271 = scmp.ne.s32.totalorder %s254, %s270
    %p272 = scmp.eq.s32.totalorder %s23, 0
    %p273 = por %p271, %p272
    %s274 = ssub.s32 %s24, %s36
    %s275 = ssub.s32 %s25, %s32
    %s276 = sor.u32 %s274, %s275
    %p277 = scmp.eq.s32.totalorder %s276, 0
    %s279 = sadd.s32 %s278, 1
    %s280 = scalar_select %p277, %s278, %s279
    %p283 = pneg %p277
    %p284 = scmp.eq.s32.totalorder %s17, 1
    %p285 = por %p283, %p284
    %p286 = scmp.ne.s32.totalorder %s278, %s281
    %p287 = scmp.eq.s32.totalorder %s17, 0
    %p288 = por %p286, %p287
    %p289 = scmp.ne.s32.totalorder %s278, %s281
    %p290 = scmp.eq.s32.totalorder %s22, 1
    %p291 = por %p289, %p290
    %p292 = scmp.ne.s32.totalorder %s281, %s282
    %p293 = scmp.eq.s32.totalorder %s22, 0
    %p294 = por %p292, %p293
    %p295 = scmp.ne.s32.totalorder %s281, %s282
    %p296 = scmp.eq.s32.totalorder %s23, 1
    %p297 = por %p295, %p296
    %p299 = scmp.ne.s32.totalorder %s282, %s298
    %p300 = scmp.eq.s32.totalorder %s23, 0
    %p301 = por %p299, %p300
    %p302 = scmp.le.s32.totalorder 1, %s17
    %p303 = scmp.lt.s32.totalorder %s17, 3
    %p304 = pnand %p302, %p303
    %p305 = pneg %p304
    // Predicated region
    $region9: #{cond_block_forward.4} parent=5 // pred_check
      _
    $region10: #{cond_block_forward.4} parent=5 // pred_check_branch
      %307 = sbr.rel (%p304) target = $region12
    $region11: #{cond_block_forward.4} parent=5 // pred_region
      %s308 = ssub.s32 %s17, 1
      // Predicated region
      $region13: #{cond_block_forward.4} parent=11 // pred_check
        %p309 = pneg %p76
      $region14: #{cond_block_forward.4} parent=11 // pred_check_branch
        %311 = sbr.rel (%p309) target = $region16
      $region15: #{cond_block_forward.4} parent=11 // pred_region
        _
      $region16: #{cond_block_forward.4} parent=11 // pred_fallthru
        _
      // Predicated region
      $region17: #{cond_block_forward.4} parent=11 // pred_check
        %p312 = pneg %p97
      $region18: #{cond_block_forward.4} parent=11 // pred_check_branch
        %314 = sbr.rel (%p312) target = $region20
      $region19: #{cond_block_forward.4} parent=11 // pred_region
        _
      $region20: #{cond_block_forward.4} parent=11 // pred_fallthru
        _
      // Predicated region
      $region21: #{cond_block_forward.4} parent=11 // pred_check
        %p315 = pneg %p118
      $region22: #{cond_block_forward.4} parent=11 // pred_check_branch
        %317 = sbr.rel (%p315) target = $region24
      $region23: #{cond_block_forward.4} parent=11 // pred_region
        _
      $region24: #{cond_block_forward.4} parent=11 // pred_fallthru
        _
      // Predicated region
      $region25: #{cond_block_forward.4} parent=11 // pred_check
        %p318 = pneg %p165
      $region26: #{cond_block_forward.4} parent=11 // pred_check_branch
        %320 = sbr.rel (%p318) target = $region28
      $region27: #{cond_block_forward.4} parent=11 // pred_region
        _
      $region28: #{cond_block_forward.4} parent=11 // pred_fallthru
        _
      // Predicated region
      $region29: #{cond_block_forward.4} parent=11 // pred_check
        %p321 = pneg %p186
      $region30: #{cond_block_forward.4} parent=11 // pred_check_branch
        %323 = sbr.rel (%p321) target = $region32
      $region31: #{cond_block_forward.4} parent=11 // pred_region
        _
      $region32: #{cond_block_forward.4} parent=11 // pred_fallthru
        _
      // Predicated region
      $region33: #{cond_block_forward.4} parent=11 // pred_check
        %p324 = pneg %p212
      $region34: #{cond_block_forward.4} parent=11 // pred_check_branch
        %326 = sbr.rel (%p324) target = $region36
      $region35: #{cond_block_forward.4} parent=11 // pred_region
        %p327 = scmp.lt.s32.totalorder %s27, 0
        %s328 = scalar_select %p327, %s27, 0
        %s329 = smul.addr %s328, 4
        %s330 = scalar_lea.vmem %s7, %s329
      $region36: #{cond_block_forward.4} parent=11 // pred_fallthru
        _
      // Predicated region
      $region37: #{cond_block_forward.4} parent=11 // pred_check
        %p331 = pneg %p238
      $region38: #{cond_block_forward.4} parent=11 // pred_check_branch
        %333 = sbr.rel (%p331) target = $region40
      $region39: #{cond_block_forward.4} parent=11 // pred_region
        %p334 = scmp.lt.s32.totalorder %s27, 0
        %s335 = scalar_select %p334, %s27, 0
        %s336 = scalar_lea.vmem %s8, %s335
      $region40: #{cond_block_forward.4} parent=11 // pred_fallthru
        _
    $region12: #{cond_block_forward.4} parent=5 // pred_fallthru
      _
    %p337 = scmp.lt.s32.totalorder %s17, 2
    // Predicated region
    $region41: #{cond_block_forward.4} parent=5 // pred_check
      %p338 = pneg %p337
    $region42: #{cond_block_forward.4} parent=5 // pred_check_branch
      %340 = sbr.rel (%p338) target = $region44
    $region43: #{cond_block_forward.4} parent=5 // pred_region
      // Predicated region
      $region45: #{cond_block_forward.4} parent=43 // pred_check
        %p341 = pneg %p49
      $region46: #{cond_block_forward.4} parent=43 // pred_check_branch
        %343 = sbr.rel (%p341) target = $region48
      $region47: #{cond_block_forward.4} parent=43 // pred_region
        %p344 = scmp.lt.s32.totalorder %s24, 1
        %s345 = scalar_select %p344, %s24, 1
        %s346 = smul.addr %s345, 32
        %s347 = smul.addr %s346, 4
        %s348 = scalar_lea.vmem %s0, %s347
      $region48: #{cond_block_forward.4} parent=43 // pred_fallthru
        _
      // Predicated region
      $region49: #{cond_block_forward.4} parent=43 // pred_check
        %p349 = pneg %p138
      $region50: #{cond_block_forward.4} parent=43 // pred_check_branch
        %351 = sbr.rel (%p349) target = $region52
      $region51: #{cond_block_forward.4} parent=43 // pred_region
        %p352 = scmp.lt.s32.totalorder %s24, 1
        %s353 = scalar_select %p352, %s24, 1
        %s354 = scalar_lea.vmem %s4, %s353
      $region52: #{cond_block_forward.4} parent=43 // pred_fallthru
        _
    $region44: #{cond_block_forward.4} parent=5 // pred_fallthru
      _
    %p355 = scmp.le.s32.totalorder 1, %s17
    %p356 = scmp.lt.s32.totalorder %s17, 3
    %p357 = pnand %p355, %p356
    %p358 = pneg %p357
    // Predicated region
    $region53: #{cond_block_forward.4} parent=5 // pred_check
      _
    $region54: #{cond_block_forward.4} parent=5 // pred_check_branch
      %360 = sbr.rel (%p357) target = $region56
    $region55: #{cond_block_forward.4} parent=5 // pred_region
      %s361 = ssub.s32 %s17, 1
      %p362 = scmp.lt.s32.totalorder %s26, 1
      %s363 = scalar_select %p362, %s26, 1
      %s364 = smul.addr %s363, 32
      %s365 = smul.addr %s364, 4
      %s366 = scalar_lea.vmem %s0, %s365
      %p367 = pneg %p55
      %p368 = pneg %p52
      %p369 = pneg %p76
      %p370 = pneg %p73
      %p371 = pneg %p97
      %p372 = pneg %p94
      %p373 = pneg %p118
      %p374 = pneg %p115
      %p375 = scmp.lt.s32.totalorder %s26, 1
      %s376 = scalar_select %p375, %s26, 1
      %s377 = scalar_lea.vmem %s4, %s376
      %p378 = pneg %p144
      %p379 = pneg %p141
      %p380 = pneg %p165
      %p381 = pneg %p162
      %p382 = pneg %p186
      %p383 = pneg %p183
      %p384 = scmp.lt.s32.totalorder %s27, 0
      %s385 = scalar_select %p384, %s27, 0
      %s386 = smul.addr %s385, 4
      %s387 = scalar_lea.vmem %s7, %s386
      %p388 = pneg %p212
      %p389 = pneg %p209
      %p390 = scmp.lt.s32.totalorder %s27, 0
      %s391 = scalar_select %p390, %s27, 0
      %s392 = scalar_lea.vmem %s8, %s391
      %p393 = pneg %p238
      %p394 = pneg %p235
      %p395 = pneg %p266
      %p396 = pneg %p263
      %p397 = scmp.lt.s32.totalorder %s26, 1
      %s398 = scalar_select %p397, %s26, 1
      %p399 = scmp.lt.s32.totalorder %s27, 0
      %s400 = scalar_select %p399, %s27, 0
      %s401 = smul.addr %s398, 32
      %s402 = sadd.s32 %s400, %s401
      %s403 = smul.addr %s402, 4
      %s404 = scalar_lea.vmem %s9, %s403
      %p405 = pneg %p294
      %p406 = pneg %p291
      %p407 = scmp.lt.s32.totalorder %s26, 1
      %s408 = scalar_select %p407, %s26, 1
      %p409 = scmp.lt.s32.totalorder %s27, 0
      %s410 = scalar_select %p409, %s27, 0
      %s411 = sadd.s32 %s410, %s408
      %s412 = smul.addr %s411, 2
      %s413 = scalar_lea.vmem %s10, %s412
      %p414 = scmp.lt.s32.totalorder %s26, 1
      %s415 = scalar_select %p414, %s26, 1
      %s416 = smul.addr %s415, 32
      %s417 = smul.addr %s416, 4
      %s418 = scalar_lea.vmem %s0, %s417
      %p419 = scmp.lt.s32.totalorder %s26, 1
      %s420 = scalar_select %p419, %s26, 1
      %s421 = scalar_lea.vmem %s4, %s420
      %p422 = scmp.lt.s32.totalorder %s27, 0
      %s423 = scalar_select %p422, %s27, 0
      %s424 = smul.addr %s423, 4
      %s425 = scalar_lea.vmem %s7, %s424
      %p426 = scmp.lt.s32.totalorder %s27, 0
      %s427 = scalar_select %p426, %s27, 0
      %s428 = scalar_lea.vmem %s8, %s427
      %p429 = scmp.lt.s32.totalorder %s26, 1
      %s430 = scalar_select %p429, %s26, 1
      %p431 = scmp.lt.s32.totalorder %s27, 0
      %s432 = scalar_select %p431, %s27, 0
      %s433 = smul.addr %s430, 32
      %s434 = sadd.s32 %s432, %s433
      %s435 = smul.addr %s434, 4
      %s436 = scalar_lea.vmem %s9, %s435
      %p437 = scmp.lt.s32.totalorder %s26, 1
      %s438 = scalar_select %p437, %s26, 1
      %p439 = scmp.lt.s32.totalorder %s27, 0
      %s440 = scalar_select %p439, %s27, 0
      %s441 = sadd.s32 %s440, %s438
      %s442 = smul.addr %s441, 2
      %s443 = scalar_lea.vmem %s10, %s442
      %v445 = vld [vmem:[%s1] sm:$0x3]
      %v446 = vld [vmem:[%s1 + $0x2] sm:$0x3]
      %vm447 = vcmask 1041408
      %v448 = vsel %vm447, %v445, 0.0
      %v449 = vsel %vm447, %v446, 0.0
      %v450 = vadd.f32 %v448, %v449
      %v451 = vmul.f32 %v450, 0.001953125
      %v452 = vmul.f32 %v451, %v451
      %v454 = vrot.slane %v452, 7
      %v456 = vsub.f32 %v451, %v454
      %v457 = vld [vmem:[%s2] sm:$0x1]
      %v458 = vadd.f32 %v456, 1e-05
      %v459 = vrsqrt.pop %v458
      %v462 = vunpack.c.l.s4 1966171168
      %v463 = vunpack.c.0.s8 %v462
      %v464 = vlaneseq
      %v465 = vshrl.u32 %v464, 7
      %v466 = vsub.s32 %v463, %v465
      %v467 = vrot.slane %v459, %v466
      %v468 = vcombine.high %v467, %v467
      %v470 = vunpack.c.l.s4 1966171168
      %v471 = vunpack.c.0.s8 %v470
      %v472 = vlaneseq
      %v473 = vshrl.u32 %v472, 7
      %v474 = vsub.s32 %v471, %v473
      %v475 = vrot.slane %v468, %v474
      %v477 = vmul.f32 %v457, %v475
      %v478 = vld [vmem:[%s3] sm:$0x1]
      %v479 = vmul.f32 %v451, %v477
      %v480 = vsub.f32 %v478, %v479
      %v481 = vld [vmem:[%s421] sm:$0x1]
      %v482 = vld [vmem:[%s5] sm:$0xff]
      %v483 = vld [vmem:[%s5 + $0x8] sm:$0xff]
      %v484 = vld [vmem:[%s5 + $0x10] sm:$0xff]
      %v485 = vld [vmem:[%s5 + $0x18] sm:$0xff]
      %v486 = vld [vmem:[%s6] sm:$0x1]
      %vm487 = vcmask 261120
      %v489 = vsel %vm487, %v481, 0
      %491 = vmatprep.subr.mxu0 0.0
      %492 = vmatpush1.msra.mxu0 0.0
      %493 = vmatprep.subr.mxu0 0.0
      %494 = vmatpush1.msra.mxu0 0.0
      %495 = vmatprep.subr.mxu0 0.0
      %496 = vmatpush1.msra.mxu0 0.0
      %497 = vmatprep.subr.mxu0 0.0
      %498 = vmatpush1.msra.mxu0 0.0
      %499 = vmatprep.subr.mxu0 0.0
      %500 = vmatpush1.msra.mxu0 0.0
      %501 = vmatprep.subr.mxu0 0.0
      %502 = vmatpush1.msra.mxu0 0.0
      %503 = vmatprep.subr.mxu0 0.0
      %504 = vmatpush1.msra.mxu0 0.0
      %505 = vmatprep.subr.mxu0 0.0
      %506 = vmatpush1.msra.mxu0 0.0
      %507 = vmatprep.subr.mxu0 0.0
      %508 = vmatpush1.msra.mxu0 0.0
      %509 = vmatprep.subr.mxu0 0.0
      %510 = vmatpush1.msra.mxu0 0.0
      %511 = vmatprep.subr.mxu0 0.0
      %512 = vmatpush1.msra.mxu0 0.0
      %513 = vmatprep.subr.mxu0 0.0
      %514 = vmatpush1.msra.mxu0 0.0
      %515 = vmatprep.subr.mxu0 0.0
      %516 = vmatpush1.msra.mxu0 %v485
      %517 = vmatprep.subr.mxu0 0.0
      %518 = vmatpush1.msra.mxu0 %v484
      %519 = vmatprep.subr.mxu0 0.0
      %520 = vmatpush1.msra.mxu0 %v483
      %521 = vmatprep.subr.mxu0 0.0
      %522 = vmatpush1.msra.mxu0 %v482
      %523 = vmatprep.subr.mxu0 0.0
      %524 = vmatpush2.msra.mxu0 0.0
      %525 = vmatprep.subr.mxu0 0.0
      %526 = vmatpush2.msra.mxu0 0.0
      %527 = vmatprep.subr.mxu0 0.0
      %528 = vmatpush2.msra.mxu0 0.0
      %529 = vmatprep.subr.mxu0 0.0
      %530 = vmatpush2.msra.mxu0 0.0
      %531 = vmatprep.subr.mxu0 0.0
      %532 = vmatpush2.msra.mxu0 0.0
      %533 = vmatprep.subr.mxu0 0.0
      %534 = vmatpush2.msra.mxu0 0.0
      %535 = vmatprep.subr.mxu0 0.0
      %536 = vmatpush2.msra.mxu0 0.0
      %537 = vmatprep.subr.mxu0 0.0
      %538 = vmatpush2.msra.mxu0 0.0
      %539 = vmatprep.subr.mxu0 0.0
      %540 = vmatpush2.msra.mxu0 0.0
      %541 = vmatprep.subr.mxu0 0.0
      %542 = vmatpush2.msra.mxu0 0.0
      %543 = vmatprep.subr.mxu0 0.0
      %544 = vmatpush2.msra.mxu0 0.0
      %545 = vmatprep.subr.mxu0 0.0
      %546 = vmatpush2.msra.mxu0 0.0
      %547 = vmatprep.subr.mxu0 0.0
      %548 = vmatpush2.msra.mxu0 0.0
      %549 = vmatprep.subr.mxu0 0.0
      %550 = vmatpush2.msra.mxu0 0.0
      %551 = vmatprep.subr.mxu0 0.0
      %552 = vmatpush2.msra.mxu0 0.0
      %553 = vmatprep.subr.mxu0 0.0
      %554 = vmatpush2.msra.mxu0 0.0
      %555 = vmatprep.mubr.f32.mxu0 0.0
      %556 = vmatmul.mubr.f32.gmra.mxu0 %v489
      %v557 = vpop.f32.mrf.mxu0
      %v558 = vadd.f32 %v486, %v557
      %v559 = vpop.f32.mrf.mxu0
      %560 = vdwg.mxu0
      %v561 = vmul.f32 %v558, 0.02
      %v562 = vmax.f32 %v558, %v561
      %v563 = vadd.f32 %v480, %v562
      %564 = vst [vmem:[#allocation2] sm:$0xf] 0
      %565 = vst [vmem:[#allocation2 + $0x4] sm:$0xf] 0
      %566 = vst [vmem:[#allocation2 + $0x8] sm:$0x1] 0
      %s567 = scalar_lea.vmem [#allocation2], 204
      %568 = vst [vmem:[%s567] sm:$0xf] 0
      %569 = vst [vmem:[%s567 + $0x4] sm:$0xf] 0
      %570 = vst [vmem:[%s567 + $0x8] sm:$0x1] 0
      %vm571 = vcmask 1040384
      %vm572 = vsmask.f32 256
      %vm573 = vmand %vm571, %vm572
      %v574 = vld [vmem:[#allocation2] sm:$0x1]
      %v575 = vsel %vm573, 0, %v574
      %576 = vst [vmem:[#allocation2] sm:$0x1] %v575
      %v577 = vld [vmem:[#allocation2 + $0xc] sm:$0x1]
      %v578 = vsel %vm573, 0, %v577
      %579 = vst [vmem:[#allocation2 + $0xc] sm:$0x1] %v578
      %v580 = vld [vmem:[#allocation2 + $0x18] sm:$0x1]
      %v581 = vsel %vm573, 0, %v580
      %582 = vst [vmem:[#allocation2 + $0x18] sm:$0x1] %v581
      %v583 = vld [vmem:[#allocation2 + $0x24] sm:$0x1]
      %v584 = vsel %vm573, 0, %v583
      %585 = vst [vmem:[#allocation2 + $0x24] sm:$0x1] %v584
      %v586 = vld [vmem:[#allocation2 + $0x30] sm:$0x1]
      %v587 = vsel %vm573, 0, %v586
      %588 = vst [vmem:[#allocation2 + $0x30] sm:$0x1] %v587
      %v589 = vld [vmem:[#allocation2 + $0x3c] sm:$0x1]
      %v590 = vsel %vm573, 0, %v589
      %591 = vst [vmem:[#allocation2 + $0x3c] sm:$0x1] %v590
      %v592 = vld [vmem:[#allocation2 + $0x48] sm:$0x1]
      %v593 = vsel %vm573, 0, %v592
      %594 = vst [vmem:[#allocation2 + $0x48] sm:$0x1] %v593
      %v595 = vld [vmem:[#allocation2 + $0x54] sm:$0x1]
      %v596 = vsel %vm573, 0, %v595
      %597 = vst [vmem:[#allocation2 + $0x54] sm:$0x1] %v596
      %v598 = vld [vmem:[#allocation2 + $0x60] sm:$0x1]
      %v599 = vsel %vm573, 0, %v598
      %600 = vst [vmem:[#allocation2 + $0x60] sm:$0x1] %v599
      %v601 = vld [vmem:[#allocation2 + $0x6c] sm:$0x1]
      %v602 = vsel %vm573, 0, %v601
      %603 = vst [vmem:[#allocation2 + $0x6c] sm:$0x1] %v602
      %v604 = vld [vmem:[#allocation2 + $0x78] sm:$0x1]
      %v605 = vsel %vm573, 0, %v604
      %606 = vst [vmem:[#allocation2 + $0x78] sm:$0x1] %v605
      %v607 = vld [vmem:[#allocation2 + $0x84] sm:$0x1]
      %v608 = vsel %vm573, 0, %v607
      %609 = vst [vmem:[#allocation2 + $0x84] sm:$0x1] %v608
      %v610 = vld [vmem:[#allocation2 + $0x90] sm:$0x1]
      %v611 = vsel %vm573, 0, %v610
      %612 = vst [vmem:[#allocation2 + $0x90] sm:$0x1] %v611
      %v613 = vld [vmem:[#allocation2 + $0x9c] sm:$0x1]
      %v614 = vsel %vm573, 0, %v613
      %615 = vst [vmem:[#allocation2 + $0x9c] sm:$0x1] %v614
      %v616 = vld [vmem:[#allocation2 + $0xa8] sm:$0x1]
      %v617 = vsel %vm573, 0, %v616
      %618 = vst [vmem:[#allocation2 + $0xa8] sm:$0x1] %v617
      %v619 = vld [vmem:[#allocation2 + $0xb4] sm:$0x1]
      %v620 = vsel %vm573, 0, %v619
      %621 = vst [vmem:[#allocation2 + $0xb4] sm:$0x1] %v620
      %v622 = vld [vmem:[#allocation2 + $0xc0] sm:$0x1]
      %v623 = vsel %vm573, 0, %v622
      %624 = vst [vmem:[#allocation2 + $0xc0] sm:$0x1] %v623
      %v625 = vld [vmem:[#allocation2 + $0xcc] sm:$0x1]
      %v626 = vsel %vm573, 0, %v625
      %627 = vst [vmem:[#allocation2 + $0xcc] sm:$0x1] %v626
      %vm628 = vsmask.f32 7938
      %vm629 = vmand %vm571, %vm628
      %v630 = vld [vmem:[#allocation2 + $0x8] sm:$0x1]
      %v631 = vsel %vm629, 0, %v630
      %632 = vst [vmem:[#allocation2 + $0x8] sm:$0x1] %v631
      %v633 = vld [vmem:[#allocation2 + $0x14] sm:$0x1]
      %v634 = vsel %vm629, 0, %v633
      %635 = vst [vmem:[#allocation2 + $0x14] sm:$0x1] %v634
      %v636 = vld [vmem:[#allocation2 + $0x20] sm:$0x1]
      %v637 = vsel %vm629, 0, %v636
      %638 = vst [vmem:[#allocation2 + $0x20] sm:$0x1] %v637
      %v639 = vld [vmem:[#allocation2 + $0x2c] sm:$0x1]
      %v640 = vsel %vm629, 0, %v639
      %641 = vst [vmem:[#allocation2 + $0x2c] sm:$0x1] %v640
      %v642 = vld [vmem:[#allocation2 + $0x38] sm:$0x1]
      %v643 = vsel %vm629, 0, %v642
      %644 = vst [vmem:[#allocation2 + $0x38] sm:$0x1] %v643
      %v645 = vld [vmem:[#allocation2 + $0x44] sm:$0x1]
      %v646 = vsel %vm629, 0, %v645
      %647 = vst [vmem:[#allocation2 + $0x44] sm:$0x1] %v646
      %v648 = vld [vmem:[#allocation2 + $0x50] sm:$0x1]
      %v649 = vsel %vm629, 0, %v648
      %650 = vst [vmem:[#allocation2 + $0x50] sm:$0x1] %v649
      %v651 = vld [vmem:[#allocation2 + $0x5c] sm:$0x1]
      %v652 = vsel %vm629, 0, %v651
      %653 = vst [vmem:[#allocation2 + $0x5c] sm:$0x1] %v652
      %v654 = vld [vmem:[#allocation2 + $0x68] sm:$0x1]
      %v655 = vsel %vm629, 0, %v654
      %656 = vst [vmem:[#allocation2 + $0x68] sm:$0x1] %v655
      %v657 = vld [vmem:[#allocation2 + $0x74] sm:$0x1]
      %v658 = vsel %vm629, 0, %v657
      %659 = vst [vmem:[#allocation2 + $0x74] sm:$0x1] %v658
      %v660 = vld [vmem:[#allocation2 + $0x80] sm:$0x1]
      %v661 = vsel %vm629, 0, %v660
      %662 = vst [vmem:[#allocation2 + $0x80] sm:$0x1] %v661
      %v663 = vld [vmem:[#allocation2 + $0x8c] sm:$0x1]
      %v664 = vsel %vm629, 0, %v663
      %665 = vst [vmem:[#allocation2 + $0x8c] sm:$0x1] %v664
      %v666 = vld [vmem:[#allocation2 + $0x98] sm:$0x1]
      %v667 = vsel %vm629, 0, %v666
      %668 = vst [vmem:[#allocation2 + $0x98] sm:$0x1] %v667
      %v669 = vld [vmem:[#allocation2 + $0xa4] sm:$0x1]
      %v670 = vsel %vm629, 0, %v669
      %671 = vst [vmem:[#allocation2 + $0xa4] sm:$0x1] %v670
      %v672 = vld [vmem:[#allocation2 + $0xb0] sm:$0x1]
      %v673 = vsel %vm629, 0, %v672
      %674 = vst [vmem:[#allocation2 + $0xb0] sm:$0x1] %v673
      %v675 = vld [vmem:[#allocation2 + $0xbc] sm:$0x1]
      %v676 = vsel %vm629, 0, %v675
      %677 = vst [vmem:[#allocation2 + $0xbc] sm:$0x1] %v676
      %v678 = vld [vmem:[#allocation2 + $0xc8] sm:$0x1]
      %v679 = vsel %vm629, 0, %v678
      %680 = vst [vmem:[#allocation2 + $0xc8] sm:$0x1] %v679
      %v681 = vld [vmem:[#allocation2 + $0xd4] sm:$0x1]
      %v682 = vsel %vm629, 0, %v681
      %683 = vst [vmem:[#allocation2 + $0xd4] sm:$0x1] %v682
      %v684 = vld [vmem:[%s418] sm:$0xf]
      %v685 = vld [vmem:[%s418 + $0x4] sm:$0xf]
      %v686 = vld [vmem:[%s418 + $0x8] sm:$0xf]
      %v687 = vld [vmem:[%s418 + $0xc] sm:$0xf]
      %v688 = vld [vmem:[%s418 + $0x10] sm:$0xf]
      %v689 = vld [vmem:[%s418 + $0x14] sm:$0xf]
      %v690 = vld [vmem:[%s418 + $0x18] sm:$0xf]
      %v691 = vld [vmem:[%s418 + $0x1c] sm:$0xf]
      %v692 = vld [vmem:[%s418 + $0x20] sm:$0xf]
      %v693 = vld [vmem:[%s418 + $0x24] sm:$0xf]
      %v694 = vld [vmem:[%s418 + $0x28] sm:$0xf]
      %v695 = vld [vmem:[%s418 + $0x2c] sm:$0xf]
      %v696 = vld [vmem:[%s418 + $0x30] sm:$0xf]
      %v697 = vld [vmem:[%s418 + $0x34] sm:$0xf]
      %v698 = vld [vmem:[%s418 + $0x38] sm:$0xf]
      %v699 = vld [vmem:[%s418 + $0x3c] sm:$0xf]
      %v700 = vld [vmem:[%s418 + $0x40] sm:$0xf]
      %v701 = vld [vmem:[%s418 + $0x44] sm:$0xf]
      %v702 = vld [vmem:[%s418 + $0x48] sm:$0xf]
      %v703 = vld [vmem:[%s418 + $0x4c] sm:$0xf]
      %v704 = vld [vmem:[%s418 + $0x50] sm:$0xf]
      %v705 = vld [vmem:[%s418 + $0x54] sm:$0xf]
      %v706 = vld [vmem:[%s418 + $0x58] sm:$0xf]
      %v707 = vld [vmem:[%s418 + $0x5c] sm:$0xf]
      %v708 = vld [vmem:[%s418 + $0x60] sm:$0xf]
      %v709 = vld [vmem:[%s418 + $0x64] sm:$0xf]
      %v710 = vld [vmem:[%s418 + $0x68] sm:$0xf]
      %v711 = vld [vmem:[%s418 + $0x6c] sm:$0xf]
      %v712 = vld [vmem:[%s418 + $0x70] sm:$0xf]
      %v713 = vld [vmem:[%s418 + $0x74] sm:$0xf]
      %v714 = vld [vmem:[%s418 + $0x78] sm:$0xf]
      %v715 = vld [vmem:[%s418 + $0x7c] sm:$0xf]
      %v716 = vunpack.c.l.bf16 %v684
      %v717 = vunpack.c.l.bf16 %v685
      %v718 = vunpack.c.l.bf16 %v686
      %v719 = vunpack.c.l.bf16 %v687
      %v720 = vunpack.c.l.bf16 %v688
      %v721 = vunpack.c.l.bf16 %v689
      %v722 = vunpack.c.l.bf16 %v690
      %v723 = vunpack.c.l.bf16 %v691
      %v724 = vunpack.c.l.bf16 %v692
      %v725 = vunpack.c.l.bf16 %v693
      %v726 = vunpack.c.l.bf16 %v694
      %v727 = vunpack.c.l.bf16 %v695
      %v728 = vunpack.c.l.bf16 %v696
      %v729 = vunpack.c.l.bf16 %v697
      %v730 = vunpack.c.l.bf16 %v698
      %v731 = vunpack.c.l.bf16 %v699
      %v732 = vunpack.c.l.bf16 %v700
      %v733 = vunpack.c.l.bf16 %v701
      %v734 = vunpack.c.l.bf16 %v702
      %v735 = vunpack.c.l.bf16 %v703
      %v736 = vunpack.c.l.bf16 %v704
      %v737 = vunpack.c.l.bf16 %v705
      %v738 = vunpack.c.l.bf16 %v706
      %v739 = vunpack.c.l.bf16 %v707
      %v740 = vunpack.c.l.bf16 %v708
      %v741 = vunpack.c.l.bf16 %v709
      %v742 = vunpack.c.l.bf16 %v710
      %v743 = vunpack.c.l.bf16 %v711
      %v744 = vunpack.c.l.bf16 %v712
      %v745 = vunpack.c.l.bf16 %v713
      %v746 = vunpack.c.l.bf16 %v714
      %v747 = vunpack.c.l.bf16 %v715
      %v749 = vlaneseq
      %v750 = vshrl.u32 %v749, 7
      %v751 = vsub.s32 0, %v750
      %v752 = vrot.slane %v477, %v751
      %v754 = vmul.f32 %v716, %v752
      %v755 = vmul.f32 %v717, %v752
      %v756 = vmul.f32 %v718, %v752
      %v757 = vmul.f32 %v719, %v752
      %v758 = vmul.f32 %v720, %v752
      %v759 = vmul.f32 %v721, %v752
      %v760 = vmul.f32 %v722, %v752
      %v761 = vmul.f32 %v723, %v752
      %v762 = vmul.f32 %v724, %v752
      %v763 = vmul.f32 %v725, %v752
      %v764 = vmul.f32 %v726, %v752
      %v765 = vmul.f32 %v727, %v752
      %v766 = vmul.f32 %v728, %v752
      %v767 = vmul.f32 %v729, %v752
      %v768 = vmul.f32 %v730, %v752
      %v769 = vmul.f32 %v731, %v752
      %v770 = vmul.f32 %v732, %v752
      %v771 = vmul.f32 %v733, %v752
      %v772 = vmul.f32 %v734, %v752
      %v773 = vmul.f32 %v735, %v752
      %v774 = vmul.f32 %v736, %v752
      %v775 = vmul.f32 %v737, %v752
      %v776 = vmul.f32 %v738, %v752
      %v777 = vmul.f32 %v739, %v752
      %v778 = vmul.f32 %v740, %v752
      %v779 = vmul.f32 %v741, %v752
      %v780 = vmul.f32 %v742, %v752
      %v781 = vmul.f32 %v743, %v752
      %v782 = vmul.f32 %v744, %v752
      %v783 = vmul.f32 %v745, %v752
      %v784 = vmul.f32 %v746, %v752
      %v785 = vmul.f32 %v747, %v752
      %v787 = vlaneseq
      %v788 = vshrl.u32 %v787, 7
      %v789 = vsub.s32 0, %v788
      %v790 = vrot.slane %v563, %v789
      %v792 = vadd.f32 %v754, %v790
      %v793 = vadd.f32 %v755, %v790
      %v794 = vadd.f32 %v756, %v790
      %v795 = vadd.f32 %v757, %v790
      %v796 = vadd.f32 %v758, %v790
      %v797 = vadd.f32 %v759, %v790
      %v798 = vadd.f32 %v760, %v790
      %v799 = vadd.f32 %v761, %v790
      %v800 = vadd.f32 %v762, %v790
      %v801 = vadd.f32 %v763, %v790
      %v802 = vadd.f32 %v764, %v790
      %v803 = vadd.f32 %v765, %v790
      %v804 = vadd.f32 %v766, %v790
      %v805 = vadd.f32 %v767, %v790
      %v806 = vadd.f32 %v768, %v790
      %v807 = vadd.f32 %v769, %v790
      %v808 = vadd.f32 %v770, %v790
      %v809 = vadd.f32 %v771, %v790
      %v810 = vadd.f32 %v772, %v790
      %v811 = vadd.f32 %v773, %v790
      %v812 = vadd.f32 %v774, %v790
      %v813 = vadd.f32 %v775, %v790
      %v814 = vadd.f32 %v776, %v790
      %v815 = vadd.f32 %v777, %v790
      %v816 = vadd.f32 %v778, %v790
      %v817 = vadd.f32 %v779, %v790
      %v818 = vadd.f32 %v780, %v790
      %v819 = vadd.f32 %v781, %v790
      %v820 = vadd.f32 %v782, %v790
      %v821 = vadd.f32 %v783, %v790
      %v822 = vadd.f32 %v784, %v790
      %v823 = vadd.f32 %v785, %v790
      %v824 = vpack.c.bf16 %v793, %v792
      %v825 = vpack.c.bf16 %v795, %v794
      %v826 = vpack.c.bf16 %v797, %v796
      %v827 = vpack.c.bf16 %v799, %v798
      %v828 = vpack.c.bf16 %v801, %v800
      %v829 = vpack.c.bf16 %v803, %v802
      %v830 = vpack.c.bf16 %v805, %v804
      %v831 = vpack.c.bf16 %v807, %v806
      %v832 = vpack.c.bf16 %v809, %v808
      %v833 = vpack.c.bf16 %v811, %v810
      %v834 = vpack.c.bf16 %v813, %v812
      %v835 = vpack.c.bf16 %v815, %v814
      %v836 = vpack.c.bf16 %v817, %v816
      %v837 = vpack.c.bf16 %v819, %v818
      %v838 = vpack.c.bf16 %v821, %v820
      %v839 = vpack.c.bf16 %v823, %v822
      %v856 = vunpack.c.l.b16 %v824
      %v857 = vunpack.c.h.b16 %v824
      %v858 = vunpack.c.l.b16 %v825
      %v859 = vunpack.c.h.b16 %v825
      %v860 = vunpack.c.l.b16 %v826
      %v861 = vunpack.c.h.b16 %v826
      %v862 = vunpack.c.l.b16 %v827
      %v863 = vunpack.c.h.b16 %v827
      %v864 = vunpack.c.l.b16 %v828
      %v865 = vunpack.c.h.b16 %v828
      %v866 = vunpack.c.l.b16 %v829
      %v867 = vunpack.c.h.b16 %v829
      %v868 = vunpack.c.l.b16 %v830
      %v869 = vunpack.c.h.b16 %v830
      %v870 = vunpack.c.l.b16 %v831
      %v871 = vunpack.c.h.b16 %v831
      %v872 = vunpack.c.l.b16 %v832
      %v873 = vunpack.c.h.b16 %v832
      %v874 = vunpack.c.l.b16 %v833
      %v875 = vunpack.c.h.b16 %v833
      %v876 = vunpack.c.l.b16 %v834
      %v877 = vunpack.c.h.b16 %v834
      %v878 = vunpack.c.l.b16 %v835
      %v879 = vunpack.c.h.b16 %v835
      %v880 = vunpack.c.l.b16 %v836
      %v881 = vunpack.c.h.b16 %v836
      %v882 = vunpack.c.l.b16 %v837
      %v883 = vunpack.c.h.b16 %v837
      %v884 = vunpack.c.l.b16 %v838
      %v885 = vunpack.c.h.b16 %v838
      %v886 = vunpack.c.l.b16 %v839
      %v887 = vunpack.c.h.b16 %v839
      %v888 = vpack.c.b16 %v856, %v856
      %v889 = vpack.c.b16 %v857, %v857
      %v890 = vpack.c.b16 %v858, %v858
      %v891 = vpack.c.b16 %v859, %v859
      %v892 = vpack.c.b16 %v860, %v860
      %v893 = vpack.c.b16 %v861, %v861
      %v894 = vpack.c.b16 %v862, %v862
      %v895 = vpack.c.b16 %v863, %v863
      %v896 = vpack.c.b16 %v864, %v864
      %v897 = vpack.c.b16 %v865, %v865
      %v898 = vpack.c.b16 %v866, %v866
      %v899 = vpack.c.b16 %v867, %v867
      %v900 = vpack.c.b16 %v868, %v868
      %v901 = vpack.c.b16 %v869, %v869
      %v902 = vpack.c.b16 %v870, %v870
      %v903 = vpack.c.b16 %v871, %v871
      %v904 = vpack.c.b16 %v872, %v872
      %v905 = vpack.c.b16 %v873, %v873
      %v906 = vpack.c.b16 %v874, %v874
      %v907 = vpack.c.b16 %v875, %v875
      %v908 = vpack.c.b16 %v876, %v876
      %v909 = vpack.c.b16 %v877, %v877
      %v910 = vpack.c.b16 %v878, %v878
      %v911 = vpack.c.b16 %v879, %v879
      %v912 = vpack.c.b16 %v880, %v880
      %v913 = vpack.c.b16 %v881, %v881
      %v914 = vpack.c.b16 %v882, %v882
      %v915 = vpack.c.b16 %v883, %v883
      %v916 = vpack.c.b16 %v884, %v884
      %v917 = vpack.c.b16 %v885, %v885
      %v918 = vpack.c.b16 %v886, %v886
      %v919 = vpack.c.b16 %v887, %v887
      %vm920 = vsmask.f32 4368
      %vm921 = vmor %vm572, %vm920
      %v923 = vshrl.u32 %v888, 16
      %v925 = vrot.slane %v923, 7
      %v926 = vshll.u32 %v888, 16
      %v928 = vor.u32 %v925, %v926
      %v929 = vrot.slane %v925, 4
      %v931 = vshrl.u32 %v889, 16
      %v933 = vrot.slane %v931, 7
      %v934 = vshll.u32 %v889, 16
      %v936 = vor.u32 %v933, %v934
      %v937 = vsel %vm921, %v929, %v936
      %v938 = vrot.slane %v933, 4
      %v940 = vshrl.u32 %v890, 16
      %v942 = vrot.slane %v940, 7
      %v943 = vshll.u32 %v890, 16
      %v945 = vor.u32 %v942, %v943
      %v946 = vrot.slane %v942, 4
      %v948 = vshrl.u32 %v891, 16
      %v950 = vrot.slane %v948, 7
      %v951 = vshll.u32 %v891, 16
      %v953 = vor.u32 %v950, %v951
      %v954 = vsel %vm921, %v946, %v953
      %v955 = vrot.slane %v950, 4
      %v957 = vshrl.u32 %v892, 16
      %v959 = vrot.slane %v957, 7
      %v960 = vshll.u32 %v892, 16
      %v962 = vor.u32 %v959, %v960
      %v963 = vrot.slane %v959, 4
      %v965 = vshrl.u32 %v893, 16
      %v967 = vrot.slane %v965, 7
      %v968 = vshll.u32 %v893, 16
      %v970 = vor.u32 %v967, %v968
      %v971 = vsel %vm921, %v963, %v970
      %v972 = vrot.slane %v967, 4
      %v974 = vshrl.u32 %v894, 16
      %v976 = vrot.slane %v974, 7
      %v977 = vshll.u32 %v894, 16
      %v979 = vor.u32 %v976, %v977
      %v980 = vrot.slane %v976, 4
      %v982 = vshrl.u32 %v895, 16
      %v984 = vrot.slane %v982, 7
      %v985 = vshll.u32 %v895, 16
      %v987 = vor.u32 %v984, %v985
      %v988 = vsel %vm921, %v980, %v987
      %v989 = vrot.slane %v984, 4
      %v991 = vshrl.u32 %v896, 16
      %v993 = vrot.slane %v991, 7
      %v994 = vshll.u32 %v896, 16
      %v996 = vor.u32 %v993, %v994
      %v997 = vrot.slane %v993, 4
      %v999 = vshrl.u32 %v897, 16
      %v1001 = vrot.slane %v999, 7
      %v1002 = vshll.u32 %v897, 16
      %v1004 = vor.u32 %v1001, %v1002
      %v1005 = vsel %vm921, %v997, %v1004
      %v1006 = vrot.slane %v1001, 4
      %v1008 = vshrl.u32 %v898, 16
      %v1010 = vrot.slane %v1008, 7
      %v1011 = vshll.u32 %v898, 16
      %v1013 = vor.u32 %v1010, %v1011
      %v1014 = vrot.slane %v1010, 4
      %v1016 = vshrl.u32 %v899, 16
      %v1018 = vrot.slane %v1016, 7
      %v1019 = vshll.u32 %v899, 16
      %v1021 = vor.u32 %v1018, %v1019
      %v1022 = vsel %vm921, %v1014, %v1021
      %v1023 = vrot.slane %v1018, 4
      %v1025 = vshrl.u32 %v900, 16
      %v1027 = vrot.slane %v1025, 7
      %v1028 = vshll.u32 %v900, 16
      %v1030 = vor.u32 %v1027, %v1028
      %v1031 = vrot.slane %v1027, 4
      %v1033 = vshrl.u32 %v901, 16
      %v1035 = vrot.slane %v1033, 7
      %v1036 = vshll.u32 %v901, 16
      %v1038 = vor.u32 %v1035, %v1036
      %v1039 = vsel %vm921, %v1031, %v1038
      %v1040 = vrot.slane %v1035, 4
      %v1042 = vshrl.u32 %v902, 16
      %v1044 = vrot.slane %v1042, 7
      %v1045 = vshll.u32 %v902, 16
      %v1047 = vor.u32 %v1044, %v1045
      %v1048 = vrot.slane %v1044, 4
      %v1050 = vshrl.u32 %v903, 16
      %v1052 = vrot.slane %v1050, 7
      %v1053 = vshll.u32 %v903, 16
      %v1055 = vor.u32 %v1052, %v1053
      %v1056 = vsel %vm921, %v1048, %v1055
      %v1057 = vrot.slane %v1052, 4
      %v1059 = vshrl.u32 %v904, 16
      %v1061 = vrot.slane %v1059, 7
      %v1062 = vshll.u32 %v904, 16
      %v1064 = vor.u32 %v1061, %v1062
      %v1065 = vrot.slane %v1061, 4
      %v1067 = vshrl.u32 %v905, 16
      %v1069 = vrot.slane %v1067, 7
      %v1070 = vshll.u32 %v905, 16
      %v1072 = vor.u32 %v1069, %v1070
      %v1073 = vsel %vm921, %v1065, %v1072
      %v1074 = vrot.slane %v1069, 4
      %v1076 = vshrl.u32 %v906, 16
      %v1078 = vrot.slane %v1076, 7
      %v1079 = vshll.u32 %v906, 16
      %v1081 = vor.u32 %v1078, %v1079
      %v1082 = vrot.slane %v1078, 4
      %v1084 = vshrl.u32 %v907, 16
      %v1086 = vrot.slane %v1084, 7
      %v1087 = vshll.u32 %v907, 16
      %v1089 = vor.u32 %v1086, %v1087
      %v1090 = vsel %vm921, %v1082, %v1089
      %v1091 = vrot.slane %v1086, 4
      %v1093 = vshrl.u32 %v908, 16
      %v1095 = vrot.slane %v1093, 7
      %v1096 = vshll.u32 %v908, 16
      %v1098 = vor.u32 %v1095, %v1096
      %v1099 = vrot.slane %v1095, 4
      %v1101 = vshrl.u32 %v909, 16
      %v1103 = vrot.slane %v1101, 7
      %v1104 = vshll.u32 %v909, 16
      %v1106 = vor.u32 %v1103, %v1104
      %v1107 = vsel %vm921, %v1099, %v1106
      %v1108 = vrot.slane %v1103, 4
      %v1110 = vshrl.u32 %v910, 16
      %v1112 = vrot.slane %v1110, 7
      %v1113 = vshll.u32 %v910, 16
      %v1115 = vor.u32 %v1112, %v1113
      %v1116 = vrot.slane %v1112, 4
      %v1118 = vshrl.u32 %v911, 16
      %v1120 = vrot.slane %v1118, 7
      %v1121 = vshll.u32 %v911, 16
      %v1123 = vor.u32 %v1120, %v1121
      %v1124 = vsel %vm921, %v1116, %v1123
      %v1125 = vrot.slane %v1120, 4
      %v1127 = vshrl.u32 %v912, 16
      %v1129 = vrot.slane %v1127, 7
      %v1130 = vshll.u32 %v912, 16
      %v1132 = vor.u32 %v1129, %v1130
      %v1133 = vrot.slane %v1129, 4
      %v1135 = vshrl.u32 %v913, 16
      %v1137 = vrot.slane %v1135, 7
      %v1138 = vshll.u32 %v913, 16
      %v1140 = vor.u32 %v1137, %v1138
      %v1141 = vsel %vm921, %v1133, %v1140
      %v1142 = vrot.slane %v1137, 4
      %v1144 = vshrl.u32 %v914, 16
      %v1146 = vrot.slane %v1144, 7
      %v1147 = vshll.u32 %v914, 16
      %v1149 = vor.u32 %v1146, %v1147
      %v1150 = vrot.slane %v1146, 4
      %v1152 = vshrl.u32 %v915, 16
      %v1154 = vrot.slane %v1152, 7
      %v1155 = vshll.u32 %v915, 16
      %v1157 = vor.u32 %v1154, %v1155
      %v1158 = vsel %vm921, %v1150, %v1157
      %v1159 = vrot.slane %v1154, 4
      %v1161 = vshrl.u32 %v916, 16
      %v1163 = vrot.slane %v1161, 7
      %v1164 = vshll.u32 %v916, 16
      %v1166 = vor.u32 %v1163, %v1164
      %v1167 = vrot.slane %v1163, 4
      %v1169 = vshrl.u32 %v917, 16
      %v1171 = vrot.slane %v1169, 7
      %v1172 = vshll.u32 %v917, 16
      %v1174 = vor.u32 %v1171, %v1172
      %v1175 = vsel %vm921, %v1167, %v1174
      %v1176 = vrot.slane %v1171, 4
      %v1178 = vshrl.u32 %v918, 16
      %v1180 = vrot.slane %v1178, 7
      %v1181 = vshll.u32 %v918, 16
      %v1183 = vor.u32 %v1180, %v1181
      %v1184 = vrot.slane %v1180, 4
      %v1186 = vshrl.u32 %v919, 16
      %v1188 = vrot.slane %v1186, 7
      %v1189 = vshll.u32 %v919, 16
      %v1191 = vor.u32 %v1188, %v1189
      %v1192 = vsel %vm921, %v1184, %v1191
      %v1193 = vrot.slane %v1188, 4
      %s1242 = scalar_lea.vmem [#allocation2], 12
      %vm1243 = vcmask 1043456
      %vm1244 = vmand %vm1243, %vm628
      %v1245 = vld [vmem:[%s1242] sm:$0xf]
      %v1246 = vsel %vm1244, %v928, %v1245
      %1247 = vst [vmem:[%s1242] sm:$0xf] %v1246
      %1248 = vst [vmem:[%s1242 + $0x4] sm:$0xf] %v937
      %v1249 = vld [vmem:[%s1242 + $0x8] sm:$0x1]
      %v1250 = vsel %vm573, %v938, %v1249
      %1251 = vst [vmem:[%s1242 + $0x8] sm:$0x1] %v1250
      %v1252 = vld [vmem:[%s1242 + $0xc] sm:$0xf]
      %v1253 = vsel %vm1244, %v945, %v1252
      %1254 = vst [vmem:[%s1242 + $0xc] sm:$0xf] %v1253
      %1255 = vst [vmem:[%s1242 + $0x10] sm:$0xf] %v954
      %v1256 = vld [vmem:[%s1242 + $0x14] sm:$0x1]
      %v1257 = vsel %vm573, %v955, %v1256
      %1258 = vst [vmem:[%s1242 + $0x14] sm:$0x1] %v1257
      %v1259 = vld [vmem:[%s1242 + $0x18] sm:$0xf]
      %v1260 = vsel %vm1244, %v962, %v1259
      %1261 = vst [vmem:[%s1242 + $0x18] sm:$0xf] %v1260
      %1262 = vst [vmem:[%s1242 + $0x1c] sm:$0xf] %v971
      %v1263 = vld [vmem:[%s1242 + $0x20] sm:$0x1]
      %v1264 = vsel %vm573, %v972, %v1263
      %1265 = vst [vmem:[%s1242 + $0x20] sm:$0x1] %v1264
      %v1266 = vld [vmem:[%s1242 + $0x24] sm:$0xf]
      %v1267 = vsel %vm1244, %v979, %v1266
      %1268 = vst [vmem:[%s1242 + $0x24] sm:$0xf] %v1267
      %1269 = vst [vmem:[%s1242 + $0x28] sm:$0xf] %v988
      %v1270 = vld [vmem:[%s1242 + $0x2c] sm:$0x1]
      %v1271 = vsel %vm573, %v989, %v1270
      %1272 = vst [vmem:[%s1242 + $0x2c] sm:$0x1] %v1271
      %v1273 = vld [vmem:[%s1242 + $0x30] sm:$0xf]
      %v1274 = vsel %vm1244, %v996, %v1273
      %1275 = vst [vmem:[%s1242 + $0x30] sm:$0xf] %v1274
      %1276 = vst [vmem:[%s1242 + $0x34] sm:$0xf] %v1005
      %v1277 = vld [vmem:[%s1242 + $0x38] sm:$0x1]
      %v1278 = vsel %vm573, %v1006, %v1277
      %1279 = vst [vmem:[%s1242 + $0x38] sm:$0x1] %v1278
      %v1280 = vld [vmem:[%s1242 + $0x3c] sm:$0xf]
      %v1281 = vsel %vm1244, %v1013, %v1280
      %1282 = vst [vmem:[%s1242 + $0x3c] sm:$0xf] %v1281
      %1283 = vst [vmem:[%s1242 + $0x40] sm:$0xf] %v1022
      %v1284 = vld [vmem:[%s1242 + $0x44] sm:$0x1]
      %v1285 = vsel %vm573, %v1023, %v1284
      %1286 = vst [vmem:[%s1242 + $0x44] sm:$0x1] %v1285
      %v1287 = vld [vmem:[%s1242 + $0x48] sm:$0xf]
      %v1288 = vsel %vm1244, %v1030, %v1287
      %1289 = vst [vmem:[%s1242 + $0x48] sm:$0xf] %v1288
      %1290 = vst [vmem:[%s1242 + $0x4c] sm:$0xf] %v1039
      %v1291 = vld [vmem:[%s1242 + $0x50] sm:$0x1]
      %v1292 = vsel %vm573, %v1040, %v1291
      %1293 = vst [vmem:[%s1242 + $0x50] sm:$0x1] %v1292
      %v1294 = vld [vmem:[%s1242 + $0x54] sm:$0xf]
      %v1295 = vsel %vm1244, %v1047, %v1294
      %1296 = vst [vmem:[%s1242 + $0x54] sm:$0xf] %v1295
      %1297 = vst [vmem:[%s1242 + $0x58] sm:$0xf] %v1056
      %v1298 = vld [vmem:[%s1242 + $0x5c] sm:$0x1]
      %v1299 = vsel %vm573, %v1057, %v1298
      %1300 = vst [vmem:[%s1242 + $0x5c] sm:$0x1] %v1299
      %v1301 = vld [vmem:[%s1242 + $0x60] sm:$0xf]
      %v1302 = vsel %vm1244, %v1064, %v1301
      %1303 = vst [vmem:[%s1242 + $0x60] sm:$0xf] %v1302
      %1304 = vst [vmem:[%s1242 + $0x64] sm:$0xf] %v1073
      %v1305 = vld [vmem:[%s1242 + $0x68] sm:$0x1]
      %v1306 = vsel %vm573, %v1074, %v1305
      %1307 = vst [vmem:[%s1242 + $0x68] sm:$0x1] %v1306
      %v1308 = vld [vmem:[%s1242 + $0x6c] sm:$0xf]
      %v1309 = vsel %vm1244, %v1081, %v1308
      %1310 = vst [vmem:[%s1242 + $0x6c] sm:$0xf] %v1309
      %1311 = vst [vmem:[%s1242 + $0x70] sm:$0xf] %v1090
      %v1312 = vld [vmem:[%s1242 + $0x74] sm:$0x1]
      %v1313 = vsel %vm573, %v1091, %v1312
      %1314 = vst [vmem:[%s1242 + $0x74] sm:$0x1] %v1313
      %v1315 = vld [vmem:[%s1242 + $0x78] sm:$0xf]
      %v1316 = vsel %vm1244, %v1098, %v1315
      %1317 = vst [vmem:[%s1242 + $0x78] sm:$0xf] %v1316
      %1318 = vst [vmem:[%s1242 + $0x7c] sm:$0xf] %v1107
      %v1319 = vld [vmem:[%s1242 + $0x80] sm:$0x1]
      %v1320 = vsel %vm573, %v1108, %v1319
      %1321 = vst [vmem:[%s1242 + $0x80] sm:$0x1] %v1320
      %v1322 = vld [vmem:[%s1242 + $0x84] sm:$0xf]
      %v1323 = vsel %vm1244, %v1115, %v1322
      %1324 = vst [vmem:[%s1242 + $0x84] sm:$0xf] %v1323
      %1325 = vst [vmem:[%s1242 + $0x88] sm:$0xf] %v1124
      %v1326 = vld [vmem:[%s1242 + $0x8c] sm:$0x1]
      %v1327 = vsel %vm573, %v1125, %v1326
      %1328 = vst [vmem:[%s1242 + $0x8c] sm:$0x1] %v1327
      %v1329 = vld [vmem:[%s1242 + $0x90] sm:$0xf]
      %v1330 = vsel %vm1244, %v1132, %v1329
      %1331 = vst [vmem:[%s1242 + $0x90] sm:$0xf] %v1330
      %1332 = vst [vmem:[%s1242 + $0x94] sm:$0xf] %v1141
      %v1333 = vld [vmem:[%s1242 + $0x98] sm:$0x1]
      %v1334 = vsel %vm573, %v1142, %v1333
      %1335 = vst [vmem:[%s1242 + $0x98] sm:$0x1] %v1334
      %v1336 = vld [vmem:[%s1242 + $0x9c] sm:$0xf]
      %v1337 = vsel %vm1244, %v1149, %v1336
      %1338 = vst [vmem:[%s1242 + $0x9c] sm:$0xf] %v1337
      %1339 = vst [vmem:[%s1242 + $0xa0] sm:$0xf] %v1158
      %v1340 = vld [vmem:[%s1242 + $0xa4] sm:$0x1]
      %v1341 = vsel %vm573, %v1159, %v1340
      %1342 = vst [vmem:[%s1242 + $0xa4] sm:$0x1] %v1341
      %v1343 = vld [vmem:[%s1242 + $0xa8] sm:$0xf]
      %v1344 = vsel %vm1244, %v1166, %v1343
      %1345 = vst [vmem:[%s1242 + $0xa8] sm:$0xf] %v1344
      %1346 = vst [vmem:[%s1242 + $0xac] sm:$0xf] %v1175
      %v1347 = vld [vmem:[%s1242 + $0xb0] sm:$0x1]
      %v1348 = vsel %vm573, %v1176, %v1347
      %1349 = vst [vmem:[%s1242 + $0xb0] sm:$0x1] %v1348
      %v1350 = vld [vmem:[%s1242 + $0xb4] sm:$0xf]
      %v1351 = vsel %vm1244, %v1183, %v1350
      %1352 = vst [vmem:[%s1242 + $0xb4] sm:$0xf] %v1351
      %1353 = vst [vmem:[%s1242 + $0xb8] sm:$0xf] %v1192
      %v1354 = vld [vmem:[%s1242 + $0xbc] sm:$0x1]
      %v1355 = vsel %vm573, %v1193, %v1354
      %1356 = vst [vmem:[%s1242 + $0xbc] sm:$0x1] %v1355
      %v1357 = vld [vmem:[#allocation2] sm:$0xf]
      %v1358 = vld [vmem:[#allocation2 + $0x4] sm:$0xf]
      %v1359 = vld [vmem:[#allocation2 + $0xc] sm:$0xf]
      %v1360 = vld [vmem:[#allocation2 + $0x10] sm:$0xf]
      %v1361 = vld [vmem:[#allocation2 + $0x18] sm:$0xf]
      %v1362 = vld [vmem:[#allocation2 + $0x1c] sm:$0xf]
      %v1363 = vld [vmem:[#allocation2 + $0x24] sm:$0xf]
      %v1364 = vld [vmem:[#allocation2 + $0x28] sm:$0xf]
      %v1365 = vld [vmem:[#allocation2 + $0x30] sm:$0xf]
      %v1366 = vld [vmem:[#allocation2 + $0x34] sm:$0xf]
      %v1367 = vld [vmem:[#allocation2 + $0x3c] sm:$0xf]
      %v1368 = vld [vmem:[#allocation2 + $0x40] sm:$0xf]
      %v1369 = vld [vmem:[#allocation2 + $0x48] sm:$0xf]
      %v1370 = vld [vmem:[#allocation2 + $0x4c] sm:$0xf]
      %v1371 = vld [vmem:[#allocation2 + $0x54] sm:$0xf]
      %v1372 = vld [vmem:[#allocation2 + $0x58] sm:$0xf]
      %v1373 = vld [vmem:[#allocation2 + $0x60] sm:$0xf]
      %v1374 = vld [vmem:[#allocation2 + $0x64] sm:$0xf]
      %v1375 = vld [vmem:[#allocation2 + $0x6c] sm:$0xf]
      %v1376 = vld [vmem:[#allocation2 + $0x70] sm:$0xf]
      %v1377 = vld [vmem:[#allocation2 + $0x78] sm:$0xf]
      %v1378 = vld [vmem:[#allocation2 + $0x7c] sm:$0xf]
      %v1379 = vld [vmem:[#allocation2 + $0x84] sm:$0xf]
      %v1380 = vld [vmem:[#allocation2 + $0x88] sm:$0xf]
      %v1381 = vld [vmem:[#allocation2 + $0x90] sm:$0xf]
      %v1382 = vld [vmem:[#allocation2 + $0x94] sm:$0xf]
      %v1383 = vld [vmem:[#allocation2 + $0x9c] sm:$0xf]
      %v1384 = vld [vmem:[#allocation2 + $0xa0] sm:$0xf]
      %v1385 = vld [vmem:[#allocation2 + $0xa8] sm:$0xf]
      %v1386 = vld [vmem:[#allocation2 + $0xac] sm:$0xf]
      %v1387 = vld [vmem:[#allocation2 + $0xb4] sm:$0xf]
      %v1388 = vld [vmem:[#allocation2 + $0xb8] sm:$0xf]
      %v1389 = vld [vmem:[%s425] sm:$0xf]
      %v1390 = vld [vmem:[%s425 + $0x4] sm:$0xf]
      %v1391 = vld [vmem:[%s425 + $0x8] sm:$0xf]
      %v1392 = vld [vmem:[%s425 + $0xc] sm:$0xf]
      %v1393 = vld [vmem:[%s425 + $0x10] sm:$0xf]
      %v1394 = vld [vmem:[%s425 + $0x14] sm:$0xf]
      %v1395 = vld [vmem:[%s425 + $0x18] sm:$0xf]
      %v1396 = vld [vmem:[%s425 + $0x1c] sm:$0xf]
      %v1397 = vld [vmem:[%s425 + $0x20] sm:$0xf]
      %v1398 = vld [vmem:[%s425 + $0x24] sm:$0xf]
      %v1399 = vld [vmem:[%s425 + $0x28] sm:$0xf]
      %v1400 = vld [vmem:[%s425 + $0x2c] sm:$0xf]
      %v1401 = vld [vmem:[%s425 + $0x30] sm:$0xf]
      %v1402 = vld [vmem:[%s425 + $0x34] sm:$0xf]
      %v1403 = vld [vmem:[%s425 + $0x38] sm:$0xf]
      %v1404 = vld [vmem:[%s425 + $0x3c] sm:$0xf]
      %v1405 = vld [vmem:[#allocation2 + $0x8] sm:$0x1]
      %v1406 = vld [vmem:[#allocation2 + $0x14] sm:$0x1]
      %v1407 = vld [vmem:[#allocation2 + $0x20] sm:$0x1]
      %v1408 = vld [vmem:[#allocation2 + $0x2c] sm:$0x1]
      %v1409 = vld [vmem:[#allocation2 + $0x38] sm:$0x1]
      %v1410 = vld [vmem:[#allocation2 + $0x44] sm:$0x1]
      %v1411 = vld [vmem:[#allocation2 + $0x50] sm:$0x1]
      %v1412 = vld [vmem:[#allocation2 + $0x5c] sm:$0x1]
      %v1413 = vld [vmem:[#allocation2 + $0x68] sm:$0x1]
      %v1414 = vld [vmem:[#allocation2 + $0x74] sm:$0x1]
      %v1415 = vld [vmem:[#allocation2 + $0x80] sm:$0x1]
      %v1416 = vld [vmem:[#allocation2 + $0x8c] sm:$0x1]
      %v1417 = vld [vmem:[#allocation2 + $0x98] sm:$0x1]
      %v1418 = vld [vmem:[#allocation2 + $0xa4] sm:$0x1]
      %v1419 = vld [vmem:[#allocation2 + $0xb0] sm:$0x1]
      %v1420 = vld [vmem:[#allocation2 + $0xbc] sm:$0x1]
      %vm1421 = vsmask.f32 3328
      %vm1422 = vsmask.f32 7440
      %vm1423 = vmor %vm1421, %vm1422
      %v1425 = vshrl.u32 %v1357, 16
      %v1427 = vrot.slane %v1425, 4
      %v1428 = vshll.u32 %v1357, 16
      %v1430 = vrot.slane %v1428, 5
      %v1431 = vor.u32 %v1427, %v1430
      %v1432 = vrot.slane %v1431, 4
      %v1434 = vshll.u32 %v1358, 16
      %v1436 = vrot.slane %v1434, 5
      %v1437 = vsel %vm1423, %v1432, %v1436
      %v1438 = vshrl.u32 %v1358, 16
      %v1440 = vrot.slane %v1438, 4
      %v1441 = vor.u32 %v1440, %v1436
      %v1442 = vrot.slane %v1441, 4
      %v1444 = vshll.u32 %v1405, 16
      %v1446 = vrot.slane %v1444, 5
      %v1447 = vsel %vm1423, %v1442, %v1446
      %v1449 = vshrl.u32 %v1359, 16
      %v1451 = vrot.slane %v1449, 4
      %v1452 = vshll.u32 %v1359, 16
      %v1454 = vrot.slane %v1452, 5
      %v1455 = vor.u32 %v1451, %v1454
      %v1456 = vrot.slane %v1455, 4
      %v1458 = vshll.u32 %v1360, 16
      %v1460 = vrot.slane %v1458, 5
      %v1461 = vsel %vm1423, %v1456, %v1460
      %v1462 = vshrl.u32 %v1360, 16
      %v1464 = vrot.slane %v1462, 4
      %v1465 = vor.u32 %v1464, %v1460
      %v1466 = vrot.slane %v1465, 4
      %v1468 = vshll.u32 %v1406, 16
      %v1470 = vrot.slane %v1468, 5
      %v1471 = vsel %vm1423, %v1466, %v1470
      %v1473 = vshrl.u32 %v1361, 16
      %v1475 = vrot.slane %v1473, 4
      %v1476 = vshll.u32 %v1361, 16
      %v1478 = vrot.slane %v1476, 5
      %v1479 = vor.u32 %v1475, %v1478
      %v1480 = vrot.slane %v1479, 4
      %v1482 = vshll.u32 %v1362, 16
      %v1484 = vrot.slane %v1482, 5
      %v1485 = vsel %vm1423, %v1480, %v1484
      %v1486 = vshrl.u32 %v1362, 16
      %v1488 = vrot.slane %v1486, 4
      %v1489 = vor.u32 %v1488, %v1484
      %v1490 = vrot.slane %v1489, 4
      %v1492 = vshll.u32 %v1407, 16
      %v1494 = vrot.slane %v1492, 5
      %v1495 = vsel %vm1423, %v1490, %v1494
      %v1497 = vshrl.u32 %v1363, 16
      %v1499 = vrot.slane %v1497, 4
      %v1500 = vshll.u32 %v1363, 16
      %v1502 = vrot.slane %v1500, 5
      %v1503 = vor.u32 %v1499, %v1502
      %v1504 = vrot.slane %v1503, 4
      %v1506 = vshll.u32 %v1364, 16
      %v1508 = vrot.slane %v1506, 5
      %v1509 = vsel %vm1423, %v1504, %v1508
      %v1510 = vshrl.u32 %v1364, 16
      %v1512 = vrot.slane %v1510, 4
      %v1513 = vor.u32 %v1512, %v1508
      %v1514 = vrot.slane %v1513, 4
      %v1516 = vshll.u32 %v1408, 16
      %v1518 = vrot.slane %v1516, 5
      %v1519 = vsel %vm1423, %v1514, %v1518
      %v1521 = vshrl.u32 %v1365, 16
      %v1523 = vrot.slane %v1521, 4
      %v1524 = vshll.u32 %v1365, 16
      %v1526 = vrot.slane %v1524, 5
      %v1527 = vor.u32 %v1523, %v1526
      %v1528 = vrot.slane %v1527, 4
      %v1530 = vshll.u32 %v1366, 16
      %v1532 = vrot.slane %v1530, 5
      %v1533 = vsel %vm1423, %v1528, %v1532
      %v1534 = vshrl.u32 %v1366, 16
      %v1536 = vrot.slane %v1534, 4
      %v1537 = vor.u32 %v1536, %v1532
      %v1538 = vrot.slane %v1537, 4
      %v1540 = vshll.u32 %v1409, 16
      %v1542 = vrot.slane %v1540, 5
      %v1543 = vsel %vm1423, %v1538, %v1542
      %v1545 = vshrl.u32 %v1367, 16
      %v1547 = vrot.slane %v1545, 4
      %v1548 = vshll.u32 %v1367, 16
      %v1550 = vrot.slane %v1548, 5
      %v1551 = vor.u32 %v1547, %v1550
      %v1552 = vrot.slane %v1551, 4
      %v1554 = vshll.u32 %v1368, 16
      %v1556 = vrot.slane %v1554, 5
      %v1557 = vsel %vm1423, %v1552, %v1556
      %v1558 = vshrl.u32 %v1368, 16
      %v1560 = vrot.slane %v1558, 4
      %v1561 = vor.u32 %v1560, %v1556
      %v1562 = vrot.slane %v1561, 4
      %v1564 = vshll.u32 %v1410, 16
      %v1566 = vrot.slane %v1564, 5
      %v1567 = vsel %vm1423, %v1562, %v1566
      %v1569 = vshrl.u32 %v1369, 16
      %v1571 = vrot.slane %v1569, 4
      %v1572 = vshll.u32 %v1369, 16
      %v1574 = vrot.slane %v1572, 5
      %v1575 = vor.u32 %v1571, %v1574
      %v1576 = vrot.slane %v1575, 4
      %v1578 = vshll.u32 %v1370, 16
      %v1580 = vrot.slane %v1578, 5
      %v1581 = vsel %vm1423, %v1576, %v1580
      %v1582 = vshrl.u32 %v1370, 16
      %v1584 = vrot.slane %v1582, 4
      %v1585 = vor.u32 %v1584, %v1580
      %v1586 = vrot.slane %v1585, 4
      %v1588 = vshll.u32 %v1411, 16
      %v1590 = vrot.slane %v1588, 5
      %v1591 = vsel %vm1423, %v1586, %v1590
      %v1593 = vshrl.u32 %v1371, 16
      %v1595 = vrot.slane %v1593, 4
      %v1596 = vshll.u32 %v1371, 16
      %v1598 = vrot.slane %v1596, 5
      %v1599 = vor.u32 %v1595, %v1598
      %v1600 = vrot.slane %v1599, 4
      %v1602 = vshll.u32 %v1372, 16
      %v1604 = vrot.slane %v1602, 5
      %v1605 = vsel %vm1423, %v1600, %v1604
      %v1606 = vshrl.u32 %v1372, 16
      %v1608 = vrot.slane %v1606, 4
      %v1609 = vor.u32 %v1608, %v1604
      %v1610 = vrot.slane %v1609, 4
      %v1612 = vshll.u32 %v1412, 16
      %v1614 = vrot.slane %v1612, 5
      %v1615 = vsel %vm1423, %v1610, %v1614
      %v1617 = vshrl.u32 %v1373, 16
      %v1619 = vrot.slane %v1617, 4
      %v1620 = vshll.u32 %v1373, 16
      %v1622 = vrot.slane %v1620, 5
      %v1623 = vor.u32 %v1619, %v1622
      %v1624 = vrot.slane %v1623, 4
      %v1626 = vshll.u32 %v1374, 16
      %v1628 = vrot.slane %v1626, 5
      %v1629 = vsel %vm1423, %v1624, %v1628
      %v1630 = vshrl.u32 %v1374, 16
      %v1632 = vrot.slane %v1630, 4
      %v1633 = vor.u32 %v1632, %v1628
      %v1634 = vrot.slane %v1633, 4
      %v1636 = vshll.u32 %v1413, 16
      %v1638 = vrot.slane %v1636, 5
      %v1639 = vsel %vm1423, %v1634, %v1638
      %v1641 = vshrl.u32 %v1375, 16
      %v1643 = vrot.slane %v1641, 4
      %v1644 = vshll.u32 %v1375, 16
      %v1646 = vrot.slane %v1644, 5
      %v1647 = vor.u32 %v1643, %v1646
      %v1648 = vrot.slane %v1647, 4
      %v1650 = vshll.u32 %v1376, 16
      %v1652 = vrot.slane %v1650, 5
      %v1653 = vsel %vm1423, %v1648, %v1652
      %v1654 = vshrl.u32 %v1376, 16
      %v1656 = vrot.slane %v1654, 4
      %v1657 = vor.u32 %v1656, %v1652
      %v1658 = vrot.slane %v1657, 4
      %v1660 = vshll.u32 %v1414, 16
      %v1662 = vrot.slane %v1660, 5
      %v1663 = vsel %vm1423, %v1658, %v1662
      %v1665 = vshrl.u32 %v1377, 16
      %v1667 = vrot.slane %v1665, 4
      %v1668 = vshll.u32 %v1377, 16
      %v1670 = vrot.slane %v1668, 5
      %v1671 = vor.u32 %v1667, %v1670
      %v1672 = vrot.slane %v1671, 4
      %v1674 = vshll.u32 %v1378, 16
      %v1676 = vrot.slane %v1674, 5
      %v1677 = vsel %vm1423, %v1672, %v1676
      %v1678 = vshrl.u32 %v1378, 16
      %v1680 = vrot.slane %v1678, 4
      %v1681 = vor.u32 %v1680, %v1676
      %v1682 = vrot.slane %v1681, 4
      %v1684 = vshll.u32 %v1415, 16
      %v1686 = vrot.slane %v1684, 5
      %v1687 = vsel %vm1423, %v1682, %v1686
      %v1689 = vshrl.u32 %v1379, 16
      %v1691 = vrot.slane %v1689, 4
      %v1692 = vshll.u32 %v1379, 16
      %v1694 = vrot.slane %v1692, 5
      %v1695 = vor.u32 %v1691, %v1694
      %v1696 = vrot.slane %v1695, 4
      %v1698 = vshll.u32 %v1380, 16
      %v1700 = vrot.slane %v1698, 5
      %v1701 = vsel %vm1423, %v1696, %v1700
      %v1702 = vshrl.u32 %v1380, 16
      %v1704 = vrot.slane %v1702, 4
      %v1705 = vor.u32 %v1704, %v1700
      %v1706 = vrot.slane %v1705, 4
      %v1708 = vshll.u32 %v1416, 16
      %v1710 = vrot.slane %v1708, 5
      %v1711 = vsel %vm1423, %v1706, %v1710
      %v1713 = vshrl.u32 %v1381, 16
      %v1715 = vrot.slane %v1713, 4
      %v1716 = vshll.u32 %v1381, 16
      %v1718 = vrot.slane %v1716, 5
      %v1719 = vor.u32 %v1715, %v1718
      %v1720 = vrot.slane %v1719, 4
      %v1722 = vshll.u32 %v1382, 16
      %v1724 = vrot.slane %v1722, 5
      %v1725 = vsel %vm1423, %v1720, %v1724
      %v1726 = vshrl.u32 %v1382, 16
      %v1728 = vrot.slane %v1726, 4
      %v1729 = vor.u32 %v1728, %v1724
      %v1730 = vrot.slane %v1729, 4
      %v1732 = vshll.u32 %v1417, 16
      %v1734 = vrot.slane %v1732, 5
      %v1735 = vsel %vm1423, %v1730, %v1734
      %v1737 = vshrl.u32 %v1383, 16
      %v1739 = vrot.slane %v1737, 4
      %v1740 = vshll.u32 %v1383, 16
      %v1742 = vrot.slane %v1740, 5
      %v1743 = vor.u32 %v1739, %v1742
      %v1744 = vrot.slane %v1743, 4
      %v1746 = vshll.u32 %v1384, 16
      %v1748 = vrot.slane %v1746, 5
      %v1749 = vsel %vm1423, %v1744, %v1748
      %v1750 = vshrl.u32 %v1384, 16
      %v1752 = vrot.slane %v1750, 4
      %v1753 = vor.u32 %v1752, %v1748
      %v1754 = vrot.slane %v1753, 4
      %v1756 = vshll.u32 %v1418, 16
      %v1758 = vrot.slane %v1756, 5
      %v1759 = vsel %vm1423, %v1754, %v1758
      %v1761 = vshrl.u32 %v1385, 16
      %v1763 = vrot.slane %v1761, 4
      %v1764 = vshll.u32 %v1385, 16
      %v1766 = vrot.slane %v1764, 5
      %v1767 = vor.u32 %v1763, %v1766
      %v1768 = vrot.slane %v1767, 4
      %v1770 = vshll.u32 %v1386, 16
      %v1772 = vrot.slane %v1770, 5
      %v1773 = vsel %vm1423, %v1768, %v1772
      %v1774 = vshrl.u32 %v1386, 16
      %v1776 = vrot.slane %v1774, 4
      %v1777 = vor.u32 %v1776, %v1772
      %v1778 = vrot.slane %v1777, 4
      %v1780 = vshll.u32 %v1419, 16
      %v1782 = vrot.slane %v1780, 5
      %v1783 = vsel %vm1423, %v1778, %v1782
      %v1785 = vshrl.u32 %v1387, 16
      %v1787 = vrot.slane %v1785, 4
      %v1788 = vshll.u32 %v1387, 16
      %v1790 = vrot.slane %v1788, 5
      %v1791 = vor.u32 %v1787, %v1790
      %v1792 = vrot.slane %v1791, 4
      %v1794 = vshll.u32 %v1388, 16
      %v1796 = vrot.slane %v1794, 5
      %v1797 = vsel %vm1423, %v1792, %v1796
      %v1798 = vshrl.u32 %v1388, 16
      %v1800 = vrot.slane %v1798, 4
      %v1801 = vor.u32 %v1800, %v1796
      %v1802 = vrot.slane %v1801, 4
      %v1804 = vshll.u32 %v1420, 16
      %v1806 = vrot.slane %v1804, 5
      %v1807 = vsel %vm1423, %v1802, %v1806
      %s1808 = scalar_lea.vmem %s425, 64
      %v1809 = vld [vmem:[%s1808] sm:$0xf]
      %v1810 = vld [vmem:[%s1808 + $0x4] sm:$0xf]
      %v1811 = vld [vmem:[%s1808 + $0x8] sm:$0xf]
      %v1812 = vld [vmem:[%s1808 + $0xc] sm:$0xf]
      %v1813 = vld [vmem:[%s1808 + $0x10] sm:$0xf]
      %v1814 = vld [vmem:[%s1808 + $0x14] sm:$0xf]
      %v1815 = vld [vmem:[%s1808 + $0x18] sm:$0xf]
      %v1816 = vld [vmem:[%s1808 + $0x1c] sm:$0xf]
      %v1817 = vld [vmem:[%s1808 + $0x20] sm:$0xf]
      %v1818 = vld [vmem:[%s1808 + $0x24] sm:$0xf]
      %v1819 = vld [vmem:[%s1808 + $0x28] sm:$0xf]
      %v1820 = vld [vmem:[%s1808 + $0x2c] sm:$0xf]
      %v1821 = vld [vmem:[%s1808 + $0x30] sm:$0xf]
      %v1822 = vld [vmem:[%s1808 + $0x34] sm:$0xf]
      %v1823 = vld [vmem:[%s1808 + $0x38] sm:$0xf]
      %v1824 = vld [vmem:[%s1808 + $0x3c] sm:$0xf]
      %v1825 = vunpack.c.l.b16 %v1437
      %v1826 = vunpack.c.l.b16 %v1447
      %v1827 = vunpack.c.l.b16 %v1461
      %v1828 = vunpack.c.l.b16 %v1471
      %v1829 = vunpack.c.l.b16 %v1485
      %v1830 = vunpack.c.l.b16 %v1495
      %v1831 = vunpack.c.l.b16 %v1509
      %v1832 = vunpack.c.l.b16 %v1519
      %v1833 = vunpack.c.l.b16 %v1533
      %v1834 = vunpack.c.l.b16 %v1543
      %v1835 = vunpack.c.l.b16 %v1557
      %v1836 = vunpack.c.l.b16 %v1567
      %v1837 = vunpack.c.l.b16 %v1581
      %v1838 = vunpack.c.l.b16 %v1591
      %v1839 = vunpack.c.l.b16 %v1605
      %v1840 = vunpack.c.l.b16 %v1615
      %v1841 = vunpack.c.l.b16 %v1629
      %v1842 = vunpack.c.l.b16 %v1639
      %v1843 = vunpack.c.l.b16 %v1653
      %v1844 = vunpack.c.l.b16 %v1663
      %v1845 = vunpack.c.l.b16 %v1677
      %v1846 = vunpack.c.l.b16 %v1687
      %v1847 = vunpack.c.l.b16 %v1701
      %v1848 = vunpack.c.l.b16 %v1711
      %v1849 = vunpack.c.l.b16 %v1725
      %v1850 = vunpack.c.l.b16 %v1735
      %v1851 = vunpack.c.l.b16 %v1749
      %v1852 = vunpack.c.l.b16 %v1759
      %v1853 = vunpack.c.l.b16 %v1773
      %v1854 = vunpack.c.l.b16 %v1783
      %v1855 = vunpack.c.l.b16 %v1797
      %v1856 = vunpack.c.l.b16 %v1807
      %v1857 = vpack.c.b16 %v1826, %v1825
      %v1858 = vpack.c.b16 %v1828, %v1827
      %v1859 = vpack.c.b16 %v1830, %v1829
      %v1860 = vpack.c.b16 %v1832, %v1831
      %v1861 = vpack.c.b16 %v1834, %v1833
      %v1862 = vpack.c.b16 %v1836, %v1835
      %v1863 = vpack.c.b16 %v1838, %v1837
      %v1864 = vpack.c.b16 %v1840, %v1839
      %v1865 = vpack.c.b16 %v1842, %v1841
      %v1866 = vpack.c.b16 %v1844, %v1843
      %v1867 = vpack.c.b16 %v1846, %v1845
      %v1868 = vpack.c.b16 %v1848, %v1847
      %v1869 = vpack.c.b16 %v1850, %v1849
      %v1870 = vpack.c.b16 %v1852, %v1851
      %v1871 = vpack.c.b16 %v1854, %v1853
      %v1872 = vpack.c.b16 %v1856, %v1855
      %v1905 = vunpack.c.l.b16 %v1809
      %v1906 = vunpack.c.l.b16 %v1810
      %v1907 = vunpack.c.l.b16 %v1811
      %v1908 = vunpack.c.l.b16 %v1812
      %v1909 = vunpack.c.l.b16 %v1813
      %v1910 = vunpack.c.l.b16 %v1814
      %v1911 = vunpack.c.l.b16 %v1815
      %v1912 = vunpack.c.l.b16 %v1816
      %v1913 = vunpack.c.l.b16 %v1817
      %v1914 = vunpack.c.l.b16 %v1818
      %v1915 = vunpack.c.l.b16 %v1819
      %v1916 = vunpack.c.l.b16 %v1820
      %v1917 = vunpack.c.l.b16 %v1821
      %v1918 = vunpack.c.l.b16 %v1822
      %v1919 = vunpack.c.l.b16 %v1823
      %v1920 = vunpack.c.l.b16 %v1824
      %v1921 = vpack.c.b16 %v1906, %v1905
      %v1922 = vpack.c.b16 %v1908, %v1907
      %v1923 = vpack.c.b16 %v1910, %v1909
      %v1924 = vpack.c.b16 %v1912, %v1911
      %v1925 = vpack.c.b16 %v1914, %v1913
      %v1926 = vpack.c.b16 %v1916, %v1915
      %v1927 = vpack.c.b16 %v1918, %v1917
      %v1928 = vpack.c.b16 %v1920, %v1919
      %1937 = vmatprep.subr.bf16.mxu0 0
      %1938 = vmatpush1.bf16.msra.mxu0 %v1928
      %1939 = vmatprep.subr.bf16.mxu0 0
      %1940 = vmatpush1.bf16.msra.mxu0 %v1927
      %1941 = vmatprep.subr.bf16.mxu0 0
      %1942 = vmatpush1.bf16.msra.mxu0 %v1926
      %1943 = vmatprep.subr.bf16.mxu0 0
      %1944 = vmatpush1.bf16.msra.mxu0 %v1925
      %1945 = vmatprep.subr.bf16.mxu0 0
      %1946 = vmatpush1.bf16.msra.mxu0 %v1924
      %1947 = vmatprep.subr.bf16.mxu0 0
      %1948 = vmatpush1.bf16.msra.mxu0 %v1923
      %1949 = vmatprep.subr.bf16.mxu0 0
      %1950 = vmatpush1.bf16.msra.mxu0 %v1922
      %1951 = vmatprep.subr.bf16.mxu0 0
      %1952 = vmatpush1.bf16.msra.mxu0 %v1921
      %1953 = vmatprep.subr.bf16.mxu0 0
      %1954 = vmatpush2.bf16.msra.mxu0 0
      %1955 = vmatprep.subr.bf16.mxu0 0
      %1956 = vmatpush2.bf16.msra.mxu0 0
      %1957 = vmatprep.subr.bf16.mxu0 0
      %1958 = vmatpush2.bf16.msra.mxu0 0
      %1959 = vmatprep.subr.bf16.mxu0 0
      %1960 = vmatpush2.bf16.msra.mxu0 0
      %1961 = vmatprep.subr.bf16.mxu0 0
      %1962 = vmatpush2.bf16.msra.mxu0 0
      %1963 = vmatprep.subr.bf16.mxu0 0
      %1964 = vmatpush2.bf16.msra.mxu0 0
      %1965 = vmatprep.subr.bf16.mxu0 0
      %1966 = vmatpush2.bf16.msra.mxu0 0
      %1967 = vmatprep.subr.bf16.mxu0 0
      %1968 = vmatpush2.bf16.msra.mxu0 0
      %1969 = vmatprep.mubr.bf16.mxu0 0
      %1970 = vmatmul.mubr.bf16.gmra.mxu0 %v1857
      %v1971 = vpop.f32.mrf.mxu0
      %v1972 = vadd.f32 0.0, %v1971
      %v1973 = vpop.f32.mrf.mxu0
      %v1974 = vpop.f32.mrf.mxu0
      %v1975 = vadd.f32 0.0, %v1974
      %v1976 = vpop.f32.mrf.mxu0
      %1977 = vmatprep.mubr.bf16.mxu0 0
      %1978 = vmatmul.mubr.bf16.gmra.mxu0 %v1858
      %v1979 = vpop.f32.mrf.mxu0
      %v1980 = vadd.f32 0.0, %v1979
      %v1981 = vpop.f32.mrf.mxu0
      %v1982 = vpop.f32.mrf.mxu0
      %v1983 = vadd.f32 0.0, %v1982
      %v1984 = vpop.f32.mrf.mxu0
      %1985 = vmatprep.mubr.bf16.mxu0 0
      %1986 = vmatmul.mubr.bf16.gmra.mxu0 %v1859
      %v1987 = vpop.f32.mrf.mxu0
      %v1988 = vadd.f32 0.0, %v1987
      %v1989 = vpop.f32.mrf.mxu0
      %v1990 = vpop.f32.mrf.mxu0
      %v1991 = vadd.f32 0.0, %v1990
      %v1992 = vpop.f32.mrf.mxu0
      %1993 = vmatprep.mubr.bf16.mxu0 0
      %1994 = vmatmul.mubr.bf16.gmra.mxu0 %v1860
      %v1995 = vpop.f32.mrf.mxu0
      %v1996 = vadd.f32 0.0, %v1995
      %v1997 = vpop.f32.mrf.mxu0
      %v1998 = vpop.f32.mrf.mxu0
      %v1999 = vadd.f32 0.0, %v1998
      %v2000 = vpop.f32.mrf.mxu0
      %2001 = vmatprep.mubr.bf16.mxu0 0
      %2002 = vmatmul.mubr.bf16.gmra.mxu0 %v1861
      %v2003 = vpop.f32.mrf.mxu0
      %v2004 = vadd.f32 0.0, %v2003
      %v2005 = vpop.f32.mrf.mxu0
      %v2006 = vpop.f32.mrf.mxu0
      %v2007 = vadd.f32 0.0, %v2006
      %v2008 = vpop.f32.mrf.mxu0
      %2009 = vmatprep.mubr.bf16.mxu0 0
      %2010 = vmatmul.mubr.bf16.gmra.mxu0 %v1862
      %v2011 = vpop.f32.mrf.mxu0
      %v2012 = vadd.f32 0.0, %v2011
      %v2013 = vpop.f32.mrf.mxu0
      %v2014 = vpop.f32.mrf.mxu0
      %v2015 = vadd.f32 0.0, %v2014
      %v2016 = vpop.f32.mrf.mxu0
      %2017 = vmatprep.mubr.bf16.mxu0 0
      %2018 = vmatmul.mubr.bf16.gmra.mxu0 %v1863
      %v2019 = vpop.f32.mrf.mxu0
      %v2020 = vadd.f32 0.0, %v2019
      %v2021 = vpop.f32.mrf.mxu0
      %v2022 = vpop.f32.mrf.mxu0
      %v2023 = vadd.f32 0.0, %v2022
      %v2024 = vpop.f32.mrf.mxu0
      %2025 = vmatprep.mubr.bf16.mxu0 0
      %2026 = vmatmul.mubr.bf16.gmra.mxu0 %v1864
      %v2027 = vpop.f32.mrf.mxu0
      %v2028 = vadd.f32 0.0, %v2027
      %v2029 = vpop.f32.mrf.mxu0
      %v2030 = vpop.f32.mrf.mxu0
      %v2031 = vadd.f32 0.0, %v2030
      %v2032 = vpop.f32.mrf.mxu0
      %2033 = vmatprep.mubr.bf16.mxu0 0
      %2034 = vmatmul.mubr.bf16.gmra.mxu0 %v1865
      %v2035 = vpop.f32.mrf.mxu0
      %v2036 = vadd.f32 0.0, %v2035
      %v2037 = vpop.f32.mrf.mxu0
      %v2038 = vpop.f32.mrf.mxu0
      %v2039 = vadd.f32 0.0, %v2038
      %v2040 = vpop.f32.mrf.mxu0
      %2041 = vmatprep.mubr.bf16.mxu0 0
      %2042 = vmatmul.mubr.bf16.gmra.mxu0 %v1866
      %v2043 = vpop.f32.mrf.mxu0
      %v2044 = vadd.f32 0.0, %v2043
      %v2045 = vpop.f32.mrf.mxu0
      %v2046 = vpop.f32.mrf.mxu0
      %v2047 = vadd.f32 0.0, %v2046
      %v2048 = vpop.f32.mrf.mxu0
      %2049 = vmatprep.mubr.bf16.mxu0 0
      %2050 = vmatmul.mubr.bf16.gmra.mxu0 %v1867
      %v2051 = vpop.f32.mrf.mxu0
      %v2052 = vadd.f32 0.0, %v2051
      %v2053 = vpop.f32.mrf.mxu0
      %v2054 = vpop.f32.mrf.mxu0
      %v2055 = vadd.f32 0.0, %v2054
      %v2056 = vpop.f32.mrf.mxu0
      %2057 = vmatprep.mubr.bf16.mxu0 0
      %2058 = vmatmul.mubr.bf16.gmra.mxu0 %v1868
      %v2059 = vpop.f32.mrf.mxu0
      %v2060 = vadd.f32 0.0, %v2059
      %v2061 = vpop.f32.mrf.mxu0
      %v2062 = vpop.f32.mrf.mxu0
      %v2063 = vadd.f32 0.0, %v2062
      %v2064 = vpop.f32.mrf.mxu0
      %2065 = vmatprep.mubr.bf16.mxu0 0
      %2066 = vmatmul.mubr.bf16.gmra.mxu0 %v1869
      %v2067 = vpop.f32.mrf.mxu0
      %v2068 = vadd.f32 0.0, %v2067
      %v2069 = vpop.f32.mrf.mxu0
      %v2070 = vpop.f32.mrf.mxu0
      %v2071 = vadd.f32 0.0, %v2070
      %v2072 = vpop.f32.mrf.mxu0
      %2073 = vmatprep.mubr.bf16.mxu0 0
      %2074 = vmatmul.mubr.bf16.gmra.mxu0 %v1870
      %v2075 = vpop.f32.mrf.mxu0
      %v2076 = vadd.f32 0.0, %v2075
      %v2077 = vpop.f32.mrf.mxu0
      %v2078 = vpop.f32.mrf.mxu0
      %v2079 = vadd.f32 0.0, %v2078
      %v2080 = vpop.f32.mrf.mxu0
      %2081 = vmatprep.mubr.bf16.mxu0 0
      %2082 = vmatmul.mubr.bf16.gmra.mxu0 %v1871
      %v2083 = vpop.f32.mrf.mxu0
      %v2084 = vadd.f32 0.0, %v2083
      %v2085 = vpop.f32.mrf.mxu0
      %v2086 = vpop.f32.mrf.mxu0
      %v2087 = vadd.f32 0.0, %v2086
      %v2088 = vpop.f32.mrf.mxu0
      %2089 = vmatprep.mubr.bf16.mxu0 0
      %2090 = vmatmul.mubr.bf16.gmra.mxu0 %v1872
      %v2091 = vpop.f32.mrf.mxu0
      %v2092 = vadd.f32 0.0, %v2091
      %v2093 = vpop.f32.mrf.mxu0
      %v2094 = vpop.f32.mrf.mxu0
      %v2095 = vadd.f32 0.0, %v2094
      %v2096 = vpop.f32.mrf.mxu0
      %2097 = vdwg.mxu0
      %v2130 = vunpack.c.l.b16 %v1357
      %v2131 = vunpack.c.l.b16 %v1358
      %v2132 = vunpack.c.l.b16 %v1359
      %v2133 = vunpack.c.l.b16 %v1360
      %v2134 = vunpack.c.l.b16 %v1361
      %v2135 = vunpack.c.l.b16 %v1362
      %v2136 = vunpack.c.l.b16 %v1363
      %v2137 = vunpack.c.l.b16 %v1364
      %v2138 = vunpack.c.l.b16 %v1365
      %v2139 = vunpack.c.l.b16 %v1366
      %v2140 = vunpack.c.l.b16 %v1367
      %v2141 = vunpack.c.l.b16 %v1368
      %v2142 = vunpack.c.l.b16 %v1369
      %v2143 = vunpack.c.l.b16 %v1370
      %v2144 = vunpack.c.l.b16 %v1371
      %v2145 = vunpack.c.l.b16 %v1372
      %v2146 = vunpack.c.l.b16 %v1373
      %v2147 = vunpack.c.l.b16 %v1374
      %v2148 = vunpack.c.l.b16 %v1375
      %v2149 = vunpack.c.l.b16 %v1376
      %v2150 = vunpack.c.l.b16 %v1377
      %v2151 = vunpack.c.l.b16 %v1378
      %v2152 = vunpack.c.l.b16 %v1379
      %v2153 = vunpack.c.l.b16 %v1380
      %v2154 = vunpack.c.l.b16 %v1381
      %v2155 = vunpack.c.l.b16 %v1382
      %v2156 = vunpack.c.l.b16 %v1383
      %v2157 = vunpack.c.l.b16 %v1384
      %v2158 = vunpack.c.l.b16 %v1385
      %v2159 = vunpack.c.l.b16 %v1386
      %v2160 = vunpack.c.l.b16 %v1387
      %v2161 = vunpack.c.l.b16 %v1388
      %v2162 = vpack.c.b16 %v2131, %v2130
      %v2163 = vpack.c.b16 %v2133, %v2132
      %v2164 = vpack.c.b16 %v2135, %v2134
      %v2165 = vpack.c.b16 %v2137, %v2136
      %v2166 = vpack.c.b16 %v2139, %v2138
      %v2167 = vpack.c.b16 %v2141, %v2140
      %v2168 = vpack.c.b16 %v2143, %v2142
      %v2169 = vpack.c.b16 %v2145, %v2144
      %v2170 = vpack.c.b16 %v2147, %v2146
      %v2171 = vpack.c.b16 %v2149, %v2148
      %v2172 = vpack.c.b16 %v2151, %v2150
      %v2173 = vpack.c.b16 %v2153, %v2152
      %v2174 = vpack.c.b16 %v2155, %v2154
      %v2175 = vpack.c.b16 %v2157, %v2156
      %v2176 = vpack.c.b16 %v2159, %v2158
      %v2177 = vpack.c.b16 %v2161, %v2160
      %v2210 = vunpack.c.l.b16 %v1389
      %v2211 = vunpack.c.l.b16 %v1390
      %v2212 = vunpack.c.l.b16 %v1391
      %v2213 = vunpack.c.l.b16 %v1392
      %v2214 = vunpack.c.l.b16 %v1393
      %v2215 = vunpack.c.l.b16 %v1394
      %v2216 = vunpack.c.l.b16 %v1395
      %v2217 = vunpack.c.l.b16 %v1396
      %v2218 = vunpack.c.l.b16 %v1397
      %v2219 = vunpack.c.l.b16 %v1398
      %v2220 = vunpack.c.l.b16 %v1399
      %v2221 = vunpack.c.l.b16 %v1400
      %v2222 = vunpack.c.l.b16 %v1401
      %v2223 = vunpack.c.l.b16 %v1402
      %v2224 = vunpack.c.l.b16 %v1403
      %v2225 = vunpack.c.l.b16 %v1404
      %v2226 = vpack.c.b16 %v2211, %v2210
      %v2227 = vpack.c.b16 %v2213, %v2212
      %v2228 = vpack.c.b16 %v2215, %v2214
      %v2229 = vpack.c.b16 %v2217, %v2216
      %v2230 = vpack.c.b16 %v2219, %v2218
      %v2231 = vpack.c.b16 %v2221, %v2220
      %v2232 = vpack.c.b16 %v2223, %v2222
      %v2233 = vpack.c.b16 %v2225, %v2224
      %2242 = vmatprep.subr.bf16.mxu0 0
      %2243 = vmatpush1.bf16.msra.mxu0 %v2233
      %2244 = vmatprep.subr.bf16.mxu0 0
      %2245 = vmatpush1.bf16.msra.mxu0 %v2232
      %2246 = vmatprep.subr.bf16.mxu0 0
      %2247 = vmatpush1.bf16.msra.mxu0 %v2231
      %2248 = vmatprep.subr.bf16.mxu0 0
      %2249 = vmatpush1.bf16.msra.mxu0 %v2230
      %2250 = vmatprep.subr.bf16.mxu0 0
      %2251 = vmatpush1.bf16.msra.mxu0 %v2229
      %2252 = vmatprep.subr.bf16.mxu0 0
      %2253 = vmatpush1.bf16.msra.mxu0 %v2228
      %2254 = vmatprep.subr.bf16.mxu0 0
      %2255 = vmatpush1.bf16.msra.mxu0 %v2227
      %2256 = vmatprep.subr.bf16.mxu0 0
      %2257 = vmatpush1.bf16.msra.mxu0 %v2226
      %2258 = vmatprep.subr.bf16.mxu0 0
      %2259 = vmatpush2.bf16.msra.mxu0 0
      %2260 = vmatprep.subr.bf16.mxu0 0
      %2261 = vmatpush2.bf16.msra.mxu0 0
      %2262 = vmatprep.subr.bf16.mxu0 0
      %2263 = vmatpush2.bf16.msra.mxu0 0
      %2264 = vmatprep.subr.bf16.mxu0 0
      %2265 = vmatpush2.bf16.msra.mxu0 0
      %2266 = vmatprep.subr.bf16.mxu0 0
      %2267 = vmatpush2.bf16.msra.mxu0 0
      %2268 = vmatprep.subr.bf16.mxu0 0
      %2269 = vmatpush2.bf16.msra.mxu0 0
      %2270 = vmatprep.subr.bf16.mxu0 0
      %2271 = vmatpush2.bf16.msra.mxu0 0
      %2272 = vmatprep.subr.bf16.mxu0 0
      %2273 = vmatpush2.bf16.msra.mxu0 0
      %2274 = vmatprep.mubr.bf16.mxu0 0
      %2275 = vmatmul.mubr.bf16.gmra.mxu0 %v2162
      %v2276 = vpop.f32.mrf.mxu0
      %v2277 = vadd.f32 %v1972, %v2276
      %v2278 = vpop.f32.mrf.mxu0
      %v2279 = vpop.f32.mrf.mxu0
      %v2280 = vadd.f32 %v1975, %v2279
      %v2281 = vpop.f32.mrf.mxu0
      %2282 = vmatprep.mubr.bf16.mxu0 0
      %2283 = vmatmul.mubr.bf16.gmra.mxu0 %v2163
      %v2284 = vpop.f32.mrf.mxu0
      %v2285 = vadd.f32 %v1980, %v2284
      %v2286 = vpop.f32.mrf.mxu0
      %v2287 = vpop.f32.mrf.mxu0
      %v2288 = vadd.f32 %v1983, %v2287
      %v2289 = vpop.f32.mrf.mxu0
      %2290 = vmatprep.mubr.bf16.mxu0 0
      %2291 = vmatmul.mubr.bf16.gmra.mxu0 %v2164
      %v2292 = vpop.f32.mrf.mxu0
      %v2293 = vadd.f32 %v1988, %v2292
      %v2294 = vpop.f32.mrf.mxu0
      %v2295 = vpop.f32.mrf.mxu0
      %v2296 = vadd.f32 %v1991, %v2295
      %v2297 = vpop.f32.mrf.mxu0
      %2298 = vmatprep.mubr.bf16.mxu0 0
      %2299 = vmatmul.mubr.bf16.gmra.mxu0 %v2165
      %v2300 = vpop.f32.mrf.mxu0
      %v2301 = vadd.f32 %v1996, %v2300
      %v2302 = vpop.f32.mrf.mxu0
      %v2303 = vpop.f32.mrf.mxu0
      %v2304 = vadd.f32 %v1999, %v2303
      %v2305 = vpop.f32.mrf.mxu0
      %2306 = vmatprep.mubr.bf16.mxu0 0
      %2307 = vmatmul.mubr.bf16.gmra.mxu0 %v2166
      %v2308 = vpop.f32.mrf.mxu0
      %v2309 = vadd.f32 %v2004, %v2308
      %v2310 = vpop.f32.mrf.mxu0
      %v2311 = vpop.f32.mrf.mxu0
      %v2312 = vadd.f32 %v2007, %v2311
      %v2313 = vpop.f32.mrf.mxu0
      %2314 = vmatprep.mubr.bf16.mxu0 0
      %2315 = vmatmul.mubr.bf16.gmra.mxu0 %v2167
      %v2316 = vpop.f32.mrf.mxu0
      %v2317 = vadd.f32 %v2012, %v2316
      %v2318 = vpop.f32.mrf.mxu0
      %v2319 = vpop.f32.mrf.mxu0
      %v2320 = vadd.f32 %v2015, %v2319
      %v2321 = vpop.f32.mrf.mxu0
      %2322 = vmatprep.mubr.bf16.mxu0 0
      %2323 = vmatmul.mubr.bf16.gmra.mxu0 %v2168
      %v2324 = vpop.f32.mrf.mxu0
      %v2325 = vadd.f32 %v2020, %v2324
      %v2326 = vpop.f32.mrf.mxu0
      %v2327 = vpop.f32.mrf.mxu0
      %v2328 = vadd.f32 %v2023, %v2327
      %v2329 = vpop.f32.mrf.mxu0
      %2330 = vmatprep.mubr.bf16.mxu0 0
      %2331 = vmatmul.mubr.bf16.gmra.mxu0 %v2169
      %v2332 = vpop.f32.mrf.mxu0
      %v2333 = vadd.f32 %v2028, %v2332
      %v2334 = vpop.f32.mrf.mxu0
      %v2335 = vpop.f32.mrf.mxu0
      %v2336 = vadd.f32 %v2031, %v2335
      %v2337 = vpop.f32.mrf.mxu0
      %2338 = vmatprep.mubr.bf16.mxu0 0
      %2339 = vmatmul.mubr.bf16.gmra.mxu0 %v2170
      %v2340 = vpop.f32.mrf.mxu0
      %v2341 = vadd.f32 %v2036, %v2340
      %v2342 = vpop.f32.mrf.mxu0
      %v2343 = vpop.f32.mrf.mxu0
      %v2344 = vadd.f32 %v2039, %v2343
      %v2345 = vpop.f32.mrf.mxu0
      %2346 = vmatprep.mubr.bf16.mxu0 0
      %2347 = vmatmul.mubr.bf16.gmra.mxu0 %v2171
      %v2348 = vpop.f32.mrf.mxu0
      %v2349 = vadd.f32 %v2044, %v2348
      %v2350 = vpop.f32.mrf.mxu0
      %v2351 = vpop.f32.mrf.mxu0
      %v2352 = vadd.f32 %v2047, %v2351
      %v2353 = vpop.f32.mrf.mxu0
      %2354 = vmatprep.mubr.bf16.mxu0 0
      %2355 = vmatmul.mubr.bf16.gmra.mxu0 %v2172
      %v2356 = vpop.f32.mrf.mxu0
      %v2357 = vadd.f32 %v2052, %v2356
      %v2358 = vpop.f32.mrf.mxu0
      %v2359 = vpop.f32.mrf.mxu0
      %v2360 = vadd.f32 %v2055, %v2359
      %v2361 = vpop.f32.mrf.mxu0
      %2362 = vmatprep.mubr.bf16.mxu0 0
      %2363 = vmatmul.mubr.bf16.gmra.mxu0 %v2173
      %v2364 = vpop.f32.mrf.mxu0
      %v2365 = vadd.f32 %v2060, %v2364
      %v2366 = vpop.f32.mrf.mxu0
      %v2367 = vpop.f32.mrf.mxu0
      %v2368 = vadd.f32 %v2063, %v2367
      %v2369 = vpop.f32.mrf.mxu0
      %2370 = vmatprep.mubr.bf16.mxu0 0
      %2371 = vmatmul.mubr.bf16.gmra.mxu0 %v2174
      %v2372 = vpop.f32.mrf.mxu0
      %v2373 = vadd.f32 %v2068, %v2372
      %v2374 = vpop.f32.mrf.mxu0
      %v2375 = vpop.f32.mrf.mxu0
      %v2376 = vadd.f32 %v2071, %v2375
      %v2377 = vpop.f32.mrf.mxu0
      %2378 = vmatprep.mubr.bf16.mxu0 0
      %2379 = vmatmul.mubr.bf16.gmra.mxu0 %v2175
      %v2380 = vpop.f32.mrf.mxu0
      %v2381 = vadd.f32 %v2076, %v2380
      %v2382 = vpop.f32.mrf.mxu0
      %v2383 = vpop.f32.mrf.mxu0
      %v2384 = vadd.f32 %v2079, %v2383
      %v2385 = vpop.f32.mrf.mxu0
      %2386 = vmatprep.mubr.bf16.mxu0 0
      %2387 = vmatmul.mubr.bf16.gmra.mxu0 %v2176
      %v2388 = vpop.f32.mrf.mxu0
      %v2389 = vadd.f32 %v2084, %v2388
      %v2390 = vpop.f32.mrf.mxu0
      %v2391 = vpop.f32.mrf.mxu0
      %v2392 = vadd.f32 %v2087, %v2391
      %v2393 = vpop.f32.mrf.mxu0
      %2394 = vmatprep.mubr.bf16.mxu0 0
      %2395 = vmatmul.mubr.bf16.gmra.mxu0 %v2177
      %v2396 = vpop.f32.mrf.mxu0
      %v2397 = vadd.f32 %v2092, %v2396
      %v2398 = vpop.f32.mrf.mxu0
      %v2399 = vpop.f32.mrf.mxu0
      %v2400 = vadd.f32 %v2095, %v2399
      %v2401 = vpop.f32.mrf.mxu0
      %2402 = vdwg.mxu0
      %v2403 = vld [vmem:[#allocation2] sm:$0xe]
      %v2404 = vld [vmem:[#allocation2 + $0xc] sm:$0xe]
      %v2405 = vld [vmem:[#allocation2 + $0x18] sm:$0xe]
      %v2406 = vld [vmem:[#allocation2 + $0x24] sm:$0xe]
      %v2407 = vld [vmem:[#allocation2 + $0x30] sm:$0xe]
      %v2408 = vld [vmem:[#allocation2 + $0x3c] sm:$0xe]
      %v2409 = vld [vmem:[#allocation2 + $0x48] sm:$0xe]
      %v2410 = vld [vmem:[#allocation2 + $0x54] sm:$0xe]
      %v2411 = vld [vmem:[#allocation2 + $0x60] sm:$0xe]
      %v2412 = vld [vmem:[#allocation2 + $0x6c] sm:$0xe]
      %v2413 = vld [vmem:[#allocation2 + $0x78] sm:$0xe]
      %v2414 = vld [vmem:[#allocation2 + $0x84] sm:$0xe]
      %v2415 = vld [vmem:[#allocation2 + $0x90] sm:$0xe]
      %v2416 = vld [vmem:[#allocation2 + $0x9c] sm:$0xe]
      %v2417 = vld [vmem:[#allocation2 + $0xa8] sm:$0xe]
      %v2418 = vld [vmem:[#allocation2 + $0xb4] sm:$0xe]
      %vm2451 = vcmask 1042432
      %vm2452 = vcmask 1046532
      %vm2453 = vmor %vm2451, %vm2452
      %v2454 = vrot.slane %v2403, 5
      %v2455 = vrot.slane %v2454, 4
      %v2456 = vrot.slane %v1358, 5
      %v2457 = vsel %vm2453, %v2455, %v2456
      %v2458 = vrot.slane %v2456, 4
      %v2459 = vrot.slane %v1405, 5
      %v2460 = vsel %vm2453, %v2458, %v2459
      %v2461 = vrot.slane %v2404, 5
      %v2462 = vrot.slane %v2461, 4
      %v2463 = vrot.slane %v1360, 5
      %v2464 = vsel %vm2453, %v2462, %v2463
      %v2465 = vrot.slane %v2463, 4
      %v2466 = vrot.slane %v1406, 5
      %v2467 = vsel %vm2453, %v2465, %v2466
      %v2468 = vrot.slane %v2405, 5
      %v2469 = vrot.slane %v2468, 4
      %v2470 = vrot.slane %v1362, 5
      %v2471 = vsel %vm2453, %v2469, %v2470
      %v2472 = vrot.slane %v2470, 4
      %v2473 = vrot.slane %v1407, 5
      %v2474 = vsel %vm2453, %v2472, %v2473
      %v2475 = vrot.slane %v2406, 5
      %v2476 = vrot.slane %v2475, 4
      %v2477 = vrot.slane %v1364, 5
      %v2478 = vsel %vm2453, %v2476, %v2477
      %v2479 = vrot.slane %v2477, 4
      %v2480 = vrot.slane %v1408, 5
      %v2481 = vsel %vm2453, %v2479, %v2480
      %v2482 = vrot.slane %v2407, 5
      %v2483 = vrot.slane %v2482, 4
      %v2484 = vrot.slane %v1366, 5
      %v2485 = vsel %vm2453, %v2483, %v2484
      %v2486 = vrot.slane %v2484, 4
      %v2487 = vrot.slane %v1409, 5
      %v2488 = vsel %vm2453, %v2486, %v2487
      %v2489 = vrot.slane %v2408, 5
      %v2490 = vrot.slane %v2489, 4
      %v2491 = vrot.slane %v1368, 5
      %v2492 = vsel %vm2453, %v2490, %v2491
      %v2493 = vrot.slane %v2491, 4
      %v2494 = vrot.slane %v1410, 5
      %v2495 = vsel %vm2453, %v2493, %v2494
      %v2496 = vrot.slane %v2409, 5
      %v2497 = vrot.slane %v2496, 4
      %v2498 = vrot.slane %v1370, 5
      %v2499 = vsel %vm2453, %v2497, %v2498
      %v2500 = vrot.slane %v2498, 4
      %v2501 = vrot.slane %v1411, 5
      %v2502 = vsel %vm2453, %v2500, %v2501
      %v2503 = vrot.slane %v2410, 5
      %v2504 = vrot.slane %v2503, 4
      %v2505 = vrot.slane %v1372, 5
      %v2506 = vsel %vm2453, %v2504, %v2505
      %v2507 = vrot.slane %v2505, 4
      %v2508 = vrot.slane %v1412, 5
      %v2509 = vsel %vm2453, %v2507, %v2508
      %v2510 = vrot.slane %v2411, 5
      %v2511 = vrot.slane %v2510, 4
      %v2512 = vrot.slane %v1374, 5
      %v2513 = vsel %vm2453, %v2511, %v2512
      %v2514 = vrot.slane %v2512, 4
      %v2515 = vrot.slane %v1413, 5
      %v2516 = vsel %vm2453, %v2514, %v2515
      %v2517 = vrot.slane %v2412, 5
      %v2518 = vrot.slane %v2517, 4
      %v2519 = vrot.slane %v1376, 5
      %v2520 = vsel %vm2453, %v2518, %v2519
      %v2521 = vrot.slane %v2519, 4
      %v2522 = vrot.slane %v1414, 5
      %v2523 = vsel %vm2453, %v2521, %v2522
      %v2524 = vrot.slane %v2413, 5
      %v2525 = vrot.slane %v2524, 4
      %v2526 = vrot.slane %v1378, 5
      %v2527 = vsel %vm2453, %v2525, %v2526
      %v2528 = vrot.slane %v2526, 4
      %v2529 = vrot.slane %v1415, 5
      %v2530 = vsel %vm2453, %v2528, %v2529
      %v2531 = vrot.slane %v2414, 5
      %v2532 = vrot.slane %v2531, 4
      %v2533 = vrot.slane %v1380, 5
      %v2534 = vsel %vm2453, %v2532, %v2533
      %v2535 = vrot.slane %v2533, 4
      %v2536 = vrot.slane %v1416, 5
      %v2537 = vsel %vm2453, %v2535, %v2536
      %v2538 = vrot.slane %v2415, 5
      %v2539 = vrot.slane %v2538, 4
      %v2540 = vrot.slane %v1382, 5
      %v2541 = vsel %vm2453, %v2539, %v2540
      %v2542 = vrot.slane %v2540, 4
      %v2543 = vrot.slane %v1417, 5
      %v2544 = vsel %vm2453, %v2542, %v2543
      %v2545 = vrot.slane %v2416, 5
      %v2546 = vrot.slane %v2545, 4
      %v2547 = vrot.slane %v1384, 5
      %v2548 = vsel %vm2453, %v2546, %v2547
      %v2549 = vrot.slane %v2547, 4
      %v2550 = vrot.slane %v1418, 5
      %v2551 = vsel %vm2453, %v2549, %v2550
      %v2552 = vrot.slane %v2417, 5
      %v2553 = vrot.slane %v2552, 4
      %v2554 = vrot.slane %v1386, 5
      %v2555 = vsel %vm2453, %v2553, %v2554
      %v2556 = vrot.slane %v2554, 4
      %v2557 = vrot.slane %v1419, 5
      %v2558 = vsel %vm2453, %v2556, %v2557
      %v2559 = vrot.slane %v2418, 5
      %v2560 = vrot.slane %v2559, 4
      %v2561 = vrot.slane %v1388, 5
      %v2562 = vsel %vm2453, %v2560, %v2561
      %v2563 = vrot.slane %v2561, 4
      %v2564 = vrot.slane %v1420, 5
      %v2565 = vsel %vm2453, %v2563, %v2564
      %s2566 = scalar_lea.vmem %s425, 128
      %v2567 = vld [vmem:[%s2566] sm:$0xf]
      %v2568 = vld [vmem:[%s2566 + $0x4] sm:$0xf]
      %v2569 = vld [vmem:[%s2566 + $0x8] sm:$0xf]
      %v2570 = vld [vmem:[%s2566 + $0xc] sm:$0xf]
      %v2571 = vld [vmem:[%s2566 + $0x10] sm:$0xf]
      %v2572 = vld [vmem:[%s2566 + $0x14] sm:$0xf]
      %v2573 = vld [vmem:[%s2566 + $0x18] sm:$0xf]
      %v2574 = vld [vmem:[%s2566 + $0x1c] sm:$0xf]
      %v2575 = vld [vmem:[%s2566 + $0x20] sm:$0xf]
      %v2576 = vld [vmem:[%s2566 + $0x24] sm:$0xf]
      %v2577 = vld [vmem:[%s2566 + $0x28] sm:$0xf]
      %v2578 = vld [vmem:[%s2566 + $0x2c] sm:$0xf]
      %v2579 = vld [vmem:[%s2566 + $0x30] sm:$0xf]
      %v2580 = vld [vmem:[%s2566 + $0x34] sm:$0xf]
      %v2581 = vld [vmem:[%s2566 + $0x38] sm:$0xf]
      %v2582 = vld [vmem:[%s2566 + $0x3c] sm:$0xf]
      %v2583 = vunpack.c.l.b16 %v2457
      %v2584 = vunpack.c.l.b16 %v2460
      %v2585 = vunpack.c.l.b16 %v2464
      %v2586 = vunpack.c.l.b16 %v2467
      %v2587 = vunpack.c.l.b16 %v2471
      %v2588 = vunpack.c.l.b16 %v2474
      %v2589 = vunpack.c.l.b16 %v2478
      %v2590 = vunpack.c.l.b16 %v2481
      %v2591 = vunpack.c.l.b16 %v2485
      %v2592 = vunpack.c.l.b16 %v2488
      %v2593 = vunpack.c.l.b16 %v2492
      %v2594 = vunpack.c.l.b16 %v2495
      %v2595 = vunpack.c.l.b16 %v2499
      %v2596 = vunpack.c.l.b16 %v2502
      %v2597 = vunpack.c.l.b16 %v2506
      %v2598 = vunpack.c.l.b16 %v2509
      %v2599 = vunpack.c.l.b16 %v2513
      %v2600 = vunpack.c.l.b16 %v2516
      %v2601 = vunpack.c.l.b16 %v2520
      %v2602 = vunpack.c.l.b16 %v2523
      %v2603 = vunpack.c.l.b16 %v2527
      %v2604 = vunpack.c.l.b16 %v2530
      %v2605 = vunpack.c.l.b16 %v2534
      %v2606 = vunpack.c.l.b16 %v2537
      %v2607 = vunpack.c.l.b16 %v2541
      %v2608 = vunpack.c.l.b16 %v2544
      %v2609 = vunpack.c.l.b16 %v2548
      %v2610 = vunpack.c.l.b16 %v2551
      %v2611 = vunpack.c.l.b16 %v2555
      %v2612 = vunpack.c.l.b16 %v2558
      %v2613 = vunpack.c.l.b16 %v2562
      %v2614 = vunpack.c.l.b16 %v2565
      %v2615 = vpack.c.b16 %v2584, %v2583
      %v2616 = vpack.c.b16 %v2586, %v2585
      %v2617 = vpack.c.b16 %v2588, %v2587
      %v2618 = vpack.c.b16 %v2590, %v2589
      %v2619 = vpack.c.b16 %v2592, %v2591
      %v2620 = vpack.c.b16 %v2594, %v2593
      %v2621 = vpack.c.b16 %v2596, %v2595
      %v2622 = vpack.c.b16 %v2598, %v2597
      %v2623 = vpack.c.b16 %v2600, %v2599
      %v2624 = vpack.c.b16 %v2602, %v2601
      %v2625 = vpack.c.b16 %v2604, %v2603
      %v2626 = vpack.c.b16 %v2606, %v2605
      %v2627 = vpack.c.b16 %v2608, %v2607
      %v2628 = vpack.c.b16 %v2610, %v2609
      %v2629 = vpack.c.b16 %v2612, %v2611
      %v2630 = vpack.c.b16 %v2614, %v2613
      %v2663 = vunpack.c.l.b16 %v2567
      %v2664 = vunpack.c.l.b16 %v2568
      %v2665 = vunpack.c.l.b16 %v2569
      %v2666 = vunpack.c.l.b16 %v2570
      %v2667 = vunpack.c.l.b16 %v2571
      %v2668 = vunpack.c.l.b16 %v2572
      %v2669 = vunpack.c.l.b16 %v2573
      %v2670 = vunpack.c.l.b16 %v2574
      %v2671 = vunpack.c.l.b16 %v2575
      %v2672 = vunpack.c.l.b16 %v2576
      %v2673 = vunpack.c.l.b16 %v2577
      %v2674 = vunpack.c.l.b16 %v2578
      %v2675 = vunpack.c.l.b16 %v2579
      %v2676 = vunpack.c.l.b16 %v2580
      %v2677 = vunpack.c.l.b16 %v2581
      %v2678 = vunpack.c.l.b16 %v2582
      %v2679 = vpack.c.b16 %v2664, %v2663
      %v2680 = vpack.c.b16 %v2666, %v2665
      %v2681 = vpack.c.b16 %v2668, %v2667
      %v2682 = vpack.c.b16 %v2670, %v2669
      %v2683 = vpack.c.b16 %v2672, %v2671
      %v2684 = vpack.c.b16 %v2674, %v2673
      %v2685 = vpack.c.b16 %v2676, %v2675
      %v2686 = vpack.c.b16 %v2678, %v2677
      %2695 = vmatprep.subr.bf16.mxu0 0
      %2696 = vmatpush1.bf16.msra.mxu0 %v2686
      %2697 = vmatprep.subr.bf16.mxu0 0
      %2698 = vmatpush1.bf16.msra.mxu0 %v2685
      %2699 = vmatprep.subr.bf16.mxu0 0
      %2700 = vmatpush1.bf16.msra.mxu0 %v2684
      %2701 = vmatprep.subr.bf16.mxu0 0
      %2702 = vmatpush1.bf16.msra.mxu0 %v2683
      %2703 = vmatprep.subr.bf16.mxu0 0
      %2704 = vmatpush1.bf16.msra.mxu0 %v2682
      %2705 = vmatprep.subr.bf16.mxu0 0
      %2706 = vmatpush1.bf16.msra.mxu0 %v2681
      %2707 = vmatprep.subr.bf16.mxu0 0
      %2708 = vmatpush1.bf16.msra.mxu0 %v2680
      %2709 = vmatprep.subr.bf16.mxu0 0
      %2710 = vmatpush1.bf16.msra.mxu0 %v2679
      %2711 = vmatprep.subr.bf16.mxu0 0
      %2712 = vmatpush2.bf16.msra.mxu0 0
      %2713 = vmatprep.subr.bf16.mxu0 0
      %2714 = vmatpush2.bf16.msra.mxu0 0
      %2715 = vmatprep.subr.bf16.mxu0 0
      %2716 = vmatpush2.bf16.msra.mxu0 0
      %2717 = vmatprep.subr.bf16.mxu0 0
      %2718 = vmatpush2.bf16.msra.mxu0 0
      %2719 = vmatprep.subr.bf16.mxu0 0
      %2720 = vmatpush2.bf16.msra.mxu0 0
      %2721 = vmatprep.subr.bf16.mxu0 0
      %2722 = vmatpush2.bf16.msra.mxu0 0
      %2723 = vmatprep.subr.bf16.mxu0 0
      %2724 = vmatpush2.bf16.msra.mxu0 0
      %2725 = vmatprep.subr.bf16.mxu0 0
      %2726 = vmatpush2.bf16.msra.mxu0 0
      %2727 = vmatprep.mubr.bf16.mxu0 0
      %2728 = vmatmul.mubr.bf16.gmra.mxu0 %v2615
      %v2729 = vpop.f32.mrf.mxu0
      %v2730 = vadd.f32 0.0, %v2729
      %v2731 = vpop.f32.mrf.mxu0
      %v2732 = vpop.f32.mrf.mxu0
      %v2733 = vadd.f32 0.0, %v2732
      %v2734 = vpop.f32.mrf.mxu0
      %2735 = vmatprep.mubr.bf16.mxu0 0
      %2736 = vmatmul.mubr.bf16.gmra.mxu0 %v2616
      %v2737 = vpop.f32.mrf.mxu0
      %v2738 = vadd.f32 0.0, %v2737
      %v2739 = vpop.f32.mrf.mxu0
      %v2740 = vpop.f32.mrf.mxu0
      %v2741 = vadd.f32 0.0, %v2740
      %v2742 = vpop.f32.mrf.mxu0
      %2743 = vmatprep.mubr.bf16.mxu0 0
      %2744 = vmatmul.mubr.bf16.gmra.mxu0 %v2617
      %v2745 = vpop.f32.mrf.mxu0
      %v2746 = vadd.f32 0.0, %v2745
      %v2747 = vpop.f32.mrf.mxu0
      %v2748 = vpop.f32.mrf.mxu0
      %v2749 = vadd.f32 0.0, %v2748
      %v2750 = vpop.f32.mrf.mxu0
      %2751 = vmatprep.mubr.bf16.mxu0 0
      %2752 = vmatmul.mubr.bf16.gmra.mxu0 %v2618
      %v2753 = vpop.f32.mrf.mxu0
      %v2754 = vadd.f32 0.0, %v2753
      %v2755 = vpop.f32.mrf.mxu0
      %v2756 = vpop.f32.mrf.mxu0
      %v2757 = vadd.f32 0.0, %v2756
      %v2758 = vpop.f32.mrf.mxu0
      %2759 = vmatprep.mubr.bf16.mxu0 0
      %2760 = vmatmul.mubr.bf16.gmra.mxu0 %v2619
      %v2761 = vpop.f32.mrf.mxu0
      %v2762 = vadd.f32 0.0, %v2761
      %v2763 = vpop.f32.mrf.mxu0
      %v2764 = vpop.f32.mrf.mxu0
      %v2765 = vadd.f32 0.0, %v2764
      %v2766 = vpop.f32.mrf.mxu0
      %2767 = vmatprep.mubr.bf16.mxu0 0
      %2768 = vmatmul.mubr.bf16.gmra.mxu0 %v2620
      %v2769 = vpop.f32.mrf.mxu0
      %v2770 = vadd.f32 0.0, %v2769
      %v2771 = vpop.f32.mrf.mxu0
      %v2772 = vpop.f32.mrf.mxu0
      %v2773 = vadd.f32 0.0, %v2772
      %v2774 = vpop.f32.mrf.mxu0
      %2775 = vmatprep.mubr.bf16.mxu0 0
      %2776 = vmatmul.mubr.bf16.gmra.mxu0 %v2621
      %v2777 = vpop.f32.mrf.mxu0
      %v2778 = vadd.f32 0.0, %v2777
      %v2779 = vpop.f32.mrf.mxu0
      %v2780 = vpop.f32.mrf.mxu0
      %v2781 = vadd.f32 0.0, %v2780
      %v2782 = vpop.f32.mrf.mxu0
      %2783 = vmatprep.mubr.bf16.mxu0 0
      %2784 = vmatmul.mubr.bf16.gmra.mxu0 %v2622
      %v2785 = vpop.f32.mrf.mxu0
      %v2786 = vadd.f32 0.0, %v2785
      %v2787 = vpop.f32.mrf.mxu0
      %v2788 = vpop.f32.mrf.mxu0
      %v2789 = vadd.f32 0.0, %v2788
      %v2790 = vpop.f32.mrf.mxu0
      %2791 = vmatprep.mubr.bf16.mxu0 0
      %2792 = vmatmul.mubr.bf16.gmra.mxu0 %v2623
      %v2793 = vpop.f32.mrf.mxu0
      %v2794 = vadd.f32 0.0, %v2793
      %v2795 = vpop.f32.mrf.mxu0
      %v2796 = vpop.f32.mrf.mxu0
      %v2797 = vadd.f32 0.0, %v2796
      %v2798 = vpop.f32.mrf.mxu0
      %2799 = vmatprep.mubr.bf16.mxu0 0
      %2800 = vmatmul.mubr.bf16.gmra.mxu0 %v2624
      %v2801 = vpop.f32.mrf.mxu0
      %v2802 = vadd.f32 0.0, %v2801
      %v2803 = vpop.f32.mrf.mxu0
      %v2804 = vpop.f32.mrf.mxu0
      %v2805 = vadd.f32 0.0, %v2804
      %v2806 = vpop.f32.mrf.mxu0
      %2807 = vmatprep.mubr.bf16.mxu0 0
      %2808 = vmatmul.mubr.bf16.gmra.mxu0 %v2625
      %v2809 = vpop.f32.mrf.mxu0
      %v2810 = vadd.f32 0.0, %v2809
      %v2811 = vpop.f32.mrf.mxu0
      %v2812 = vpop.f32.mrf.mxu0
      %v2813 = vadd.f32 0.0, %v2812
      %v2814 = vpop.f32.mrf.mxu0
      %2815 = vmatprep.mubr.bf16.mxu0 0
      %2816 = vmatmul.mubr.bf16.gmra.mxu0 %v2626
      %v2817 = vpop.f32.mrf.mxu0
      %v2818 = vadd.f32 0.0, %v2817
      %v2819 = vpop.f32.mrf.mxu0
      %v2820 = vpop.f32.mrf.mxu0
      %v2821 = vadd.f32 0.0, %v2820
      %v2822 = vpop.f32.mrf.mxu0
      %2823 = vmatprep.mubr.bf16.mxu0 0
      %2824 = vmatmul.mubr.bf16.gmra.mxu0 %v2627
      %v2825 = vpop.f32.mrf.mxu0
      %v2826 = vadd.f32 0.0, %v2825
      %v2827 = vpop.f32.mrf.mxu0
      %v2828 = vpop.f32.mrf.mxu0
      %v2829 = vadd.f32 0.0, %v2828
      %v2830 = vpop.f32.mrf.mxu0
      %2831 = vmatprep.mubr.bf16.mxu0 0
      %2832 = vmatmul.mubr.bf16.gmra.mxu0 %v2628
      %v2833 = vpop.f32.mrf.mxu0
      %v2834 = vadd.f32 0.0, %v2833
      %v2835 = vpop.f32.mrf.mxu0
      %v2836 = vpop.f32.mrf.mxu0
      %v2837 = vadd.f32 0.0, %v2836
      %v2838 = vpop.f32.mrf.mxu0
      %2839 = vmatprep.mubr.bf16.mxu0 0
      %2840 = vmatmul.mubr.bf16.gmra.mxu0 %v2629
      %v2841 = vpop.f32.mrf.mxu0
      %v2842 = vadd.f32 0.0, %v2841
      %v2843 = vpop.f32.mrf.mxu0
      %v2844 = vpop.f32.mrf.mxu0
      %v2845 = vadd.f32 0.0, %v2844
      %v2846 = vpop.f32.mrf.mxu0
      %2847 = vmatprep.mubr.bf16.mxu0 0
      %2848 = vmatmul.mubr.bf16.gmra.mxu0 %v2630
      %v2849 = vpop.f32.mrf.mxu0
      %v2850 = vadd.f32 0.0, %v2849
      %v2851 = vpop.f32.mrf.mxu0
      %v2852 = vpop.f32.mrf.mxu0
      %v2853 = vadd.f32 0.0, %v2852
      %v2854 = vpop.f32.mrf.mxu0
      %2855 = vdwg.mxu0
      %v2856 = vadd.f32 %v2277, %v2730
      %v2857 = vadd.f32 %v2280, %v2733
      %v2858 = vadd.f32 %v2285, %v2738
      %v2859 = vadd.f32 %v2288, %v2741
      %v2860 = vadd.f32 %v2293, %v2746
      %v2861 = vadd.f32 %v2296, %v2749
      %v2862 = vadd.f32 %v2301, %v2754
      %v2863 = vadd.f32 %v2304, %v2757
      %v2864 = vadd.f32 %v2309, %v2762
      %v2865 = vadd.f32 %v2312, %v2765
      %v2866 = vadd.f32 %v2317, %v2770
      %v2867 = vadd.f32 %v2320, %v2773
      %v2868 = vadd.f32 %v2325, %v2778
      %v2869 = vadd.f32 %v2328, %v2781
      %v2870 = vadd.f32 %v2333, %v2786
      %v2871 = vadd.f32 %v2336, %v2789
      %v2872 = vadd.f32 %v2341, %v2794
      %v2873 = vadd.f32 %v2344, %v2797
      %v2874 = vadd.f32 %v2349, %v2802
      %v2875 = vadd.f32 %v2352, %v2805
      %v2876 = vadd.f32 %v2357, %v2810
      %v2877 = vadd.f32 %v2360, %v2813
      %v2878 = vadd.f32 %v2365, %v2818
      %v2879 = vadd.f32 %v2368, %v2821
      %v2880 = vadd.f32 %v2373, %v2826
      %v2881 = vadd.f32 %v2376, %v2829
      %v2882 = vadd.f32 %v2381, %v2834
      %v2883 = vadd.f32 %v2384, %v2837
      %v2884 = vadd.f32 %v2389, %v2842
      %v2885 = vadd.f32 %v2392, %v2845
      %v2886 = vadd.f32 %v2397, %v2850
      %v2887 = vadd.f32 %v2400, %v2853
      %v2888 = vld [vmem:[%s1242] sm:$0xf]
      %v2889 = vld [vmem:[%s1242 + $0x4] sm:$0xf]
      %v2890 = vld [vmem:[%s1242 + $0xc] sm:$0xf]
      %v2891 = vld [vmem:[%s1242 + $0x10] sm:$0xf]
      %v2892 = vld [vmem:[%s1242 + $0x18] sm:$0xf]
      %v2893 = vld [vmem:[%s1242 + $0x1c] sm:$0xf]
      %v2894 = vld [vmem:[%s1242 + $0x24] sm:$0xf]
      %v2895 = vld [vmem:[%s1242 + $0x28] sm:$0xf]
      %v2896 = vld [vmem:[%s1242 + $0x30] sm:$0xf]
      %v2897 = vld [vmem:[%s1242 + $0x34] sm:$0xf]
      %v2898 = vld [vmem:[%s1242 + $0x3c] sm:$0xf]
      %v2899 = vld [vmem:[%s1242 + $0x40] sm:$0xf]
      %v2900 = vld [vmem:[%s1242 + $0x48] sm:$0xf]
      %v2901 = vld [vmem:[%s1242 + $0x4c] sm:$0xf]
      %v2902 = vld [vmem:[%s1242 + $0x54] sm:$0xf]
      %v2903 = vld [vmem:[%s1242 + $0x58] sm:$0xf]
      %v2904 = vld [vmem:[%s1242 + $0x60] sm:$0xf]
      %v2905 = vld [vmem:[%s1242 + $0x64] sm:$0xf]
      %v2906 = vld [vmem:[%s1242 + $0x6c] sm:$0xf]
      %v2907 = vld [vmem:[%s1242 + $0x70] sm:$0xf]
      %v2908 = vld [vmem:[%s1242 + $0x78] sm:$0xf]
      %v2909 = vld [vmem:[%s1242 + $0x7c] sm:$0xf]
      %v2910 = vld [vmem:[%s1242 + $0x84] sm:$0xf]
      %v2911 = vld [vmem:[%s1242 + $0x88] sm:$0xf]
      %v2912 = vld [vmem:[%s1242 + $0x90] sm:$0xf]
      %v2913 = vld [vmem:[%s1242 + $0x94] sm:$0xf]
      %v2914 = vld [vmem:[%s1242 + $0x9c] sm:$0xf]
      %v2915 = vld [vmem:[%s1242 + $0xa0] sm:$0xf]
      %v2916 = vld [vmem:[%s1242 + $0xa8] sm:$0xf]
      %v2917 = vld [vmem:[%s1242 + $0xac] sm:$0xf]
      %v2918 = vld [vmem:[%s1242 + $0xb4] sm:$0xf]
      %v2919 = vld [vmem:[%s1242 + $0xb8] sm:$0xf]
      %s2920 = scalar_lea.vmem %s425, 192
      %v2921 = vld [vmem:[%s2920] sm:$0xf]
      %v2922 = vld [vmem:[%s2920 + $0x4] sm:$0xf]
      %v2923 = vld [vmem:[%s2920 + $0x8] sm:$0xf]
      %v2924 = vld [vmem:[%s2920 + $0xc] sm:$0xf]
      %v2925 = vld [vmem:[%s2920 + $0x10] sm:$0xf]
      %v2926 = vld [vmem:[%s2920 + $0x14] sm:$0xf]
      %v2927 = vld [vmem:[%s2920 + $0x18] sm:$0xf]
      %v2928 = vld [vmem:[%s2920 + $0x1c] sm:$0xf]
      %v2929 = vld [vmem:[%s2920 + $0x20] sm:$0xf]
      %v2930 = vld [vmem:[%s2920 + $0x24] sm:$0xf]
      %v2931 = vld [vmem:[%s2920 + $0x28] sm:$0xf]
      %v2932 = vld [vmem:[%s2920 + $0x2c] sm:$0xf]
      %v2933 = vld [vmem:[%s2920 + $0x30] sm:$0xf]
      %v2934 = vld [vmem:[%s2920 + $0x34] sm:$0xf]
      %v2935 = vld [vmem:[%s2920 + $0x38] sm:$0xf]
      %v2936 = vld [vmem:[%s2920 + $0x3c] sm:$0xf]
      %v2969 = vunpack.c.l.b16 %v2888
      %v2970 = vunpack.c.l.b16 %v2889
      %v2971 = vunpack.c.l.b16 %v2890
      %v2972 = vunpack.c.l.b16 %v2891
      %v2973 = vunpack.c.l.b16 %v2892
      %v2974 = vunpack.c.l.b16 %v2893
      %v2975 = vunpack.c.l.b16 %v2894
      %v2976 = vunpack.c.l.b16 %v2895
      %v2977 = vunpack.c.l.b16 %v2896
      %v2978 = vunpack.c.l.b16 %v2897
      %v2979 = vunpack.c.l.b16 %v2898
      %v2980 = vunpack.c.l.b16 %v2899
      %v2981 = vunpack.c.l.b16 %v2900
      %v2982 = vunpack.c.l.b16 %v2901
      %v2983 = vunpack.c.l.b16 %v2902
      %v2984 = vunpack.c.l.b16 %v2903
      %v2985 = vunpack.c.l.b16 %v2904
      %v2986 = vunpack.c.l.b16 %v2905
      %v2987 = vunpack.c.l.b16 %v2906
      %v2988 = vunpack.c.l.b16 %v2907
      %v2989 = vunpack.c.l.b16 %v2908
      %v2990 = vunpack.c.l.b16 %v2909
      %v2991 = vunpack.c.l.b16 %v2910
      %v2992 = vunpack.c.l.b16 %v2911
      %v2993 = vunpack.c.l.b16 %v2912
      %v2994 = vunpack.c.l.b16 %v2913
      %v2995 = vunpack.c.l.b16 %v2914
      %v2996 = vunpack.c.l.b16 %v2915
      %v2997 = vunpack.c.l.b16 %v2916
      %v2998 = vunpack.c.l.b16 %v2917
      %v2999 = vunpack.c.l.b16 %v2918
      %v3000 = vunpack.c.l.b16 %v2919
      %v3001 = vpack.c.b16 %v2970, %v2969
      %v3002 = vpack.c.b16 %v2972, %v2971
      %v3003 = vpack.c.b16 %v2974, %v2973
      %v3004 = vpack.c.b16 %v2976, %v2975
      %v3005 = vpack.c.b16 %v2978, %v2977
      %v3006 = vpack.c.b16 %v2980, %v2979
      %v3007 = vpack.c.b16 %v2982, %v2981
      %v3008 = vpack.c.b16 %v2984, %v2983
      %v3009 = vpack.c.b16 %v2986, %v2985
      %v3010 = vpack.c.b16 %v2988, %v2987
      %v3011 = vpack.c.b16 %v2990, %v2989
      %v3012 = vpack.c.b16 %v2992, %v2991
      %v3013 = vpack.c.b16 %v2994, %v2993
      %v3014 = vpack.c.b16 %v2996, %v2995
      %v3015 = vpack.c.b16 %v2998, %v2997
      %v3016 = vpack.c.b16 %v3000, %v2999
      %v3049 = vunpack.c.l.b16 %v2921
      %v3050 = vunpack.c.l.b16 %v2922
      %v3051 = vunpack.c.l.b16 %v2923
      %v3052 = vunpack.c.l.b16 %v2924
      %v3053 = vunpack.c.l.b16 %v2925
      %v3054 = vunpack.c.l.b16 %v2926
      %v3055 = vunpack.c.l.b16 %v2927
      %v3056 = vunpack.c.l.b16 %v2928
      %v3057 = vunpack.c.l.b16 %v2929
      %v3058 = vunpack.c.l.b16 %v2930
      %v3059 = vunpack.c.l.b16 %v2931
      %v3060 = vunpack.c.l.b16 %v2932
      %v3061 = vunpack.c.l.b16 %v2933
      %v3062 = vunpack.c.l.b16 %v2934
      %v3063 = vunpack.c.l.b16 %v2935
      %v3064 = vunpack.c.l.b16 %v2936
      %v3065 = vpack.c.b16 %v3050, %v3049
      %v3066 = vpack.c.b16 %v3052, %v3051
      %v3067 = vpack.c.b16 %v3054, %v3053
      %v3068 = vpack.c.b16 %v3056, %v3055
      %v3069 = vpack.c.b16 %v3058, %v3057
      %v3070 = vpack.c.b16 %v3060, %v3059
      %v3071 = vpack.c.b16 %v3062, %v3061
      %v3072 = vpack.c.b16 %v3064, %v3063
      %3081 = vmatprep.subr.bf16.mxu0 0
      %3082 = vmatpush1.bf16.msra.mxu0 %v3072
      %3083 = vmatprep.subr.bf16.mxu0 0
      %3084 = vmatpush1.bf16.msra.mxu0 %v3071
      %3085 = vmatprep.subr.bf16.mxu0 0
      %3086 = vmatpush1.bf16.msra.mxu0 %v3070
      %3087 = vmatprep.subr.bf16.mxu0 0
      %3088 = vmatpush1.bf16.msra.mxu0 %v3069
      %3089 = vmatprep.subr.bf16.mxu0 0
      %3090 = vmatpush1.bf16.msra.mxu0 %v3068
      %3091 = vmatprep.subr.bf16.mxu0 0
      %3092 = vmatpush1.bf16.msra.mxu0 %v3067
      %3093 = vmatprep.subr.bf16.mxu0 0
      %3094 = vmatpush1.bf16.msra.mxu0 %v3066
      %3095 = vmatprep.subr.bf16.mxu0 0
      %3096 = vmatpush1.bf16.msra.mxu0 %v3065
      %3097 = vmatprep.subr.bf16.mxu0 0
      %3098 = vmatpush2.bf16.msra.mxu0 0
      %3099 = vmatprep.subr.bf16.mxu0 0
      %3100 = vmatpush2.bf16.msra.mxu0 0
      %3101 = vmatprep.subr.bf16.mxu0 0
      %3102 = vmatpush2.bf16.msra.mxu0 0
      %3103 = vmatprep.subr.bf16.mxu0 0
      %3104 = vmatpush2.bf16.msra.mxu0 0
      %3105 = vmatprep.subr.bf16.mxu0 0
      %3106 = vmatpush2.bf16.msra.mxu0 0
      %3107 = vmatprep.subr.bf16.mxu0 0
      %3108 = vmatpush2.bf16.msra.mxu0 0
      %3109 = vmatprep.subr.bf16.mxu0 0
      %3110 = vmatpush2.bf16.msra.mxu0 0
      %3111 = vmatprep.subr.bf16.mxu0 0
      %3112 = vmatpush2.bf16.msra.mxu0 0
      %3113 = vmatprep.mubr.bf16.mxu0 0
      %3114 = vmatmul.mubr.bf16.gmra.mxu0 %v3001
      %v3115 = vpop.f32.mrf.mxu0
      %v3116 = vadd.f32 0.0, %v3115
      %v3117 = vpop.f32.mrf.mxu0
      %v3118 = vpop.f32.mrf.mxu0
      %v3119 = vadd.f32 0.0, %v3118
      %v3120 = vpop.f32.mrf.mxu0
      %3121 = vmatprep.mubr.bf16.mxu0 0
      %3122 = vmatmul.mubr.bf16.gmra.mxu0 %v3002
      %v3123 = vpop.f32.mrf.mxu0
      %v3124 = vadd.f32 0.0, %v3123
      %v3125 = vpop.f32.mrf.mxu0
      %v3126 = vpop.f32.mrf.mxu0
      %v3127 = vadd.f32 0.0, %v3126
      %v3128 = vpop.f32.mrf.mxu0
      %3129 = vmatprep.mubr.bf16.mxu0 0
      %3130 = vmatmul.mubr.bf16.gmra.mxu0 %v3003
      %v3131 = vpop.f32.mrf.mxu0
      %v3132 = vadd.f32 0.0, %v3131
      %v3133 = vpop.f32.mrf.mxu0
      %v3134 = vpop.f32.mrf.mxu0
      %v3135 = vadd.f32 0.0, %v3134
      %v3136 = vpop.f32.mrf.mxu0
      %3137 = vmatprep.mubr.bf16.mxu0 0
      %3138 = vmatmul.mubr.bf16.gmra.mxu0 %v3004
      %v3139 = vpop.f32.mrf.mxu0
      %v3140 = vadd.f32 0.0, %v3139
      %v3141 = vpop.f32.mrf.mxu0
      %v3142 = vpop.f32.mrf.mxu0
      %v3143 = vadd.f32 0.0, %v3142
      %v3144 = vpop.f32.mrf.mxu0
      %3145 = vmatprep.mubr.bf16.mxu0 0
      %3146 = vmatmul.mubr.bf16.gmra.mxu0 %v3005
      %v3147 = vpop.f32.mrf.mxu0
      %v3148 = vadd.f32 0.0, %v3147
      %v3149 = vpop.f32.mrf.mxu0
      %v3150 = vpop.f32.mrf.mxu0
      %v3151 = vadd.f32 0.0, %v3150
      %v3152 = vpop.f32.mrf.mxu0
      %3153 = vmatprep.mubr.bf16.mxu0 0
      %3154 = vmatmul.mubr.bf16.gmra.mxu0 %v3006
      %v3155 = vpop.f32.mrf.mxu0
      %v3156 = vadd.f32 0.0, %v3155
      %v3157 = vpop.f32.mrf.mxu0
      %v3158 = vpop.f32.mrf.mxu0
      %v3159 = vadd.f32 0.0, %v3158
      %v3160 = vpop.f32.mrf.mxu0
      %3161 = vmatprep.mubr.bf16.mxu0 0
      %3162 = vmatmul.mubr.bf16.gmra.mxu0 %v3007
      %v3163 = vpop.f32.mrf.mxu0
      %v3164 = vadd.f32 0.0, %v3163
      %v3165 = vpop.f32.mrf.mxu0
      %v3166 = vpop.f32.mrf.mxu0
      %v3167 = vadd.f32 0.0, %v3166
      %v3168 = vpop.f32.mrf.mxu0
      %3169 = vmatprep.mubr.bf16.mxu0 0
      %3170 = vmatmul.mubr.bf16.gmra.mxu0 %v3008
      %v3171 = vpop.f32.mrf.mxu0
      %v3172 = vadd.f32 0.0, %v3171
      %v3173 = vpop.f32.mrf.mxu0
      %v3174 = vpop.f32.mrf.mxu0
      %v3175 = vadd.f32 0.0, %v3174
      %v3176 = vpop.f32.mrf.mxu0
      %3177 = vmatprep.mubr.bf16.mxu0 0
      %3178 = vmatmul.mubr.bf16.gmra.mxu0 %v3009
      %v3179 = vpop.f32.mrf.mxu0
      %v3180 = vadd.f32 0.0, %v3179
      %v3181 = vpop.f32.mrf.mxu0
      %v3182 = vpop.f32.mrf.mxu0
      %v3183 = vadd.f32 0.0, %v3182
      %v3184 = vpop.f32.mrf.mxu0
      %3185 = vmatprep.mubr.bf16.mxu0 0
      %3186 = vmatmul.mubr.bf16.gmra.mxu0 %v3010
      %v3187 = vpop.f32.mrf.mxu0
      %v3188 = vadd.f32 0.0, %v3187
      %v3189 = vpop.f32.mrf.mxu0
      %v3190 = vpop.f32.mrf.mxu0
      %v3191 = vadd.f32 0.0, %v3190
      %v3192 = vpop.f32.mrf.mxu0
      %3193 = vmatprep.mubr.bf16.mxu0 0
      %3194 = vmatmul.mubr.bf16.gmra.mxu0 %v3011
      %v3195 = vpop.f32.mrf.mxu0
      %v3196 = vadd.f32 0.0, %v3195
      %v3197 = vpop.f32.mrf.mxu0
      %v3198 = vpop.f32.mrf.mxu0
      %v3199 = vadd.f32 0.0, %v3198
      %v3200 = vpop.f32.mrf.mxu0
      %3201 = vmatprep.mubr.bf16.mxu0 0
      %3202 = vmatmul.mubr.bf16.gmra.mxu0 %v3012
      %v3203 = vpop.f32.mrf.mxu0
      %v3204 = vadd.f32 0.0, %v3203
      %v3205 = vpop.f32.mrf.mxu0
      %v3206 = vpop.f32.mrf.mxu0
      %v3207 = vadd.f32 0.0, %v3206
      %v3208 = vpop.f32.mrf.mxu0
      %3209 = vmatprep.mubr.bf16.mxu0 0
      %3210 = vmatmul.mubr.bf16.gmra.mxu0 %v3013
      %v3211 = vpop.f32.mrf.mxu0
      %v3212 = vadd.f32 0.0, %v3211
      %v3213 = vpop.f32.mrf.mxu0
      %v3214 = vpop.f32.mrf.mxu0
      %v3215 = vadd.f32 0.0, %v3214
      %v3216 = vpop.f32.mrf.mxu0
      %3217 = vmatprep.mubr.bf16.mxu0 0
      %3218 = vmatmul.mubr.bf16.gmra.mxu0 %v3014
      %v3219 = vpop.f32.mrf.mxu0
      %v3220 = vadd.f32 0.0, %v3219
      %v3221 = vpop.f32.mrf.mxu0
      %v3222 = vpop.f32.mrf.mxu0
      %v3223 = vadd.f32 0.0, %v3222
      %v3224 = vpop.f32.mrf.mxu0
      %3225 = vmatprep.mubr.bf16.mxu0 0
      %3226 = vmatmul.mubr.bf16.gmra.mxu0 %v3015
      %v3227 = vpop.f32.mrf.mxu0
      %v3228 = vadd.f32 0.0, %v3227
      %v3229 = vpop.f32.mrf.mxu0
      %v3230 = vpop.f32.mrf.mxu0
      %v3231 = vadd.f32 0.0, %v3230
      %v3232 = vpop.f32.mrf.mxu0
      %3233 = vmatprep.mubr.bf16.mxu0 0
      %3234 = vmatmul.mubr.bf16.gmra.mxu0 %v3016
      %v3235 = vpop.f32.mrf.mxu0
      %v3236 = vadd.f32 0.0, %v3235
      %v3237 = vpop.f32.mrf.mxu0
      %v3238 = vpop.f32.mrf.mxu0
      %v3239 = vadd.f32 0.0, %v3238
      %v3240 = vpop.f32.mrf.mxu0
      %3241 = vdwg.mxu0
      %v3242 = vadd.f32 %v2856, %v3116
      %v3243 = vadd.f32 %v2857, %v3119
      %v3244 = vadd.f32 %v2858, %v3124
      %v3245 = vadd.f32 %v2859, %v3127
      %v3246 = vadd.f32 %v2860, %v3132
      %v3247 = vadd.f32 %v2861, %v3135
      %v3248 = vadd.f32 %v2862, %v3140
      %v3249 = vadd.f32 %v2863, %v3143
      %v3250 = vadd.f32 %v2864, %v3148
      %v3251 = vadd.f32 %v2865, %v3151
      %v3252 = vadd.f32 %v2866, %v3156
      %v3253 = vadd.f32 %v2867, %v3159
      %v3254 = vadd.f32 %v2868, %v3164
      %v3255 = vadd.f32 %v2869, %v3167
      %v3256 = vadd.f32 %v2870, %v3172
      %v3257 = vadd.f32 %v2871, %v3175
      %v3258 = vadd.f32 %v2872, %v3180
      %v3259 = vadd.f32 %v2873, %v3183
      %v3260 = vadd.f32 %v2874, %v3188
      %v3261 = vadd.f32 %v2875, %v3191
      %v3262 = vadd.f32 %v2876, %v3196
      %v3263 = vadd.f32 %v2877, %v3199
      %v3264 = vadd.f32 %v2878, %v3204
      %v3265 = vadd.f32 %v2879, %v3207
      %v3266 = vadd.f32 %v2880, %v3212
      %v3267 = vadd.f32 %v2881, %v3215
      %v3268 = vadd.f32 %v2882, %v3220
      %v3269 = vadd.f32 %v2883, %v3223
      %v3270 = vadd.f32 %v2884, %v3228
      %v3271 = vadd.f32 %v2885, %v3231
      %v3272 = vadd.f32 %v2886, %v3236
      %v3273 = vadd.f32 %v2887, %v3239
      %v3274 = vld [vmem:[%s1242] sm:$0xf]
      %v3275 = vld [vmem:[%s1242 + $0x4] sm:$0xf]
      %v3276 = vld [vmem:[%s1242 + $0x8] sm:$0x1]
      %v3277 = vld [vmem:[%s1242 + $0xc] sm:$0xf]
      %v3278 = vld [vmem:[%s1242 + $0x10] sm:$0xf]
      %v3279 = vld [vmem:[%s1242 + $0x14] sm:$0x1]
      %v3280 = vld [vmem:[%s1242 + $0x18] sm:$0xf]
      %v3281 = vld [vmem:[%s1242 + $0x1c] sm:$0xf]
      %v3282 = vld [vmem:[%s1242 + $0x20] sm:$0x1]
      %v3283 = vld [vmem:[%s1242 + $0x24] sm:$0xf]
      %v3284 = vld [vmem:[%s1242 + $0x28] sm:$0xf]
      %v3285 = vld [vmem:[%s1242 + $0x2c] sm:$0x1]
      %v3286 = vld [vmem:[%s1242 + $0x30] sm:$0xf]
      %v3287 = vld [vmem:[%s1242 + $0x34] sm:$0xf]
      %v3288 = vld [vmem:[%s1242 + $0x38] sm:$0x1]
      %v3289 = vld [vmem:[%s1242 + $0x3c] sm:$0xf]
      %v3290 = vld [vmem:[%s1242 + $0x40] sm:$0xf]
      %v3291 = vld [vmem:[%s1242 + $0x44] sm:$0x1]
      %v3292 = vld [vmem:[%s1242 + $0x48] sm:$0xf]
      %v3293 = vld [vmem:[%s1242 + $0x4c] sm:$0xf]
      %v3294 = vld [vmem:[%s1242 + $0x50] sm:$0x1]
      %v3295 = vld [vmem:[%s1242 + $0x54] sm:$0xf]
      %v3296 = vld [vmem:[%s1242 + $0x58] sm:$0xf]
      %v3297 = vld [vmem:[%s1242 + $0x5c] sm:$0x1]
      %v3298 = vld [vmem:[%s1242 + $0x60] sm:$0xf]
      %v3299 = vld [vmem:[%s1242 + $0x64] sm:$0xf]
      %v3300 = vld [vmem:[%s1242 + $0x68] sm:$0x1]
      %v3301 = vld [vmem:[%s1242 + $0x6c] sm:$0xf]
      %v3302 = vld [vmem:[%s1242 + $0x70] sm:$0xf]
      %v3303 = vld [vmem:[%s1242 + $0x74] sm:$0x1]
      %v3304 = vld [vmem:[%s1242 + $0x78] sm:$0xf]
      %v3305 = vld [vmem:[%s1242 + $0x7c] sm:$0xf]
      %v3306 = vld [vmem:[%s1242 + $0x80] sm:$0x1]
      %v3307 = vld [vmem:[%s1242 + $0x84] sm:$0xf]
      %v3308 = vld [vmem:[%s1242 + $0x88] sm:$0xf]
      %v3309 = vld [vmem:[%s1242 + $0x8c] sm:$0x1]
      %v3310 = vld [vmem:[%s1242 + $0x90] sm:$0xf]
      %v3311 = vld [vmem:[%s1242 + $0x94] sm:$0xf]
      %v3312 = vld [vmem:[%s1242 + $0x98] sm:$0x1]
      %v3313 = vld [vmem:[%s1242 + $0x9c] sm:$0xf]
      %v3314 = vld [vmem:[%s1242 + $0xa0] sm:$0xf]
      %v3315 = vld [vmem:[%s1242 + $0xa4] sm:$0x1]
      %v3316 = vld [vmem:[%s1242 + $0xa8] sm:$0xf]
      %v3317 = vld [vmem:[%s1242 + $0xac] sm:$0xf]
      %v3318 = vld [vmem:[%s1242 + $0xb0] sm:$0x1]
      %v3319 = vld [vmem:[%s1242 + $0xb4] sm:$0xf]
      %v3320 = vld [vmem:[%s1242 + $0xb8] sm:$0xf]
      %v3321 = vld [vmem:[%s1242 + $0xbc] sm:$0x1]
      %v3323 = vshrl.u32 %v3274, 16
      %v3325 = vrot.slane %v3323, 4
      %v3326 = vshll.u32 %v3274, 16
      %v3328 = vrot.slane %v3326, 5
      %v3329 = vor.u32 %v3325, %v3328
      %v3330 = vrot.slane %v3329, 4
      %v3332 = vshll.u32 %v3275, 16
      %v3334 = vrot.slane %v3332, 5
      %v3335 = vsel %vm1423, %v3330, %v3334
      %v3336 = vshrl.u32 %v3275, 16
      %v3338 = vrot.slane %v3336, 4
      %v3339 = vor.u32 %v3338, %v3334
      %v3340 = vrot.slane %v3339, 4
      %v3342 = vshll.u32 %v3276, 16
      %v3344 = vrot.slane %v3342, 5
      %v3345 = vsel %vm1423, %v3340, %v3344
      %v3347 = vshrl.u32 %v3277, 16
      %v3349 = vrot.slane %v3347, 4
      %v3350 = vshll.u32 %v3277, 16
      %v3352 = vrot.slane %v3350, 5
      %v3353 = vor.u32 %v3349, %v3352
      %v3354 = vrot.slane %v3353, 4
      %v3356 = vshll.u32 %v3278, 16
      %v3358 = vrot.slane %v3356, 5
      %v3359 = vsel %vm1423, %v3354, %v3358
      %v3360 = vshrl.u32 %v3278, 16
      %v3362 = vrot.slane %v3360, 4
      %v3363 = vor.u32 %v3362, %v3358
      %v3364 = vrot.slane %v3363, 4
      %v3366 = vshll.u32 %v3279, 16
      %v3368 = vrot.slane %v3366, 5
      %v3369 = vsel %vm1423, %v3364, %v3368
      %v3371 = vshrl.u32 %v3280, 16
      %v3373 = vrot.slane %v3371, 4
      %v3374 = vshll.u32 %v3280, 16
      %v3376 = vrot.slane %v3374, 5
      %v3377 = vor.u32 %v3373, %v3376
      %v3378 = vrot.slane %v3377, 4
      %v3380 = vshll.u32 %v3281, 16
      %v3382 = vrot.slane %v3380, 5
      %v3383 = vsel %vm1423, %v3378, %v3382
      %v3384 = vshrl.u32 %v3281, 16
      %v3386 = vrot.slane %v3384, 4
      %v3387 = vor.u32 %v3386, %v3382
      %v3388 = vrot.slane %v3387, 4
      %v3390 = vshll.u32 %v3282, 16
      %v3392 = vrot.slane %v3390, 5
      %v3393 = vsel %vm1423, %v3388, %v3392
      %v3395 = vshrl.u32 %v3283, 16
      %v3397 = vrot.slane %v3395, 4
      %v3398 = vshll.u32 %v3283, 16
      %v3400 = vrot.slane %v3398, 5
      %v3401 = vor.u32 %v3397, %v3400
      %v3402 = vrot.slane %v3401, 4
      %v3404 = vshll.u32 %v3284, 16
      %v3406 = vrot.slane %v3404, 5
      %v3407 = vsel %vm1423, %v3402, %v3406
      %v3408 = vshrl.u32 %v3284, 16
      %v3410 = vrot.slane %v3408, 4
      %v3411 = vor.u32 %v3410, %v3406
      %v3412 = vrot.slane %v3411, 4
      %v3414 = vshll.u32 %v3285, 16
      %v3416 = vrot.slane %v3414, 5
      %v3417 = vsel %vm1423, %v3412, %v3416
      %v3419 = vshrl.u32 %v3286, 16
      %v3421 = vrot.slane %v3419, 4
      %v3422 = vshll.u32 %v3286, 16
      %v3424 = vrot.slane %v3422, 5
      %v3425 = vor.u32 %v3421, %v3424
      %v3426 = vrot.slane %v3425, 4
      %v3428 = vshll.u32 %v3287, 16
      %v3430 = vrot.slane %v3428, 5
      %v3431 = vsel %vm1423, %v3426, %v3430
      %v3432 = vshrl.u32 %v3287, 16
      %v3434 = vrot.slane %v3432, 4
      %v3435 = vor.u32 %v3434, %v3430
      %v3436 = vrot.slane %v3435, 4
      %v3438 = vshll.u32 %v3288, 16
      %v3440 = vrot.slane %v3438, 5
      %v3441 = vsel %vm1423, %v3436, %v3440
      %v3443 = vshrl.u32 %v3289, 16
      %v3445 = vrot.slane %v3443, 4
      %v3446 = vshll.u32 %v3289, 16
      %v3448 = vrot.slane %v3446, 5
      %v3449 = vor.u32 %v3445, %v3448
      %v3450 = vrot.slane %v3449, 4
      %v3452 = vshll.u32 %v3290, 16
      %v3454 = vrot.slane %v3452, 5
      %v3455 = vsel %vm1423, %v3450, %v3454
      %v3456 = vshrl.u32 %v3290, 16
      %v3458 = vrot.slane %v3456, 4
      %v3459 = vor.u32 %v3458, %v3454
      %v3460 = vrot.slane %v3459, 4
      %v3462 = vshll.u32 %v3291, 16
      %v3464 = vrot.slane %v3462, 5
      %v3465 = vsel %vm1423, %v3460, %v3464
      %v3467 = vshrl.u32 %v3292, 16
      %v3469 = vrot.slane %v3467, 4
      %v3470 = vshll.u32 %v3292, 16
      %v3472 = vrot.slane %v3470, 5
      %v3473 = vor.u32 %v3469, %v3472
      %v3474 = vrot.slane %v3473, 4
      %v3476 = vshll.u32 %v3293, 16
      %v3478 = vrot.slane %v3476, 5
      %v3479 = vsel %vm1423, %v3474, %v3478
      %v3480 = vshrl.u32 %v3293, 16
      %v3482 = vrot.slane %v3480, 4
      %v3483 = vor.u32 %v3482, %v3478
      %v3484 = vrot.slane %v3483, 4
      %v3486 = vshll.u32 %v3294, 16
      %v3488 = vrot.slane %v3486, 5
      %v3489 = vsel %vm1423, %v3484, %v3488
      %v3491 = vshrl.u32 %v3295, 16
      %v3493 = vrot.slane %v3491, 4
      %v3494 = vshll.u32 %v3295, 16
      %v3496 = vrot.slane %v3494, 5
      %v3497 = vor.u32 %v3493, %v3496
      %v3498 = vrot.slane %v3497, 4
      %v3500 = vshll.u32 %v3296, 16
      %v3502 = vrot.slane %v3500, 5
      %v3503 = vsel %vm1423, %v3498, %v3502
      %v3504 = vshrl.u32 %v3296, 16
      %v3506 = vrot.slane %v3504, 4
      %v3507 = vor.u32 %v3506, %v3502
      %v3508 = vrot.slane %v3507, 4
      %v3510 = vshll.u32 %v3297, 16
      %v3512 = vrot.slane %v3510, 5
      %v3513 = vsel %vm1423, %v3508, %v3512
      %v3515 = vshrl.u32 %v3298, 16
      %v3517 = vrot.slane %v3515, 4
      %v3518 = vshll.u32 %v3298, 16
      %v3520 = vrot.slane %v3518, 5
      %v3521 = vor.u32 %v3517, %v3520
      %v3522 = vrot.slane %v3521, 4
      %v3524 = vshll.u32 %v3299, 16
      %v3526 = vrot.slane %v3524, 5
      %v3527 = vsel %vm1423, %v3522, %v3526
      %v3528 = vshrl.u32 %v3299, 16
      %v3530 = vrot.slane %v3528, 4
      %v3531 = vor.u32 %v3530, %v3526
      %v3532 = vrot.slane %v3531, 4
      %v3534 = vshll.u32 %v3300, 16
      %v3536 = vrot.slane %v3534, 5
      %v3537 = vsel %vm1423, %v3532, %v3536
      %v3539 = vshrl.u32 %v3301, 16
      %v3541 = vrot.slane %v3539, 4
      %v3542 = vshll.u32 %v3301, 16
      %v3544 = vrot.slane %v3542, 5
      %v3545 = vor.u32 %v3541, %v3544
      %v3546 = vrot.slane %v3545, 4
      %v3548 = vshll.u32 %v3302, 16
      %v3550 = vrot.slane %v3548, 5
      %v3551 = vsel %vm1423, %v3546, %v3550
      %v3552 = vshrl.u32 %v3302, 16
      %v3554 = vrot.slane %v3552, 4
      %v3555 = vor.u32 %v3554, %v3550
      %v3556 = vrot.slane %v3555, 4
      %v3558 = vshll.u32 %v3303, 16
      %v3560 = vrot.slane %v3558, 5
      %v3561 = vsel %vm1423, %v3556, %v3560
      %v3563 = vshrl.u32 %v3304, 16
      %v3565 = vrot.slane %v3563, 4
      %v3566 = vshll.u32 %v3304, 16
      %v3568 = vrot.slane %v3566, 5
      %v3569 = vor.u32 %v3565, %v3568
      %v3570 = vrot.slane %v3569, 4
      %v3572 = vshll.u32 %v3305, 16
      %v3574 = vrot.slane %v3572, 5
      %v3575 = vsel %vm1423, %v3570, %v3574
      %v3576 = vshrl.u32 %v3305, 16
      %v3578 = vrot.slane %v3576, 4
      %v3579 = vor.u32 %v3578, %v3574
      %v3580 = vrot.slane %v3579, 4
      %v3582 = vshll.u32 %v3306, 16
      %v3584 = vrot.slane %v3582, 5
      %v3585 = vsel %vm1423, %v3580, %v3584
      %v3587 = vshrl.u32 %v3307, 16
      %v3589 = vrot.slane %v3587, 4
      %v3590 = vshll.u32 %v3307, 16
      %v3592 = vrot.slane %v3590, 5
      %v3593 = vor.u32 %v3589, %v3592
      %v3594 = vrot.slane %v3593, 4
      %v3596 = vshll.u32 %v3308, 16
      %v3598 = vrot.slane %v3596, 5
      %v3599 = vsel %vm1423, %v3594, %v3598
      %v3600 = vshrl.u32 %v3308, 16
      %v3602 = vrot.slane %v3600, 4
      %v3603 = vor.u32 %v3602, %v3598
      %v3604 = vrot.slane %v3603, 4
      %v3606 = vshll.u32 %v3309, 16
      %v3608 = vrot.slane %v3606, 5
      %v3609 = vsel %vm1423, %v3604, %v3608
      %v3611 = vshrl.u32 %v3310, 16
      %v3613 = vrot.slane %v3611, 4
      %v3614 = vshll.u32 %v3310, 16
      %v3616 = vrot.slane %v3614, 5
      %v3617 = vor.u32 %v3613, %v3616
      %v3618 = vrot.slane %v3617, 4
      %v3620 = vshll.u32 %v3311, 16
      %v3622 = vrot.slane %v3620, 5
      %v3623 = vsel %vm1423, %v3618, %v3622
      %v3624 = vshrl.u32 %v3311, 16
      %v3626 = vrot.slane %v3624, 4
      %v3627 = vor.u32 %v3626, %v3622
      %v3628 = vrot.slane %v3627, 4
      %v3630 = vshll.u32 %v3312, 16
      %v3632 = vrot.slane %v3630, 5
      %v3633 = vsel %vm1423, %v3628, %v3632
      %v3635 = vshrl.u32 %v3313, 16
      %v3637 = vrot.slane %v3635, 4
      %v3638 = vshll.u32 %v3313, 16
      %v3640 = vrot.slane %v3638, 5
      %v3641 = vor.u32 %v3637, %v3640
      %v3642 = vrot.slane %v3641, 4
      %v3644 = vshll.u32 %v3314, 16
      %v3646 = vrot.slane %v3644, 5
      %v3647 = vsel %vm1423, %v3642, %v3646
      %v3648 = vshrl.u32 %v3314, 16
      %v3650 = vrot.slane %v3648, 4
      %v3651 = vor.u32 %v3650, %v3646
      %v3652 = vrot.slane %v3651, 4
      %v3654 = vshll.u32 %v3315, 16
      %v3656 = vrot.slane %v3654, 5
      %v3657 = vsel %vm1423, %v3652, %v3656
      %v3659 = vshrl.u32 %v3316, 16
      %v3661 = vrot.slane %v3659, 4
      %v3662 = vshll.u32 %v3316, 16
      %v3664 = vrot.slane %v3662, 5
      %v3665 = vor.u32 %v3661, %v3664
      %v3666 = vrot.slane %v3665, 4
      %v3668 = vshll.u32 %v3317, 16
      %v3670 = vrot.slane %v3668, 5
      %v3671 = vsel %vm1423, %v3666, %v3670
      %v3672 = vshrl.u32 %v3317, 16
      %v3674 = vrot.slane %v3672, 4
      %v3675 = vor.u32 %v3674, %v3670
      %v3676 = vrot.slane %v3675, 4
      %v3678 = vshll.u32 %v3318, 16
      %v3680 = vrot.slane %v3678, 5
      %v3681 = vsel %vm1423, %v3676, %v3680
      %v3683 = vshrl.u32 %v3319, 16
      %v3685 = vrot.slane %v3683, 4
      %v3686 = vshll.u32 %v3319, 16
      %v3688 = vrot.slane %v3686, 5
      %v3689 = vor.u32 %v3685, %v3688
      %v3690 = vrot.slane %v3689, 4
      %v3692 = vshll.u32 %v3320, 16
      %v3694 = vrot.slane %v3692, 5
      %v3695 = vsel %vm1423, %v3690, %v3694
      %v3696 = vshrl.u32 %v3320, 16
      %v3698 = vrot.slane %v3696, 4
      %v3699 = vor.u32 %v3698, %v3694
      %v3700 = vrot.slane %v3699, 4
      %v3702 = vshll.u32 %v3321, 16
      %v3704 = vrot.slane %v3702, 5
      %v3705 = vsel %vm1423, %v3700, %v3704
      %s3706 = scalar_lea.vmem %s425, 256
      %v3707 = vld [vmem:[%s3706] sm:$0xf]
      %v3708 = vld [vmem:[%s3706 + $0x4] sm:$0xf]
      %v3709 = vld [vmem:[%s3706 + $0x8] sm:$0xf]
      %v3710 = vld [vmem:[%s3706 + $0xc] sm:$0xf]
      %v3711 = vld [vmem:[%s3706 + $0x10] sm:$0xf]
      %v3712 = vld [vmem:[%s3706 + $0x14] sm:$0xf]
      %v3713 = vld [vmem:[%s3706 + $0x18] sm:$0xf]
      %v3714 = vld [vmem:[%s3706 + $0x1c] sm:$0xf]
      %v3715 = vld [vmem:[%s3706 + $0x20] sm:$0xf]
      %v3716 = vld [vmem:[%s3706 + $0x24] sm:$0xf]
      %v3717 = vld [vmem:[%s3706 + $0x28] sm:$0xf]
      %v3718 = vld [vmem:[%s3706 + $0x2c] sm:$0xf]
      %v3719 = vld [vmem:[%s3706 + $0x30] sm:$0xf]
      %v3720 = vld [vmem:[%s3706 + $0x34] sm:$0xf]
      %v3721 = vld [vmem:[%s3706 + $0x38] sm:$0xf]
      %v3722 = vld [vmem:[%s3706 + $0x3c] sm:$0xf]
      %v3723 = vunpack.c.l.b16 %v3335
      %v3724 = vunpack.c.l.b16 %v3345
      %v3725 = vunpack.c.l.b16 %v3359
      %v3726 = vunpack.c.l.b16 %v3369
      %v3727 = vunpack.c.l.b16 %v3383
      %v3728 = vunpack.c.l.b16 %v3393
      %v3729 = vunpack.c.l.b16 %v3407
      %v3730 = vunpack.c.l.b16 %v3417
      %v3731 = vunpack.c.l.b16 %v3431
      %v3732 = vunpack.c.l.b16 %v3441
      %v3733 = vunpack.c.l.b16 %v3455
      %v3734 = vunpack.c.l.b16 %v3465
      %v3735 = vunpack.c.l.b16 %v3479
      %v3736 = vunpack.c.l.b16 %v3489
      %v3737 = vunpack.c.l.b16 %v3503
      %v3738 = vunpack.c.l.b16 %v3513
      %v3739 = vunpack.c.l.b16 %v3527
      %v3740 = vunpack.c.l.b16 %v3537
      %v3741 = vunpack.c.l.b16 %v3551
      %v3742 = vunpack.c.l.b16 %v3561
      %v3743 = vunpack.c.l.b16 %v3575
      %v3744 = vunpack.c.l.b16 %v3585
      %v3745 = vunpack.c.l.b16 %v3599
      %v3746 = vunpack.c.l.b16 %v3609
      %v3747 = vunpack.c.l.b16 %v3623
      %v3748 = vunpack.c.l.b16 %v3633
      %v3749 = vunpack.c.l.b16 %v3647
      %v3750 = vunpack.c.l.b16 %v3657
      %v3751 = vunpack.c.l.b16 %v3671
      %v3752 = vunpack.c.l.b16 %v3681
      %v3753 = vunpack.c.l.b16 %v3695
      %v3754 = vunpack.c.l.b16 %v3705
      %v3755 = vpack.c.b16 %v3724, %v3723
      %v3756 = vpack.c.b16 %v3726, %v3725
      %v3757 = vpack.c.b16 %v3728, %v3727
      %v3758 = vpack.c.b16 %v3730, %v3729
      %v3759 = vpack.c.b16 %v3732, %v3731
      %v3760 = vpack.c.b16 %v3734, %v3733
      %v3761 = vpack.c.b16 %v3736, %v3735
      %v3762 = vpack.c.b16 %v3738, %v3737
      %v3763 = vpack.c.b16 %v3740, %v3739
      %v3764 = vpack.c.b16 %v3742, %v3741
      %v3765 = vpack.c.b16 %v3744, %v3743
      %v3766 = vpack.c.b16 %v3746, %v3745
      %v3767 = vpack.c.b16 %v3748, %v3747
      %v3768 = vpack.c.b16 %v3750, %v3749
      %v3769 = vpack.c.b16 %v3752, %v3751
      %v3770 = vpack.c.b16 %v3754, %v3753
      %v3803 = vunpack.c.l.b16 %v3707
      %v3804 = vunpack.c.l.b16 %v3708
      %v3805 = vunpack.c.l.b16 %v3709
      %v3806 = vunpack.c.l.b16 %v3710
      %v3807 = vunpack.c.l.b16 %v3711
      %v3808 = vunpack.c.l.b16 %v3712
      %v3809 = vunpack.c.l.b16 %v3713
      %v3810 = vunpack.c.l.b16 %v3714
      %v3811 = vunpack.c.l.b16 %v3715
      %v3812 = vunpack.c.l.b16 %v3716
      %v3813 = vunpack.c.l.b16 %v3717
      %v3814 = vunpack.c.l.b16 %v3718
      %v3815 = vunpack.c.l.b16 %v3719
      %v3816 = vunpack.c.l.b16 %v3720
      %v3817 = vunpack.c.l.b16 %v3721
      %v3818 = vunpack.c.l.b16 %v3722
      %v3819 = vpack.c.b16 %v3804, %v3803
      %v3820 = vpack.c.b16 %v3806, %v3805
      %v3821 = vpack.c.b16 %v3808, %v3807
      %v3822 = vpack.c.b16 %v3810, %v3809
      %v3823 = vpack.c.b16 %v3812, %v3811
      %v3824 = vpack.c.b16 %v3814, %v3813
      %v3825 = vpack.c.b16 %v3816, %v3815
      %v3826 = vpack.c.b16 %v3818, %v3817
      %3835 = vmatprep.subr.bf16.mxu0 0
      %3836 = vmatpush1.bf16.msra.mxu0 %v3826
      %3837 = vmatprep.subr.bf16.mxu0 0
      %3838 = vmatpush1.bf16.msra.mxu0 %v3825
      %3839 = vmatprep.subr.bf16.mxu0 0
      %3840 = vmatpush1.bf16.msra.mxu0 %v3824
      %3841 = vmatprep.subr.bf16.mxu0 0
      %3842 = vmatpush1.bf16.msra.mxu0 %v3823
      %3843 = vmatprep.subr.bf16.mxu0 0
      %3844 = vmatpush1.bf16.msra.mxu0 %v3822
      %3845 = vmatprep.subr.bf16.mxu0 0
      %3846 = vmatpush1.bf16.msra.mxu0 %v3821
      %3847 = vmatprep.subr.bf16.mxu0 0
      %3848 = vmatpush1.bf16.msra.mxu0 %v3820
      %3849 = vmatprep.subr.bf16.mxu0 0
      %3850 = vmatpush1.bf16.msra.mxu0 %v3819
      %3851 = vmatprep.subr.bf16.mxu0 0
      %3852 = vmatpush2.bf16.msra.mxu0 0
      %3853 = vmatprep.subr.bf16.mxu0 0
      %3854 = vmatpush2.bf16.msra.mxu0 0
      %3855 = vmatprep.subr.bf16.mxu0 0
      %3856 = vmatpush2.bf16.msra.mxu0 0
      %3857 = vmatprep.subr.bf16.mxu0 0
      %3858 = vmatpush2.bf16.msra.mxu0 0
      %3859 = vmatprep.subr.bf16.mxu0 0
      %3860 = vmatpush2.bf16.msra.mxu0 0
      %3861 = vmatprep.subr.bf16.mxu0 0
      %3862 = vmatpush2.bf16.msra.mxu0 0
      %3863 = vmatprep.subr.bf16.mxu0 0
      %3864 = vmatpush2.bf16.msra.mxu0 0
      %3865 = vmatprep.subr.bf16.mxu0 0
      %3866 = vmatpush2.bf16.msra.mxu0 0
      %3867 = vmatprep.mubr.bf16.mxu0 0
      %3868 = vmatmul.mubr.bf16.gmra.mxu0 %v3755
      %v3869 = vpop.f32.mrf.mxu0
      %v3870 = vadd.f32 0.0, %v3869
      %v3871 = vpop.f32.mrf.mxu0
      %v3872 = vpop.f32.mrf.mxu0
      %v3873 = vadd.f32 0.0, %v3872
      %v3874 = vpop.f32.mrf.mxu0
      %3875 = vmatprep.mubr.bf16.mxu0 0
      %3876 = vmatmul.mubr.bf16.gmra.mxu0 %v3756
      %v3877 = vpop.f32.mrf.mxu0
      %v3878 = vadd.f32 0.0, %v3877
      %v3879 = vpop.f32.mrf.mxu0
      %v3880 = vpop.f32.mrf.mxu0
      %v3881 = vadd.f32 0.0, %v3880
      %v3882 = vpop.f32.mrf.mxu0
      %3883 = vmatprep.mubr.bf16.mxu0 0
      %3884 = vmatmul.mubr.bf16.gmra.mxu0 %v3757
      %v3885 = vpop.f32.mrf.mxu0
      %v3886 = vadd.f32 0.0, %v3885
      %v3887 = vpop.f32.mrf.mxu0
      %v3888 = vpop.f32.mrf.mxu0
      %v3889 = vadd.f32 0.0, %v3888
      %v3890 = vpop.f32.mrf.mxu0
      %3891 = vmatprep.mubr.bf16.mxu0 0
      %3892 = vmatmul.mubr.bf16.gmra.mxu0 %v3758
      %v3893 = vpop.f32.mrf.mxu0
      %v3894 = vadd.f32 0.0, %v3893
      %v3895 = vpop.f32.mrf.mxu0
      %v3896 = vpop.f32.mrf.mxu0
      %v3897 = vadd.f32 0.0, %v3896
      %v3898 = vpop.f32.mrf.mxu0
      %3899 = vmatprep.mubr.bf16.mxu0 0
      %3900 = vmatmul.mubr.bf16.gmra.mxu0 %v3759
      %v3901 = vpop.f32.mrf.mxu0
      %v3902 = vadd.f32 0.0, %v3901
      %v3903 = vpop.f32.mrf.mxu0
      %v3904 = vpop.f32.mrf.mxu0
      %v3905 = vadd.f32 0.0, %v3904
      %v3906 = vpop.f32.mrf.mxu0
      %3907 = vmatprep.mubr.bf16.mxu0 0
      %3908 = vmatmul.mubr.bf16.gmra.mxu0 %v3760
      %v3909 = vpop.f32.mrf.mxu0
      %v3910 = vadd.f32 0.0, %v3909
      %v3911 = vpop.f32.mrf.mxu0
      %v3912 = vpop.f32.mrf.mxu0
      %v3913 = vadd.f32 0.0, %v3912
      %v3914 = vpop.f32.mrf.mxu0
      %3915 = vmatprep.mubr.bf16.mxu0 0
      %3916 = vmatmul.mubr.bf16.gmra.mxu0 %v3761
      %v3917 = vpop.f32.mrf.mxu0
      %v3918 = vadd.f32 0.0, %v3917
      %v3919 = vpop.f32.mrf.mxu0
      %v3920 = vpop.f32.mrf.mxu0
      %v3921 = vadd.f32 0.0, %v3920
      %v3922 = vpop.f32.mrf.mxu0
      %3923 = vmatprep.mubr.bf16.mxu0 0
      %3924 = vmatmul.mubr.bf16.gmra.mxu0 %v3762
      %v3925 = vpop.f32.mrf.mxu0
      %v3926 = vadd.f32 0.0, %v3925
      %v3927 = vpop.f32.mrf.mxu0
      %v3928 = vpop.f32.mrf.mxu0
      %v3929 = vadd.f32 0.0, %v3928
      %v3930 = vpop.f32.mrf.mxu0
      %3931 = vmatprep.mubr.bf16.mxu0 0
      %3932 = vmatmul.mubr.bf16.gmra.mxu0 %v3763
      %v3933 = vpop.f32.mrf.mxu0
      %v3934 = vadd.f32 0.0, %v3933
      %v3935 = vpop.f32.mrf.mxu0
      %v3936 = vpop.f32.mrf.mxu0
      %v3937 = vadd.f32 0.0, %v3936
      %v3938 = vpop.f32.mrf.mxu0
      %3939 = vmatprep.mubr.bf16.mxu0 0
      %3940 = vmatmul.mubr.bf16.gmra.mxu0 %v3764
      %v3941 = vpop.f32.mrf.mxu0
      %v3942 = vadd.f32 0.0, %v3941
      %v3943 = vpop.f32.mrf.mxu0
      %v3944 = vpop.f32.mrf.mxu0
      %v3945 = vadd.f32 0.0, %v3944
      %v3946 = vpop.f32.mrf.mxu0
      %3947 = vmatprep.mubr.bf16.mxu0 0
      %3948 = vmatmul.mubr.bf16.gmra.mxu0 %v3765
      %v3949 = vpop.f32.mrf.mxu0
      %v3950 = vadd.f32 0.0, %v3949
      %v3951 = vpop.f32.mrf.mxu0
      %v3952 = vpop.f32.mrf.mxu0
      %v3953 = vadd.f32 0.0, %v3952
      %v3954 = vpop.f32.mrf.mxu0
      %3955 = vmatprep.mubr.bf16.mxu0 0
      %3956 = vmatmul.mubr.bf16.gmra.mxu0 %v3766
      %v3957 = vpop.f32.mrf.mxu0
      %v3958 = vadd.f32 0.0, %v3957
      %v3959 = vpop.f32.mrf.mxu0
      %v3960 = vpop.f32.mrf.mxu0
      %v3961 = vadd.f32 0.0, %v3960
      %v3962 = vpop.f32.mrf.mxu0
      %3963 = vmatprep.mubr.bf16.mxu0 0
      %3964 = vmatmul.mubr.bf16.gmra.mxu0 %v3767
      %v3965 = vpop.f32.mrf.mxu0
      %v3966 = vadd.f32 0.0, %v3965
      %v3967 = vpop.f32.mrf.mxu0
      %v3968 = vpop.f32.mrf.mxu0
      %v3969 = vadd.f32 0.0, %v3968
      %v3970 = vpop.f32.mrf.mxu0
      %3971 = vmatprep.mubr.bf16.mxu0 0
      %3972 = vmatmul.mubr.bf16.gmra.mxu0 %v3768
      %v3973 = vpop.f32.mrf.mxu0
      %v3974 = vadd.f32 0.0, %v3973
      %v3975 = vpop.f32.mrf.mxu0
      %v3976 = vpop.f32.mrf.mxu0
      %v3977 = vadd.f32 0.0, %v3976
      %v3978 = vpop.f32.mrf.mxu0
      %3979 = vmatprep.mubr.bf16.mxu0 0
      %3980 = vmatmul.mubr.bf16.gmra.mxu0 %v3769
      %v3981 = vpop.f32.mrf.mxu0
      %v3982 = vadd.f32 0.0, %v3981
      %v3983 = vpop.f32.mrf.mxu0
      %v3984 = vpop.f32.mrf.mxu0
      %v3985 = vadd.f32 0.0, %v3984
      %v3986 = vpop.f32.mrf.mxu0
      %3987 = vmatprep.mubr.bf16.mxu0 0
      %3988 = vmatmul.mubr.bf16.gmra.mxu0 %v3770
      %v3989 = vpop.f32.mrf.mxu0
      %v3990 = vadd.f32 0.0, %v3989
      %v3991 = vpop.f32.mrf.mxu0
      %v3992 = vpop.f32.mrf.mxu0
      %v3993 = vadd.f32 0.0, %v3992
      %v3994 = vpop.f32.mrf.mxu0
      %3995 = vdwg.mxu0
      %v3996 = vadd.f32 %v3242, %v3870
      %v3997 = vadd.f32 %v3243, %v3873
      %v3998 = vadd.f32 %v3244, %v3878
      %v3999 = vadd.f32 %v3245, %v3881
      %v4000 = vadd.f32 %v3246, %v3886
      %v4001 = vadd.f32 %v3247, %v3889
      %v4002 = vadd.f32 %v3248, %v3894
      %v4003 = vadd.f32 %v3249, %v3897
      %v4004 = vadd.f32 %v3250, %v3902
      %v4005 = vadd.f32 %v3251, %v3905
      %v4006 = vadd.f32 %v3252, %v3910
      %v4007 = vadd.f32 %v3253, %v3913
      %v4008 = vadd.f32 %v3254, %v3918
      %v4009 = vadd.f32 %v3255, %v3921
      %v4010 = vadd.f32 %v3256, %v3926
      %v4011 = vadd.f32 %v3257, %v3929
      %v4012 = vadd.f32 %v3258, %v3934
      %v4013 = vadd.f32 %v3259, %v3937
      %v4014 = vadd.f32 %v3260, %v3942
      %v4015 = vadd.f32 %v3261, %v3945
      %v4016 = vadd.f32 %v3262, %v3950
      %v4017 = vadd.f32 %v3263, %v3953
      %v4018 = vadd.f32 %v3264, %v3958
      %v4019 = vadd.f32 %v3265, %v3961
      %v4020 = vadd.f32 %v3266, %v3966
      %v4021 = vadd.f32 %v3267, %v3969
      %v4022 = vadd.f32 %v3268, %v3974
      %v4023 = vadd.f32 %v3269, %v3977
      %v4024 = vadd.f32 %v3270, %v3982
      %v4025 = vadd.f32 %v3271, %v3985
      %v4026 = vadd.f32 %v3272, %v3990
      %v4027 = vadd.f32 %v3273, %v3993
      %v4028 = vld [vmem:[%s1242] sm:$0xe]
      %v4029 = vld [vmem:[%s1242 + $0xc] sm:$0xe]
      %v4030 = vld [vmem:[%s1242 + $0x18] sm:$0xe]
      %v4031 = vld [vmem:[%s1242 + $0x24] sm:$0xe]
      %v4032 = vld [vmem:[%s1242 + $0x30] sm:$0xe]
      %v4033 = vld [vmem:[%s1242 + $0x3c] sm:$0xe]
      %v4034 = vld [vmem:[%s1242 + $0x48] sm:$0xe]
      %v4035 = vld [vmem:[%s1242 + $0x54] sm:$0xe]
      %v4036 = vld [vmem:[%s1242 + $0x60] sm:$0xe]
      %v4037 = vld [vmem:[%s1242 + $0x6c] sm:$0xe]
      %v4038 = vld [vmem:[%s1242 + $0x78] sm:$0xe]
      %v4039 = vld [vmem:[%s1242 + $0x84] sm:$0xe]
      %v4040 = vld [vmem:[%s1242 + $0x90] sm:$0xe]
      %v4041 = vld [vmem:[%s1242 + $0x9c] sm:$0xe]
      %v4042 = vld [vmem:[%s1242 + $0xa8] sm:$0xe]
      %v4043 = vld [vmem:[%s1242 + $0xb4] sm:$0xe]
      %v4092 = vrot.slane %v4028, 5
      %v4093 = vrot.slane %v4092, 4
      %v4094 = vrot.slane %v3275, 5
      %v4095 = vsel %vm2453, %v4093, %v4094
      %v4096 = vrot.slane %v4094, 4
      %v4097 = vrot.slane %v3276, 5
      %v4098 = vsel %vm2453, %v4096, %v4097
      %v4099 = vrot.slane %v4029, 5
      %v4100 = vrot.slane %v4099, 4
      %v4101 = vrot.slane %v3278, 5
      %v4102 = vsel %vm2453, %v4100, %v4101
      %v4103 = vrot.slane %v4101, 4
      %v4104 = vrot.slane %v3279, 5
      %v4105 = vsel %vm2453, %v4103, %v4104
      %v4106 = vrot.slane %v4030, 5
      %v4107 = vrot.slane %v4106, 4
      %v4108 = vrot.slane %v3281, 5
      %v4109 = vsel %vm2453, %v4107, %v4108
      %v4110 = vrot.slane %v4108, 4
      %v4111 = vrot.slane %v3282, 5
      %v4112 = vsel %vm2453, %v4110, %v4111
      %v4113 = vrot.slane %v4031, 5
      %v4114 = vrot.slane %v4113, 4
      %v4115 = vrot.slane %v3284, 5
      %v4116 = vsel %vm2453, %v4114, %v4115
      %v4117 = vrot.slane %v4115, 4
      %v4118 = vrot.slane %v3285, 5
      %v4119 = vsel %vm2453, %v4117, %v4118
      %v4120 = vrot.slane %v4032, 5
      %v4121 = vrot.slane %v4120, 4
      %v4122 = vrot.slane %v3287, 5
      %v4123 = vsel %vm2453, %v4121, %v4122
      %v4124 = vrot.slane %v4122, 4
      %v4125 = vrot.slane %v3288, 5
      %v4126 = vsel %vm2453, %v4124, %v4125
      %v4127 = vrot.slane %v4033, 5
      %v4128 = vrot.slane %v4127, 4
      %v4129 = vrot.slane %v3290, 5
      %v4130 = vsel %vm2453, %v4128, %v4129
      %v4131 = vrot.slane %v4129, 4
      %v4132 = vrot.slane %v3291, 5
      %v4133 = vsel %vm2453, %v4131, %v4132
      %v4134 = vrot.slane %v4034, 5
      %v4135 = vrot.slane %v4134, 4
      %v4136 = vrot.slane %v3293, 5
      %v4137 = vsel %vm2453, %v4135, %v4136
      %v4138 = vrot.slane %v4136, 4
      %v4139 = vrot.slane %v3294, 5
      %v4140 = vsel %vm2453, %v4138, %v4139
      %v4141 = vrot.slane %v4035, 5
      %v4142 = vrot.slane %v4141, 4
      %v4143 = vrot.slane %v3296, 5
      %v4144 = vsel %vm2453, %v4142, %v4143
      %v4145 = vrot.slane %v4143, 4
      %v4146 = vrot.slane %v3297, 5
      %v4147 = vsel %vm2453, %v4145, %v4146
      %v4148 = vrot.slane %v4036, 5
      %v4149 = vrot.slane %v4148, 4
      %v4150 = vrot.slane %v3299, 5
      %v4151 = vsel %vm2453, %v4149, %v4150
      %v4152 = vrot.slane %v4150, 4
      %v4153 = vrot.slane %v3300, 5
      %v4154 = vsel %vm2453, %v4152, %v4153
      %v4155 = vrot.slane %v4037, 5
      %v4156 = vrot.slane %v4155, 4
      %v4157 = vrot.slane %v3302, 5
      %v4158 = vsel %vm2453, %v4156, %v4157
      %v4159 = vrot.slane %v4157, 4
      %v4160 = vrot.slane %v3303, 5
      %v4161 = vsel %vm2453, %v4159, %v4160
      %v4162 = vrot.slane %v4038, 5
      %v4163 = vrot.slane %v4162, 4
      %v4164 = vrot.slane %v3305, 5
      %v4165 = vsel %vm2453, %v4163, %v4164
      %v4166 = vrot.slane %v4164, 4
      %v4167 = vrot.slane %v3306, 5
      %v4168 = vsel %vm2453, %v4166, %v4167
      %v4169 = vrot.slane %v4039, 5
      %v4170 = vrot.slane %v4169, 4
      %v4171 = vrot.slane %v3308, 5
      %v4172 = vsel %vm2453, %v4170, %v4171
      %v4173 = vrot.slane %v4171, 4
      %v4174 = vrot.slane %v3309, 5
      %v4175 = vsel %vm2453, %v4173, %v4174
      %v4176 = vrot.slane %v4040, 5
      %v4177 = vrot.slane %v4176, 4
      %v4178 = vrot.slane %v3311, 5
      %v4179 = vsel %vm2453, %v4177, %v4178
      %v4180 = vrot.slane %v4178, 4
      %v4181 = vrot.slane %v3312, 5
      %v4182 = vsel %vm2453, %v4180, %v4181
      %v4183 = vrot.slane %v4041, 5
      %v4184 = vrot.slane %v4183, 4
      %v4185 = vrot.slane %v3314, 5
      %v4186 = vsel %vm2453, %v4184, %v4185
      %v4187 = vrot.slane %v4185, 4
      %v4188 = vrot.slane %v3315, 5
      %v4189 = vsel %vm2453, %v4187, %v4188
      %v4190 = vrot.slane %v4042, 5
      %v4191 = vrot.slane %v4190, 4
      %v4192 = vrot.slane %v3317, 5
      %v4193 = vsel %vm2453, %v4191, %v4192
      %v4194 = vrot.slane %v4192, 4
      %v4195 = vrot.slane %v3318, 5
      %v4196 = vsel %vm2453, %v4194, %v4195
      %v4197 = vrot.slane %v4043, 5
      %v4198 = vrot.slane %v4197, 4
      %v4199 = vrot.slane %v3320, 5
      %v4200 = vsel %vm2453, %v4198, %v4199
      %v4201 = vrot.slane %v4199, 4
      %v4202 = vrot.slane %v3321, 5
      %v4203 = vsel %vm2453, %v4201, %v4202
      %s4204 = scalar_lea.vmem %s425, 320
      %v4205 = vld [vmem:[%s4204] sm:$0xf]
      %v4206 = vld [vmem:[%s4204 + $0x4] sm:$0xf]
      %v4207 = vld [vmem:[%s4204 + $0x8] sm:$0xf]
      %v4208 = vld [vmem:[%s4204 + $0xc] sm:$0xf]
      %v4209 = vld [vmem:[%s4204 + $0x10] sm:$0xf]
      %v4210 = vld [vmem:[%s4204 + $0x14] sm:$0xf]
      %v4211 = vld [vmem:[%s4204 + $0x18] sm:$0xf]
      %v4212 = vld [vmem:[%s4204 + $0x1c] sm:$0xf]
      %v4213 = vld [vmem:[%s4204 + $0x20] sm:$0xf]
      %v4214 = vld [vmem:[%s4204 + $0x24] sm:$0xf]
      %v4215 = vld [vmem:[%s4204 + $0x28] sm:$0xf]
      %v4216 = vld [vmem:[%s4204 + $0x2c] sm:$0xf]
      %v4217 = vld [vmem:[%s4204 + $0x30] sm:$0xf]
      %v4218 = vld [vmem:[%s4204 + $0x34] sm:$0xf]
      %v4219 = vld [vmem:[%s4204 + $0x38] sm:$0xf]
      %v4220 = vld [vmem:[%s4204 + $0x3c] sm:$0xf]
      %v4221 = vunpack.c.l.b16 %v4095
      %v4222 = vunpack.c.l.b16 %v4098
      %v4223 = vunpack.c.l.b16 %v4102
      %v4224 = vunpack.c.l.b16 %v4105
      %v4225 = vunpack.c.l.b16 %v4109
      %v4226 = vunpack.c.l.b16 %v4112
      %v4227 = vunpack.c.l.b16 %v4116
      %v4228 = vunpack.c.l.b16 %v4119
      %v4229 = vunpack.c.l.b16 %v4123
      %v4230 = vunpack.c.l.b16 %v4126
      %v4231 = vunpack.c.l.b16 %v4130
      %v4232 = vunpack.c.l.b16 %v4133
      %v4233 = vunpack.c.l.b16 %v4137
      %v4234 = vunpack.c.l.b16 %v4140
      %v4235 = vunpack.c.l.b16 %v4144
      %v4236 = vunpack.c.l.b16 %v4147
      %v4237 = vunpack.c.l.b16 %v4151
      %v4238 = vunpack.c.l.b16 %v4154
      %v4239 = vunpack.c.l.b16 %v4158
      %v4240 = vunpack.c.l.b16 %v4161
      %v4241 = vunpack.c.l.b16 %v4165
      %v4242 = vunpack.c.l.b16 %v4168
      %v4243 = vunpack.c.l.b16 %v4172
      %v4244 = vunpack.c.l.b16 %v4175
      %v4245 = vunpack.c.l.b16 %v4179
      %v4246 = vunpack.c.l.b16 %v4182
      %v4247 = vunpack.c.l.b16 %v4186
      %v4248 = vunpack.c.l.b16 %v4189
      %v4249 = vunpack.c.l.b16 %v4193
      %v4250 = vunpack.c.l.b16 %v4196
      %v4251 = vunpack.c.l.b16 %v4200
      %v4252 = vunpack.c.l.b16 %v4203
      %v4253 = vpack.c.b16 %v4222, %v4221
      %v4254 = vpack.c.b16 %v4224, %v4223
      %v4255 = vpack.c.b16 %v4226, %v4225
      %v4256 = vpack.c.b16 %v4228, %v4227
      %v4257 = vpack.c.b16 %v4230, %v4229
      %v4258 = vpack.c.b16 %v4232, %v4231
      %v4259 = vpack.c.b16 %v4234, %v4233
      %v4260 = vpack.c.b16 %v4236, %v4235
      %v4261 = vpack.c.b16 %v4238, %v4237
      %v4262 = vpack.c.b16 %v4240, %v4239
      %v4263 = vpack.c.b16 %v4242, %v4241
      %v4264 = vpack.c.b16 %v4244, %v4243
      %v4265 = vpack.c.b16 %v4246, %v4245
      %v4266 = vpack.c.b16 %v4248, %v4247
      %v4267 = vpack.c.b16 %v4250, %v4249
      %v4268 = vpack.c.b16 %v4252, %v4251
      %v4301 = vunpack.c.l.b16 %v4205
      %v4302 = vunpack.c.l.b16 %v4206
      %v4303 = vunpack.c.l.b16 %v4207
      %v4304 = vunpack.c.l.b16 %v4208
      %v4305 = vunpack.c.l.b16 %v4209
      %v4306 = vunpack.c.l.b16 %v4210
      %v4307 = vunpack.c.l.b16 %v4211
      %v4308 = vunpack.c.l.b16 %v4212
      %v4309 = vunpack.c.l.b16 %v4213
      %v4310 = vunpack.c.l.b16 %v4214
      %v4311 = vunpack.c.l.b16 %v4215
      %v4312 = vunpack.c.l.b16 %v4216
      %v4313 = vunpack.c.l.b16 %v4217
      %v4314 = vunpack.c.l.b16 %v4218
      %v4315 = vunpack.c.l.b16 %v4219
      %v4316 = vunpack.c.l.b16 %v4220
      %v4317 = vpack.c.b16 %v4302, %v4301
      %v4318 = vpack.c.b16 %v4304, %v4303
      %v4319 = vpack.c.b16 %v4306, %v4305
      %v4320 = vpack.c.b16 %v4308, %v4307
      %v4321 = vpack.c.b16 %v4310, %v4309
      %v4322 = vpack.c.b16 %v4312, %v4311
      %v4323 = vpack.c.b16 %v4314, %v4313
      %v4324 = vpack.c.b16 %v4316, %v4315
      %4333 = vmatprep.subr.bf16.mxu0 0
      %4334 = vmatpush1.bf16.msra.mxu0 %v4324
      %4335 = vmatprep.subr.bf16.mxu0 0
      %4336 = vmatpush1.bf16.msra.mxu0 %v4323
      %4337 = vmatprep.subr.bf16.mxu0 0
      %4338 = vmatpush1.bf16.msra.mxu0 %v4322
      %4339 = vmatprep.subr.bf16.mxu0 0
      %4340 = vmatpush1.bf16.msra.mxu0 %v4321
      %4341 = vmatprep.subr.bf16.mxu0 0
      %4342 = vmatpush1.bf16.msra.mxu0 %v4320
      %4343 = vmatprep.subr.bf16.mxu0 0
      %4344 = vmatpush1.bf16.msra.mxu0 %v4319
      %4345 = vmatprep.subr.bf16.mxu0 0
      %4346 = vmatpush1.bf16.msra.mxu0 %v4318
      %4347 = vmatprep.subr.bf16.mxu0 0
      %4348 = vmatpush1.bf16.msra.mxu0 %v4317
      %4349 = vmatprep.subr.bf16.mxu0 0
      %4350 = vmatpush2.bf16.msra.mxu0 0
      %4351 = vmatprep.subr.bf16.mxu0 0
      %4352 = vmatpush2.bf16.msra.mxu0 0
      %4353 = vmatprep.subr.bf16.mxu0 0
      %4354 = vmatpush2.bf16.msra.mxu0 0
      %4355 = vmatprep.subr.bf16.mxu0 0
      %4356 = vmatpush2.bf16.msra.mxu0 0
      %4357 = vmatprep.subr.bf16.mxu0 0
      %4358 = vmatpush2.bf16.msra.mxu0 0
      %4359 = vmatprep.subr.bf16.mxu0 0
      %4360 = vmatpush2.bf16.msra.mxu0 0
      %4361 = vmatprep.subr.bf16.mxu0 0
      %4362 = vmatpush2.bf16.msra.mxu0 0
      %4363 = vmatprep.subr.bf16.mxu0 0
      %4364 = vmatpush2.bf16.msra.mxu0 0
      %4365 = vmatprep.mubr.bf16.mxu0 0
      %4366 = vmatmul.mubr.bf16.gmra.mxu0 %v4253
      %v4367 = vpop.f32.mrf.mxu0
      %v4368 = vadd.f32 0.0, %v4367
      %v4369 = vpop.f32.mrf.mxu0
      %v4370 = vpop.f32.mrf.mxu0
      %v4371 = vadd.f32 0.0, %v4370
      %v4372 = vpop.f32.mrf.mxu0
      %4373 = vmatprep.mubr.bf16.mxu0 0
      %4374 = vmatmul.mubr.bf16.gmra.mxu0 %v4254
      %v4375 = vpop.f32.mrf.mxu0
      %v4376 = vadd.f32 0.0, %v4375
      %v4377 = vpop.f32.mrf.mxu0
      %v4378 = vpop.f32.mrf.mxu0
      %v4379 = vadd.f32 0.0, %v4378
      %v4380 = vpop.f32.mrf.mxu0
      %4381 = vmatprep.mubr.bf16.mxu0 0
      %4382 = vmatmul.mubr.bf16.gmra.mxu0 %v4255
      %v4383 = vpop.f32.mrf.mxu0
      %v4384 = vadd.f32 0.0, %v4383
      %v4385 = vpop.f32.mrf.mxu0
      %v4386 = vpop.f32.mrf.mxu0
      %v4387 = vadd.f32 0.0, %v4386
      %v4388 = vpop.f32.mrf.mxu0
      %4389 = vmatprep.mubr.bf16.mxu0 0
      %4390 = vmatmul.mubr.bf16.gmra.mxu0 %v4256
      %v4391 = vpop.f32.mrf.mxu0
      %v4392 = vadd.f32 0.0, %v4391
      %v4393 = vpop.f32.mrf.mxu0
      %v4394 = vpop.f32.mrf.mxu0
      %v4395 = vadd.f32 0.0, %v4394
      %v4396 = vpop.f32.mrf.mxu0
      %4397 = vmatprep.mubr.bf16.mxu0 0
      %4398 = vmatmul.mubr.bf16.gmra.mxu0 %v4257
      %v4399 = vpop.f32.mrf.mxu0
      %v4400 = vadd.f32 0.0, %v4399
      %v4401 = vpop.f32.mrf.mxu0
      %v4402 = vpop.f32.mrf.mxu0
      %v4403 = vadd.f32 0.0, %v4402
      %v4404 = vpop.f32.mrf.mxu0
      %4405 = vmatprep.mubr.bf16.mxu0 0
      %4406 = vmatmul.mubr.bf16.gmra.mxu0 %v4258
      %v4407 = vpop.f32.mrf.mxu0
      %v4408 = vadd.f32 0.0, %v4407
      %v4409 = vpop.f32.mrf.mxu0
      %v4410 = vpop.f32.mrf.mxu0
      %v4411 = vadd.f32 0.0, %v4410
      %v4412 = vpop.f32.mrf.mxu0
      %4413 = vmatprep.mubr.bf16.mxu0 0
      %4414 = vmatmul.mubr.bf16.gmra.mxu0 %v4259
      %v4415 = vpop.f32.mrf.mxu0
      %v4416 = vadd.f32 0.0, %v4415
      %v4417 = vpop.f32.mrf.mxu0
      %v4418 = vpop.f32.mrf.mxu0
      %v4419 = vadd.f32 0.0, %v4418
      %v4420 = vpop.f32.mrf.mxu0
      %4421 = vmatprep.mubr.bf16.mxu0 0
      %4422 = vmatmul.mubr.bf16.gmra.mxu0 %v4260
      %v4423 = vpop.f32.mrf.mxu0
      %v4424 = vadd.f32 0.0, %v4423
      %v4425 = vpop.f32.mrf.mxu0
      %v4426 = vpop.f32.mrf.mxu0
      %v4427 = vadd.f32 0.0, %v4426
      %v4428 = vpop.f32.mrf.mxu0
      %4429 = vmatprep.mubr.bf16.mxu0 0
      %4430 = vmatmul.mubr.bf16.gmra.mxu0 %v4261
      %v4431 = vpop.f32.mrf.mxu0
      %v4432 = vadd.f32 0.0, %v4431
      %v4433 = vpop.f32.mrf.mxu0
      %v4434 = vpop.f32.mrf.mxu0
      %v4435 = vadd.f32 0.0, %v4434
      %v4436 = vpop.f32.mrf.mxu0
      %4437 = vmatprep.mubr.bf16.mxu0 0
      %4438 = vmatmul.mubr.bf16.gmra.mxu0 %v4262
      %v4439 = vpop.f32.mrf.mxu0
      %v4440 = vadd.f32 0.0, %v4439
      %v4441 = vpop.f32.mrf.mxu0
      %v4442 = vpop.f32.mrf.mxu0
      %v4443 = vadd.f32 0.0, %v4442
      %v4444 = vpop.f32.mrf.mxu0
      %4445 = vmatprep.mubr.bf16.mxu0 0
      %4446 = vmatmul.mubr.bf16.gmra.mxu0 %v4263
      %v4447 = vpop.f32.mrf.mxu0
      %v4448 = vadd.f32 0.0, %v4447
      %v4449 = vpop.f32.mrf.mxu0
      %v4450 = vpop.f32.mrf.mxu0
      %v4451 = vadd.f32 0.0, %v4450
      %v4452 = vpop.f32.mrf.mxu0
      %4453 = vmatprep.mubr.bf16.mxu0 0
      %4454 = vmatmul.mubr.bf16.gmra.mxu0 %v4264
      %v4455 = vpop.f32.mrf.mxu0
      %v4456 = vadd.f32 0.0, %v4455
      %v4457 = vpop.f32.mrf.mxu0
      %v4458 = vpop.f32.mrf.mxu0
      %v4459 = vadd.f32 0.0, %v4458
      %v4460 = vpop.f32.mrf.mxu0
      %4461 = vmatprep.mubr.bf16.mxu0 0
      %4462 = vmatmul.mubr.bf16.gmra.mxu0 %v4265
      %v4463 = vpop.f32.mrf.mxu0
      %v4464 = vadd.f32 0.0, %v4463
      %v4465 = vpop.f32.mrf.mxu0
      %v4466 = vpop.f32.mrf.mxu0
      %v4467 = vadd.f32 0.0, %v4466
      %v4468 = vpop.f32.mrf.mxu0
      %4469 = vmatprep.mubr.bf16.mxu0 0
      %4470 = vmatmul.mubr.bf16.gmra.mxu0 %v4266
      %v4471 = vpop.f32.mrf.mxu0
      %v4472 = vadd.f32 0.0, %v4471
      %v4473 = vpop.f32.mrf.mxu0
      %v4474 = vpop.f32.mrf.mxu0
      %v4475 = vadd.f32 0.0, %v4474
      %v4476 = vpop.f32.mrf.mxu0
      %4477 = vmatprep.mubr.bf16.mxu0 0
      %4478 = vmatmul.mubr.bf16.gmra.mxu0 %v4267
      %v4479 = vpop.f32.mrf.mxu0
      %v4480 = vadd.f32 0.0, %v4479
      %v4481 = vpop.f32.mrf.mxu0
      %v4482 = vpop.f32.mrf.mxu0
      %v4483 = vadd.f32 0.0, %v4482
      %v4484 = vpop.f32.mrf.mxu0
      %4485 = vmatprep.mubr.bf16.mxu0 0
      %4486 = vmatmul.mubr.bf16.gmra.mxu0 %v4268
      %v4487 = vpop.f32.mrf.mxu0
      %v4488 = vadd.f32 0.0, %v4487
      %v4489 = vpop.f32.mrf.mxu0
      %v4490 = vpop.f32.mrf.mxu0
      %v4491 = vadd.f32 0.0, %v4490
      %v4492 = vpop.f32.mrf.mxu0
      %4493 = vdwg.mxu0
      %v4494 = vadd.f32 %v3996, %v4368
      %v4495 = vadd.f32 %v3997, %v4371
      %v4496 = vadd.f32 %v3998, %v4376
      %v4497 = vadd.f32 %v3999, %v4379
      %v4498 = vadd.f32 %v4000, %v4384
      %v4499 = vadd.f32 %v4001, %v4387
      %v4500 = vadd.f32 %v4002, %v4392
      %v4501 = vadd.f32 %v4003, %v4395
      %v4502 = vadd.f32 %v4004, %v4400
      %v4503 = vadd.f32 %v4005, %v4403
      %v4504 = vadd.f32 %v4006, %v4408
      %v4505 = vadd.f32 %v4007, %v4411
      %v4506 = vadd.f32 %v4008, %v4416
      %v4507 = vadd.f32 %v4009, %v4419
      %v4508 = vadd.f32 %v4010, %v4424
      %v4509 = vadd.f32 %v4011, %v4427
      %v4510 = vadd.f32 %v4012, %v4432
      %v4511 = vadd.f32 %v4013, %v4435
      %v4512 = vadd.f32 %v4014, %v4440
      %v4513 = vadd.f32 %v4015, %v4443
      %v4514 = vadd.f32 %v4016, %v4448
      %v4515 = vadd.f32 %v4017, %v4451
      %v4516 = vadd.f32 %v4018, %v4456
      %v4517 = vadd.f32 %v4019, %v4459
      %v4518 = vadd.f32 %v4020, %v4464
      %v4519 = vadd.f32 %v4021, %v4467
      %v4520 = vadd.f32 %v4022, %v4472
      %v4521 = vadd.f32 %v4023, %v4475
      %v4522 = vadd.f32 %v4024, %v4480
      %v4523 = vadd.f32 %v4025, %v4483
      %v4524 = vadd.f32 %v4026, %v4488
      %v4525 = vadd.f32 %v4027, %v4491
      %s4526 = scalar_lea.vmem [#allocation2], 24
      %v4527 = vld [vmem:[%s4526] sm:$0xf]
      %v4528 = vld [vmem:[%s4526 + $0x4] sm:$0xf]
      %v4529 = vld [vmem:[%s4526 + $0xc] sm:$0xf]
      %v4530 = vld [vmem:[%s4526 + $0x10] sm:$0xf]
      %v4531 = vld [vmem:[%s4526 + $0x18] sm:$0xf]
      %v4532 = vld [vmem:[%s4526 + $0x1c] sm:$0xf]
      %v4533 = vld [vmem:[%s4526 + $0x24] sm:$0xf]
      %v4534 = vld [vmem:[%s4526 + $0x28] sm:$0xf]
      %v4535 = vld [vmem:[%s4526 + $0x30] sm:$0xf]
      %v4536 = vld [vmem:[%s4526 + $0x34] sm:$0xf]
      %v4537 = vld [vmem:[%s4526 + $0x3c] sm:$0xf]
      %v4538 = vld [vmem:[%s4526 + $0x40] sm:$0xf]
      %v4539 = vld [vmem:[%s4526 + $0x48] sm:$0xf]
      %v4540 = vld [vmem:[%s4526 + $0x4c] sm:$0xf]
      %v4541 = vld [vmem:[%s4526 + $0x54] sm:$0xf]
      %v4542 = vld [vmem:[%s4526 + $0x58] sm:$0xf]
      %v4543 = vld [vmem:[%s4526 + $0x60] sm:$0xf]
      %v4544 = vld [vmem:[%s4526 + $0x64] sm:$0xf]
      %v4545 = vld [vmem:[%s4526 + $0x6c] sm:$0xf]
      %v4546 = vld [vmem:[%s4526 + $0x70] sm:$0xf]
      %v4547 = vld [vmem:[%s4526 + $0x78] sm:$0xf]
      %v4548 = vld [vmem:[%s4526 + $0x7c] sm:$0xf]
      %v4549 = vld [vmem:[%s4526 + $0x84] sm:$0xf]
      %v4550 = vld [vmem:[%s4526 + $0x88] sm:$0xf]
      %v4551 = vld [vmem:[%s4526 + $0x90] sm:$0xf]
      %v4552 = vld [vmem:[%s4526 + $0x94] sm:$0xf]
      %v4553 = vld [vmem:[%s4526 + $0x9c] sm:$0xf]
      %v4554 = vld [vmem:[%s4526 + $0xa0] sm:$0xf]
      %v4555 = vld [vmem:[%s4526 + $0xa8] sm:$0xf]
      %v4556 = vld [vmem:[%s4526 + $0xac] sm:$0xf]
      %v4557 = vld [vmem:[%s4526 + $0xb4] sm:$0xf]
      %v4558 = vld [vmem:[%s4526 + $0xb8] sm:$0xf]
      %s4559 = scalar_lea.vmem %s425, 384
      %v4560 = vld [vmem:[%s4559] sm:$0xf]
      %v4561 = vld [vmem:[%s4559 + $0x4] sm:$0xf]
      %v4562 = vld [vmem:[%s4559 + $0x8] sm:$0xf]
      %v4563 = vld [vmem:[%s4559 + $0xc] sm:$0xf]
      %v4564 = vld [vmem:[%s4559 + $0x10] sm:$0xf]
      %v4565 = vld [vmem:[%s4559 + $0x14] sm:$0xf]
      %v4566 = vld [vmem:[%s4559 + $0x18] sm:$0xf]
      %v4567 = vld [vmem:[%s4559 + $0x1c] sm:$0xf]
      %v4568 = vld [vmem:[%s4559 + $0x20] sm:$0xf]
      %v4569 = vld [vmem:[%s4559 + $0x24] sm:$0xf]
      %v4570 = vld [vmem:[%s4559 + $0x28] sm:$0xf]
      %v4571 = vld [vmem:[%s4559 + $0x2c] sm:$0xf]
      %v4572 = vld [vmem:[%s4559 + $0x30] sm:$0xf]
      %v4573 = vld [vmem:[%s4559 + $0x34] sm:$0xf]
      %v4574 = vld [vmem:[%s4559 + $0x38] sm:$0xf]
      %v4575 = vld [vmem:[%s4559 + $0x3c] sm:$0xf]
      %v4608 = vunpack.c.l.b16 %v4527
      %v4609 = vunpack.c.l.b16 %v4528
      %v4610 = vunpack.c.l.b16 %v4529
      %v4611 = vunpack.c.l.b16 %v4530
      %v4612 = vunpack.c.l.b16 %v4531
      %v4613 = vunpack.c.l.b16 %v4532
      %v4614 = vunpack.c.l.b16 %v4533
      %v4615 = vunpack.c.l.b16 %v4534
      %v4616 = vunpack.c.l.b16 %v4535
      %v4617 = vunpack.c.l.b16 %v4536
      %v4618 = vunpack.c.l.b16 %v4537
      %v4619 = vunpack.c.l.b16 %v4538
      %v4620 = vunpack.c.l.b16 %v4539
      %v4621 = vunpack.c.l.b16 %v4540
      %v4622 = vunpack.c.l.b16 %v4541
      %v4623 = vunpack.c.l.b16 %v4542
      %v4624 = vunpack.c.l.b16 %v4543
      %v4625 = vunpack.c.l.b16 %v4544
      %v4626 = vunpack.c.l.b16 %v4545
      %v4627 = vunpack.c.l.b16 %v4546
      %v4628 = vunpack.c.l.b16 %v4547
      %v4629 = vunpack.c.l.b16 %v4548
      %v4630 = vunpack.c.l.b16 %v4549
      %v4631 = vunpack.c.l.b16 %v4550
      %v4632 = vunpack.c.l.b16 %v4551
      %v4633 = vunpack.c.l.b16 %v4552
      %v4634 = vunpack.c.l.b16 %v4553
      %v4635 = vunpack.c.l.b16 %v4554
      %v4636 = vunpack.c.l.b16 %v4555
      %v4637 = vunpack.c.l.b16 %v4556
      %v4638 = vunpack.c.l.b16 %v4557
      %v4639 = vunpack.c.l.b16 %v4558
      %v4640 = vpack.c.b16 %v4609, %v4608
      %v4641 = vpack.c.b16 %v4611, %v4610
      %v4642 = vpack.c.b16 %v4613, %v4612
      %v4643 = vpack.c.b16 %v4615, %v4614
      %v4644 = vpack.c.b16 %v4617, %v4616
      %v4645 = vpack.c.b16 %v4619, %v4618
      %v4646 = vpack.c.b16 %v4621, %v4620
      %v4647 = vpack.c.b16 %v4623, %v4622
      %v4648 = vpack.c.b16 %v4625, %v4624
      %v4649 = vpack.c.b16 %v4627, %v4626
      %v4650 = vpack.c.b16 %v4629, %v4628
      %v4651 = vpack.c.b16 %v4631, %v4630
      %v4652 = vpack.c.b16 %v4633, %v4632
      %v4653 = vpack.c.b16 %v4635, %v4634
      %v4654 = vpack.c.b16 %v4637, %v4636
      %v4655 = vpack.c.b16 %v4639, %v4638
      %v4688 = vunpack.c.l.b16 %v4560
      %v4689 = vunpack.c.l.b16 %v4561
      %v4690 = vunpack.c.l.b16 %v4562
      %v4691 = vunpack.c.l.b16 %v4563
      %v4692 = vunpack.c.l.b16 %v4564
      %v4693 = vunpack.c.l.b16 %v4565
      %v4694 = vunpack.c.l.b16 %v4566
      %v4695 = vunpack.c.l.b16 %v4567
      %v4696 = vunpack.c.l.b16 %v4568
      %v4697 = vunpack.c.l.b16 %v4569
      %v4698 = vunpack.c.l.b16 %v4570
      %v4699 = vunpack.c.l.b16 %v4571
      %v4700 = vunpack.c.l.b16 %v4572
      %v4701 = vunpack.c.l.b16 %v4573
      %v4702 = vunpack.c.l.b16 %v4574
      %v4703 = vunpack.c.l.b16 %v4575
      %v4704 = vpack.c.b16 %v4689, %v4688
      %v4705 = vpack.c.b16 %v4691, %v4690
      %v4706 = vpack.c.b16 %v4693, %v4692
      %v4707 = vpack.c.b16 %v4695, %v4694
      %v4708 = vpack.c.b16 %v4697, %v4696
      %v4709 = vpack.c.b16 %v4699, %v4698
      %v4710 = vpack.c.b16 %v4701, %v4700
      %v4711 = vpack.c.b16 %v4703, %v4702
      %4720 = vmatprep.subr.bf16.mxu0 0
      %4721 = vmatpush1.bf16.msra.mxu0 %v4711
      %4722 = vmatprep.subr.bf16.mxu0 0
      %4723 = vmatpush1.bf16.msra.mxu0 %v4710
      %4724 = vmatprep.subr.bf16.mxu0 0
      %4725 = vmatpush1.bf16.msra.mxu0 %v4709
      %4726 = vmatprep.subr.bf16.mxu0 0
      %4727 = vmatpush1.bf16.msra.mxu0 %v4708
      %4728 = vmatprep.subr.bf16.mxu0 0
      %4729 = vmatpush1.bf16.msra.mxu0 %v4707
      %4730 = vmatprep.subr.bf16.mxu0 0
      %4731 = vmatpush1.bf16.msra.mxu0 %v4706
      %4732 = vmatprep.subr.bf16.mxu0 0
      %4733 = vmatpush1.bf16.msra.mxu0 %v4705
      %4734 = vmatprep.subr.bf16.mxu0 0
      %4735 = vmatpush1.bf16.msra.mxu0 %v4704
      %4736 = vmatprep.subr.bf16.mxu0 0
      %4737 = vmatpush2.bf16.msra.mxu0 0
      %4738 = vmatprep.subr.bf16.mxu0 0
      %4739 = vmatpush2.bf16.msra.mxu0 0
      %4740 = vmatprep.subr.bf16.mxu0 0
      %4741 = vmatpush2.bf16.msra.mxu0 0
      %4742 = vmatprep.subr.bf16.mxu0 0
      %4743 = vmatpush2.bf16.msra.mxu0 0
      %4744 = vmatprep.subr.bf16.mxu0 0
      %4745 = vmatpush2.bf16.msra.mxu0 0
      %4746 = vmatprep.subr.bf16.mxu0 0
      %4747 = vmatpush2.bf16.msra.mxu0 0
      %4748 = vmatprep.subr.bf16.mxu0 0
      %4749 = vmatpush2.bf16.msra.mxu0 0
      %4750 = vmatprep.subr.bf16.mxu0 0
      %4751 = vmatpush2.bf16.msra.mxu0 0
      %4752 = vmatprep.mubr.bf16.mxu0 0
      %4753 = vmatmul.mubr.bf16.gmra.mxu0 %v4640
      %v4754 = vpop.f32.mrf.mxu0
      %v4755 = vadd.f32 0.0, %v4754
      %v4756 = vpop.f32.mrf.mxu0
      %v4757 = vpop.f32.mrf.mxu0
      %v4758 = vadd.f32 0.0, %v4757
      %v4759 = vpop.f32.mrf.mxu0
      %4760 = vmatprep.mubr.bf16.mxu0 0
      %4761 = vmatmul.mubr.bf16.gmra.mxu0 %v4641
      %v4762 = vpop.f32.mrf.mxu0
      %v4763 = vadd.f32 0.0, %v4762
      %v4764 = vpop.f32.mrf.mxu0
      %v4765 = vpop.f32.mrf.mxu0
      %v4766 = vadd.f32 0.0, %v4765
      %v4767 = vpop.f32.mrf.mxu0
      %4768 = vmatprep.mubr.bf16.mxu0 0
      %4769 = vmatmul.mubr.bf16.gmra.mxu0 %v4642
      %v4770 = vpop.f32.mrf.mxu0
      %v4771 = vadd.f32 0.0, %v4770
      %v4772 = vpop.f32.mrf.mxu0
      %v4773 = vpop.f32.mrf.mxu0
      %v4774 = vadd.f32 0.0, %v4773
      %v4775 = vpop.f32.mrf.mxu0
      %4776 = vmatprep.mubr.bf16.mxu0 0
      %4777 = vmatmul.mubr.bf16.gmra.mxu0 %v4643
      %v4778 = vpop.f32.mrf.mxu0
      %v4779 = vadd.f32 0.0, %v4778
      %v4780 = vpop.f32.mrf.mxu0
      %v4781 = vpop.f32.mrf.mxu0
      %v4782 = vadd.f32 0.0, %v4781
      %v4783 = vpop.f32.mrf.mxu0
      %4784 = vmatprep.mubr.bf16.mxu0 0
      %4785 = vmatmul.mubr.bf16.gmra.mxu0 %v4644
      %v4786 = vpop.f32.mrf.mxu0
      %v4787 = vadd.f32 0.0, %v4786
      %v4788 = vpop.f32.mrf.mxu0
      %v4789 = vpop.f32.mrf.mxu0
      %v4790 = vadd.f32 0.0, %v4789
      %v4791 = vpop.f32.mrf.mxu0
      %4792 = vmatprep.mubr.bf16.mxu0 0
      %4793 = vmatmul.mubr.bf16.gmra.mxu0 %v4645
      %v4794 = vpop.f32.mrf.mxu0
      %v4795 = vadd.f32 0.0, %v4794
      %v4796 = vpop.f32.mrf.mxu0
      %v4797 = vpop.f32.mrf.mxu0
      %v4798 = vadd.f32 0.0, %v4797
      %v4799 = vpop.f32.mrf.mxu0
      %4800 = vmatprep.mubr.bf16.mxu0 0
      %4801 = vmatmul.mubr.bf16.gmra.mxu0 %v4646
      %v4802 = vpop.f32.mrf.mxu0
      %v4803 = vadd.f32 0.0, %v4802
      %v4804 = vpop.f32.mrf.mxu0
      %v4805 = vpop.f32.mrf.mxu0
      %v4806 = vadd.f32 0.0, %v4805
      %v4807 = vpop.f32.mrf.mxu0
      %4808 = vmatprep.mubr.bf16.mxu0 0
      %4809 = vmatmul.mubr.bf16.gmra.mxu0 %v4647
      %v4810 = vpop.f32.mrf.mxu0
      %v4811 = vadd.f32 0.0, %v4810
      %v4812 = vpop.f32.mrf.mxu0
      %v4813 = vpop.f32.mrf.mxu0
      %v4814 = vadd.f32 0.0, %v4813
      %v4815 = vpop.f32.mrf.mxu0
      %4816 = vmatprep.mubr.bf16.mxu0 0
      %4817 = vmatmul.mubr.bf16.gmra.mxu0 %v4648
      %v4818 = vpop.f32.mrf.mxu0
      %v4819 = vadd.f32 0.0, %v4818
      %v4820 = vpop.f32.mrf.mxu0
      %v4821 = vpop.f32.mrf.mxu0
      %v4822 = vadd.f32 0.0, %v4821
      %v4823 = vpop.f32.mrf.mxu0
      %4824 = vmatprep.mubr.bf16.mxu0 0
      %4825 = vmatmul.mubr.bf16.gmra.mxu0 %v4649
      %v4826 = vpop.f32.mrf.mxu0
      %v4827 = vadd.f32 0.0, %v4826
      %v4828 = vpop.f32.mrf.mxu0
      %v4829 = vpop.f32.mrf.mxu0
      %v4830 = vadd.f32 0.0, %v4829
      %v4831 = vpop.f32.mrf.mxu0
      %4832 = vmatprep.mubr.bf16.mxu0 0
      %4833 = vmatmul.mubr.bf16.gmra.mxu0 %v4650
      %v4834 = vpop.f32.mrf.mxu0
      %v4835 = vadd.f32 0.0, %v4834
      %v4836 = vpop.f32.mrf.mxu0
      %v4837 = vpop.f32.mrf.mxu0
      %v4838 = vadd.f32 0.0, %v4837
      %v4839 = vpop.f32.mrf.mxu0
      %4840 = vmatprep.mubr.bf16.mxu0 0
      %4841 = vmatmul.mubr.bf16.gmra.mxu0 %v4651
      %v4842 = vpop.f32.mrf.mxu0
      %v4843 = vadd.f32 0.0, %v4842
      %v4844 = vpop.f32.mrf.mxu0
      %v4845 = vpop.f32.mrf.mxu0
      %v4846 = vadd.f32 0.0, %v4845
      %v4847 = vpop.f32.mrf.mxu0
      %4848 = vmatprep.mubr.bf16.mxu0 0
      %4849 = vmatmul.mubr.bf16.gmra.mxu0 %v4652
      %v4850 = vpop.f32.mrf.mxu0
      %v4851 = vadd.f32 0.0, %v4850
      %v4852 = vpop.f32.mrf.mxu0
      %v4853 = vpop.f32.mrf.mxu0
      %v4854 = vadd.f32 0.0, %v4853
      %v4855 = vpop.f32.mrf.mxu0
      %4856 = vmatprep.mubr.bf16.mxu0 0
      %4857 = vmatmul.mubr.bf16.gmra.mxu0 %v4653
      %v4858 = vpop.f32.mrf.mxu0
      %v4859 = vadd.f32 0.0, %v4858
      %v4860 = vpop.f32.mrf.mxu0
      %v4861 = vpop.f32.mrf.mxu0
      %v4862 = vadd.f32 0.0, %v4861
      %v4863 = vpop.f32.mrf.mxu0
      %4864 = vmatprep.mubr.bf16.mxu0 0
      %4865 = vmatmul.mubr.bf16.gmra.mxu0 %v4654
      %v4866 = vpop.f32.mrf.mxu0
      %v4867 = vadd.f32 0.0, %v4866
      %v4868 = vpop.f32.mrf.mxu0
      %v4869 = vpop.f32.mrf.mxu0
      %v4870 = vadd.f32 0.0, %v4869
      %v4871 = vpop.f32.mrf.mxu0
      %4872 = vmatprep.mubr.bf16.mxu0 0
      %4873 = vmatmul.mubr.bf16.gmra.mxu0 %v4655
      %v4874 = vpop.f32.mrf.mxu0
      %v4875 = vadd.f32 0.0, %v4874
      %v4876 = vpop.f32.mrf.mxu0
      %v4877 = vpop.f32.mrf.mxu0
      %v4878 = vadd.f32 0.0, %v4877
      %v4879 = vpop.f32.mrf.mxu0
      %4880 = vdwg.mxu0
      %v4881 = vadd.f32 %v4494, %v4755
      %v4882 = vadd.f32 %v4495, %v4758
      %v4883 = vadd.f32 %v4496, %v4763
      %v4884 = vadd.f32 %v4497, %v4766
      %v4885 = vadd.f32 %v4498, %v4771
      %v4886 = vadd.f32 %v4499, %v4774
      %v4887 = vadd.f32 %v4500, %v4779
      %v4888 = vadd.f32 %v4501, %v4782
      %v4889 = vadd.f32 %v4502, %v4787
      %v4890 = vadd.f32 %v4503, %v4790
      %v4891 = vadd.f32 %v4504, %v4795
      %v4892 = vadd.f32 %v4505, %v4798
      %v4893 = vadd.f32 %v4506, %v4803
      %v4894 = vadd.f32 %v4507, %v4806
      %v4895 = vadd.f32 %v4508, %v4811
      %v4896 = vadd.f32 %v4509, %v4814
      %v4897 = vadd.f32 %v4510, %v4819
      %v4898 = vadd.f32 %v4511, %v4822
      %v4899 = vadd.f32 %v4512, %v4827
      %v4900 = vadd.f32 %v4513, %v4830
      %v4901 = vadd.f32 %v4514, %v4835
      %v4902 = vadd.f32 %v4515, %v4838
      %v4903 = vadd.f32 %v4516, %v4843
      %v4904 = vadd.f32 %v4517, %v4846
      %v4905 = vadd.f32 %v4518, %v4851
      %v4906 = vadd.f32 %v4519, %v4854
      %v4907 = vadd.f32 %v4520, %v4859
      %v4908 = vadd.f32 %v4521, %v4862
      %v4909 = vadd.f32 %v4522, %v4867
      %v4910 = vadd.f32 %v4523, %v4870
      %v4911 = vadd.f32 %v4524, %v4875
      %v4912 = vadd.f32 %v4525, %v4878
      %v4913 = vld [vmem:[%s4526] sm:$0xf]
      %v4914 = vld [vmem:[%s4526 + $0x4] sm:$0xf]
      %v4915 = vld [vmem:[%s4526 + $0x8] sm:$0x1]
      %v4916 = vld [vmem:[%s4526 + $0xc] sm:$0xf]
      %v4917 = vld [vmem:[%s4526 + $0x10] sm:$0xf]
      %v4918 = vld [vmem:[%s4526 + $0x14] sm:$0x1]
      %v4919 = vld [vmem:[%s4526 + $0x18] sm:$0xf]
      %v4920 = vld [vmem:[%s4526 + $0x1c] sm:$0xf]
      %v4921 = vld [vmem:[%s4526 + $0x20] sm:$0x1]
      %v4922 = vld [vmem:[%s4526 + $0x24] sm:$0xf]
      %v4923 = vld [vmem:[%s4526 + $0x28] sm:$0xf]
      %v4924 = vld [vmem:[%s4526 + $0x2c] sm:$0x1]
      %v4925 = vld [vmem:[%s4526 + $0x30] sm:$0xf]
      %v4926 = vld [vmem:[%s4526 + $0x34] sm:$0xf]
      %v4927 = vld [vmem:[%s4526 + $0x38] sm:$0x1]
      %v4928 = vld [vmem:[%s4526 + $0x3c] sm:$0xf]
      %v4929 = vld [vmem:[%s4526 + $0x40] sm:$0xf]
      %v4930 = vld [vmem:[%s4526 + $0x44] sm:$0x1]
      %v4931 = vld [vmem:[%s4526 + $0x48] sm:$0xf]
      %v4932 = vld [vmem:[%s4526 + $0x4c] sm:$0xf]
      %v4933 = vld [vmem:[%s4526 + $0x50] sm:$0x1]
      %v4934 = vld [vmem:[%s4526 + $0x54] sm:$0xf]
      %v4935 = vld [vmem:[%s4526 + $0x58] sm:$0xf]
      %v4936 = vld [vmem:[%s4526 + $0x5c] sm:$0x1]
      %v4937 = vld [vmem:[%s4526 + $0x60] sm:$0xf]
      %v4938 = vld [vmem:[%s4526 + $0x64] sm:$0xf]
      %v4939 = vld [vmem:[%s4526 + $0x68] sm:$0x1]
      %v4940 = vld [vmem:[%s4526 + $0x6c] sm:$0xf]
      %v4941 = vld [vmem:[%s4526 + $0x70] sm:$0xf]
      %v4942 = vld [vmem:[%s4526 + $0x74] sm:$0x1]
      %v4943 = vld [vmem:[%s4526 + $0x78] sm:$0xf]
      %v4944 = vld [vmem:[%s4526 + $0x7c] sm:$0xf]
      %v4945 = vld [vmem:[%s4526 + $0x80] sm:$0x1]
      %v4946 = vld [vmem:[%s4526 + $0x84] sm:$0xf]
      %v4947 = vld [vmem:[%s4526 + $0x88] sm:$0xf]
      %v4948 = vld [vmem:[%s4526 + $0x8c] sm:$0x1]
      %v4949 = vld [vmem:[%s4526 + $0x90] sm:$0xf]
      %v4950 = vld [vmem:[%s4526 + $0x94] sm:$0xf]
      %v4951 = vld [vmem:[%s4526 + $0x98] sm:$0x1]
      %v4952 = vld [vmem:[%s4526 + $0x9c] sm:$0xf]
      %v4953 = vld [vmem:[%s4526 + $0xa0] sm:$0xf]
      %v4954 = vld [vmem:[%s4526 + $0xa4] sm:$0x1]
      %v4955 = vld [vmem:[%s4526 + $0xa8] sm:$0xf]
      %v4956 = vld [vmem:[%s4526 + $0xac] sm:$0xf]
      %v4957 = vld [vmem:[%s4526 + $0xb0] sm:$0x1]
      %v4958 = vld [vmem:[%s4526 + $0xb4] sm:$0xf]
      %v4959 = vld [vmem:[%s4526 + $0xb8] sm:$0xf]
      %v4960 = vld [vmem:[%s4526 + $0xbc] sm:$0x1]
      %v4962 = vshrl.u32 %v4913, 16
      %v4964 = vrot.slane %v4962, 4
      %v4965 = vshll.u32 %v4913, 16
      %v4967 = vrot.slane %v4965, 5
      %v4968 = vor.u32 %v4964, %v4967
      %v4969 = vrot.slane %v4968, 4
      %v4971 = vshll.u32 %v4914, 16
      %v4973 = vrot.slane %v4971, 5
      %v4974 = vsel %vm1423, %v4969, %v4973
      %v4975 = vshrl.u32 %v4914, 16
      %v4977 = vrot.slane %v4975, 4
      %v4978 = vor.u32 %v4977, %v4973
      %v4979 = vrot.slane %v4978, 4
      %v4981 = vshll.u32 %v4915, 16
      %v4983 = vrot.slane %v4981, 5
      %v4984 = vsel %vm1423, %v4979, %v4983
      %v4986 = vshrl.u32 %v4916, 16
      %v4988 = vrot.slane %v4986, 4
      %v4989 = vshll.u32 %v4916, 16
      %v4991 = vrot.slane %v4989, 5
      %v4992 = vor.u32 %v4988, %v4991
      %v4993 = vrot.slane %v4992, 4
      %v4995 = vshll.u32 %v4917, 16
      %v4997 = vrot.slane %v4995, 5
      %v4998 = vsel %vm1423, %v4993, %v4997
      %v4999 = vshrl.u32 %v4917, 16
      %v5001 = vrot.slane %v4999, 4
      %v5002 = vor.u32 %v5001, %v4997
      %v5003 = vrot.slane %v5002, 4
      %v5005 = vshll.u32 %v4918, 16
      %v5007 = vrot.slane %v5005, 5
      %v5008 = vsel %vm1423, %v5003, %v5007
      %v5010 = vshrl.u32 %v4919, 16
      %v5012 = vrot.slane %v5010, 4
      %v5013 = vshll.u32 %v4919, 16
      %v5015 = vrot.slane %v5013, 5
      %v5016 = vor.u32 %v5012, %v5015
      %v5017 = vrot.slane %v5016, 4
      %v5019 = vshll.u32 %v4920, 16
      %v5021 = vrot.slane %v5019, 5
      %v5022 = vsel %vm1423, %v5017, %v5021
      %v5023 = vshrl.u32 %v4920, 16
      %v5025 = vrot.slane %v5023, 4
      %v5026 = vor.u32 %v5025, %v5021
      %v5027 = vrot.slane %v5026, 4
      %v5029 = vshll.u32 %v4921, 16
      %v5031 = vrot.slane %v5029, 5
      %v5032 = vsel %vm1423, %v5027, %v5031
      %v5034 = vshrl.u32 %v4922, 16
      %v5036 = vrot.slane %v5034, 4
      %v5037 = vshll.u32 %v4922, 16
      %v5039 = vrot.slane %v5037, 5
      %v5040 = vor.u32 %v5036, %v5039
      %v5041 = vrot.slane %v5040, 4
      %v5043 = vshll.u32 %v4923, 16
      %v5045 = vrot.slane %v5043, 5
      %v5046 = vsel %vm1423, %v5041, %v5045
      %v5047 = vshrl.u32 %v4923, 16
      %v5049 = vrot.slane %v5047, 4
      %v5050 = vor.u32 %v5049, %v5045
      %v5051 = vrot.slane %v5050, 4
      %v5053 = vshll.u32 %v4924, 16
      %v5055 = vrot.slane %v5053, 5
      %v5056 = vsel %vm1423, %v5051, %v5055
      %v5058 = vshrl.u32 %v4925, 16
      %v5060 = vrot.slane %v5058, 4
      %v5061 = vshll.u32 %v4925, 16
      %v5063 = vrot.slane %v5061, 5
      %v5064 = vor.u32 %v5060, %v5063
      %v5065 = vrot.slane %v5064, 4
      %v5067 = vshll.u32 %v4926, 16
      %v5069 = vrot.slane %v5067, 5
      %v5070 = vsel %vm1423, %v5065, %v5069
      %v5071 = vshrl.u32 %v4926, 16
      %v5073 = vrot.slane %v5071, 4
      %v5074 = vor.u32 %v5073, %v5069
      %v5075 = vrot.slane %v5074, 4
      %v5077 = vshll.u32 %v4927, 16
      %v5079 = vrot.slane %v5077, 5
      %v5080 = vsel %vm1423, %v5075, %v5079
      %v5082 = vshrl.u32 %v4928, 16
      %v5084 = vrot.slane %v5082, 4
      %v5085 = vshll.u32 %v4928, 16
      %v5087 = vrot.slane %v5085, 5
      %v5088 = vor.u32 %v5084, %v5087
      %v5089 = vrot.slane %v5088, 4
      %v5091 = vshll.u32 %v4929, 16
      %v5093 = vrot.slane %v5091, 5
      %v5094 = vsel %vm1423, %v5089, %v5093
      %v5095 = vshrl.u32 %v4929, 16
      %v5097 = vrot.slane %v5095, 4
      %v5098 = vor.u32 %v5097, %v5093
      %v5099 = vrot.slane %v5098, 4
      %v5101 = vshll.u32 %v4930, 16
      %v5103 = vrot.slane %v5101, 5
      %v5104 = vsel %vm1423, %v5099, %v5103
      %v5106 = vshrl.u32 %v4931, 16
      %v5108 = vrot.slane %v5106, 4
      %v5109 = vshll.u32 %v4931, 16
      %v5111 = vrot.slane %v5109, 5
      %v5112 = vor.u32 %v5108, %v5111
      %v5113 = vrot.slane %v5112, 4
      %v5115 = vshll.u32 %v4932, 16
      %v5117 = vrot.slane %v5115, 5
      %v5118 = vsel %vm1423, %v5113, %v5117
      %v5119 = vshrl.u32 %v4932, 16
      %v5121 = vrot.slane %v5119, 4
      %v5122 = vor.u32 %v5121, %v5117
      %v5123 = vrot.slane %v5122, 4
      %v5125 = vshll.u32 %v4933, 16
      %v5127 = vrot.slane %v5125, 5
      %v5128 = vsel %vm1423, %v5123, %v5127
      %v5130 = vshrl.u32 %v4934, 16
      %v5132 = vrot.slane %v5130, 4
      %v5133 = vshll.u32 %v4934, 16
      %v5135 = vrot.slane %v5133, 5
      %v5136 = vor.u32 %v5132, %v5135
      %v5137 = vrot.slane %v5136, 4
      %v5139 = vshll.u32 %v4935, 16
      %v5141 = vrot.slane %v5139, 5
      %v5142 = vsel %vm1423, %v5137, %v5141
      %v5143 = vshrl.u32 %v4935, 16
      %v5145 = vrot.slane %v5143, 4
      %v5146 = vor.u32 %v5145, %v5141
      %v5147 = vrot.slane %v5146, 4
      %v5149 = vshll.u32 %v4936, 16
      %v5151 = vrot.slane %v5149, 5
      %v5152 = vsel %vm1423, %v5147, %v5151
      %v5154 = vshrl.u32 %v4937, 16
      %v5156 = vrot.slane %v5154, 4
      %v5157 = vshll.u32 %v4937, 16
      %v5159 = vrot.slane %v5157, 5
      %v5160 = vor.u32 %v5156, %v5159
      %v5161 = vrot.slane %v5160, 4
      %v5163 = vshll.u32 %v4938, 16
      %v5165 = vrot.slane %v5163, 5
      %v5166 = vsel %vm1423, %v5161, %v5165
      %v5167 = vshrl.u32 %v4938, 16
      %v5169 = vrot.slane %v5167, 4
      %v5170 = vor.u32 %v5169, %v5165
      %v5171 = vrot.slane %v5170, 4
      %v5173 = vshll.u32 %v4939, 16
      %v5175 = vrot.slane %v5173, 5
      %v5176 = vsel %vm1423, %v5171, %v5175
      %v5178 = vshrl.u32 %v4940, 16
      %v5180 = vrot.slane %v5178, 4
      %v5181 = vshll.u32 %v4940, 16
      %v5183 = vrot.slane %v5181, 5
      %v5184 = vor.u32 %v5180, %v5183
      %v5185 = vrot.slane %v5184, 4
      %v5187 = vshll.u32 %v4941, 16
      %v5189 = vrot.slane %v5187, 5
      %v5190 = vsel %vm1423, %v5185, %v5189
      %v5191 = vshrl.u32 %v4941, 16
      %v5193 = vrot.slane %v5191, 4
      %v5194 = vor.u32 %v5193, %v5189
      %v5195 = vrot.slane %v5194, 4
      %v5197 = vshll.u32 %v4942, 16
      %v5199 = vrot.slane %v5197, 5
      %v5200 = vsel %vm1423, %v5195, %v5199
      %v5202 = vshrl.u32 %v4943, 16
      %v5204 = vrot.slane %v5202, 4
      %v5205 = vshll.u32 %v4943, 16
      %v5207 = vrot.slane %v5205, 5
      %v5208 = vor.u32 %v5204, %v5207
      %v5209 = vrot.slane %v5208, 4
      %v5211 = vshll.u32 %v4944, 16
      %v5213 = vrot.slane %v5211, 5
      %v5214 = vsel %vm1423, %v5209, %v5213
      %v5215 = vshrl.u32 %v4944, 16
      %v5217 = vrot.slane %v5215, 4
      %v5218 = vor.u32 %v5217, %v5213
      %v5219 = vrot.slane %v5218, 4
      %v5221 = vshll.u32 %v4945, 16
      %v5223 = vrot.slane %v5221, 5
      %v5224 = vsel %vm1423, %v5219, %v5223
      %v5226 = vshrl.u32 %v4946, 16
      %v5228 = vrot.slane %v5226, 4
      %v5229 = vshll.u32 %v4946, 16
      %v5231 = vrot.slane %v5229, 5
      %v5232 = vor.u32 %v5228, %v5231
      %v5233 = vrot.slane %v5232, 4
      %v5235 = vshll.u32 %v4947, 16
      %v5237 = vrot.slane %v5235, 5
      %v5238 = vsel %vm1423, %v5233, %v5237
      %v5239 = vshrl.u32 %v4947, 16
      %v5241 = vrot.slane %v5239, 4
      %v5242 = vor.u32 %v5241, %v5237
      %v5243 = vrot.slane %v5242, 4
      %v5245 = vshll.u32 %v4948, 16
      %v5247 = vrot.slane %v5245, 5
      %v5248 = vsel %vm1423, %v5243, %v5247
      %v5250 = vshrl.u32 %v4949, 16
      %v5252 = vrot.slane %v5250, 4
      %v5253 = vshll.u32 %v4949, 16
      %v5255 = vrot.slane %v5253, 5
      %v5256 = vor.u32 %v5252, %v5255
      %v5257 = vrot.slane %v5256, 4
      %v5259 = vshll.u32 %v4950, 16
      %v5261 = vrot.slane %v5259, 5
      %v5262 = vsel %vm1423, %v5257, %v5261
      %v5263 = vshrl.u32 %v4950, 16
      %v5265 = vrot.slane %v5263, 4
      %v5266 = vor.u32 %v5265, %v5261
      %v5267 = vrot.slane %v5266, 4
      %v5269 = vshll.u32 %v4951, 16
      %v5271 = vrot.slane %v5269, 5
      %v5272 = vsel %vm1423, %v5267, %v5271
      %v5274 = vshrl.u32 %v4952, 16
      %v5276 = vrot.slane %v5274, 4
      %v5277 = vshll.u32 %v4952, 16
      %v5279 = vrot.slane %v5277, 5
      %v5280 = vor.u32 %v5276, %v5279
      %v5281 = vrot.slane %v5280, 4
      %v5283 = vshll.u32 %v4953, 16
      %v5285 = vrot.slane %v5283, 5
      %v5286 = vsel %vm1423, %v5281, %v5285
      %v5287 = vshrl.u32 %v4953, 16
      %v5289 = vrot.slane %v5287, 4
      %v5290 = vor.u32 %v5289, %v5285
      %v5291 = vrot.slane %v5290, 4
      %v5293 = vshll.u32 %v4954, 16
      %v5295 = vrot.slane %v5293, 5
      %v5296 = vsel %vm1423, %v5291, %v5295
      %v5298 = vshrl.u32 %v4955, 16
      %v5300 = vrot.slane %v5298, 4
      %v5301 = vshll.u32 %v4955, 16
      %v5303 = vrot.slane %v5301, 5
      %v5304 = vor.u32 %v5300, %v5303
      %v5305 = vrot.slane %v5304, 4
      %v5307 = vshll.u32 %v4956, 16
      %v5309 = vrot.slane %v5307, 5
      %v5310 = vsel %vm1423, %v5305, %v5309
      %v5311 = vshrl.u32 %v4956, 16
      %v5313 = vrot.slane %v5311, 4
      %v5314 = vor.u32 %v5313, %v5309
      %v5315 = vrot.slane %v5314, 4
      %v5317 = vshll.u32 %v4957, 16
      %v5319 = vrot.slane %v5317, 5
      %v5320 = vsel %vm1423, %v5315, %v5319
      %v5322 = vshrl.u32 %v4958, 16
      %v5324 = vrot.slane %v5322, 4
      %v5325 = vshll.u32 %v4958, 16
      %v5327 = vrot.slane %v5325, 5
      %v5328 = vor.u32 %v5324, %v5327
      %v5329 = vrot.slane %v5328, 4
      %v5331 = vshll.u32 %v4959, 16
      %v5333 = vrot.slane %v5331, 5
      %v5334 = vsel %vm1423, %v5329, %v5333
      %v5335 = vshrl.u32 %v4959, 16
      %v5337 = vrot.slane %v5335, 4
      %v5338 = vor.u32 %v5337, %v5333
      %v5339 = vrot.slane %v5338, 4
      %v5341 = vshll.u32 %v4960, 16
      %v5343 = vrot.slane %v5341, 5
      %v5344 = vsel %vm1423, %v5339, %v5343
      %s5345 = scalar_lea.vmem %s425, 448
      %v5346 = vld [vmem:[%s5345] sm:$0xf]
      %v5347 = vld [vmem:[%s5345 + $0x4] sm:$0xf]
      %v5348 = vld [vmem:[%s5345 + $0x8] sm:$0xf]
      %v5349 = vld [vmem:[%s5345 + $0xc] sm:$0xf]
      %v5350 = vld [vmem:[%s5345 + $0x10] sm:$0xf]
      %v5351 = vld [vmem:[%s5345 + $0x14] sm:$0xf]
      %v5352 = vld [vmem:[%s5345 + $0x18] sm:$0xf]
      %v5353 = vld [vmem:[%s5345 + $0x1c] sm:$0xf]
      %v5354 = vld [vmem:[%s5345 + $0x20] sm:$0xf]
      %v5355 = vld [vmem:[%s5345 + $0x24] sm:$0xf]
      %v5356 = vld [vmem:[%s5345 + $0x28] sm:$0xf]
      %v5357 = vld [vmem:[%s5345 + $0x2c] sm:$0xf]
      %v5358 = vld [vmem:[%s5345 + $0x30] sm:$0xf]
      %v5359 = vld [vmem:[%s5345 + $0x34] sm:$0xf]
      %v5360 = vld [vmem:[%s5345 + $0x38] sm:$0xf]
      %v5361 = vld [vmem:[%s5345 + $0x3c] sm:$0xf]
      %v5362 = vunpack.c.l.b16 %v4974
      %v5363 = vunpack.c.l.b16 %v4984
      %v5364 = vunpack.c.l.b16 %v4998
      %v5365 = vunpack.c.l.b16 %v5008
      %v5366 = vunpack.c.l.b16 %v5022
      %v5367 = vunpack.c.l.b16 %v5032
      %v5368 = vunpack.c.l.b16 %v5046
      %v5369 = vunpack.c.l.b16 %v5056
      %v5370 = vunpack.c.l.b16 %v5070
      %v5371 = vunpack.c.l.b16 %v5080
      %v5372 = vunpack.c.l.b16 %v5094
      %v5373 = vunpack.c.l.b16 %v5104
      %v5374 = vunpack.c.l.b16 %v5118
      %v5375 = vunpack.c.l.b16 %v5128
      %v5376 = vunpack.c.l.b16 %v5142
      %v5377 = vunpack.c.l.b16 %v5152
      %v5378 = vunpack.c.l.b16 %v5166
      %v5379 = vunpack.c.l.b16 %v5176
      %v5380 = vunpack.c.l.b16 %v5190
      %v5381 = vunpack.c.l.b16 %v5200
      %v5382 = vunpack.c.l.b16 %v5214
      %v5383 = vunpack.c.l.b16 %v5224
      %v5384 = vunpack.c.l.b16 %v5238
      %v5385 = vunpack.c.l.b16 %v5248
      %v5386 = vunpack.c.l.b16 %v5262
      %v5387 = vunpack.c.l.b16 %v5272
      %v5388 = vunpack.c.l.b16 %v5286
      %v5389 = vunpack.c.l.b16 %v5296
      %v5390 = vunpack.c.l.b16 %v5310
      %v5391 = vunpack.c.l.b16 %v5320
      %v5392 = vunpack.c.l.b16 %v5334
      %v5393 = vunpack.c.l.b16 %v5344
      %v5394 = vpack.c.b16 %v5363, %v5362
      %v5395 = vpack.c.b16 %v5365, %v5364
      %v5396 = vpack.c.b16 %v5367, %v5366
      %v5397 = vpack.c.b16 %v5369, %v5368
      %v5398 = vpack.c.b16 %v5371, %v5370
      %v5399 = vpack.c.b16 %v5373, %v5372
      %v5400 = vpack.c.b16 %v5375, %v5374
      %v5401 = vpack.c.b16 %v5377, %v5376
      %v5402 = vpack.c.b16 %v5379, %v5378
      %v5403 = vpack.c.b16 %v5381, %v5380
      %v5404 = vpack.c.b16 %v5383, %v5382
      %v5405 = vpack.c.b16 %v5385, %v5384
      %v5406 = vpack.c.b16 %v5387, %v5386
      %v5407 = vpack.c.b16 %v5389, %v5388
      %v5408 = vpack.c.b16 %v5391, %v5390
      %v5409 = vpack.c.b16 %v5393, %v5392
      %v5442 = vunpack.c.l.b16 %v5346
      %v5443 = vunpack.c.l.b16 %v5347
      %v5444 = vunpack.c.l.b16 %v5348
      %v5445 = vunpack.c.l.b16 %v5349
      %v5446 = vunpack.c.l.b16 %v5350
      %v5447 = vunpack.c.l.b16 %v5351
      %v5448 = vunpack.c.l.b16 %v5352
      %v5449 = vunpack.c.l.b16 %v5353
      %v5450 = vunpack.c.l.b16 %v5354
      %v5451 = vunpack.c.l.b16 %v5355
      %v5452 = vunpack.c.l.b16 %v5356
      %v5453 = vunpack.c.l.b16 %v5357
      %v5454 = vunpack.c.l.b16 %v5358
      %v5455 = vunpack.c.l.b16 %v5359
      %v5456 = vunpack.c.l.b16 %v5360
      %v5457 = vunpack.c.l.b16 %v5361
      %v5458 = vpack.c.b16 %v5443, %v5442
      %v5459 = vpack.c.b16 %v5445, %v5444
      %v5460 = vpack.c.b16 %v5447, %v5446
      %v5461 = vpack.c.b16 %v5449, %v5448
      %v5462 = vpack.c.b16 %v5451, %v5450
      %v5463 = vpack.c.b16 %v5453, %v5452
      %v5464 = vpack.c.b16 %v5455, %v5454
      %v5465 = vpack.c.b16 %v5457, %v5456
      %5474 = vmatprep.subr.bf16.mxu0 0
      %5475 = vmatpush1.bf16.msra.mxu0 %v5465
      %5476 = vmatprep.subr.bf16.mxu0 0
      %5477 = vmatpush1.bf16.msra.mxu0 %v5464
      %5478 = vmatprep.subr.bf16.mxu0 0
      %5479 = vmatpush1.bf16.msra.mxu0 %v5463
      %5480 = vmatprep.subr.bf16.mxu0 0
      %5481 = vmatpush1.bf16.msra.mxu0 %v5462
      %5482 = vmatprep.subr.bf16.mxu0 0
      %5483 = vmatpush1.bf16.msra.mxu0 %v5461
      %5484 = vmatprep.subr.bf16.mxu0 0
      %5485 = vmatpush1.bf16.msra.mxu0 %v5460
      %5486 = vmatprep.subr.bf16.mxu0 0
      %5487 = vmatpush1.bf16.msra.mxu0 %v5459
      %5488 = vmatprep.subr.bf16.mxu0 0
      %5489 = vmatpush1.bf16.msra.mxu0 %v5458
      %5490 = vmatprep.subr.bf16.mxu0 0
      %5491 = vmatpush2.bf16.msra.mxu0 0
      %5492 = vmatprep.subr.bf16.mxu0 0
      %5493 = vmatpush2.bf16.msra.mxu0 0
      %5494 = vmatprep.subr.bf16.mxu0 0
      %5495 = vmatpush2.bf16.msra.mxu0 0
      %5496 = vmatprep.subr.bf16.mxu0 0
      %5497 = vmatpush2.bf16.msra.mxu0 0
      %5498 = vmatprep.subr.bf16.mxu0 0
      %5499 = vmatpush2.bf16.msra.mxu0 0
      %5500 = vmatprep.subr.bf16.mxu0 0
      %5501 = vmatpush2.bf16.msra.mxu0 0
      %5502 = vmatprep.subr.bf16.mxu0 0
      %5503 = vmatpush2.bf16.msra.mxu0 0
      %5504 = vmatprep.subr.bf16.mxu0 0
      %5505 = vmatpush2.bf16.msra.mxu0 0
      %5506 = vmatprep.mubr.bf16.mxu0 0
      %5507 = vmatmul.mubr.bf16.gmra.mxu0 %v5394
      %v5508 = vpop.f32.mrf.mxu0
      %v5509 = vadd.f32 0.0, %v5508
      %v5510 = vpop.f32.mrf.mxu0
      %v5511 = vpop.f32.mrf.mxu0
      %v5512 = vadd.f32 0.0, %v5511
      %v5513 = vpop.f32.mrf.mxu0
      %5514 = vmatprep.mubr.bf16.mxu0 0
      %5515 = vmatmul.mubr.bf16.gmra.mxu0 %v5395
      %v5516 = vpop.f32.mrf.mxu0
      %v5517 = vadd.f32 0.0, %v5516
      %v5518 = vpop.f32.mrf.mxu0
      %v5519 = vpop.f32.mrf.mxu0
      %v5520 = vadd.f32 0.0, %v5519
      %v5521 = vpop.f32.mrf.mxu0
      %5522 = vmatprep.mubr.bf16.mxu0 0
      %5523 = vmatmul.mubr.bf16.gmra.mxu0 %v5396
      %v5524 = vpop.f32.mrf.mxu0
      %v5525 = vadd.f32 0.0, %v5524
      %v5526 = vpop.f32.mrf.mxu0
      %v5527 = vpop.f32.mrf.mxu0
      %v5528 = vadd.f32 0.0, %v5527
      %v5529 = vpop.f32.mrf.mxu0
      %5530 = vmatprep.mubr.bf16.mxu0 0
      %5531 = vmatmul.mubr.bf16.gmra.mxu0 %v5397
      %v5532 = vpop.f32.mrf.mxu0
      %v5533 = vadd.f32 0.0, %v5532
      %v5534 = vpop.f32.mrf.mxu0
      %v5535 = vpop.f32.mrf.mxu0
      %v5536 = vadd.f32 0.0, %v5535
      %v5537 = vpop.f32.mrf.mxu0
      %5538 = vmatprep.mubr.bf16.mxu0 0
      %5539 = vmatmul.mubr.bf16.gmra.mxu0 %v5398
      %v5540 = vpop.f32.mrf.mxu0
      %v5541 = vadd.f32 0.0, %v5540
      %v5542 = vpop.f32.mrf.mxu0
      %v5543 = vpop.f32.mrf.mxu0
      %v5544 = vadd.f32 0.0, %v5543
      %v5545 = vpop.f32.mrf.mxu0
      %5546 = vmatprep.mubr.bf16.mxu0 0
      %5547 = vmatmul.mubr.bf16.gmra.mxu0 %v5399
      %v5548 = vpop.f32.mrf.mxu0
      %v5549 = vadd.f32 0.0, %v5548
      %v5550 = vpop.f32.mrf.mxu0
      %v5551 = vpop.f32.mrf.mxu0
      %v5552 = vadd.f32 0.0, %v5551
      %v5553 = vpop.f32.mrf.mxu0
      %5554 = vmatprep.mubr.bf16.mxu0 0
      %5555 = vmatmul.mubr.bf16.gmra.mxu0 %v5400
      %v5556 = vpop.f32.mrf.mxu0
      %v5557 = vadd.f32 0.0, %v5556
      %v5558 = vpop.f32.mrf.mxu0
      %v5559 = vpop.f32.mrf.mxu0
      %v5560 = vadd.f32 0.0, %v5559
      %v5561 = vpop.f32.mrf.mxu0
      %5562 = vmatprep.mubr.bf16.mxu0 0
      %5563 = vmatmul.mubr.bf16.gmra.mxu0 %v5401
      %v5564 = vpop.f32.mrf.mxu0
      %v5565 = vadd.f32 0.0, %v5564
      %v5566 = vpop.f32.mrf.mxu0
      %v5567 = vpop.f32.mrf.mxu0
      %v5568 = vadd.f32 0.0, %v5567
      %v5569 = vpop.f32.mrf.mxu0
      %5570 = vmatprep.mubr.bf16.mxu0 0
      %5571 = vmatmul.mubr.bf16.gmra.mxu0 %v5402
      %v5572 = vpop.f32.mrf.mxu0
      %v5573 = vadd.f32 0.0, %v5572
      %v5574 = vpop.f32.mrf.mxu0
      %v5575 = vpop.f32.mrf.mxu0
      %v5576 = vadd.f32 0.0, %v5575
      %v5577 = vpop.f32.mrf.mxu0
      %5578 = vmatprep.mubr.bf16.mxu0 0
      %5579 = vmatmul.mubr.bf16.gmra.mxu0 %v5403
      %v5580 = vpop.f32.mrf.mxu0
      %v5581 = vadd.f32 0.0, %v5580
      %v5582 = vpop.f32.mrf.mxu0
      %v5583 = vpop.f32.mrf.mxu0
      %v5584 = vadd.f32 0.0, %v5583
      %v5585 = vpop.f32.mrf.mxu0
      %5586 = vmatprep.mubr.bf16.mxu0 0
      %5587 = vmatmul.mubr.bf16.gmra.mxu0 %v5404
      %v5588 = vpop.f32.mrf.mxu0
      %v5589 = vadd.f32 0.0, %v5588
      %v5590 = vpop.f32.mrf.mxu0
      %v5591 = vpop.f32.mrf.mxu0
      %v5592 = vadd.f32 0.0, %v5591
      %v5593 = vpop.f32.mrf.mxu0
      %5594 = vmatprep.mubr.bf16.mxu0 0
      %5595 = vmatmul.mubr.bf16.gmra.mxu0 %v5405
      %v5596 = vpop.f32.mrf.mxu0
      %v5597 = vadd.f32 0.0, %v5596
      %v5598 = vpop.f32.mrf.mxu0
      %v5599 = vpop.f32.mrf.mxu0
      %v5600 = vadd.f32 0.0, %v5599
      %v5601 = vpop.f32.mrf.mxu0
      %5602 = vmatprep.mubr.bf16.mxu0 0
      %5603 = vmatmul.mubr.bf16.gmra.mxu0 %v5406
      %v5604 = vpop.f32.mrf.mxu0
      %v5605 = vadd.f32 0.0, %v5604
      %v5606 = vpop.f32.mrf.mxu0
      %v5607 = vpop.f32.mrf.mxu0
      %v5608 = vadd.f32 0.0, %v5607
      %v5609 = vpop.f32.mrf.mxu0
      %5610 = vmatprep.mubr.bf16.mxu0 0
      %5611 = vmatmul.mubr.bf16.gmra.mxu0 %v5407
      %v5612 = vpop.f32.mrf.mxu0
      %v5613 = vadd.f32 0.0, %v5612
      %v5614 = vpop.f32.mrf.mxu0
      %v5615 = vpop.f32.mrf.mxu0
      %v5616 = vadd.f32 0.0, %v5615
      %v5617 = vpop.f32.mrf.mxu0
      %5618 = vmatprep.mubr.bf16.mxu0 0
      %5619 = vmatmul.mubr.bf16.gmra.mxu0 %v5408
      %v5620 = vpop.f32.mrf.mxu0
      %v5621 = vadd.f32 0.0, %v5620
      %v5622 = vpop.f32.mrf.mxu0
      %v5623 = vpop.f32.mrf.mxu0
      %v5624 = vadd.f32 0.0, %v5623
      %v5625 = vpop.f32.mrf.mxu0
      %5626 = vmatprep.mubr.bf16.mxu0 0
      %5627 = vmatmul.mubr.bf16.gmra.mxu0 %v5409
      %v5628 = vpop.f32.mrf.mxu0
      %v5629 = vadd.f32 0.0, %v5628
      %v5630 = vpop.f32.mrf.mxu0
      %v5631 = vpop.f32.mrf.mxu0
      %v5632 = vadd.f32 0.0, %v5631
      %v5633 = vpop.f32.mrf.mxu0
      %5634 = vdwg.mxu0
      %v5635 = vadd.f32 %v4881, %v5509
      %v5636 = vadd.f32 %v4882, %v5512
      %v5637 = vadd.f32 %v4883, %v5517
      %v5638 = vadd.f32 %v4884, %v5520
      %v5639 = vadd.f32 %v4885, %v5525
      %v5640 = vadd.f32 %v4886, %v5528
      %v5641 = vadd.f32 %v4887, %v5533
      %v5642 = vadd.f32 %v4888, %v5536
      %v5643 = vadd.f32 %v4889, %v5541
      %v5644 = vadd.f32 %v4890, %v5544
      %v5645 = vadd.f32 %v4891, %v5549
      %v5646 = vadd.f32 %v4892, %v5552
      %v5647 = vadd.f32 %v4893, %v5557
      %v5648 = vadd.f32 %v4894, %v5560
      %v5649 = vadd.f32 %v4895, %v5565
      %v5650 = vadd.f32 %v4896, %v5568
      %v5651 = vadd.f32 %v4897, %v5573
      %v5652 = vadd.f32 %v4898, %v5576
      %v5653 = vadd.f32 %v4899, %v5581
      %v5654 = vadd.f32 %v4900, %v5584
      %v5655 = vadd.f32 %v4901, %v5589
      %v5656 = vadd.f32 %v4902, %v5592
      %v5657 = vadd.f32 %v4903, %v5597
      %v5658 = vadd.f32 %v4904, %v5600
      %v5659 = vadd.f32 %v4905, %v5605
      %v5660 = vadd.f32 %v4906, %v5608
      %v5661 = vadd.f32 %v4907, %v5613
      %v5662 = vadd.f32 %v4908, %v5616
      %v5663 = vadd.f32 %v4909, %v5621
      %v5664 = vadd.f32 %v4910, %v5624
      %v5665 = vadd.f32 %v4911, %v5629
      %v5666 = vadd.f32 %v4912, %v5632
      %v5667 = vld [vmem:[%s4526] sm:$0xe]
      %v5668 = vld [vmem:[%s4526 + $0xc] sm:$0xe]
      %v5669 = vld [vmem:[%s4526 + $0x18] sm:$0xe]
      %v5670 = vld [vmem:[%s4526 + $0x24] sm:$0xe]
      %v5671 = vld [vmem:[%s4526 + $0x30] sm:$0xe]
      %v5672 = vld [vmem:[%s4526 + $0x3c] sm:$0xe]
      %v5673 = vld [vmem:[%s4526 + $0x48] sm:$0xe]
      %v5674 = vld [vmem:[%s4526 + $0x54] sm:$0xe]
      %v5675 = vld [vmem:[%s4526 + $0x60] sm:$0xe]
      %v5676 = vld [vmem:[%s4526 + $0x6c] sm:$0xe]
      %v5677 = vld [vmem:[%s4526 + $0x78] sm:$0xe]
      %v5678 = vld [vmem:[%s4526 + $0x84] sm:$0xe]
      %v5679 = vld [vmem:[%s4526 + $0x90] sm:$0xe]
      %v5680 = vld [vmem:[%s4526 + $0x9c] sm:$0xe]
      %v5681 = vld [vmem:[%s4526 + $0xa8] sm:$0xe]
      %v5682 = vld [vmem:[%s4526 + $0xb4] sm:$0xe]
      %v5731 = vrot.slane %v5667, 5
      %v5732 = vrot.slane %v5731, 4
      %v5733 = vrot.slane %v4914, 5
      %v5734 = vsel %vm2453, %v5732, %v5733
      %v5735 = vrot.slane %v5733, 4
      %v5736 = vrot.slane %v4915, 5
      %v5737 = vsel %vm2453, %v5735, %v5736
      %v5738 = vrot.slane %v5668, 5
      %v5739 = vrot.slane %v5738, 4
      %v5740 = vrot.slane %v4917, 5
      %v5741 = vsel %vm2453, %v5739, %v5740
      %v5742 = vrot.slane %v5740, 4
      %v5743 = vrot.slane %v4918, 5
      %v5744 = vsel %vm2453, %v5742, %v5743
      %v5745 = vrot.slane %v5669, 5
      %v5746 = vrot.slane %v5745, 4
      %v5747 = vrot.slane %v4920, 5
      %v5748 = vsel %vm2453, %v5746, %v5747
      %v5749 = vrot.slane %v5747, 4
      %v5750 = vrot.slane %v4921, 5
      %v5751 = vsel %vm2453, %v5749, %v5750
      %v5752 = vrot.slane %v5670, 5
      %v5753 = vrot.slane %v5752, 4
      %v5754 = vrot.slane %v4923, 5
      %v5755 = vsel %vm2453, %v5753, %v5754
      %v5756 = vrot.slane %v5754, 4
      %v5757 = vrot.slane %v4924, 5
      %v5758 = vsel %vm2453, %v5756, %v5757
      %v5759 = vrot.slane %v5671, 5
      %v5760 = vrot.slane %v5759, 4
      %v5761 = vrot.slane %v4926, 5
      %v5762 = vsel %vm2453, %v5760, %v5761
      %v5763 = vrot.slane %v5761, 4
      %v5764 = vrot.slane %v4927, 5
      %v5765 = vsel %vm2453, %v5763, %v5764
      %v5766 = vrot.slane %v5672, 5
      %v5767 = vrot.slane %v5766, 4
      %v5768 = vrot.slane %v4929, 5
      %v5769 = vsel %vm2453, %v5767, %v5768
      %v5770 = vrot.slane %v5768, 4
      %v5771 = vrot.slane %v4930, 5
      %v5772 = vsel %vm2453, %v5770, %v5771
      %v5773 = vrot.slane %v5673, 5
      %v5774 = vrot.slane %v5773, 4
      %v5775 = vrot.slane %v4932, 5
      %v5776 = vsel %vm2453, %v5774, %v5775
      %v5777 = vrot.slane %v5775, 4
      %v5778 = vrot.slane %v4933, 5
      %v5779 = vsel %vm2453, %v5777, %v5778
      %v5780 = vrot.slane %v5674, 5
      %v5781 = vrot.slane %v5780, 4
      %v5782 = vrot.slane %v4935, 5
      %v5783 = vsel %vm2453, %v5781, %v5782
      %v5784 = vrot.slane %v5782, 4
      %v5785 = vrot.slane %v4936, 5
      %v5786 = vsel %vm2453, %v5784, %v5785
      %v5787 = vrot.slane %v5675, 5
      %v5788 = vrot.slane %v5787, 4
      %v5789 = vrot.slane %v4938, 5
      %v5790 = vsel %vm2453, %v5788, %v5789
      %v5791 = vrot.slane %v5789, 4
      %v5792 = vrot.slane %v4939, 5
      %v5793 = vsel %vm2453, %v5791, %v5792
      %v5794 = vrot.slane %v5676, 5
      %v5795 = vrot.slane %v5794, 4
      %v5796 = vrot.slane %v4941, 5
      %v5797 = vsel %vm2453, %v5795, %v5796
      %v5798 = vrot.slane %v5796, 4
      %v5799 = vrot.slane %v4942, 5
      %v5800 = vsel %vm2453, %v5798, %v5799
      %v5801 = vrot.slane %v5677, 5
      %v5802 = vrot.slane %v5801, 4
      %v5803 = vrot.slane %v4944, 5
      %v5804 = vsel %vm2453, %v5802, %v5803
      %v5805 = vrot.slane %v5803, 4
      %v5806 = vrot.slane %v4945, 5
      %v5807 = vsel %vm2453, %v5805, %v5806
      %v5808 = vrot.slane %v5678, 5
      %v5809 = vrot.slane %v5808, 4
      %v5810 = vrot.slane %v4947, 5
      %v5811 = vsel %vm2453, %v5809, %v5810
      %v5812 = vrot.slane %v5810, 4
      %v5813 = vrot.slane %v4948, 5
      %v5814 = vsel %vm2453, %v5812, %v5813
      %v5815 = vrot.slane %v5679, 5
      %v5816 = vrot.slane %v5815, 4
      %v5817 = vrot.slane %v4950, 5
      %v5818 = vsel %vm2453, %v5816, %v5817
      %v5819 = vrot.slane %v5817, 4
      %v5820 = vrot.slane %v4951, 5
      %v5821 = vsel %vm2453, %v5819, %v5820
      %v5822 = vrot.slane %v5680, 5
      %v5823 = vrot.slane %v5822, 4
      %v5824 = vrot.slane %v4953, 5
      %v5825 = vsel %vm2453, %v5823, %v5824
      %v5826 = vrot.slane %v5824, 4
      %v5827 = vrot.slane %v4954, 5
      %v5828 = vsel %vm2453, %v5826, %v5827
      %v5829 = vrot.slane %v5681, 5
      %v5830 = vrot.slane %v5829, 4
      %v5831 = vrot.slane %v4956, 5
      %v5832 = vsel %vm2453, %v5830, %v5831
      %v5833 = vrot.slane %v5831, 4
      %v5834 = vrot.slane %v4957, 5
      %v5835 = vsel %vm2453, %v5833, %v5834
      %v5836 = vrot.slane %v5682, 5
      %v5837 = vrot.slane %v5836, 4
      %v5838 = vrot.slane %v4959, 5
      %v5839 = vsel %vm2453, %v5837, %v5838
      %v5840 = vrot.slane %v5838, 4
      %v5841 = vrot.slane %v4960, 5
      %v5842 = vsel %vm2453, %v5840, %v5841
      %s5843 = scalar_lea.vmem %s425, 512
      %v5844 = vld [vmem:[%s5843] sm:$0xf]
      %v5845 = vld [vmem:[%s5843 + $0x4] sm:$0xf]
      %v5846 = vld [vmem:[%s5843 + $0x8] sm:$0xf]
      %v5847 = vld [vmem:[%s5843 + $0xc] sm:$0xf]
      %v5848 = vld [vmem:[%s5843 + $0x10] sm:$0xf]
      %v5849 = vld [vmem:[%s5843 + $0x14] sm:$0xf]
      %v5850 = vld [vmem:[%s5843 + $0x18] sm:$0xf]
      %v5851 = vld [vmem:[%s5843 + $0x1c] sm:$0xf]
      %v5852 = vld [vmem:[%s5843 + $0x20] sm:$0xf]
      %v5853 = vld [vmem:[%s5843 + $0x24] sm:$0xf]
      %v5854 = vld [vmem:[%s5843 + $0x28] sm:$0xf]
      %v5855 = vld [vmem:[%s5843 + $0x2c] sm:$0xf]
      %v5856 = vld [vmem:[%s5843 + $0x30] sm:$0xf]
      %v5857 = vld [vmem:[%s5843 + $0x34] sm:$0xf]
      %v5858 = vld [vmem:[%s5843 + $0x38] sm:$0xf]
      %v5859 = vld [vmem:[%s5843 + $0x3c] sm:$0xf]
      %v5860 = vunpack.c.l.b16 %v5734
      %v5861 = vunpack.c.l.b16 %v5737
      %v5862 = vunpack.c.l.b16 %v5741
      %v5863 = vunpack.c.l.b16 %v5744
      %v5864 = vunpack.c.l.b16 %v5748
      %v5865 = vunpack.c.l.b16 %v5751
      %v5866 = vunpack.c.l.b16 %v5755
      %v5867 = vunpack.c.l.b16 %v5758
      %v5868 = vunpack.c.l.b16 %v5762
      %v5869 = vunpack.c.l.b16 %v5765
      %v5870 = vunpack.c.l.b16 %v5769
      %v5871 = vunpack.c.l.b16 %v5772
      %v5872 = vunpack.c.l.b16 %v5776
      %v5873 = vunpack.c.l.b16 %v5779
      %v5874 = vunpack.c.l.b16 %v5783
      %v5875 = vunpack.c.l.b16 %v5786
      %v5876 = vunpack.c.l.b16 %v5790
      %v5877 = vunpack.c.l.b16 %v5793
      %v5878 = vunpack.c.l.b16 %v5797
      %v5879 = vunpack.c.l.b16 %v5800
      %v5880 = vunpack.c.l.b16 %v5804
      %v5881 = vunpack.c.l.b16 %v5807
      %v5882 = vunpack.c.l.b16 %v5811
      %v5883 = vunpack.c.l.b16 %v5814
      %v5884 = vunpack.c.l.b16 %v5818
      %v5885 = vunpack.c.l.b16 %v5821
      %v5886 = vunpack.c.l.b16 %v5825
      %v5887 = vunpack.c.l.b16 %v5828
      %v5888 = vunpack.c.l.b16 %v5832
      %v5889 = vunpack.c.l.b16 %v5835
      %v5890 = vunpack.c.l.b16 %v5839
      %v5891 = vunpack.c.l.b16 %v5842
      %v5892 = vpack.c.b16 %v5861, %v5860
      %v5893 = vpack.c.b16 %v5863, %v5862
      %v5894 = vpack.c.b16 %v5865, %v5864
      %v5895 = vpack.c.b16 %v5867, %v5866
      %v5896 = vpack.c.b16 %v5869, %v5868
      %v5897 = vpack.c.b16 %v5871, %v5870
      %v5898 = vpack.c.b16 %v5873, %v5872
      %v5899 = vpack.c.b16 %v5875, %v5874
      %v5900 = vpack.c.b16 %v5877, %v5876
      %v5901 = vpack.c.b16 %v5879, %v5878
      %v5902 = vpack.c.b16 %v5881, %v5880
      %v5903 = vpack.c.b16 %v5883, %v5882
      %v5904 = vpack.c.b16 %v5885, %v5884
      %v5905 = vpack.c.b16 %v5887, %v5886
      %v5906 = vpack.c.b16 %v5889, %v5888
      %v5907 = vpack.c.b16 %v5891, %v5890
      %v5940 = vunpack.c.l.b16 %v5844
      %v5941 = vunpack.c.l.b16 %v5845
      %v5942 = vunpack.c.l.b16 %v5846
      %v5943 = vunpack.c.l.b16 %v5847
      %v5944 = vunpack.c.l.b16 %v5848
      %v5945 = vunpack.c.l.b16 %v5849
      %v5946 = vunpack.c.l.b16 %v5850
      %v5947 = vunpack.c.l.b16 %v5851
      %v5948 = vunpack.c.l.b16 %v5852
      %v5949 = vunpack.c.l.b16 %v5853
      %v5950 = vunpack.c.l.b16 %v5854
      %v5951 = vunpack.c.l.b16 %v5855
      %v5952 = vunpack.c.l.b16 %v5856
      %v5953 = vunpack.c.l.b16 %v5857
      %v5954 = vunpack.c.l.b16 %v5858
      %v5955 = vunpack.c.l.b16 %v5859
      %v5956 = vpack.c.b16 %v5941, %v5940
      %v5957 = vpack.c.b16 %v5943, %v5942
      %v5958 = vpack.c.b16 %v5945, %v5944
      %v5959 = vpack.c.b16 %v5947, %v5946
      %v5960 = vpack.c.b16 %v5949, %v5948
      %v5961 = vpack.c.b16 %v5951, %v5950
      %v5962 = vpack.c.b16 %v5953, %v5952
      %v5963 = vpack.c.b16 %v5955, %v5954
      %5972 = vmatprep.subr.bf16.mxu0 0
      %5973 = vmatpush1.bf16.msra.mxu0 %v5963
      %5974 = vmatprep.subr.bf16.mxu0 0
      %5975 = vmatpush1.bf16.msra.mxu0 %v5962
      %5976 = vmatprep.subr.bf16.mxu0 0
      %5977 = vmatpush1.bf16.msra.mxu0 %v5961
      %5978 = vmatprep.subr.bf16.mxu0 0
      %5979 = vmatpush1.bf16.msra.mxu0 %v5960
      %5980 = vmatprep.subr.bf16.mxu0 0
      %5981 = vmatpush1.bf16.msra.mxu0 %v5959
      %5982 = vmatprep.subr.bf16.mxu0 0
      %5983 = vmatpush1.bf16.msra.mxu0 %v5958
      %5984 = vmatprep.subr.bf16.mxu0 0
      %5985 = vmatpush1.bf16.msra.mxu0 %v5957
      %5986 = vmatprep.subr.bf16.mxu0 0
      %5987 = vmatpush1.bf16.msra.mxu0 %v5956
      %5988 = vmatprep.subr.bf16.mxu0 0
      %5989 = vmatpush2.bf16.msra.mxu0 0
      %5990 = vmatprep.subr.bf16.mxu0 0
      %5991 = vmatpush2.bf16.msra.mxu0 0
      %5992 = vmatprep.subr.bf16.mxu0 0
      %5993 = vmatpush2.bf16.msra.mxu0 0
      %5994 = vmatprep.subr.bf16.mxu0 0
      %5995 = vmatpush2.bf16.msra.mxu0 0
      %5996 = vmatprep.subr.bf16.mxu0 0
      %5997 = vmatpush2.bf16.msra.mxu0 0
      %5998 = vmatprep.subr.bf16.mxu0 0
      %5999 = vmatpush2.bf16.msra.mxu0 0
      %6000 = vmatprep.subr.bf16.mxu0 0
      %6001 = vmatpush2.bf16.msra.mxu0 0
      %6002 = vmatprep.subr.bf16.mxu0 0
      %6003 = vmatpush2.bf16.msra.mxu0 0
      %6004 = vmatprep.mubr.bf16.mxu0 0
      %6005 = vmatmul.mubr.bf16.gmra.mxu0 %v5892
      %v6006 = vpop.f32.mrf.mxu0
      %v6007 = vadd.f32 0.0, %v6006
      %v6008 = vpop.f32.mrf.mxu0
      %v6009 = vpop.f32.mrf.mxu0
      %v6010 = vadd.f32 0.0, %v6009
      %v6011 = vpop.f32.mrf.mxu0
      %6012 = vmatprep.mubr.bf16.mxu0 0
      %6013 = vmatmul.mubr.bf16.gmra.mxu0 %v5893
      %v6014 = vpop.f32.mrf.mxu0
      %v6015 = vadd.f32 0.0, %v6014
      %v6016 = vpop.f32.mrf.mxu0
      %v6017 = vpop.f32.mrf.mxu0
      %v6018 = vadd.f32 0.0, %v6017
      %v6019 = vpop.f32.mrf.mxu0
      %6020 = vmatprep.mubr.bf16.mxu0 0
      %6021 = vmatmul.mubr.bf16.gmra.mxu0 %v5894
      %v6022 = vpop.f32.mrf.mxu0
      %v6023 = vadd.f32 0.0, %v6022
      %v6024 = vpop.f32.mrf.mxu0
      %v6025 = vpop.f32.mrf.mxu0
      %v6026 = vadd.f32 0.0, %v6025
      %v6027 = vpop.f32.mrf.mxu0
      %6028 = vmatprep.mubr.bf16.mxu0 0
      %6029 = vmatmul.mubr.bf16.gmra.mxu0 %v5895
      %v6030 = vpop.f32.mrf.mxu0
      %v6031 = vadd.f32 0.0, %v6030
      %v6032 = vpop.f32.mrf.mxu0
      %v6033 = vpop.f32.mrf.mxu0
      %v6034 = vadd.f32 0.0, %v6033
      %v6035 = vpop.f32.mrf.mxu0
      %6036 = vmatprep.mubr.bf16.mxu0 0
      %6037 = vmatmul.mubr.bf16.gmra.mxu0 %v5896
      %v6038 = vpop.f32.mrf.mxu0
      %v6039 = vadd.f32 0.0, %v6038
      %v6040 = vpop.f32.mrf.mxu0
      %v6041 = vpop.f32.mrf.mxu0
      %v6042 = vadd.f32 0.0, %v6041
      %v6043 = vpop.f32.mrf.mxu0
      %6044 = vmatprep.mubr.bf16.mxu0 0
      %6045 = vmatmul.mubr.bf16.gmra.mxu0 %v5897
      %v6046 = vpop.f32.mrf.mxu0
      %v6047 = vadd.f32 0.0, %v6046
      %v6048 = vpop.f32.mrf.mxu0
      %v6049 = vpop.f32.mrf.mxu0
      %v6050 = vadd.f32 0.0, %v6049
      %v6051 = vpop.f32.mrf.mxu0
      %6052 = vmatprep.mubr.bf16.mxu0 0
      %6053 = vmatmul.mubr.bf16.gmra.mxu0 %v5898
      %v6054 = vpop.f32.mrf.mxu0
      %v6055 = vadd.f32 0.0, %v6054
      %v6056 = vpop.f32.mrf.mxu0
      %v6057 = vpop.f32.mrf.mxu0
      %v6058 = vadd.f32 0.0, %v6057
      %v6059 = vpop.f32.mrf.mxu0
      %6060 = vmatprep.mubr.bf16.mxu0 0
      %6061 = vmatmul.mubr.bf16.gmra.mxu0 %v5899
      %v6062 = vpop.f32.mrf.mxu0
      %v6063 = vadd.f32 0.0, %v6062
      %v6064 = vpop.f32.mrf.mxu0
      %v6065 = vpop.f32.mrf.mxu0
      %v6066 = vadd.f32 0.0, %v6065
      %v6067 = vpop.f32.mrf.mxu0
      %6068 = vmatprep.mubr.bf16.mxu0 0
      %6069 = vmatmul.mubr.bf16.gmra.mxu0 %v5900
      %v6070 = vpop.f32.mrf.mxu0
      %v6071 = vadd.f32 0.0, %v6070
      %v6072 = vpop.f32.mrf.mxu0
      %v6073 = vpop.f32.mrf.mxu0
      %v6074 = vadd.f32 0.0, %v6073
      %v6075 = vpop.f32.mrf.mxu0
      %6076 = vmatprep.mubr.bf16.mxu0 0
      %6077 = vmatmul.mubr.bf16.gmra.mxu0 %v5901
      %v6078 = vpop.f32.mrf.mxu0
      %v6079 = vadd.f32 0.0, %v6078
      %v6080 = vpop.f32.mrf.mxu0
      %v6081 = vpop.f32.mrf.mxu0
      %v6082 = vadd.f32 0.0, %v6081
      %v6083 = vpop.f32.mrf.mxu0
      %6084 = vmatprep.mubr.bf16.mxu0 0
      %6085 = vmatmul.mubr.bf16.gmra.mxu0 %v5902
      %v6086 = vpop.f32.mrf.mxu0
      %v6087 = vadd.f32 0.0, %v6086
      %v6088 = vpop.f32.mrf.mxu0
      %v6089 = vpop.f32.mrf.mxu0
      %v6090 = vadd.f32 0.0, %v6089
      %v6091 = vpop.f32.mrf.mxu0
      %6092 = vmatprep.mubr.bf16.mxu0 0
      %6093 = vmatmul.mubr.bf16.gmra.mxu0 %v5903
      %v6094 = vpop.f32.mrf.mxu0
      %v6095 = vadd.f32 0.0, %v6094
      %v6096 = vpop.f32.mrf.mxu0
      %v6097 = vpop.f32.mrf.mxu0
      %v6098 = vadd.f32 0.0, %v6097
      %v6099 = vpop.f32.mrf.mxu0
      %6100 = vmatprep.mubr.bf16.mxu0 0
      %6101 = vmatmul.mubr.bf16.gmra.mxu0 %v5904
      %v6102 = vpop.f32.mrf.mxu0
      %v6103 = vadd.f32 0.0, %v6102
      %v6104 = vpop.f32.mrf.mxu0
      %v6105 = vpop.f32.mrf.mxu0
      %v6106 = vadd.f32 0.0, %v6105
      %v6107 = vpop.f32.mrf.mxu0
      %6108 = vmatprep.mubr.bf16.mxu0 0
      %6109 = vmatmul.mubr.bf16.gmra.mxu0 %v5905
      %v6110 = vpop.f32.mrf.mxu0
      %v6111 = vadd.f32 0.0, %v6110
      %v6112 = vpop.f32.mrf.mxu0
      %v6113 = vpop.f32.mrf.mxu0
      %v6114 = vadd.f32 0.0, %v6113
      %v6115 = vpop.f32.mrf.mxu0
      %6116 = vmatprep.mubr.bf16.mxu0 0
      %6117 = vmatmul.mubr.bf16.gmra.mxu0 %v5906
      %v6118 = vpop.f32.mrf.mxu0
      %v6119 = vadd.f32 0.0, %v6118
      %v6120 = vpop.f32.mrf.mxu0
      %v6121 = vpop.f32.mrf.mxu0
      %v6122 = vadd.f32 0.0, %v6121
      %v6123 = vpop.f32.mrf.mxu0
      %6124 = vmatprep.mubr.bf16.mxu0 0
      %6125 = vmatmul.mubr.bf16.gmra.mxu0 %v5907
      %v6126 = vpop.f32.mrf.mxu0
      %v6127 = vadd.f32 0.0, %v6126
      %v6128 = vpop.f32.mrf.mxu0
      %v6129 = vpop.f32.mrf.mxu0
      %v6130 = vadd.f32 0.0, %v6129
      %v6131 = vpop.f32.mrf.mxu0
      %6132 = vdwg.mxu0
      %v6133 = vadd.f32 %v5635, %v6007
      %v6134 = vadd.f32 %v5636, %v6010
      %v6135 = vadd.f32 %v5637, %v6015
      %v6136 = vadd.f32 %v5638, %v6018
      %v6137 = vadd.f32 %v5639, %v6023
      %v6138 = vadd.f32 %v5640, %v6026
      %v6139 = vadd.f32 %v5641, %v6031
      %v6140 = vadd.f32 %v5642, %v6034
      %v6141 = vadd.f32 %v5643, %v6039
      %v6142 = vadd.f32 %v5644, %v6042
      %v6143 = vadd.f32 %v5645, %v6047
      %v6144 = vadd.f32 %v5646, %v6050
      %v6145 = vadd.f32 %v5647, %v6055
      %v6146 = vadd.f32 %v5648, %v6058
      %v6147 = vadd.f32 %v5649, %v6063
      %v6148 = vadd.f32 %v5650, %v6066
      %v6149 = vadd.f32 %v5651, %v6071
      %v6150 = vadd.f32 %v5652, %v6074
      %v6151 = vadd.f32 %v5653, %v6079
      %v6152 = vadd.f32 %v5654, %v6082
      %v6153 = vadd.f32 %v5655, %v6087
      %v6154 = vadd.f32 %v5656, %v6090
      %v6155 = vadd.f32 %v5657, %v6095
      %v6156 = vadd.f32 %v5658, %v6098
      %v6157 = vadd.f32 %v5659, %v6103
      %v6158 = vadd.f32 %v5660, %v6106
      %v6159 = vadd.f32 %v5661, %v6111
      %v6160 = vadd.f32 %v5662, %v6114
      %v6161 = vadd.f32 %v5663, %v6119
      %v6162 = vadd.f32 %v5664, %v6122
      %v6163 = vadd.f32 %v5665, %v6127
      %v6164 = vadd.f32 %v5666, %v6130
      %v6165 = vld [vmem:[%s428] sm:$0x1]
      %v6167 = vlaneseq
      %v6168 = vshrl.u32 %v6167, 7
      %v6169 = vsub.s32 0, %v6168
      %v6170 = vrot.slane %v6165, %v6169
      %v6172 = vadd.f32 %v6133, %v6170
      %v6173 = vadd.f32 %v6134, %v6170
      %v6174 = vadd.f32 %v6135, %v6170
      %v6175 = vadd.f32 %v6136, %v6170
      %v6176 = vadd.f32 %v6137, %v6170
      %v6177 = vadd.f32 %v6138, %v6170
      %v6178 = vadd.f32 %v6139, %v6170
      %v6179 = vadd.f32 %v6140, %v6170
      %v6180 = vadd.f32 %v6141, %v6170
      %v6181 = vadd.f32 %v6142, %v6170
      %v6182 = vadd.f32 %v6143, %v6170
      %v6183 = vadd.f32 %v6144, %v6170
      %v6184 = vadd.f32 %v6145, %v6170
      %v6185 = vadd.f32 %v6146, %v6170
      %v6186 = vadd.f32 %v6147, %v6170
      %v6187 = vadd.f32 %v6148, %v6170
      %v6188 = vadd.f32 %v6149, %v6170
      %v6189 = vadd.f32 %v6150, %v6170
      %v6190 = vadd.f32 %v6151, %v6170
      %v6191 = vadd.f32 %v6152, %v6170
      %v6192 = vadd.f32 %v6153, %v6170
      %v6193 = vadd.f32 %v6154, %v6170
      %v6194 = vadd.f32 %v6155, %v6170
      %v6195 = vadd.f32 %v6156, %v6170
      %v6196 = vadd.f32 %v6157, %v6170
      %v6197 = vadd.f32 %v6158, %v6170
      %v6198 = vadd.f32 %v6159, %v6170
      %v6199 = vadd.f32 %v6160, %v6170
      %v6200 = vadd.f32 %v6161, %v6170
      %v6201 = vadd.f32 %v6162, %v6170
      %v6202 = vadd.f32 %v6163, %v6170
      %v6203 = vadd.f32 %v6164, %v6170
      %v6204 = vmul.f32 %v6172, 0.02
      %v6205 = vmul.f32 %v6173, 0.02
      %v6206 = vmul.f32 %v6174, 0.02
      %v6207 = vmul.f32 %v6175, 0.02
      %v6208 = vmul.f32 %v6176, 0.02
      %v6209 = vmul.f32 %v6177, 0.02
      %v6210 = vmul.f32 %v6178, 0.02
      %v6211 = vmul.f32 %v6179, 0.02
      %v6212 = vmul.f32 %v6180, 0.02
      %v6213 = vmul.f32 %v6181, 0.02
      %v6214 = vmul.f32 %v6182, 0.02
      %v6215 = vmul.f32 %v6183, 0.02
      %v6216 = vmul.f32 %v6184, 0.02
      %v6217 = vmul.f32 %v6185, 0.02
      %v6218 = vmul.f32 %v6186, 0.02
      %v6219 = vmul.f32 %v6187, 0.02
      %v6220 = vmul.f32 %v6188, 0.02
      %v6221 = vmul.f32 %v6189, 0.02
      %v6222 = vmul.f32 %v6190, 0.02
      %v6223 = vmul.f32 %v6191, 0.02
      %v6224 = vmul.f32 %v6192, 0.02
      %v6225 = vmul.f32 %v6193, 0.02
      %v6226 = vmul.f32 %v6194, 0.02
      %v6227 = vmul.f32 %v6195, 0.02
      %v6228 = vmul.f32 %v6196, 0.02
      %v6229 = vmul.f32 %v6197, 0.02
      %v6230 = vmul.f32 %v6198, 0.02
      %v6231 = vmul.f32 %v6199, 0.02
      %v6232 = vmul.f32 %v6200, 0.02
      %v6233 = vmul.f32 %v6201, 0.02
      %v6234 = vmul.f32 %v6202, 0.02
      %v6235 = vmul.f32 %v6203, 0.02
      %v6236 = vmax.f32 %v6172, %v6204
      %v6237 = vmax.f32 %v6173, %v6205
      %v6238 = vmax.f32 %v6174, %v6206
      %v6239 = vmax.f32 %v6175, %v6207
      %v6240 = vmax.f32 %v6176, %v6208
      %v6241 = vmax.f32 %v6177, %v6209
      %v6242 = vmax.f32 %v6178, %v6210
      %v6243 = vmax.f32 %v6179, %v6211
      %v6244 = vmax.f32 %v6180, %v6212
      %v6245 = vmax.f32 %v6181, %v6213
      %v6246 = vmax.f32 %v6182, %v6214
      %v6247 = vmax.f32 %v6183, %v6215
      %v6248 = vmax.f32 %v6184, %v6216
      %v6249 = vmax.f32 %v6185, %v6217
      %v6250 = vmax.f32 %v6186, %v6218
      %v6251 = vmax.f32 %v6187, %v6219
      %v6252 = vmax.f32 %v6188, %v6220
      %v6253 = vmax.f32 %v6189, %v6221
      %v6254 = vmax.f32 %v6190, %v6222
      %v6255 = vmax.f32 %v6191, %v6223
      %v6256 = vmax.f32 %v6192, %v6224
      %v6257 = vmax.f32 %v6193, %v6225
      %v6258 = vmax.f32 %v6194, %v6226
      %v6259 = vmax.f32 %v6195, %v6227
      %v6260 = vmax.f32 %v6196, %v6228
      %v6261 = vmax.f32 %v6197, %v6229
      %v6262 = vmax.f32 %v6198, %v6230
      %v6263 = vmax.f32 %v6199, %v6231
      %v6264 = vmax.f32 %v6200, %v6232
      %v6265 = vmax.f32 %v6201, %v6233
      %v6266 = vmax.f32 %v6202, %v6234
      %v6267 = vmax.f32 %v6203, %v6235
      %v6268 = vpack.c.bf16 %v6237, %v6236
      %v6269 = vpack.c.bf16 %v6239, %v6238
      %v6270 = vpack.c.bf16 %v6241, %v6240
      %v6271 = vpack.c.bf16 %v6243, %v6242
      %v6272 = vpack.c.bf16 %v6245, %v6244
      %v6273 = vpack.c.bf16 %v6247, %v6246
      %v6274 = vpack.c.bf16 %v6249, %v6248
      %v6275 = vpack.c.bf16 %v6251, %v6250
      %v6276 = vpack.c.bf16 %v6253, %v6252
      %v6277 = vpack.c.bf16 %v6255, %v6254
      %v6278 = vpack.c.bf16 %v6257, %v6256
      %v6279 = vpack.c.bf16 %v6259, %v6258
      %v6280 = vpack.c.bf16 %v6261, %v6260
      %v6281 = vpack.c.bf16 %v6263, %v6262
      %v6282 = vpack.c.bf16 %v6265, %v6264
      %v6283 = vpack.c.bf16 %v6267, %v6266
      %v6300 = vunpack.c.l.b16 %v6268
      %v6301 = vunpack.c.h.b16 %v6268
      %v6302 = vunpack.c.l.b16 %v6269
      %v6303 = vunpack.c.h.b16 %v6269
      %v6304 = vunpack.c.l.b16 %v6270
      %v6305 = vunpack.c.h.b16 %v6270
      %v6306 = vunpack.c.l.b16 %v6271
      %v6307 = vunpack.c.h.b16 %v6271
      %v6308 = vunpack.c.l.b16 %v6272
      %v6309 = vunpack.c.h.b16 %v6272
      %v6310 = vunpack.c.l.b16 %v6273
      %v6311 = vunpack.c.h.b16 %v6273
      %v6312 = vunpack.c.l.b16 %v6274
      %v6313 = vunpack.c.h.b16 %v6274
      %v6314 = vunpack.c.l.b16 %v6275
      %v6315 = vunpack.c.h.b16 %v6275
      %v6316 = vunpack.c.l.b16 %v6276
      %v6317 = vunpack.c.h.b16 %v6276
      %v6318 = vunpack.c.l.b16 %v6277
      %v6319 = vunpack.c.h.b16 %v6277
      %v6320 = vunpack.c.l.b16 %v6278
      %v6321 = vunpack.c.h.b16 %v6278
      %v6322 = vunpack.c.l.b16 %v6279
      %v6323 = vunpack.c.h.b16 %v6279
      %v6324 = vunpack.c.l.b16 %v6280
      %v6325 = vunpack.c.h.b16 %v6280
      %v6326 = vunpack.c.l.b16 %v6281
      %v6327 = vunpack.c.h.b16 %v6281
      %v6328 = vunpack.c.l.b16 %v6282
      %v6329 = vunpack.c.h.b16 %v6282
      %v6330 = vunpack.c.l.b16 %v6283
      %v6331 = vunpack.c.h.b16 %v6283
      %v6332 = vpack.c.b16 %v6300, %v6300
      %v6333 = vpack.c.b16 %v6301, %v6301
      %v6334 = vpack.c.b16 %v6302, %v6302
      %v6335 = vpack.c.b16 %v6303, %v6303
      %v6336 = vpack.c.b16 %v6304, %v6304
      %v6337 = vpack.c.b16 %v6305, %v6305
      %v6338 = vpack.c.b16 %v6306, %v6306
      %v6339 = vpack.c.b16 %v6307, %v6307
      %v6340 = vpack.c.b16 %v6308, %v6308
      %v6341 = vpack.c.b16 %v6309, %v6309
      %v6342 = vpack.c.b16 %v6310, %v6310
      %v6343 = vpack.c.b16 %v6311, %v6311
      %v6344 = vpack.c.b16 %v6312, %v6312
      %v6345 = vpack.c.b16 %v6313, %v6313
      %v6346 = vpack.c.b16 %v6314, %v6314
      %v6347 = vpack.c.b16 %v6315, %v6315
      %v6348 = vpack.c.b16 %v6316, %v6316
      %v6349 = vpack.c.b16 %v6317, %v6317
      %v6350 = vpack.c.b16 %v6318, %v6318
      %v6351 = vpack.c.b16 %v6319, %v6319
      %v6352 = vpack.c.b16 %v6320, %v6320
      %v6353 = vpack.c.b16 %v6321, %v6321
      %v6354 = vpack.c.b16 %v6322, %v6322
      %v6355 = vpack.c.b16 %v6323, %v6323
      %v6356 = vpack.c.b16 %v6324, %v6324
      %v6357 = vpack.c.b16 %v6325, %v6325
      %v6358 = vpack.c.b16 %v6326, %v6326
      %v6359 = vpack.c.b16 %v6327, %v6327
      %v6360 = vpack.c.b16 %v6328, %v6328
      %v6361 = vpack.c.b16 %v6329, %v6329
      %v6362 = vpack.c.b16 %v6330, %v6330
      %v6363 = vpack.c.b16 %v6331, %v6331
      %6396 = vst [vmem:[%s436] sm:$0xf] %v6332
      %6397 = vst [vmem:[%s436 + $0x4] sm:$0xf] %v6333
      %6398 = vst [vmem:[%s436 + $0x8] sm:$0xf] %v6334
      %6399 = vst [vmem:[%s436 + $0xc] sm:$0xf] %v6335
      %6400 = vst [vmem:[%s436 + $0x10] sm:$0xf] %v6336
      %6401 = vst [vmem:[%s436 + $0x14] sm:$0xf] %v6337
      %6402 = vst [vmem:[%s436 + $0x18] sm:$0xf] %v6338
      %6403 = vst [vmem:[%s436 + $0x1c] sm:$0xf] %v6339
      %6404 = vst [vmem:[%s436 + $0x20] sm:$0xf] %v6340
      %6405 = vst [vmem:[%s436 + $0x24] sm:$0xf] %v6341
      %6406 = vst [vmem:[%s436 + $0x28] sm:$0xf] %v6342
      %6407 = vst [vmem:[%s436 + $0x2c] sm:$0xf] %v6343
      %6408 = vst [vmem:[%s436 + $0x30] sm:$0xf] %v6344
      %6409 = vst [vmem:[%s436 + $0x34] sm:$0xf] %v6345
      %6410 = vst [vmem:[%s436 + $0x38] sm:$0xf] %v6346
      %6411 = vst [vmem:[%s436 + $0x3c] sm:$0xf] %v6347
      %6412 = vst [vmem:[%s436 + $0x40] sm:$0xf] %v6348
      %6413 = vst [vmem:[%s436 + $0x44] sm:$0xf] %v6349
      %6414 = vst [vmem:[%s436 + $0x48] sm:$0xf] %v6350
      %6415 = vst [vmem:[%s436 + $0x4c] sm:$0xf] %v6351
      %6416 = vst [vmem:[%s436 + $0x50] sm:$0xf] %v6352
      %6417 = vst [vmem:[%s436 + $0x54] sm:$0xf] %v6353
      %6418 = vst [vmem:[%s436 + $0x58] sm:$0xf] %v6354
      %6419 = vst [vmem:[%s436 + $0x5c] sm:$0xf] %v6355
      %6420 = vst [vmem:[%s436 + $0x60] sm:$0xf] %v6356
      %6421 = vst [vmem:[%s436 + $0x64] sm:$0xf] %v6357
      %6422 = vst [vmem:[%s436 + $0x68] sm:$0xf] %v6358
      %6423 = vst [vmem:[%s436 + $0x6c] sm:$0xf] %v6359
      %6424 = vst [vmem:[%s436 + $0x70] sm:$0xf] %v6360
      %6425 = vst [vmem:[%s436 + $0x74] sm:$0xf] %v6361
      %6426 = vst [vmem:[%s436 + $0x78] sm:$0xf] %v6362
      %6427 = vst [vmem:[%s436 + $0x7c] sm:$0xf] %v6363
      %v6428 = vadd.f32 %v6236, %v6237
      %v6429 = vadd.f32 %v6428, %v6238
      %v6430 = vadd.f32 %v6429, %v6239
      %v6431 = vadd.f32 %v6430, %v6240
      %v6432 = vadd.f32 %v6431, %v6241
      %v6433 = vadd.f32 %v6432, %v6242
      %v6434 = vadd.f32 %v6433, %v6243
      %v6435 = vadd.f32 %v6434, %v6244
      %v6436 = vadd.f32 %v6435, %v6245
      %v6437 = vadd.f32 %v6436, %v6246
      %v6438 = vadd.f32 %v6437, %v6247
      %v6439 = vadd.f32 %v6438, %v6248
      %v6440 = vadd.f32 %v6439, %v6249
      %v6441 = vadd.f32 %v6440, %v6250
      %v6442 = vadd.f32 %v6441, %v6251
      %v6443 = vadd.f32 %v6442, %v6252
      %v6444 = vadd.f32 %v6443, %v6253
      %v6445 = vadd.f32 %v6444, %v6254
      %v6446 = vadd.f32 %v6445, %v6255
      %v6447 = vadd.f32 %v6446, %v6256
      %v6448 = vadd.f32 %v6447, %v6257
      %v6449 = vadd.f32 %v6448, %v6258
      %v6450 = vadd.f32 %v6449, %v6259
      %v6451 = vadd.f32 %v6450, %v6260
      %v6452 = vadd.f32 %v6451, %v6261
      %v6453 = vadd.f32 %v6452, %v6262
      %v6454 = vadd.f32 %v6453, %v6263
      %v6455 = vadd.f32 %v6454, %v6264
      %v6456 = vadd.f32 %v6455, %v6265
      %v6457 = vadd.f32 %v6456, %v6266
      %v6458 = vadd.f32 %v6457, %v6267
      %v6459 = vrot.slane %v6458, 4
      %v6460 = vadd.f32 %v6458, %v6459
      %v6461 = vrot.slane %v6460, 2
      %v6462 = vadd.f32 %v6460, %v6461
      %v6463 = vrot.slane %v6462, 1
      %v6464 = vadd.f32 %v6462, %v6463
      %v6465 = vmul.f32 %v6236, %v6236
      %v6466 = vmul.f32 %v6237, %v6237
      %v6467 = vmul.f32 %v6238, %v6238
      %v6468 = vmul.f32 %v6239, %v6239
      %v6469 = vmul.f32 %v6240, %v6240
      %v6470 = vmul.f32 %v6241, %v6241
      %v6471 = vmul.f32 %v6242, %v6242
      %v6472 = vmul.f32 %v6243, %v6243
      %v6473 = vmul.f32 %v6244, %v6244
      %v6474 = vmul.f32 %v6245, %v6245
      %v6475 = vmul.f32 %v6246, %v6246
      %v6476 = vmul.f32 %v6247, %v6247
      %v6477 = vmul.f32 %v6248, %v6248
      %v6478 = vmul.f32 %v6249, %v6249
      %v6479 = vmul.f32 %v6250, %v6250
      %v6480 = vmul.f32 %v6251, %v6251
      %v6481 = vmul.f32 %v6252, %v6252
      %v6482 = vmul.f32 %v6253, %v6253
      %v6483 = vmul.f32 %v6254, %v6254
      %v6484 = vmul.f32 %v6255, %v6255
      %v6485 = vmul.f32 %v6256, %v6256
      %v6486 = vmul.f32 %v6257, %v6257
      %v6487 = vmul.f32 %v6258, %v6258
      %v6488 = vmul.f32 %v6259, %v6259
      %v6489 = vmul.f32 %v6260, %v6260
      %v6490 = vmul.f32 %v6261, %v6261
      %v6491 = vmul.f32 %v6262, %v6262
      %v6492 = vmul.f32 %v6263, %v6263
      %v6493 = vmul.f32 %v6264, %v6264
      %v6494 = vmul.f32 %v6265, %v6265
      %v6495 = vmul.f32 %v6266, %v6266
      %v6496 = vmul.f32 %v6267, %v6267
      %v6497 = vadd.f32 %v6465, %v6466
      %v6498 = vadd.f32 %v6497, %v6467
      %v6499 = vadd.f32 %v6498, %v6468
      %v6500 = vadd.f32 %v6499, %v6469
      %v6501 = vadd.f32 %v6500, %v6470
      %v6502 = vadd.f32 %v6501, %v6471
      %v6503 = vadd.f32 %v6502, %v6472
      %v6504 = vadd.f32 %v6503, %v6473
      %v6505 = vadd.f32 %v6504, %v6474
      %v6506 = vadd.f32 %v6505, %v6475
      %v6507 = vadd.f32 %v6506, %v6476
      %v6508 = vadd.f32 %v6507, %v6477
      %v6509 = vadd.f32 %v6508, %v6478
      %v6510 = vadd.f32 %v6509, %v6479
      %v6511 = vadd.f32 %v6510, %v6480
      %v6512 = vadd.f32 %v6511, %v6481
      %v6513 = vadd.f32 %v6512, %v6482
      %v6514 = vadd.f32 %v6513, %v6483
      %v6515 = vadd.f32 %v6514, %v6484
      %v6516 = vadd.f32 %v6515, %v6485
      %v6517 = vadd.f32 %v6516, %v6486
      %v6518 = vadd.f32 %v6517, %v6487
      %v6519 = vadd.f32 %v6518, %v6488
      %v6520 = vadd.f32 %v6519, %v6489
      %v6521 = vadd.f32 %v6520, %v6490
      %v6522 = vadd.f32 %v6521, %v6491
      %v6523 = vadd.f32 %v6522, %v6492
      %v6524 = vadd.f32 %v6523, %v6493
      %v6525 = vadd.f32 %v6524, %v6494
      %v6526 = vadd.f32 %v6525, %v6495
      %v6527 = vadd.f32 %v6526, %v6496
      %v6528 = vrot.slane %v6527, 4
      %v6529 = vadd.f32 %v6527, %v6528
      %v6530 = vrot.slane %v6529, 2
      %v6531 = vadd.f32 %v6529, %v6530
      %v6532 = vrot.slane %v6531, 1
      %v6533 = vadd.f32 %v6531, %v6532
      %vm6534 = vcmask 1040384
      %v6535 = vsel %vm6534, %v6464, %v6533
      %6536 = vst [vmem:[%s443] sm:$0x3] %v6535
      %p6537 = scmp.lt.s32.totalorder %s26, 1
      %s6538 = scalar_select %p6537, %s26, 1
      %p6539 = scmp.lt.s32.totalorder %s27, 0
      %s6540 = scalar_select %p6539, %s27, 0
      %s6541 = smul.addr %s6538, 32
      %s6542 = sadd.s32 %s6540, %s6541
      %s6543 = smul.addr %s6542, 4
      %s6544 = scalar_lea.vmem %s9, %s6543
      %p6545 = scmp.lt.s32.totalorder %s26, 1
      %s6546 = scalar_select %p6545, %s26, 1
      %p6547 = scmp.lt.s32.totalorder %s27, 0
      %s6548 = scalar_select %p6547, %s27, 0
      %s6549 = sadd.s32 %s6548, %s6546
      %s6550 = smul.addr %s6549, 2
      %s6551 = scalar_lea.vmem %s10, %s6550
      // Predicated region
      $region57: #{cond_block_forward.4} parent=55 // pred_check
        %p6552 = pneg %p263
      $region58: #{cond_block_forward.4} parent=55 // pred_check_branch
        %6554 = sbr.rel (%p6552) target = $region60
      $region59: #{cond_block_forward.4} parent=55 // pred_region
        _
      $region60: #{cond_block_forward.4} parent=55 // pred_fallthru
        _
      // Predicated region
      $region61: #{cond_block_forward.4} parent=55 // pred_check
        %p6555 = pneg %p291
      $region62: #{cond_block_forward.4} parent=55 // pred_check_branch
        %6557 = sbr.rel (%p6555) target = $region64
      $region63: #{cond_block_forward.4} parent=55 // pred_region
        _
      $region64: #{cond_block_forward.4} parent=55 // pred_fallthru
        _
    $region56: #{cond_block_forward.4} parent=5 // pred_fallthru
      _
    %p6558 = scmp.le.s32.totalorder 2, %s17
    // Predicated region
    $region65: #{cond_block_forward.4} parent=5 // pred_check
      %p6559 = pneg %p6558
    $region66: #{cond_block_forward.4} parent=5 // pred_check_branch
      %6561 = sbr.rel (%p6559) target = $region68
    $region67: #{cond_block_forward.4} parent=5 // pred_region
      %s6562 = ssub.s32 %s17, 2
      // Predicated region
      $region69: #{cond_block_forward.4} parent=67 // pred_check
        %p6563 = pneg %p269
      $region70: #{cond_block_forward.4} parent=67 // pred_check_branch
        %6565 = sbr.rel (%p6563) target = $region72
      $region71: #{cond_block_forward.4} parent=67 // pred_region
        %p6566 = scmp.lt.s32.totalorder %s28, 1
        %s6567 = scalar_select %p6566, %s28, 1
        %p6568 = scmp.lt.s32.totalorder %s29, 0
        %s6569 = scalar_select %p6568, %s29, 0
        %s6570 = smul.addr %s6567, 32
        %s6571 = sadd.s32 %s6569, %s6570
        %s6572 = smul.addr %s6571, 4
        %s6573 = scalar_lea.vmem %s9, %s6572
      $region72: #{cond_block_forward.4} parent=67 // pred_fallthru
        _
      // Predicated region
      $region73: #{cond_block_forward.4} parent=67 // pred_check
        %p6574 = pneg %p297
      $region74: #{cond_block_forward.4} parent=67 // pred_check_branch
        %6576 = sbr.rel (%p6574) target = $region76
      $region75: #{cond_block_forward.4} parent=67 // pred_region
        %p6577 = scmp.lt.s32.totalorder %s28, 1
        %s6578 = scalar_select %p6577, %s28, 1
        %p6579 = scmp.lt.s32.totalorder %s29, 0
        %s6580 = scalar_select %p6579, %s29, 0
        %s6581 = sadd.s32 %s6580, %s6578
        %s6582 = smul.addr %s6581, 2
        %s6583 = scalar_lea.vmem %s10, %s6582
      $region76: #{cond_block_forward.4} parent=67 // pred_fallthru
        _
    $region68: #{cond_block_forward.4} parent=5 // pred_fallthru
      _
  $region6: #{cond_block_forward.4} parent=0 // loop_footer
    %s21 = sadd.s32 1, %s17
  $region7: #{cond_block_forward.4} parent=0 // loop_footer_branch
    %16 = sbr.rel target = $region3
  $region8: #{cond_block_forward.4} parent=0 // loop_exit
    _

</llo_original>
